<compile_context>
chip_gen: v7x
topology: tpu7x:2x2x1
jax: 0.10.0
libtpu: 0.0.40
codegen_flags: <defaults>
</compile_context>

<pallas_src>
import math
from functools import partial

import jax
import jax.numpy as jnp
from jax import lax
from jax.experimental import pallas as pl
from jax.experimental.pallas import tpu as pltpu


# ----------------------------------------------------------------------------
# Fused Pallas kernel: embed + num_layers encoder layers + flatten head
# ----------------------------------------------------------------------------

def _layer_norm(x, g, b, eps=1e-5):
    mu = jnp.mean(x, axis=-1, keepdims=True)
    var = jnp.mean((x - mu) ** 2, axis=-1, keepdims=True)
    return (x - mu) * lax.rsqrt(var + eps) * g + b


def _fused_kernel(num_layers, nhead,
                  xp_ref, emb_w_ref, pos_ref,
                  w_qkv_ref, b_qkv_ref, wo_ref, w1_ref, b1_ref, w2_ref, vec_ref,
                  head_w_ref, head_b_ref,
                  o_ref):
    # xp_ref:     (N*P, L)  f32     flattened patches for all sequences
    # emb_w_ref:  (L, D)    bf16    patch-embedding weight
    # pos_ref:    (P, D)    f32     emb_bias + W_pos (precomputed)
    # w_qkv_ref:  (NL, D, 3D) bf16  fused QKV weights (1/sqrt(dh) folded into Q)
    # b_qkv_ref:  (NL, 1, 3D) f32
    # wo_ref:     (NL, D, D)  bf16  attention output projection
    # w1_ref:     (NL, D, F) bf16   b1_ref: (NL, 1, F) f32   w2_ref: (NL, F, D) bf16
    # vec_ref:    (NL, 6, D) f32    rows = [bo, ln1_g, ln1_b, b2, ln2_g, ln2_b]
    # head_w_ref: (P, D, T)  bf16   flatten-head weight, pre-permuted
    # head_b_ref: (1, T)     f32
    # o_ref:      (N, T)     f32
    MP, L = xp_ref.shape
    P, D = pos_ref.shape
    N = MP // P
    dh = D // nhead
    T = head_b_ref.shape[1]

    # --- patch embedding + (bias + positional encoding); dropout == identity ---
    u = jnp.dot(xp_ref[...].astype(jnp.bfloat16), emb_w_ref[...],
                preferred_element_type=jnp.float32)              # (N*P, D) f32
    x2d = (u.reshape(N, P, D) + pos_ref[...]).reshape(MP, D)

    # --- post-norm transformer encoder layers (ReLU FFN) ---
    for l in range(num_layers):
        vec = vec_ref[l]                                          # (6, D) f32

        # fused QKV projection (one fat matmul; bf16 operands, f32 accumulate)
        qkv = jnp.dot(x2d.astype(jnp.bfloat16), w_qkv_ref[l],
                      preferred_element_type=jnp.float32) + b_qkv_ref[l]
        q = qkv[:, :D].reshape(N, P, D)
        k = qkv[:, D:2 * D].reshape(N, P, D)
        v = qkv[:, 2 * D:].reshape(N, P, D)

        # per-head attention, batched over all N sequences (1/sqrt(dh) already in Wq)
        heads = []
        for h in range(nhead):
            sl = slice(h * dh, (h + 1) * dh)
            s = jnp.einsum('npd,nqd->npq', q[:, :, sl], k[:, :, sl],
                           preferred_element_type=jnp.float32)    # (N, P, P)
            s = s - jnp.max(s, axis=-1, keepdims=True)
            e = jnp.exp(s)
            pr = e * pl.reciprocal(jnp.sum(e, axis=-1, keepdims=True), approx=True)
            heads.append(jnp.einsum('npq,nqd->npd', pr, v[:, :, sl],
                                    preferred_element_type=jnp.float32))
        attn = jnp.concatenate(heads, axis=-1).reshape(MP, D)
        attn = jnp.dot(attn.astype(jnp.bfloat16), wo_ref[l],
                       preferred_element_type=jnp.float32) + vec[0:1]      # + bo

        x2d = _layer_norm(x2d + attn, vec[1:2], vec[2:3])

        hmid = jnp.maximum(
            jnp.dot(x2d.astype(jnp.bfloat16), w1_ref[l],
                    preferred_element_type=jnp.float32) + b1_ref[l],
            0.0)
        ff = jnp.dot(hmid.astype(jnp.bfloat16), w2_ref[l],
                     preferred_element_type=jnp.float32) + vec[3:4]        # + b2
        x2d = _layer_norm(x2d + ff, vec[4:5], vec[5:6])

    # --- flatten head: out[n] = sum_p z[n, p, :] @ head_w[p]  (+ bias) ---
    z3 = x2d.reshape(N, P, D)
    out = jnp.zeros((N, T), jnp.float32)
    for p_i in range(P):
        out = out + jnp.dot(z3[:, p_i, :].astype(jnp.bfloat16), head_w_ref[p_i],
                            preferred_element_type=jnp.float32)
    o_ref[...] = out + head_b_ref[...]


def fused_forward(xp2, prep, cfg, n_seq):
    # xp2: (N*P, patch_len)  ->  (N, T)
    MP, Lp = xp2.shape
    N = n_seq
    P = MP // N
    D, F, T = cfg["d_model"], cfg["dim_ff"], cfg["target_window"]
    NL, H = cfg["num_layers"], cfg["nhead"]
    dh = D // H

    args = (xp2, prep["emb_w"], prep["pos_bias"], prep["w_qkv"], prep["b_qkv"],
            prep["wo"], prep["w1"], prep["b1"], prep["w2"], prep["vec"],
            prep["head_w"], prep["head_b"])

    def full(shape):
        zeros = (0,) * len(shape)
        return pl.BlockSpec(shape, lambda i, z=zeros: z)

    # Advisory cost estimate so XLA can schedule/overlap this tiny custom call.
    flops = 2 * (MP * Lp * D
                 + NL * (MP * D * 3 * D + 2 * H * N * P * P * dh
                         + MP * D * D + 2 * MP * D * F)
                 + MP * D * T)
    transcendentals = NL * (H * N * P * P + H * N * P + 2 * MP)
    bytes_accessed = sum(int(a.nbytes) for a in args) + N * T * 4

    return pl.pallas_call(
        partial(_fused_kernel, NL, H),
        out_shape=jax.ShapeDtypeStruct((N, T), jnp.float32),
        grid=(1,),
        in_specs=[full(a.shape) for a in args],
        out_specs=pl.BlockSpec((N, T), lambda i: (0, 0)),
        compiler_params=pltpu.CompilerParams(dimension_semantics=("arbitrary",)),
        cost_estimate=pl.CostEstimate(flops=flops,
                                      transcendentals=transcendentals,
                                      bytes_accessed=bytes_accessed),
    )(*args)


# ----------------------------------------------------------------------------
# Parameter construction (deterministic, in-script) and packing
# ----------------------------------------------------------------------------

def positional_encoding_jax(q_len, d_model):
    position = jnp.arange(q_len, dtype=jnp.float32)[:, None]
    div_term = jnp.exp(jnp.arange(0, d_model, 2, dtype=jnp.float32)
                       * -(math.log(10000.0) / d_model))
    pe = jnp.zeros((q_len, d_model), jnp.float32)
    pe = pe.at[:, 0::2].set(jnp.sin(position * div_term))
    pe = pe.at[:, 1::2].set(jnp.cos(position * div_term))
    pe = pe - pe.mean()
    pe = pe / (pe.std(ddof=1) * 10.0)   # torch.std is unbiased (ddof=1)
    return pe


def init_params(key, cfg):
    D, H, F = cfg["d_model"], cfg["nhead"], cfg["dim_ff"]
    dh = D // H
    P = (cfg["context_window"] - cfg["patch_len"]) // cfg["stride"] + 1
    T = cfg["target_window"]
    s = 0.05

    def nrm(k, shape):
        return s * jax.random.normal(k, shape, jnp.float32)

    keys = jax.random.split(key, 4 + cfg["num_layers"])
    params = {
        "emb_w": nrm(keys[0], (cfg["patch_len"], D)),
        "emb_b": nrm(keys[1], (1, D)),
        "w_pos": positional_encoding_jax(P, D),
        "head_w": nrm(keys[2], (D * P, T)),        # torch Flatten_Head layout (D*P, T)
        "head_b": nrm(keys[3], (1, T)),
        "layers": [],
    }
    for l in range(cfg["num_layers"]):
        lk = jax.random.split(keys[4 + l], 12)
        params["layers"].append(dict(
            wq=nrm(lk[0], (H, D, dh)), wk=nrm(lk[1], (H, D, dh)), wv=nrm(lk[2], (H, D, dh)),
            bq=nrm(lk[3], (H, 1, dh)), bk=nrm(lk[4], (H, 1, dh)), bv=nrm(lk[5], (H, 1, dh)),
            wo=nrm(lk[6], (H, dh, D)), bo=nrm(lk[7], (1, D)),
            ln1_g=jnp.ones((1, D), jnp.float32), ln1_b=jnp.zeros((1, D), jnp.float32),
            w1=nrm(lk[8], (D, F)), b1=nrm(lk[9], (1, F)),
            w2=nrm(lk[10], (F, D)), b2=nrm(lk[11], (1, D)),
            ln2_g=jnp.ones((1, D), jnp.float32), ln2_b=jnp.zeros((1, D), jnp.float32),
        ))
    return params


def prepare_params(params, cfg):
    """One-time packing: fused QKV, folded softmax scale, packed LN/bias vectors,
    pre-added positional term, head weight permuted to (P, D, T).  All matmul
    weights are stored in bfloat16 (DMA-bound kernel: halves HBM->VMEM bytes);
    biases / LN params stay in f32."""
    D, H = cfg["d_model"], cfg["nhead"]
    dh = D // H
    P = (cfg["context_window"] - cfg["patch_len"]) // cfg["stride"] + 1
    scale = 1.0 / math.sqrt(dh)

    pos_bias = params["emb_b"] + params["w_pos"]                   # (P, D) f32

    w_qkv, b_qkv, wo, w1, b1, w2, vec = [], [], [], [], [], [], []
    for lp in params["layers"]:
        wq = jnp.transpose(lp["wq"], (1, 0, 2)).reshape(D, D) * scale
        wk = jnp.transpose(lp["wk"], (1, 0, 2)).reshape(D, D)
        wv = jnp.transpose(lp["wv"], (1, 0, 2)).reshape(D, D)
        bq = lp["bq"].reshape(1, D) * scale
        bk = lp["bk"].reshape(1, D)
        bv = lp["bv"].reshape(1, D)
        w_qkv.append(jnp.concatenate([wq, wk, wv], axis=1))        # (D, 3D)
        b_qkv.append(jnp.concatenate([bq, bk, bv], axis=1))        # (1, 3D)
        wo.append(lp["wo"].reshape(H * dh, D))                     # (D, D)
        w1.append(lp["w1"]); b1.append(lp["b1"]); w2.append(lp["w2"])
        vec.append(jnp.concatenate([lp["bo"], lp["ln1_g"], lp["ln1_b"],
                                    lp["b2"], lp["ln2_g"], lp["ln2_b"]], axis=0))  # (6, D)

    # head_w (D*P, T) -> (P, D, T) so z flattened as (p, d) hits the right rows
    # (PyTorch Flatten_Head flattens the permuted (..., D, P) tensor: index d*P+p)
    head_w = jnp.transpose(params["head_w"].reshape(D, P, cfg["target_window"]),
                           (1, 0, 2))

    bf = jnp.bfloat16
    return dict(
        emb_w=params["emb_w"].astype(bf), pos_bias=pos_bias,
        w_qkv=jnp.stack(w_qkv).astype(bf), b_qkv=jnp.stack(b_qkv),
        wo=jnp.stack(wo).astype(bf),
        w1=jnp.stack(w1).astype(bf), b1=jnp.stack(b1),
        w2=jnp.stack(w2).astype(bf),
        vec=jnp.stack(vec), head_w=head_w.astype(bf), head_b=params["head_b"],
    )


# ----------------------------------------------------------------------------
# Forward pass glue
# ----------------------------------------------------------------------------

def unfold_patches(x, patch_len, stride):
    # x: (B, n_vars, L) -> (B, n_vars, patch_num, patch_len), like torch.unfold
    L = x.shape[-1]
    patch_num = (L - patch_len) // stride + 1
    idx = jnp.arange(patch_num)[:, None] * stride + jnp.arange(patch_len)[None, :]
    return x[:, :, idx]


def patch_transformer_forward(x, prep, cfg):
    B, L, V = x.shape
    N = B * V
    T = cfg["target_window"]

    xp = jnp.transpose(x, (0, 2, 1))                              # (B, V, L)
    xp = unfold_patches(xp, cfg["patch_len"], cfg["stride"])      # (B, V, P, patch_len)
    P = xp.shape[2]

    # Single grid step: present the patches pre-flattened to (N*P, patch_len).
    # NOTE: at this batch size the kernel is overhead/DMA-bound on every TPU
    # generation; the real throughput lever is batching more sequences per call.
    xp2 = xp.reshape(N * P, cfg["patch_len"]).astype(jnp.float32)

    out = fused_forward(xp2, prep, cfg, N)                        # (N, T)
    out = out.reshape(B, V, T)
    return jnp.transpose(out, (0, 2, 1))                          # (B, T, V)


# ----------------------------------------------------------------------------
# Main
# ----------------------------------------------------------------------------

if __name__ == "__main__":
    cfg = dict(
        in_features=3,
        context_window=72,
        d_model=64,
        nhead=4,
        num_layers=2,
        target_window=12,
        dim_ff=128,
        patch_len=16,
        stride=8,
    )
    B = 2

    key = jax.random.PRNGKey(0)
    k_x, k_p = jax.random.split(key)
    x = jax.random.normal(k_x, (B, cfg["context_window"], cfg["in_features"]),
                          dtype=jnp.float32)
    params = init_params(k_p, cfg)
    prep = prepare_params(params, cfg)

    out = patch_transformer_forward(x, prep, cfg)
    out = jax.block_until_ready(out)

    expected = (B, cfg["target_window"], cfg["in_features"])
    assert out.shape == expected, (out.shape, expected)
    assert jnp.all(jnp.isfinite(out))
    print("KERNEL_OK")
</pallas_src>

<mosaic_0001>
module attributes {stable_mosaic.version = 11 : i64} {
  func.func @_fused_kernel(%arg0: i32, %arg1: memref<48x16xf32, #tpu.memory_space<vmem>>, %arg2: memref<16x64xbf16, #tpu.memory_space<vmem>>, %arg3: memref<8x64xf32, #tpu.memory_space<vmem>>, %arg4: memref<2x64x192xbf16, #tpu.memory_space<vmem>>, %arg5: memref<2x1x192xf32, #tpu.memory_space<vmem>>, %arg6: memref<2x64x64xbf16, #tpu.memory_space<vmem>>, %arg7: memref<2x64x128xbf16, #tpu.memory_space<vmem>>, %arg8: memref<2x1x128xf32, #tpu.memory_space<vmem>>, %arg9: memref<2x128x64xbf16, #tpu.memory_space<vmem>>, %arg10: memref<2x6x64xf32, #tpu.memory_space<vmem>>, %arg11: memref<8x64x12xbf16, #tpu.memory_space<vmem>>, %arg12: memref<1x12xf32, #tpu.memory_space<vmem>>, %arg13: memref<6x12xf32, #tpu.memory_space<vmem>>) attributes {dimension_semantics = [#tpu.dimension_semantics<arbitrary>], iteration_bounds = array<i64: 1>, scalar_prefetch = 0 : i64, scratch_operands = 0 : i64, tpu.core_type = #tpu.core_type<tc>, window_params = [{pipeline_mode = #tpu.pipeline_mode<synchronous>, transform_indices = @transform_0, window_bounds = array<i64: 48, 16>}, {pipeline_mode = #tpu.pipeline_mode<synchronous>, transform_indices = @transform_1, window_bounds = array<i64: 16, 64>}, {pipeline_mode = #tpu.pipeline_mode<synchronous>, transform_indices = @transform_2, window_bounds = array<i64: 8, 64>}, {pipeline_mode = #tpu.pipeline_mode<synchronous>, transform_indices = @transform_3, window_bounds = array<i64: 2, 64, 192>}, {pipeline_mode = #tpu.pipeline_mode<synchronous>, transform_indices = @transform_4, window_bounds = array<i64: 2, 1, 192>}, {pipeline_mode = #tpu.pipeline_mode<synchronous>, transform_indices = @transform_5, window_bounds = array<i64: 2, 64, 64>}, {pipeline_mode = #tpu.pipeline_mode<synchronous>, transform_indices = @transform_6, window_bounds = array<i64: 2, 64, 128>}, {pipeline_mode = #tpu.pipeline_mode<synchronous>, transform_indices = @transform_7, window_bounds = array<i64: 2, 1, 128>}, {pipeline_mode = #tpu.pipeline_mode<synchronous>, transform_indices = @transform_8, window_bounds = array<i64: 2, 128, 64>}, {pipeline_mode = #tpu.pipeline_mode<synchronous>, transform_indices = @transform_9, window_bounds = array<i64: 2, 6, 64>}, {pipeline_mode = #tpu.pipeline_mode<synchronous>, transform_indices = @transform_10, window_bounds = array<i64: 8, 64, 12>}, {pipeline_mode = #tpu.pipeline_mode<synchronous>, transform_indices = @transform_11, window_bounds = array<i64: 1, 12>}, {pipeline_mode = #tpu.pipeline_mode<synchronous>, transform_indices = @transform_12, window_bounds = array<i64: 6, 12>}]} {
    %c0 = arith.constant 0 : index
    %c0_0 = arith.constant 0 : index
    %0 = vector.load %arg1[%c0, %c0_0] : memref<48x16xf32, #tpu.memory_space<vmem>>, vector<48x16xf32>
    %1 = arith.truncf %0 : vector<48x16xf32> to vector<48x16xbf16>
    %c0_1 = arith.constant 0 : index
    %c0_2 = arith.constant 0 : index
    %2 = vector.load %arg2[%c0_1, %c0_2] : memref<16x64xbf16, #tpu.memory_space<vmem>>, vector<16x64xbf16>
    %cst = arith.constant dense<0.000000e+00> : vector<48x64xf32>
    %3 = tpu.matmul %1, %2, %cst {dimension_numbers = #tpu.dot_dimension_numbers<[1], [0], [0], [1], [0, 0, 1, 1], [], []>} : vector<48x16xbf16>, vector<16x64xbf16>, vector<48x64xf32> -> vector<48x64xf32>
    %4 = vector.shape_cast %3 : vector<48x64xf32> to vector<6x8x64xf32>
    %c0_3 = arith.constant 0 : index
    %c0_4 = arith.constant 0 : index
    %5 = vector.load %arg3[%c0_3, %c0_4] : memref<8x64xf32, #tpu.memory_space<vmem>>, vector<8x64xf32>
    %6 = vector.shape_cast %5 : vector<8x64xf32> to vector<1x8x64xf32>
    %7 = vector.broadcast %6 : vector<1x8x64xf32> to vector<6x8x64xf32>
    %8 = arith.addf %4, %7 : vector<6x8x64xf32>
    %9 = vector.shape_cast %8 : vector<6x8x64xf32> to vector<48x64xf32>
    %c0_5 = arith.constant 0 : index
    %c0_6 = arith.constant 0 : index
    %c0_7 = arith.constant 0 : index
    %10 = vector.load %arg10[%c0_5, %c0_6, %c0_7] : memref<2x6x64xf32, #tpu.memory_space<vmem>>, vector<1x6x64xf32>
    %11 = vector.shape_cast %10 : vector<1x6x64xf32> to vector<6x64xf32>
    %12 = arith.truncf %9 : vector<48x64xf32> to vector<48x64xbf16>
    %c0_8 = arith.constant 0 : index
    %c0_9 = arith.constant 0 : index
    %c0_10 = arith.constant 0 : index
    %13 = vector.load %arg4[%c0_8, %c0_9, %c0_10] : memref<2x64x192xbf16, #tpu.memory_space<vmem>>, vector<1x64x192xbf16>
    %14 = vector.shape_cast %13 : vector<1x64x192xbf16> to vector<64x192xbf16>
    %cst_11 = arith.constant dense<0.000000e+00> : vector<48x192xf32>
    %15 = tpu.matmul %12, %14, %cst_11 {dimension_numbers = #tpu.dot_dimension_numbers<[1], [0], [0], [1], [0, 0, 1, 1], [], []>} : vector<48x64xbf16>, vector<64x192xbf16>, vector<48x192xf32> -> vector<48x192xf32>
    %c0_12 = arith.constant 0 : index
    %c0_13 = arith.constant 0 : index
    %c0_14 = arith.constant 0 : index
    %16 = vector.load %arg5[%c0_12, %c0_13, %c0_14] : memref<2x1x192xf32, #tpu.memory_space<vmem>>, vector<1x1x192xf32>
    %17 = vector.shape_cast %16 : vector<1x1x192xf32> to vector<1x192xf32>
    %18 = vector.broadcast %17 : vector<1x192xf32> to vector<48x192xf32>
    %19 = arith.addf %15, %18 : vector<48x192xf32>
    %20 = vector.extract_strided_slice %19 {offsets = [0, 0], sizes = [48, 64], strides = [1, 1]} : vector<48x192xf32> to vector<48x64xf32>
    %21 = vector.shape_cast %20 : vector<48x64xf32> to vector<6x8x64xf32>
    %22 = vector.extract_strided_slice %19 {offsets = [0, 64], sizes = [48, 64], strides = [1, 1]} : vector<48x192xf32> to vector<48x64xf32>
    %23 = vector.shape_cast %22 : vector<48x64xf32> to vector<6x8x64xf32>
    %24 = vector.extract_strided_slice %19 {offsets = [0, 128], sizes = [48, 64], strides = [1, 1]} : vector<48x192xf32> to vector<48x64xf32>
    %25 = vector.shape_cast %24 : vector<48x64xf32> to vector<6x8x64xf32>
    %26 = vector.extract_strided_slice %21 {offsets = [0, 0, 0], sizes = [6, 8, 16], strides = [1, 1, 1]} : vector<6x8x64xf32> to vector<6x8x16xf32>
    %27 = vector.extract_strided_slice %23 {offsets = [0, 0, 0], sizes = [6, 8, 16], strides = [1, 1, 1]} : vector<6x8x64xf32> to vector<6x8x16xf32>
    "tpu.trace_start"() <{level = 10 : i32, message = "npd,nqd->npq"}> : () -> ()
    %cst_15 = arith.constant dense<0.000000e+00> : vector<6x8x8xf32>
    %28 = tpu.matmul %26, %27, %cst_15 {dimension_numbers = #tpu.dot_dimension_numbers<[2], [2], [1], [1], [0, 0, 0, 1, 1, 1], [0], [0]>} : vector<6x8x16xf32>, vector<6x8x16xf32>, vector<6x8x8xf32> -> vector<6x8x8xf32>
    "tpu.trace_stop"() : () -> ()
    %cst_16 = arith.constant dense<0xFF800000> : vector<6x8xf32>
    %29 = vector.multi_reduction <maximumf>, %28, %cst_16 [2] : vector<6x8x8xf32> to vector<6x8xf32>
    %30 = vector.shape_cast %29 : vector<6x8xf32> to vector<6x8x1xf32>
    %31 = vector.broadcast %30 : vector<6x8x1xf32> to vector<6x8x8xf32>
    %32 = arith.subf %28, %31 : vector<6x8x8xf32>
    %33 = math.exp %32 : vector<6x8x8xf32>
    %cst_17 = arith.constant dense<0.000000e+00> : vector<6x8xf32>
    %34 = vector.multi_reduction <add>, %33, %cst_17 [2] : vector<6x8x8xf32> to vector<6x8xf32>
    %35 = vector.shape_cast %34 : vector<6x8xf32> to vector<6x8x1xf32>
    %36 = tpu.reciprocal %35 {approx = true} : vector<6x8x1xf32> -> vector<6x8x1xf32>
    %37 = vector.broadcast %36 : vector<6x8x1xf32> to vector<6x8x8xf32>
    %38 = arith.mulf %33, %37 : vector<6x8x8xf32>
    %39 = vector.extract_strided_slice %25 {offsets = [0, 0, 0], sizes = [6, 8, 16], strides = [1, 1, 1]} : vector<6x8x64xf32> to vector<6x8x16xf32>
    "tpu.trace_start"() <{level = 10 : i32, message = "npq,nqd->npd"}> : () -> ()
    %cst_18 = arith.constant dense<0.000000e+00> : vector<6x8x16xf32>
    %40 = tpu.matmul %38, %39, %cst_18 {dimension_numbers = #tpu.dot_dimension_numbers<[2], [1], [1], [2], [0, 0, 0, 1, 1, 2], [0], [0]>} : vector<6x8x8xf32>, vector<6x8x16xf32>, vector<6x8x16xf32> -> vector<6x8x16xf32>
    "tpu.trace_stop"() : () -> ()
    %41 = vector.extract_strided_slice %21 {offsets = [0, 0, 16], sizes = [6, 8, 16], strides = [1, 1, 1]} : vector<6x8x64xf32> to vector<6x8x16xf32>
    %42 = vector.extract_strided_slice %23 {offsets = [0, 0, 16], sizes = [6, 8, 16], strides = [1, 1, 1]} : vector<6x8x64xf32> to vector<6x8x16xf32>
    "tpu.trace_start"() <{level = 10 : i32, message = "npd,nqd->npq"}> : () -> ()
    %cst_19 = arith.constant dense<0.000000e+00> : vector<6x8x8xf32>
    %43 = tpu.matmul %41, %42, %cst_19 {dimension_numbers = #tpu.dot_dimension_numbers<[2], [2], [1], [1], [0, 0, 0, 1, 1, 1], [0], [0]>} : vector<6x8x16xf32>, vector<6x8x16xf32>, vector<6x8x8xf32> -> vector<6x8x8xf32>
    "tpu.trace_stop"() : () -> ()
    %cst_20 = arith.constant dense<0xFF800000> : vector<6x8xf32>
    %44 = vector.multi_reduction <maximumf>, %43, %cst_20 [2] : vector<6x8x8xf32> to vector<6x8xf32>
    %45 = vector.shape_cast %44 : vector<6x8xf32> to vector<6x8x1xf32>
    %46 = vector.broadcast %45 : vector<6x8x1xf32> to vector<6x8x8xf32>
    %47 = arith.subf %43, %46 : vector<6x8x8xf32>
    %48 = math.exp %47 : vector<6x8x8xf32>
    %cst_21 = arith.constant dense<0.000000e+00> : vector<6x8xf32>
    %49 = vector.multi_reduction <add>, %48, %cst_21 [2] : vector<6x8x8xf32> to vector<6x8xf32>
    %50 = vector.shape_cast %49 : vector<6x8xf32> to vector<6x8x1xf32>
    %51 = tpu.reciprocal %50 {approx = true} : vector<6x8x1xf32> -> vector<6x8x1xf32>
    %52 = vector.broadcast %51 : vector<6x8x1xf32> to vector<6x8x8xf32>
    %53 = arith.mulf %48, %52 : vector<6x8x8xf32>
    %54 = vector.extract_strided_slice %25 {offsets = [0, 0, 16], sizes = [6, 8, 16], strides = [1, 1, 1]} : vector<6x8x64xf32> to vector<6x8x16xf32>
    "tpu.trace_start"() <{level = 10 : i32, message = "npq,nqd->npd"}> : () -> ()
    %cst_22 = arith.constant dense<0.000000e+00> : vector<6x8x16xf32>
    %55 = tpu.matmul %53, %54, %cst_22 {dimension_numbers = #tpu.dot_dimension_numbers<[2], [1], [1], [2], [0, 0, 0, 1, 1, 2], [0], [0]>} : vector<6x8x8xf32>, vector<6x8x16xf32>, vector<6x8x16xf32> -> vector<6x8x16xf32>
    "tpu.trace_stop"() : () -> ()
    %56 = vector.extract_strided_slice %21 {offsets = [0, 0, 32], sizes = [6, 8, 16], strides = [1, 1, 1]} : vector<6x8x64xf32> to vector<6x8x16xf32>
    %57 = vector.extract_strided_slice %23 {offsets = [0, 0, 32], sizes = [6, 8, 16], strides = [1, 1, 1]} : vector<6x8x64xf32> to vector<6x8x16xf32>
    "tpu.trace_start"() <{level = 10 : i32, message = "npd,nqd->npq"}> : () -> ()
    %cst_23 = arith.constant dense<0.000000e+00> : vector<6x8x8xf32>
    %58 = tpu.matmul %56, %57, %cst_23 {dimension_numbers = #tpu.dot_dimension_numbers<[2], [2], [1], [1], [0, 0, 0, 1, 1, 1], [0], [0]>} : vector<6x8x16xf32>, vector<6x8x16xf32>, vector<6x8x8xf32> -> vector<6x8x8xf32>
    "tpu.trace_stop"() : () -> ()
    %cst_24 = arith.constant dense<0xFF800000> : vector<6x8xf32>
    %59 = vector.multi_reduction <maximumf>, %58, %cst_24 [2] : vector<6x8x8xf32> to vector<6x8xf32>
    %60 = vector.shape_cast %59 : vector<6x8xf32> to vector<6x8x1xf32>
    %61 = vector.broadcast %60 : vector<6x8x1xf32> to vector<6x8x8xf32>
    %62 = arith.subf %58, %61 : vector<6x8x8xf32>
    %63 = math.exp %62 : vector<6x8x8xf32>
    %cst_25 = arith.constant dense<0.000000e+00> : vector<6x8xf32>
    %64 = vector.multi_reduction <add>, %63, %cst_25 [2] : vector<6x8x8xf32> to vector<6x8xf32>
    %65 = vector.shape_cast %64 : vector<6x8xf32> to vector<6x8x1xf32>
    %66 = tpu.reciprocal %65 {approx = true} : vector<6x8x1xf32> -> vector<6x8x1xf32>
    %67 = vector.broadcast %66 : vector<6x8x1xf32> to vector<6x8x8xf32>
    %68 = arith.mulf %63, %67 : vector<6x8x8xf32>
    %69 = vector.extract_strided_slice %25 {offsets = [0, 0, 32], sizes = [6, 8, 16], strides = [1, 1, 1]} : vector<6x8x64xf32> to vector<6x8x16xf32>
    "tpu.trace_start"() <{level = 10 : i32, message = "npq,nqd->npd"}> : () -> ()
    %cst_26 = arith.constant dense<0.000000e+00> : vector<6x8x16xf32>
    %70 = tpu.matmul %68, %69, %cst_26 {dimension_numbers = #tpu.dot_dimension_numbers<[2], [1], [1], [2], [0, 0, 0, 1, 1, 2], [0], [0]>} : vector<6x8x8xf32>, vector<6x8x16xf32>, vector<6x8x16xf32> -> vector<6x8x16xf32>
    "tpu.trace_stop"() : () -> ()
    %71 = vector.extract_strided_slice %21 {offsets = [0, 0, 48], sizes = [6, 8, 16], strides = [1, 1, 1]} : vector<6x8x64xf32> to vector<6x8x16xf32>
    %72 = vector.extract_strided_slice %23 {offsets = [0, 0, 48], sizes = [6, 8, 16], strides = [1, 1, 1]} : vector<6x8x64xf32> to vector<6x8x16xf32>
    "tpu.trace_start"() <{level = 10 : i32, message = "npd,nqd->npq"}> : () -> ()
    %cst_27 = arith.constant dense<0.000000e+00> : vector<6x8x8xf32>
    %73 = tpu.matmul %71, %72, %cst_27 {dimension_numbers = #tpu.dot_dimension_numbers<[2], [2], [1], [1], [0, 0, 0, 1, 1, 1], [0], [0]>} : vector<6x8x16xf32>, vector<6x8x16xf32>, vector<6x8x8xf32> -> vector<6x8x8xf32>
    "tpu.trace_stop"() : () -> ()
    %cst_28 = arith.constant dense<0xFF800000> : vector<6x8xf32>
    %74 = vector.multi_reduction <maximumf>, %73, %cst_28 [2] : vector<6x8x8xf32> to vector<6x8xf32>
    %75 = vector.shape_cast %74 : vector<6x8xf32> to vector<6x8x1xf32>
    %76 = vector.broadcast %75 : vector<6x8x1xf32> to vector<6x8x8xf32>
    %77 = arith.subf %73, %76 : vector<6x8x8xf32>
    %78 = math.exp %77 : vector<6x8x8xf32>
    %cst_29 = arith.constant dense<0.000000e+00> : vector<6x8xf32>
    %79 = vector.multi_reduction <add>, %78, %cst_29 [2] : vector<6x8x8xf32> to vector<6x8xf32>
    %80 = vector.shape_cast %79 : vector<6x8xf32> to vector<6x8x1xf32>
    %81 = tpu.reciprocal %80 {approx = true} : vector<6x8x1xf32> -> vector<6x8x1xf32>
    %82 = vector.broadcast %81 : vector<6x8x1xf32> to vector<6x8x8xf32>
    %83 = arith.mulf %78, %82 : vector<6x8x8xf32>
    %84 = vector.extract_strided_slice %25 {offsets = [0, 0, 48], sizes = [6, 8, 16], strides = [1, 1, 1]} : vector<6x8x64xf32> to vector<6x8x16xf32>
    "tpu.trace_start"() <{level = 10 : i32, message = "npq,nqd->npd"}> : () -> ()
    %cst_30 = arith.constant dense<0.000000e+00> : vector<6x8x16xf32>
    %85 = tpu.matmul %83, %84, %cst_30 {dimension_numbers = #tpu.dot_dimension_numbers<[2], [1], [1], [2], [0, 0, 0, 1, 1, 2], [0], [0]>} : vector<6x8x8xf32>, vector<6x8x16xf32>, vector<6x8x16xf32> -> vector<6x8x16xf32>
    "tpu.trace_stop"() : () -> ()
    %86 = tpu.concatenate %40, %55, %70, %85 in 2 : vector<6x8x16xf32>, vector<6x8x16xf32>, vector<6x8x16xf32>, vector<6x8x16xf32> -> vector<6x8x64xf32>
    %87 = vector.shape_cast %86 : vector<6x8x64xf32> to vector<48x64xf32>
    %88 = arith.truncf %87 : vector<48x64xf32> to vector<48x64xbf16>
    %c0_31 = arith.constant 0 : index
    %c0_32 = arith.constant 0 : index
    %c0_33 = arith.constant 0 : index
    %89 = vector.load %arg6[%c0_31, %c0_32, %c0_33] : memref<2x64x64xbf16, #tpu.memory_space<vmem>>, vector<1x64x64xbf16>
    %90 = vector.shape_cast %89 : vector<1x64x64xbf16> to vector<64x64xbf16>
    %cst_34 = arith.constant dense<0.000000e+00> : vector<48x64xf32>
    %91 = tpu.matmul %88, %90, %cst_34 {dimension_numbers = #tpu.dot_dimension_numbers<[1], [0], [0], [1], [0, 0, 1, 1], [], []>} : vector<48x64xbf16>, vector<64x64xbf16>, vector<48x64xf32> -> vector<48x64xf32>
    %92 = vector.extract_strided_slice %11 {offsets = [0, 0], sizes = [1, 64], strides = [1, 1]} : vector<6x64xf32> to vector<1x64xf32>
    %93 = vector.broadcast %92 : vector<1x64xf32> to vector<48x64xf32>
    %94 = arith.addf %91, %93 : vector<48x64xf32>
    %95 = arith.addf %9, %94 : vector<48x64xf32>
    %96 = vector.extract_strided_slice %11 {offsets = [1, 0], sizes = [1, 64], strides = [1, 1]} : vector<6x64xf32> to vector<1x64xf32>
    %97 = vector.extract_strided_slice %11 {offsets = [2, 0], sizes = [1, 64], strides = [1, 1]} : vector<6x64xf32> to vector<1x64xf32>
    %cst_35 = arith.constant dense<0.000000e+00> : vector<48xf32>
    %98 = vector.multi_reduction <add>, %95, %cst_35 [1] : vector<48x64xf32> to vector<48xf32>
    %99 = vector.shape_cast %98 : vector<48xf32> to vector<48x1xf32>
    %cst_36 = arith.constant 6.400000e+01 : f32
    %100 = vector.broadcast %cst_36 : f32 to vector<48x1xf32>
    %101 = arith.divf %99, %100 : vector<48x1xf32>
    %102 = vector.broadcast %101 : vector<48x1xf32> to vector<48x64xf32>
    %103 = arith.subf %95, %102 : vector<48x64xf32>
    %104 = arith.mulf %103, %103 : vector<48x64xf32>
    %cst_37 = arith.constant dense<0.000000e+00> : vector<48xf32>
    %105 = vector.multi_reduction <add>, %104, %cst_37 [1] : vector<48x64xf32> to vector<48xf32>
    %106 = vector.shape_cast %105 : vector<48xf32> to vector<48x1xf32>
    %cst_38 = arith.constant 6.400000e+01 : f32
    %107 = vector.broadcast %cst_38 : f32 to vector<48x1xf32>
    %108 = arith.divf %106, %107 : vector<48x1xf32>
    %109 = vector.broadcast %101 : vector<48x1xf32> to vector<48x64xf32>
    %110 = arith.subf %95, %109 : vector<48x64xf32>
    %cst_39 = arith.constant 9.99999974E-6 : f32
    %111 = vector.broadcast %cst_39 : f32 to vector<48x1xf32>
    %112 = arith.addf %108, %111 : vector<48x1xf32>
    %113 = math.rsqrt %112 : vector<48x1xf32>
    %114 = vector.broadcast %113 : vector<48x1xf32> to vector<48x64xf32>
    %115 = arith.mulf %110, %114 : vector<48x64xf32>
    %116 = vector.broadcast %96 : vector<1x64xf32> to vector<48x64xf32>
    %117 = arith.mulf %115, %116 : vector<48x64xf32>
    %118 = vector.broadcast %97 : vector<1x64xf32> to vector<48x64xf32>
    %119 = arith.addf %117, %118 : vector<48x64xf32>
    %120 = arith.truncf %119 : vector<48x64xf32> to vector<48x64xbf16>
    %c0_40 = arith.constant 0 : index
    %c0_41 = arith.constant 0 : index
    %c0_42 = arith.constant 0 : index
    %121 = vector.load %arg7[%c0_40, %c0_41, %c0_42] : memref<2x64x128xbf16, #tpu.memory_space<vmem>>, vector<1x64x128xbf16>
    %122 = vector.shape_cast %121 : vector<1x64x128xbf16> to vector<64x128xbf16>
    %cst_43 = arith.constant dense<0.000000e+00> : vector<48x128xf32>
    %123 = tpu.matmul %120, %122, %cst_43 {dimension_numbers = #tpu.dot_dimension_numbers<[1], [0], [0], [1], [0, 0, 1, 1], [], []>} : vector<48x64xbf16>, vector<64x128xbf16>, vector<48x128xf32> -> vector<48x128xf32>
    %c0_44 = arith.constant 0 : index
    %c0_45 = arith.constant 0 : index
    %c0_46 = arith.constant 0 : index
    %124 = vector.load %arg8[%c0_44, %c0_45, %c0_46] : memref<2x1x128xf32, #tpu.memory_space<vmem>>, vector<1x1x128xf32>
    %125 = vector.shape_cast %124 : vector<1x1x128xf32> to vector<1x128xf32>
    %126 = vector.broadcast %125 : vector<1x128xf32> to vector<48x128xf32>
    %127 = arith.addf %123, %126 : vector<48x128xf32>
    %cst_47 = arith.constant 0.000000e+00 : f32
    %128 = vector.broadcast %cst_47 : f32 to vector<48x128xf32>
    %129 = arith.maximumf %127, %128 : vector<48x128xf32>
    %130 = arith.truncf %129 : vector<48x128xf32> to vector<48x128xbf16>
    %c0_48 = arith.constant 0 : index
    %c0_49 = arith.constant 0 : index
    %c0_50 = arith.constant 0 : index
    %131 = vector.load %arg9[%c0_48, %c0_49, %c0_50] : memref<2x128x64xbf16, #tpu.memory_space<vmem>>, vector<1x128x64xbf16>
    %132 = vector.shape_cast %131 : vector<1x128x64xbf16> to vector<128x64xbf16>
    %cst_51 = arith.constant dense<0.000000e+00> : vector<48x64xf32>
    %133 = tpu.matmul %130, %132, %cst_51 {dimension_numbers = #tpu.dot_dimension_numbers<[1], [0], [0], [1], [0, 0, 1, 1], [], []>} : vector<48x128xbf16>, vector<128x64xbf16>, vector<48x64xf32> -> vector<48x64xf32>
    %134 = vector.extract_strided_slice %11 {offsets = [3, 0], sizes = [1, 64], strides = [1, 1]} : vector<6x64xf32> to vector<1x64xf32>
    %135 = vector.broadcast %134 : vector<1x64xf32> to vector<48x64xf32>
    %136 = arith.addf %133, %135 : vector<48x64xf32>
    %137 = arith.addf %119, %136 : vector<48x64xf32>
    %138 = vector.extract_strided_slice %11 {offsets = [4, 0], sizes = [1, 64], strides = [1, 1]} : vector<6x64xf32> to vector<1x64xf32>
    %139 = vector.extract_strided_slice %11 {offsets = [5, 0], sizes = [1, 64], strides = [1, 1]} : vector<6x64xf32> to vector<1x64xf32>
    %cst_52 = arith.constant dense<0.000000e+00> : vector<48xf32>
    %140 = vector.multi_reduction <add>, %137, %cst_52 [1] : vector<48x64xf32> to vector<48xf32>
    %141 = vector.shape_cast %140 : vector<48xf32> to vector<48x1xf32>
    %cst_53 = arith.constant 6.400000e+01 : f32
    %142 = vector.broadcast %cst_53 : f32 to vector<48x1xf32>
    %143 = arith.divf %141, %142 : vector<48x1xf32>
    %144 = vector.broadcast %143 : vector<48x1xf32> to vector<48x64xf32>
    %145 = arith.subf %137, %144 : vector<48x64xf32>
    %146 = arith.mulf %145, %145 : vector<48x64xf32>
    %cst_54 = arith.constant dense<0.000000e+00> : vector<48xf32>
    %147 = vector.multi_reduction <add>, %146, %cst_54 [1] : vector<48x64xf32> to vector<48xf32>
    %148 = vector.shape_cast %147 : vector<48xf32> to vector<48x1xf32>
    %cst_55 = arith.constant 6.400000e+01 : f32
    %149 = vector.broadcast %cst_55 : f32 to vector<48x1xf32>
    %150 = arith.divf %148, %149 : vector<48x1xf32>
    %151 = vector.broadcast %143 : vector<48x1xf32> to vector<48x64xf32>
    %152 = arith.subf %137, %151 : vector<48x64xf32>
    %cst_56 = arith.constant 9.99999974E-6 : f32
    %153 = vector.broadcast %cst_56 : f32 to vector<48x1xf32>
    %154 = arith.addf %150, %153 : vector<48x1xf32>
    %155 = math.rsqrt %154 : vector<48x1xf32>
    %156 = vector.broadcast %155 : vector<48x1xf32> to vector<48x64xf32>
    %157 = arith.mulf %152, %156 : vector<48x64xf32>
    %158 = vector.broadcast %138 : vector<1x64xf32> to vector<48x64xf32>
    %159 = arith.mulf %157, %158 : vector<48x64xf32>
    %160 = vector.broadcast %139 : vector<1x64xf32> to vector<48x64xf32>
    %161 = arith.addf %159, %160 : vector<48x64xf32>
    %c1 = arith.constant 1 : index
    %c0_57 = arith.constant 0 : index
    %c0_58 = arith.constant 0 : index
    %162 = vector.load %arg10[%c1, %c0_57, %c0_58] : memref<2x6x64xf32, #tpu.memory_space<vmem>>, vector<1x6x64xf32>
    %163 = vector.shape_cast %162 : vector<1x6x64xf32> to vector<6x64xf32>
    %164 = arith.truncf %161 : vector<48x64xf32> to vector<48x64xbf16>
    %c1_59 = arith.constant 1 : index
    %c0_60 = arith.constant 0 : index
    %c0_61 = arith.constant 0 : index
    %165 = vector.load %arg4[%c1_59, %c0_60, %c0_61] : memref<2x64x192xbf16, #tpu.memory_space<vmem>>, vector<1x64x192xbf16>
    %166 = vector.shape_cast %165 : vector<1x64x192xbf16> to vector<64x192xbf16>
    %cst_62 = arith.constant dense<0.000000e+00> : vector<48x192xf32>
    %167 = tpu.matmul %164, %166, %cst_62 {dimension_numbers = #tpu.dot_dimension_numbers<[1], [0], [0], [1], [0, 0, 1, 1], [], []>} : vector<48x64xbf16>, vector<64x192xbf16>, vector<48x192xf32> -> vector<48x192xf32>
    %c1_63 = arith.constant 1 : index
    %c0_64 = arith.constant 0 : index
    %c0_65 = arith.constant 0 : index
    %168 = vector.load %arg5[%c1_63, %c0_64, %c0_65] : memref<2x1x192xf32, #tpu.memory_space<vmem>>, vector<1x1x192xf32>
    %169 = vector.shape_cast %168 : vector<1x1x192xf32> to vector<1x192xf32>
    %170 = vector.broadcast %169 : vector<1x192xf32> to vector<48x192xf32>
    %171 = arith.addf %167, %170 : vector<48x192xf32>
    %172 = vector.extract_strided_slice %171 {offsets = [0, 0], sizes = [48, 64], strides = [1, 1]} : vector<48x192xf32> to vector<48x64xf32>
    %173 = vector.shape_cast %172 : vector<48x64xf32> to vector<6x8x64xf32>
    %174 = vector.extract_strided_slice %171 {offsets = [0, 64], sizes = [48, 64], strides = [1, 1]} : vector<48x192xf32> to vector<48x64xf32>
    %175 = vector.shape_cast %174 : vector<48x64xf32> to vector<6x8x64xf32>
    %176 = vector.extract_strided_slice %171 {offsets = [0, 128], sizes = [48, 64], strides = [1, 1]} : vector<48x192xf32> to vector<48x64xf32>
    %177 = vector.shape_cast %176 : vector<48x64xf32> to vector<6x8x64xf32>
    %178 = vector.extract_strided_slice %173 {offsets = [0, 0, 0], sizes = [6, 8, 16], strides = [1, 1, 1]} : vector<6x8x64xf32> to vector<6x8x16xf32>
    %179 = vector.extract_strided_slice %175 {offsets = [0, 0, 0], sizes = [6, 8, 16], strides = [1, 1, 1]} : vector<6x8x64xf32> to vector<6x8x16xf32>
    "tpu.trace_start"() <{level = 10 : i32, message = "npd,nqd->npq"}> : () -> ()
    %cst_66 = arith.constant dense<0.000000e+00> : vector<6x8x8xf32>
    %180 = tpu.matmul %178, %179, %cst_66 {dimension_numbers = #tpu.dot_dimension_numbers<[2], [2], [1], [1], [0, 0, 0, 1, 1, 1], [0], [0]>} : vector<6x8x16xf32>, vector<6x8x16xf32>, vector<6x8x8xf32> -> vector<6x8x8xf32>
    "tpu.trace_stop"() : () -> ()
    %cst_67 = arith.constant dense<0xFF800000> : vector<6x8xf32>
    %181 = vector.multi_reduction <maximumf>, %180, %cst_67 [2] : vector<6x8x8xf32> to vector<6x8xf32>
    %182 = vector.shape_cast %181 : vector<6x8xf32> to vector<6x8x1xf32>
    %183 = vector.broadcast %182 : vector<6x8x1xf32> to vector<6x8x8xf32>
    %184 = arith.subf %180, %183 : vector<6x8x8xf32>
    %185 = math.exp %184 : vector<6x8x8xf32>
    %cst_68 = arith.constant dense<0.000000e+00> : vector<6x8xf32>
    %186 = vector.multi_reduction <add>, %185, %cst_68 [2] : vector<6x8x8xf32> to vector<6x8xf32>
    %187 = vector.shape_cast %186 : vector<6x8xf32> to vector<6x8x1xf32>
    %188 = tpu.reciprocal %187 {approx = true} : vector<6x8x1xf32> -> vector<6x8x1xf32>
    %189 = vector.broadcast %188 : vector<6x8x1xf32> to vector<6x8x8xf32>
    %190 = arith.mulf %185, %189 : vector<6x8x8xf32>
    %191 = vector.extract_strided_slice %177 {offsets = [0, 0, 0], sizes = [6, 8, 16], strides = [1, 1, 1]} : vector<6x8x64xf32> to vector<6x8x16xf32>
    "tpu.trace_start"() <{level = 10 : i32, message = "npq,nqd->npd"}> : () -> ()
    %cst_69 = arith.constant dense<0.000000e+00> : vector<6x8x16xf32>
    %192 = tpu.matmul %190, %191, %cst_69 {dimension_numbers = #tpu.dot_dimension_numbers<[2], [1], [1], [2], [0, 0, 0, 1, 1, 2], [0], [0]>} : vector<6x8x8xf32>, vector<6x8x16xf32>, vector<6x8x16xf32> -> vector<6x8x16xf32>
    "tpu.trace_stop"() : () -> ()
    %193 = vector.extract_strided_slice %173 {offsets = [0, 0, 16], sizes = [6, 8, 16], strides = [1, 1, 1]} : vector<6x8x64xf32> to vector<6x8x16xf32>
    %194 = vector.extract_strided_slice %175 {offsets = [0, 0, 16], sizes = [6, 8, 16], strides = [1, 1, 1]} : vector<6x8x64xf32> to vector<6x8x16xf32>
    "tpu.trace_start"() <{level = 10 : i32, message = "npd,nqd->npq"}> : () -> ()
    %cst_70 = arith.constant dense<0.000000e+00> : vector<6x8x8xf32>
    %195 = tpu.matmul %193, %194, %cst_70 {dimension_numbers = #tpu.dot_dimension_numbers<[2], [2], [1], [1], [0, 0, 0, 1, 1, 1], [0], [0]>} : vector<6x8x16xf32>, vector<6x8x16xf32>, vector<6x8x8xf32> -> vector<6x8x8xf32>
    "tpu.trace_stop"() : () -> ()
    %cst_71 = arith.constant dense<0xFF800000> : vector<6x8xf32>
    %196 = vector.multi_reduction <maximumf>, %195, %cst_71 [2] : vector<6x8x8xf32> to vector<6x8xf32>
    %197 = vector.shape_cast %196 : vector<6x8xf32> to vector<6x8x1xf32>
    %198 = vector.broadcast %197 : vector<6x8x1xf32> to vector<6x8x8xf32>
    %199 = arith.subf %195, %198 : vector<6x8x8xf32>
    %200 = math.exp %199 : vector<6x8x8xf32>
    %cst_72 = arith.constant dense<0.000000e+00> : vector<6x8xf32>
    %201 = vector.multi_reduction <add>, %200, %cst_72 [2] : vector<6x8x8xf32> to vector<6x8xf32>
    %202 = vector.shape_cast %201 : vector<6x8xf32> to vector<6x8x1xf32>
    %203 = tpu.reciprocal %202 {approx = true} : vector<6x8x1xf32> -> vector<6x8x1xf32>
    %204 = vector.broadcast %203 : vector<6x8x1xf32> to vector<6x8x8xf32>
    %205 = arith.mulf %200, %204 : vector<6x8x8xf32>
    %206 = vector.extract_strided_slice %177 {offsets = [0, 0, 16], sizes = [6, 8, 16], strides = [1, 1, 1]} : vector<6x8x64xf32> to vector<6x8x16xf32>
    "tpu.trace_start"() <{level = 10 : i32, message = "npq,nqd->npd"}> : () -> ()
    %cst_73 = arith.constant dense<0.000000e+00> : vector<6x8x16xf32>
    %207 = tpu.matmul %205, %206, %cst_73 {dimension_numbers = #tpu.dot_dimension_numbers<[2], [1], [1], [2], [0, 0, 0, 1, 1, 2], [0], [0]>} : vector<6x8x8xf32>, vector<6x8x16xf32>, vector<6x8x16xf32> -> vector<6x8x16xf32>
    "tpu.trace_stop"() : () -> ()
    %208 = vector.extract_strided_slice %173 {offsets = [0, 0, 32], sizes = [6, 8, 16], strides = [1, 1, 1]} : vector<6x8x64xf32> to vector<6x8x16xf32>
    %209 = vector.extract_strided_slice %175 {offsets = [0, 0, 32], sizes = [6, 8, 16], strides = [1, 1, 1]} : vector<6x8x64xf32> to vector<6x8x16xf32>
    "tpu.trace_start"() <{level = 10 : i32, message = "npd,nqd->npq"}> : () -> ()
    %cst_74 = arith.constant dense<0.000000e+00> : vector<6x8x8xf32>
    %210 = tpu.matmul %208, %209, %cst_74 {dimension_numbers = #tpu.dot_dimension_numbers<[2], [2], [1], [1], [0, 0, 0, 1, 1, 1], [0], [0]>} : vector<6x8x16xf32>, vector<6x8x16xf32>, vector<6x8x8xf32> -> vector<6x8x8xf32>
    "tpu.trace_stop"() : () -> ()
    %cst_75 = arith.constant dense<0xFF800000> : vector<6x8xf32>
    %211 = vector.multi_reduction <maximumf>, %210, %cst_75 [2] : vector<6x8x8xf32> to vector<6x8xf32>
    %212 = vector.shape_cast %211 : vector<6x8xf32> to vector<6x8x1xf32>
    %213 = vector.broadcast %212 : vector<6x8x1xf32> to vector<6x8x8xf32>
    %214 = arith.subf %210, %213 : vector<6x8x8xf32>
    %215 = math.exp %214 : vector<6x8x8xf32>
    %cst_76 = arith.constant dense<0.000000e+00> : vector<6x8xf32>
    %216 = vector.multi_reduction <add>, %215, %cst_76 [2] : vector<6x8x8xf32> to vector<6x8xf32>
    %217 = vector.shape_cast %216 : vector<6x8xf32> to vector<6x8x1xf32>
    %218 = tpu.reciprocal %217 {approx = true} : vector<6x8x1xf32> -> vector<6x8x1xf32>
    %219 = vector.broadcast %218 : vector<6x8x1xf32> to vector<6x8x8xf32>
    %220 = arith.mulf %215, %219 : vector<6x8x8xf32>
    %221 = vector.extract_strided_slice %177 {offsets = [0, 0, 32], sizes = [6, 8, 16], strides = [1, 1, 1]} : vector<6x8x64xf32> to vector<6x8x16xf32>
    "tpu.trace_start"() <{level = 10 : i32, message = "npq,nqd->npd"}> : () -> ()
    %cst_77 = arith.constant dense<0.000000e+00> : vector<6x8x16xf32>
    %222 = tpu.matmul %220, %221, %cst_77 {dimension_numbers = #tpu.dot_dimension_numbers<[2], [1], [1], [2], [0, 0, 0, 1, 1, 2], [0], [0]>} : vector<6x8x8xf32>, vector<6x8x16xf32>, vector<6x8x16xf32> -> vector<6x8x16xf32>
    "tpu.trace_stop"() : () -> ()
    %223 = vector.extract_strided_slice %173 {offsets = [0, 0, 48], sizes = [6, 8, 16], strides = [1, 1, 1]} : vector<6x8x64xf32> to vector<6x8x16xf32>
    %224 = vector.extract_strided_slice %175 {offsets = [0, 0, 48], sizes = [6, 8, 16], strides = [1, 1, 1]} : vector<6x8x64xf32> to vector<6x8x16xf32>
    "tpu.trace_start"() <{level = 10 : i32, message = "npd,nqd->npq"}> : () -> ()
    %cst_78 = arith.constant dense<0.000000e+00> : vector<6x8x8xf32>
    %225 = tpu.matmul %223, %224, %cst_78 {dimension_numbers = #tpu.dot_dimension_numbers<[2], [2], [1], [1], [0, 0, 0, 1, 1, 1], [0], [0]>} : vector<6x8x16xf32>, vector<6x8x16xf32>, vector<6x8x8xf32> -> vector<6x8x8xf32>
    "tpu.trace_stop"() : () -> ()
    %cst_79 = arith.constant dense<0xFF800000> : vector<6x8xf32>
    %226 = vector.multi_reduction <maximumf>, %225, %cst_79 [2] : vector<6x8x8xf32> to vector<6x8xf32>
    %227 = vector.shape_cast %226 : vector<6x8xf32> to vector<6x8x1xf32>
    %228 = vector.broadcast %227 : vector<6x8x1xf32> to vector<6x8x8xf32>
    %229 = arith.subf %225, %228 : vector<6x8x8xf32>
    %230 = math.exp %229 : vector<6x8x8xf32>
    %cst_80 = arith.constant dense<0.000000e+00> : vector<6x8xf32>
    %231 = vector.multi_reduction <add>, %230, %cst_80 [2] : vector<6x8x8xf32> to vector<6x8xf32>
    %232 = vector.shape_cast %231 : vector<6x8xf32> to vector<6x8x1xf32>
    %233 = tpu.reciprocal %232 {approx = true} : vector<6x8x1xf32> -> vector<6x8x1xf32>
    %234 = vector.broadcast %233 : vector<6x8x1xf32> to vector<6x8x8xf32>
    %235 = arith.mulf %230, %234 : vector<6x8x8xf32>
    %236 = vector.extract_strided_slice %177 {offsets = [0, 0, 48], sizes = [6, 8, 16], strides = [1, 1, 1]} : vector<6x8x64xf32> to vector<6x8x16xf32>
    "tpu.trace_start"() <{level = 10 : i32, message = "npq,nqd->npd"}> : () -> ()
    %cst_81 = arith.constant dense<0.000000e+00> : vector<6x8x16xf32>
    %237 = tpu.matmul %235, %236, %cst_81 {dimension_numbers = #tpu.dot_dimension_numbers<[2], [1], [1], [2], [0, 0, 0, 1, 1, 2], [0], [0]>} : vector<6x8x8xf32>, vector<6x8x16xf32>, vector<6x8x16xf32> -> vector<6x8x16xf32>
    "tpu.trace_stop"() : () -> ()
    %238 = tpu.concatenate %192, %207, %222, %237 in 2 : vector<6x8x16xf32>, vector<6x8x16xf32>, vector<6x8x16xf32>, vector<6x8x16xf32> -> vector<6x8x64xf32>
    %239 = vector.shape_cast %238 : vector<6x8x64xf32> to vector<48x64xf32>
    %240 = arith.truncf %239 : vector<48x64xf32> to vector<48x64xbf16>
    %c1_82 = arith.constant 1 : index
    %c0_83 = arith.constant 0 : index
    %c0_84 = arith.constant 0 : index
    %241 = vector.load %arg6[%c1_82, %c0_83, %c0_84] : memref<2x64x64xbf16, #tpu.memory_space<vmem>>, vector<1x64x64xbf16>
    %242 = vector.shape_cast %241 : vector<1x64x64xbf16> to vector<64x64xbf16>
    %cst_85 = arith.constant dense<0.000000e+00> : vector<48x64xf32>
    %243 = tpu.matmul %240, %242, %cst_85 {dimension_numbers = #tpu.dot_dimension_numbers<[1], [0], [0], [1], [0, 0, 1, 1], [], []>} : vector<48x64xbf16>, vector<64x64xbf16>, vector<48x64xf32> -> vector<48x64xf32>
    %244 = vector.extract_strided_slice %163 {offsets = [0, 0], sizes = [1, 64], strides = [1, 1]} : vector<6x64xf32> to vector<1x64xf32>
    %245 = vector.broadcast %244 : vector<1x64xf32> to vector<48x64xf32>
    %246 = arith.addf %243, %245 : vector<48x64xf32>
    %247 = arith.addf %161, %246 : vector<48x64xf32>
    %248 = vector.extract_strided_slice %163 {offsets = [1, 0], sizes = [1, 64], strides = [1, 1]} : vector<6x64xf32> to vector<1x64xf32>
    %249 = vector.extract_strided_slice %163 {offsets = [2, 0], sizes = [1, 64], strides = [1, 1]} : vector<6x64xf32> to vector<1x64xf32>
    %cst_86 = arith.constant dense<0.000000e+00> : vector<48xf32>
    %250 = vector.multi_reduction <add>, %247, %cst_86 [1] : vector<48x64xf32> to vector<48xf32>
    %251 = vector.shape_cast %250 : vector<48xf32> to vector<48x1xf32>
    %cst_87 = arith.constant 6.400000e+01 : f32
    %252 = vector.broadcast %cst_87 : f32 to vector<48x1xf32>
    %253 = arith.divf %251, %252 : vector<48x1xf32>
    %254 = vector.broadcast %253 : vector<48x1xf32> to vector<48x64xf32>
    %255 = arith.subf %247, %254 : vector<48x64xf32>
    %256 = arith.mulf %255, %255 : vector<48x64xf32>
    %cst_88 = arith.constant dense<0.000000e+00> : vector<48xf32>
    %257 = vector.multi_reduction <add>, %256, %cst_88 [1] : vector<48x64xf32> to vector<48xf32>
    %258 = vector.shape_cast %257 : vector<48xf32> to vector<48x1xf32>
    %cst_89 = arith.constant 6.400000e+01 : f32
    %259 = vector.broadcast %cst_89 : f32 to vector<48x1xf32>
    %260 = arith.divf %258, %259 : vector<48x1xf32>
    %261 = vector.broadcast %253 : vector<48x1xf32> to vector<48x64xf32>
    %262 = arith.subf %247, %261 : vector<48x64xf32>
    %cst_90 = arith.constant 9.99999974E-6 : f32
    %263 = vector.broadcast %cst_90 : f32 to vector<48x1xf32>
    %264 = arith.addf %260, %263 : vector<48x1xf32>
    %265 = math.rsqrt %264 : vector<48x1xf32>
    %266 = vector.broadcast %265 : vector<48x1xf32> to vector<48x64xf32>
    %267 = arith.mulf %262, %266 : vector<48x64xf32>
    %268 = vector.broadcast %248 : vector<1x64xf32> to vector<48x64xf32>
    %269 = arith.mulf %267, %268 : vector<48x64xf32>
    %270 = vector.broadcast %249 : vector<1x64xf32> to vector<48x64xf32>
    %271 = arith.addf %269, %270 : vector<48x64xf32>
    %272 = arith.truncf %271 : vector<48x64xf32> to vector<48x64xbf16>
    %c1_91 = arith.constant 1 : index
    %c0_92 = arith.constant 0 : index
    %c0_93 = arith.constant 0 : index
    %273 = vector.load %arg7[%c1_91, %c0_92, %c0_93] : memref<2x64x128xbf16, #tpu.memory_space<vmem>>, vector<1x64x128xbf16>
    %274 = vector.shape_cast %273 : vector<1x64x128xbf16> to vector<64x128xbf16>
    %cst_94 = arith.constant dense<0.000000e+00> : vector<48x128xf32>
    %275 = tpu.matmul %272, %274, %cst_94 {dimension_numbers = #tpu.dot_dimension_numbers<[1], [0], [0], [1], [0, 0, 1, 1], [], []>} : vector<48x64xbf16>, vector<64x128xbf16>, vector<48x128xf32> -> vector<48x128xf32>
    %c1_95 = arith.constant 1 : index
    %c0_96 = arith.constant 0 : index
    %c0_97 = arith.constant 0 : index
    %276 = vector.load %arg8[%c1_95, %c0_96, %c0_97] : memref<2x1x128xf32, #tpu.memory_space<vmem>>, vector<1x1x128xf32>
    %277 = vector.shape_cast %276 : vector<1x1x128xf32> to vector<1x128xf32>
    %278 = vector.broadcast %277 : vector<1x128xf32> to vector<48x128xf32>
    %279 = arith.addf %275, %278 : vector<48x128xf32>
    %cst_98 = arith.constant 0.000000e+00 : f32
    %280 = vector.broadcast %cst_98 : f32 to vector<48x128xf32>
    %281 = arith.maximumf %279, %280 : vector<48x128xf32>
    %282 = arith.truncf %281 : vector<48x128xf32> to vector<48x128xbf16>
    %c1_99 = arith.constant 1 : index
    %c0_100 = arith.constant 0 : index
    %c0_101 = arith.constant 0 : index
    %283 = vector.load %arg9[%c1_99, %c0_100, %c0_101] : memref<2x128x64xbf16, #tpu.memory_space<vmem>>, vector<1x128x64xbf16>
    %284 = vector.shape_cast %283 : vector<1x128x64xbf16> to vector<128x64xbf16>
    %cst_102 = arith.constant dense<0.000000e+00> : vector<48x64xf32>
    %285 = tpu.matmul %282, %284, %cst_102 {dimension_numbers = #tpu.dot_dimension_numbers<[1], [0], [0], [1], [0, 0, 1, 1], [], []>} : vector<48x128xbf16>, vector<128x64xbf16>, vector<48x64xf32> -> vector<48x64xf32>
    %286 = vector.extract_strided_slice %163 {offsets = [3, 0], sizes = [1, 64], strides = [1, 1]} : vector<6x64xf32> to vector<1x64xf32>
    %287 = vector.broadcast %286 : vector<1x64xf32> to vector<48x64xf32>
    %288 = arith.addf %285, %287 : vector<48x64xf32>
    %289 = arith.addf %271, %288 : vector<48x64xf32>
    %290 = vector.extract_strided_slice %163 {offsets = [4, 0], sizes = [1, 64], strides = [1, 1]} : vector<6x64xf32> to vector<1x64xf32>
    %291 = vector.extract_strided_slice %163 {offsets = [5, 0], sizes = [1, 64], strides = [1, 1]} : vector<6x64xf32> to vector<1x64xf32>
    %cst_103 = arith.constant dense<0.000000e+00> : vector<48xf32>
    %292 = vector.multi_reduction <add>, %289, %cst_103 [1] : vector<48x64xf32> to vector<48xf32>
    %293 = vector.shape_cast %292 : vector<48xf32> to vector<48x1xf32>
    %cst_104 = arith.constant 6.400000e+01 : f32
    %294 = vector.broadcast %cst_104 : f32 to vector<48x1xf32>
    %295 = arith.divf %293, %294 : vector<48x1xf32>
    %296 = vector.broadcast %295 : vector<48x1xf32> to vector<48x64xf32>
    %297 = arith.subf %289, %296 : vector<48x64xf32>
    %298 = arith.mulf %297, %297 : vector<48x64xf32>
    %cst_105 = arith.constant dense<0.000000e+00> : vector<48xf32>
    %299 = vector.multi_reduction <add>, %298, %cst_105 [1] : vector<48x64xf32> to vector<48xf32>
    %300 = vector.shape_cast %299 : vector<48xf32> to vector<48x1xf32>
    %cst_106 = arith.constant 6.400000e+01 : f32
    %301 = vector.broadcast %cst_106 : f32 to vector<48x1xf32>
    %302 = arith.divf %300, %301 : vector<48x1xf32>
    %303 = vector.broadcast %295 : vector<48x1xf32> to vector<48x64xf32>
    %304 = arith.subf %289, %303 : vector<48x64xf32>
    %cst_107 = arith.constant 9.99999974E-6 : f32
    %305 = vector.broadcast %cst_107 : f32 to vector<48x1xf32>
    %306 = arith.addf %302, %305 : vector<48x1xf32>
    %307 = math.rsqrt %306 : vector<48x1xf32>
    %308 = vector.broadcast %307 : vector<48x1xf32> to vector<48x64xf32>
    %309 = arith.mulf %304, %308 : vector<48x64xf32>
    %310 = vector.broadcast %290 : vector<1x64xf32> to vector<48x64xf32>
    %311 = arith.mulf %309, %310 : vector<48x64xf32>
    %312 = vector.broadcast %291 : vector<1x64xf32> to vector<48x64xf32>
    %313 = arith.addf %311, %312 : vector<48x64xf32>
    %314 = vector.shape_cast %313 : vector<48x64xf32> to vector<6x8x64xf32>
    %cst_108 = arith.constant 0.000000e+00 : f32
    %315 = vector.broadcast %cst_108 : f32 to vector<6x12xf32>
    %316 = vector.extract_strided_slice %314 {offsets = [0, 0, 0], sizes = [6, 1, 64], strides = [1, 1, 1]} : vector<6x8x64xf32> to vector<6x1x64xf32>
    %317 = vector.shape_cast %316 : vector<6x1x64xf32> to vector<6x64xf32>
    %318 = arith.truncf %317 : vector<6x64xf32> to vector<6x64xbf16>
    %c0_109 = arith.constant 0 : index
    %c0_110 = arith.constant 0 : index
    %c0_111 = arith.constant 0 : index
    %319 = vector.load %arg11[%c0_109, %c0_110, %c0_111] : memref<8x64x12xbf16, #tpu.memory_space<vmem>>, vector<1x64x12xbf16>
    %320 = vector.shape_cast %319 : vector<1x64x12xbf16> to vector<64x12xbf16>
    %cst_112 = arith.constant dense<0.000000e+00> : vector<6x12xf32>
    %321 = tpu.matmul %318, %320, %cst_112 {dimension_numbers = #tpu.dot_dimension_numbers<[1], [0], [0], [1], [0, 0, 1, 1], [], []>} : vector<6x64xbf16>, vector<64x12xbf16>, vector<6x12xf32> -> vector<6x12xf32>
    %322 = arith.addf %315, %321 : vector<6x12xf32>
    %323 = vector.extract_strided_slice %314 {offsets = [0, 1, 0], sizes = [6, 1, 64], strides = [1, 1, 1]} : vector<6x8x64xf32> to vector<6x1x64xf32>
    %324 = vector.shape_cast %323 : vector<6x1x64xf32> to vector<6x64xf32>
    %325 = arith.truncf %324 : vector<6x64xf32> to vector<6x64xbf16>
    %c1_113 = arith.constant 1 : index
    %c0_114 = arith.constant 0 : index
    %c0_115 = arith.constant 0 : index
    %326 = vector.load %arg11[%c1_113, %c0_114, %c0_115] : memref<8x64x12xbf16, #tpu.memory_space<vmem>>, vector<1x64x12xbf16>
    %327 = vector.shape_cast %326 : vector<1x64x12xbf16> to vector<64x12xbf16>
    %cst_116 = arith.constant dense<0.000000e+00> : vector<6x12xf32>
    %328 = tpu.matmul %325, %327, %cst_116 {dimension_numbers = #tpu.dot_dimension_numbers<[1], [0], [0], [1], [0, 0, 1, 1], [], []>} : vector<6x64xbf16>, vector<64x12xbf16>, vector<6x12xf32> -> vector<6x12xf32>
    %329 = arith.addf %322, %328 : vector<6x12xf32>
    %330 = vector.extract_strided_slice %314 {offsets = [0, 2, 0], sizes = [6, 1, 64], strides = [1, 1, 1]} : vector<6x8x64xf32> to vector<6x1x64xf32>
    %331 = vector.shape_cast %330 : vector<6x1x64xf32> to vector<6x64xf32>
    %332 = arith.truncf %331 : vector<6x64xf32> to vector<6x64xbf16>
    %c2 = arith.constant 2 : index
    %c0_117 = arith.constant 0 : index
    %c0_118 = arith.constant 0 : index
    %333 = vector.load %arg11[%c2, %c0_117, %c0_118] : memref<8x64x12xbf16, #tpu.memory_space<vmem>>, vector<1x64x12xbf16>
    %334 = vector.shape_cast %333 : vector<1x64x12xbf16> to vector<64x12xbf16>
    %cst_119 = arith.constant dense<0.000000e+00> : vector<6x12xf32>
    %335 = tpu.matmul %332, %334, %cst_119 {dimension_numbers = #tpu.dot_dimension_numbers<[1], [0], [0], [1], [0, 0, 1, 1], [], []>} : vector<6x64xbf16>, vector<64x12xbf16>, vector<6x12xf32> -> vector<6x12xf32>
    %336 = arith.addf %329, %335 : vector<6x12xf32>
    %337 = vector.extract_strided_slice %314 {offsets = [0, 3, 0], sizes = [6, 1, 64], strides = [1, 1, 1]} : vector<6x8x64xf32> to vector<6x1x64xf32>
    %338 = vector.shape_cast %337 : vector<6x1x64xf32> to vector<6x64xf32>
    %339 = arith.truncf %338 : vector<6x64xf32> to vector<6x64xbf16>
    %c3 = arith.constant 3 : index
    %c0_120 = arith.constant 0 : index
    %c0_121 = arith.constant 0 : index
    %340 = vector.load %arg11[%c3, %c0_120, %c0_121] : memref<8x64x12xbf16, #tpu.memory_space<vmem>>, vector<1x64x12xbf16>
    %341 = vector.shape_cast %340 : vector<1x64x12xbf16> to vector<64x12xbf16>
    %cst_122 = arith.constant dense<0.000000e+00> : vector<6x12xf32>
    %342 = tpu.matmul %339, %341, %cst_122 {dimension_numbers = #tpu.dot_dimension_numbers<[1], [0], [0], [1], [0, 0, 1, 1], [], []>} : vector<6x64xbf16>, vector<64x12xbf16>, vector<6x12xf32> -> vector<6x12xf32>
    %343 = arith.addf %336, %342 : vector<6x12xf32>
    %344 = vector.extract_strided_slice %314 {offsets = [0, 4, 0], sizes = [6, 1, 64], strides = [1, 1, 1]} : vector<6x8x64xf32> to vector<6x1x64xf32>
    %345 = vector.shape_cast %344 : vector<6x1x64xf32> to vector<6x64xf32>
    %346 = arith.truncf %345 : vector<6x64xf32> to vector<6x64xbf16>
    %c4 = arith.constant 4 : index
    %c0_123 = arith.constant 0 : index
    %c0_124 = arith.constant 0 : index
    %347 = vector.load %arg11[%c4, %c0_123, %c0_124] : memref<8x64x12xbf16, #tpu.memory_space<vmem>>, vector<1x64x12xbf16>
    %348 = vector.shape_cast %347 : vector<1x64x12xbf16> to vector<64x12xbf16>
    %cst_125 = arith.constant dense<0.000000e+00> : vector<6x12xf32>
    %349 = tpu.matmul %346, %348, %cst_125 {dimension_numbers = #tpu.dot_dimension_numbers<[1], [0], [0], [1], [0, 0, 1, 1], [], []>} : vector<6x64xbf16>, vector<64x12xbf16>, vector<6x12xf32> -> vector<6x12xf32>
    %350 = arith.addf %343, %349 : vector<6x12xf32>
    %351 = vector.extract_strided_slice %314 {offsets = [0, 5, 0], sizes = [6, 1, 64], strides = [1, 1, 1]} : vector<6x8x64xf32> to vector<6x1x64xf32>
    %352 = vector.shape_cast %351 : vector<6x1x64xf32> to vector<6x64xf32>
    %353 = arith.truncf %352 : vector<6x64xf32> to vector<6x64xbf16>
    %c5 = arith.constant 5 : index
    %c0_126 = arith.constant 0 : index
    %c0_127 = arith.constant 0 : index
    %354 = vector.load %arg11[%c5, %c0_126, %c0_127] : memref<8x64x12xbf16, #tpu.memory_space<vmem>>, vector<1x64x12xbf16>
    %355 = vector.shape_cast %354 : vector<1x64x12xbf16> to vector<64x12xbf16>
    %cst_128 = arith.constant dense<0.000000e+00> : vector<6x12xf32>
    %356 = tpu.matmul %353, %355, %cst_128 {dimension_numbers = #tpu.dot_dimension_numbers<[1], [0], [0], [1], [0, 0, 1, 1], [], []>} : vector<6x64xbf16>, vector<64x12xbf16>, vector<6x12xf32> -> vector<6x12xf32>
    %357 = arith.addf %350, %356 : vector<6x12xf32>
    %358 = vector.extract_strided_slice %314 {offsets = [0, 6, 0], sizes = [6, 1, 64], strides = [1, 1, 1]} : vector<6x8x64xf32> to vector<6x1x64xf32>
    %359 = vector.shape_cast %358 : vector<6x1x64xf32> to vector<6x64xf32>
    %360 = arith.truncf %359 : vector<6x64xf32> to vector<6x64xbf16>
    %c6 = arith.constant 6 : index
    %c0_129 = arith.constant 0 : index
    %c0_130 = arith.constant 0 : index
    %361 = vector.load %arg11[%c6, %c0_129, %c0_130] : memref<8x64x12xbf16, #tpu.memory_space<vmem>>, vector<1x64x12xbf16>
    %362 = vector.shape_cast %361 : vector<1x64x12xbf16> to vector<64x12xbf16>
    %cst_131 = arith.constant dense<0.000000e+00> : vector<6x12xf32>
    %363 = tpu.matmul %360, %362, %cst_131 {dimension_numbers = #tpu.dot_dimension_numbers<[1], [0], [0], [1], [0, 0, 1, 1], [], []>} : vector<6x64xbf16>, vector<64x12xbf16>, vector<6x12xf32> -> vector<6x12xf32>
    %364 = arith.addf %357, %363 : vector<6x12xf32>
    %365 = vector.extract_strided_slice %314 {offsets = [0, 7, 0], sizes = [6, 1, 64], strides = [1, 1, 1]} : vector<6x8x64xf32> to vector<6x1x64xf32>
    %366 = vector.shape_cast %365 : vector<6x1x64xf32> to vector<6x64xf32>
    %367 = arith.truncf %366 : vector<6x64xf32> to vector<6x64xbf16>
    %c7 = arith.constant 7 : index
    %c0_132 = arith.constant 0 : index
    %c0_133 = arith.constant 0 : index
    %368 = vector.load %arg11[%c7, %c0_132, %c0_133] : memref<8x64x12xbf16, #tpu.memory_space<vmem>>, vector<1x64x12xbf16>
    %369 = vector.shape_cast %368 : vector<1x64x12xbf16> to vector<64x12xbf16>
    %cst_134 = arith.constant dense<0.000000e+00> : vector<6x12xf32>
    %370 = tpu.matmul %367, %369, %cst_134 {dimension_numbers = #tpu.dot_dimension_numbers<[1], [0], [0], [1], [0, 0, 1, 1], [], []>} : vector<6x64xbf16>, vector<64x12xbf16>, vector<6x12xf32> -> vector<6x12xf32>
    %371 = arith.addf %364, %370 : vector<6x12xf32>
    %c0_135 = arith.constant 0 : index
    %c0_136 = arith.constant 0 : index
    %372 = vector.load %arg12[%c0_135, %c0_136] : memref<1x12xf32, #tpu.memory_space<vmem>>, vector<1x12xf32>
    %373 = vector.broadcast %372 : vector<1x12xf32> to vector<6x12xf32>
    %374 = arith.addf %371, %373 : vector<6x12xf32>
    %c0_137 = arith.constant 0 : index
    %c0_138 = arith.constant 0 : index
    %375 = vector.load %arg13[%c0_137, %c0_138] : memref<6x12xf32, #tpu.memory_space<vmem>>, vector<6x12xf32>
    tpu.vector_store %arg13[%c0_137, %c0_138], %374 {strides = array<i32>} : memref<6x12xf32, #tpu.memory_space<vmem>>, vector<6x12xf32>,
    return
  }
  func.func @transform_0(%arg0: i32) -> (i32, i32) {
    %c0_i32 = arith.constant 0 : i32
    %c0_i32_0 = arith.constant 0 : i32
    %c0_i32_1 = arith.constant 0 : i32
    return %c0_i32, %c0_i32_0 : i32, i32
  }
  func.func @transform_1(%arg0: i32) -> (i32, i32) {
    %c0_i32 = arith.constant 0 : i32
    %c0_i32_0 = arith.constant 0 : i32
    %c0_i32_1 = arith.constant 0 : i32
    return %c0_i32, %c0_i32_0 : i32, i32
  }
  func.func @transform_2(%arg0: i32) -> (i32, i32) {
    %c0_i32 = arith.constant 0 : i32
    %c0_i32_0 = arith.constant 0 : i32
    %c0_i32_1 = arith.constant 0 : i32
    return %c0_i32, %c0_i32_0 : i32, i32
  }
  func.func @transform_3(%arg0: i32) -> (i32, i32, i32) {
    %c0_i32 = arith.constant 0 : i32
    %c0_i32_0 = arith.constant 0 : i32
    %c0_i32_1 = arith.constant 0 : i32
    %c0_i32_2 = arith.constant 0 : i32
    return %c0_i32, %c0_i32_0, %c0_i32_1 : i32, i32, i32
  }
  func.func @transform_4(%arg0: i32) -> (i32, i32, i32) {
    %c0_i32 = arith.constant 0 : i32
    %c0_i32_0 = arith.constant 0 : i32
    %c0_i32_1 = arith.constant 0 : i32
    %c0_i32_2 = arith.constant 0 : i32
    return %c0_i32, %c0_i32_0, %c0_i32_1 : i32, i32, i32
  }
  func.func @transform_5(%arg0: i32) -> (i32, i32, i32) {
    %c0_i32 = arith.constant 0 : i32
    %c0_i32_0 = arith.constant 0 : i32
    %c0_i32_1 = arith.constant 0 : i32
    %c0_i32_2 = arith.constant 0 : i32
    return %c0_i32, %c0_i32_0, %c0_i32_1 : i32, i32, i32
  }
  func.func @transform_6(%arg0: i32) -> (i32, i32, i32) {
    %c0_i32 = arith.constant 0 : i32
    %c0_i32_0 = arith.constant 0 : i32
    %c0_i32_1 = arith.constant 0 : i32
    %c0_i32_2 = arith.constant 0 : i32
    return %c0_i32, %c0_i32_0, %c0_i32_1 : i32, i32, i32
  }
  func.func @transform_7(%arg0: i32) -> (i32, i32, i32) {
    %c0_i32 = arith.constant 0 : i32
    %c0_i32_0 = arith.constant 0 : i32
    %c0_i32_1 = arith.constant 0 : i32
    %c0_i32_2 = arith.constant 0 : i32
    return %c0_i32, %c0_i32_0, %c0_i32_1 : i32, i32, i32
  }
  func.func @transform_8(%arg0: i32) -> (i32, i32, i32) {
    %c0_i32 = arith.constant 0 : i32
    %c0_i32_0 = arith.constant 0 : i32
    %c0_i32_1 = arith.constant 0 : i32
    %c0_i32_2 = arith.constant 0 : i32
    return %c0_i32, %c0_i32_0, %c0_i32_1 : i32, i32, i32
  }
  func.func @transform_9(%arg0: i32) -> (i32, i32, i32) {
    %c0_i32 = arith.constant 0 : i32
    %c0_i32_0 = arith.constant 0 : i32
    %c0_i32_1 = arith.constant 0 : i32
    %c0_i32_2 = arith.constant 0 : i32
    return %c0_i32, %c0_i32_0, %c0_i32_1 : i32, i32, i32
  }
  func.func @transform_10(%arg0: i32) -> (i32, i32, i32) {
    %c0_i32 = arith.constant 0 : i32
    %c0_i32_0 = arith.constant 0 : i32
    %c0_i32_1 = arith.constant 0 : i32
    %c0_i32_2 = arith.constant 0 : i32
    return %c0_i32, %c0_i32_0, %c0_i32_1 : i32, i32, i32
  }
  func.func @transform_11(%arg0: i32) -> (i32, i32) {
    %c0_i32 = arith.constant 0 : i32
    %c0_i32_0 = arith.constant 0 : i32
    %c0_i32_1 = arith.constant 0 : i32
    return %c0_i32, %c0_i32_0 : i32, i32
  }
  func.func @transform_12(%arg0: i32) -> (i32, i32) {
    %c0_i32 = arith.constant 0 : i32
    %c0_i32_0 = arith.constant 0 : i32
    %c0_i32_1 = arith.constant 0 : i32
    return %c0_i32, %c0_i32_0 : i32, i32
  }
}

</mosaic_0001>

<llo_original>
// kernel: tpu_custom_call.1
$region0: #{tpu_custom_call.1}
  #allocation0 [shape = 'u32[]', space=smem, size = 0x4, offset = 0x4, fixed_abs, tag = 'smem constant byte address 0x4 - core index']
  #allocation1 [shape = 'u32[144,128]{1,0:T(1,128)}', space=vmem, size = 0x12000, scoped, tag = 'internal scratch']
  %s0 = inlined_call_operand.vmem [shape: f32[48,16], index: 0, kind: input, shape index: {}]
  %s1 = inlined_call_operand.vmem [shape: bf16[16,64], index: 1, kind: input, shape index: {}]
  %s2 = inlined_call_operand.vmem [shape: f32[8,64], index: 2, kind: input, shape index: {}]
  %s3 = inlined_call_operand.vmem [shape: bf16[2,64,192], index: 3, kind: input, shape index: {}]
  %s4 = inlined_call_operand.vmem [shape: f32[2,1,192], index: 4, kind: input, shape index: {}]
  %s5 = inlined_call_operand.vmem [shape: bf16[2,64,64], index: 5, kind: input, shape index: {}]
  %s6 = inlined_call_operand.vmem [shape: bf16[2,64,128], index: 6, kind: input, shape index: {}]
  %s7 = inlined_call_operand.vmem [shape: f32[2,1,128], index: 7, kind: input, shape index: {}]
  %s8 = inlined_call_operand.vmem [shape: bf16[2,128,64], index: 8, kind: input, shape index: {}]
  %s9 = inlined_call_operand.vmem [shape: f32[2,6,64], index: 9, kind: input, shape index: {}]
  %s10 = inlined_call_operand.vmem [shape: bf16[8,64,12], index: 10, kind: input, shape index: {}]
  %s11 = inlined_call_operand.vmem [shape: f32[1,12], index: 11, kind: input, shape index: {}]
  %s12 = inlined_call_operand.hbm [shape: f32[6,12], index: 12, kind: output, shape index: {}]
  %s13 = sld [smem:[#allocation0]]
  $region58: #{tpu_custom_call.1} parent=0
    _
  %s15 = ssub.s32 1, %s13
  %s16 = scalar_select 0, %s15, %s13
  $region1: #{tpu_custom_call.1} parent=0
    #allocation2 [shape = 'u8[4096]{0}', space=vmem, size = 0x1000, scoped, tag = 'output window, operand 0, single buffered']
    #allocation3 [shape = 's32[1]{0}', space=sflag, size = 0x4, scoped, tag = 'scoped memory for tpu_custom_call.1']
    %17 = vsyncpa [#allocation3], 0
    // Predicated region
    $region2: #{tpu_custom_call.1} parent=1 // pred_check
      _
    $region3: #{tpu_custom_call.1} parent=1 // pred_check_branch
      %19 = sbr.rel (0) target = $region5
    $region4: #{tpu_custom_call.1} parent=1 // pred_region
      _
    $region5: #{tpu_custom_call.1} parent=1 // pred_fallthru
      _
    // Predicated region
    $region6: #{tpu_custom_call.1} parent=1 // pred_check
      _
    $region7: #{tpu_custom_call.1} parent=1 // pred_check_branch
      %21 = sbr.rel (0) target = $region9
    $region8: #{tpu_custom_call.1} parent=1 // pred_region
      _
    $region9: #{tpu_custom_call.1} parent=1 // pred_fallthru
      _
    // Predicated region
    $region10: #{tpu_custom_call.1} parent=1 // pred_check
      _
    $region11: #{tpu_custom_call.1} parent=1 // pred_check_branch
      %23 = sbr.rel (0) target = $region13
    $region12: #{tpu_custom_call.1} parent=1 // pred_region
      _
    $region13: #{tpu_custom_call.1} parent=1 // pred_fallthru
      _
    // Predicated region
    $region14: #{tpu_custom_call.1} parent=1 // pred_check
      _
    $region15: #{tpu_custom_call.1} parent=1 // pred_check_branch
      %25 = sbr.rel (0) target = $region17
    $region16: #{tpu_custom_call.1} parent=1 // pred_region
      _
    $region17: #{tpu_custom_call.1} parent=1 // pred_fallthru
      _
    // Predicated region
    $region18: #{tpu_custom_call.1} parent=1 // pred_check
      _
    $region19: #{tpu_custom_call.1} parent=1 // pred_check_branch
      %27 = sbr.rel (0) target = $region21
    $region20: #{tpu_custom_call.1} parent=1 // pred_region
      _
    $region21: #{tpu_custom_call.1} parent=1 // pred_fallthru
      _
    // Predicated region
    $region22: #{tpu_custom_call.1} parent=1 // pred_check
      _
    $region23: #{tpu_custom_call.1} parent=1 // pred_check_branch
      %29 = sbr.rel (0) target = $region25
    $region24: #{tpu_custom_call.1} parent=1 // pred_region
      _
    $region25: #{tpu_custom_call.1} parent=1 // pred_fallthru
      _
    // Predicated region
    $region26: #{tpu_custom_call.1} parent=1 // pred_check
      _
    $region27: #{tpu_custom_call.1} parent=1 // pred_check_branch
      %31 = sbr.rel (0) target = $region29
    $region28: #{tpu_custom_call.1} parent=1 // pred_region
      _
    $region29: #{tpu_custom_call.1} parent=1 // pred_fallthru
      _
    // Predicated region
    $region30: #{tpu_custom_call.1} parent=1 // pred_check
      _
    $region31: #{tpu_custom_call.1} parent=1 // pred_check_branch
      %33 = sbr.rel (0) target = $region33
    $region32: #{tpu_custom_call.1} parent=1 // pred_region
      _
    $region33: #{tpu_custom_call.1} parent=1 // pred_fallthru
      _
    // Predicated region
    $region34: #{tpu_custom_call.1} parent=1 // pred_check
      _
    $region35: #{tpu_custom_call.1} parent=1 // pred_check_branch
      %35 = sbr.rel (0) target = $region37
    $region36: #{tpu_custom_call.1} parent=1 // pred_region
      _
    $region37: #{tpu_custom_call.1} parent=1 // pred_fallthru
      _
    // Predicated region
    $region38: #{tpu_custom_call.1} parent=1 // pred_check
      _
    $region39: #{tpu_custom_call.1} parent=1 // pred_check_branch
      %37 = sbr.rel (0) target = $region41
    $region40: #{tpu_custom_call.1} parent=1 // pred_region
      _
    $region41: #{tpu_custom_call.1} parent=1 // pred_fallthru
      _
    // Predicated region
    $region42: #{tpu_custom_call.1} parent=1 // pred_check
      _
    $region43: #{tpu_custom_call.1} parent=1 // pred_check_branch
      %39 = sbr.rel (0) target = $region45
    $region44: #{tpu_custom_call.1} parent=1 // pred_region
      _
    $region45: #{tpu_custom_call.1} parent=1 // pred_fallthru
      _
    // Predicated region
    $region46: #{tpu_custom_call.1} parent=1 // pred_check
      _
    $region47: #{tpu_custom_call.1} parent=1 // pred_check_branch
      %41 = sbr.rel (0) target = $region49
    $region48: #{tpu_custom_call.1} parent=1 // pred_region
      _
    $region49: #{tpu_custom_call.1} parent=1 // pred_fallthru
      _
    %v43 = vld [vmem:[%s0] sm:$0xff]
    %v44 = vld [vmem:[%s0 + $0x8] sm:$0xff]
    %v45 = vld [vmem:[%s0 + $0x10] sm:$0xff]
    %v46 = vld [vmem:[%s0 + $0x18] sm:$0xff]
    %v47 = vld [vmem:[%s0 + $0x20] sm:$0xff]
    %v48 = vld [vmem:[%s0 + $0x28] sm:$0xff]
    %v49 = vpack.c.bf16 %v44, %v43
    %v50 = vpack.c.bf16 %v46, %v45
    %v51 = vpack.c.bf16 %v48, %v47
    %v52 = vld [vmem:[%s1] sm:$0xf]
    %v53 = vld [vmem:[%s1 + $0x4] sm:$0xf]
    %v56 = vunpack.c.l.b16 %v52
    %v57 = vunpack.c.l.b16 %v53
    %v58 = vpack.c.b16 %v57, %v56
    %vm60 = vcmask 130048
    %v62 = vsel %vm60, %v49, 0
    %v65 = vsel %vm60, %v50, 0
    %v68 = vsel %vm60, %v51, 0
    %70 = vmatprep.subr.bf16.mxu0 0
    %71 = vmatpush1.bf16.msra.mxu0 %v58
    %72 = vmatprep.subr.bf16.mxu0 0
    %73 = vmatpush1.bf16.msra.mxu0 0
    %74 = vmatprep.subr.bf16.mxu0 0
    %75 = vmatpush1.bf16.msra.mxu0 0
    %76 = vmatprep.subr.bf16.mxu0 0
    %77 = vmatpush1.bf16.msra.mxu0 0
    %78 = vmatprep.subr.bf16.mxu0 0
    %79 = vmatpush1.bf16.msra.mxu0 0
    %80 = vmatprep.subr.bf16.mxu0 0
    %81 = vmatpush1.bf16.msra.mxu0 0
    %82 = vmatprep.subr.bf16.mxu0 0
    %83 = vmatpush1.bf16.msra.mxu0 0
    %84 = vmatprep.subr.bf16.mxu0 0
    %85 = vmatpush1.bf16.msra.mxu0 0
    %86 = vmatprep.subr.bf16.mxu0 0
    %87 = vmatpush1.bf16.msra.mxu0 0
    %88 = vmatprep.subr.bf16.mxu0 0
    %89 = vmatpush1.bf16.msra.mxu0 0
    %90 = vmatprep.subr.bf16.mxu0 0
    %91 = vmatpush1.bf16.msra.mxu0 0
    %92 = vmatprep.subr.bf16.mxu0 0
    %93 = vmatpush1.bf16.msra.mxu0 0
    %94 = vmatprep.subr.bf16.mxu0 0
    %95 = vmatpush1.bf16.msra.mxu0 0
    %96 = vmatprep.subr.bf16.mxu0 0
    %97 = vmatpush1.bf16.msra.mxu0 0
    %98 = vmatprep.subr.bf16.mxu0 0
    %99 = vmatpush1.bf16.msra.mxu0 0
    %100 = vmatprep.subr.bf16.mxu0 0
    %101 = vmatpush1.bf16.msra.mxu0 0
    %102 = vmatprep.mubr.bf16.mxu0 0
    %103 = vmatmul.mubr.bf16.gmra.mrb[0].mxu0 %v62
    %v104 = vpop.f32.mrb[0].mxu0
    %v105 = vadd.f32 0.0, %v104
    %v106 = vpop.f32.mrb[0].mxu0
    %v107 = vpop.f32.mrb[0].mxu0
    %v108 = vadd.f32 0.0, %v107
    %v109 = vpop.f32.mrb[0].mxu0
    %110 = vmatprep.mubr.bf16.mxu0 0
    %111 = vmatmul.mubr.bf16.gmra.mrb[0].mxu0 %v65
    %v112 = vpop.f32.mrb[0].mxu0
    %v113 = vadd.f32 0.0, %v112
    %v114 = vpop.f32.mrb[0].mxu0
    %v115 = vpop.f32.mrb[0].mxu0
    %v116 = vadd.f32 0.0, %v115
    %v117 = vpop.f32.mrb[0].mxu0
    %118 = vmatprep.mubr.bf16.mxu0 0
    %119 = vmatmul.mubr.bf16.gmra.mrb[0].mxu0 %v68
    %v120 = vpop.f32.mrb[0].mxu0
    %v121 = vadd.f32 0.0, %v120
    %v122 = vpop.f32.mrb[0].mxu0
    %v123 = vpop.f32.mrb[0].mxu0
    %v124 = vadd.f32 0.0, %v123
    %v125 = vpop.f32.mrb[0].mxu0
    %126 = vdwg.mxu0
    %v127 = vld [vmem:[%s2] sm:$0xff]
    %v128 = vadd.f32 %v105, %v127
    %v129 = vadd.f32 %v108, %v127
    %v130 = vadd.f32 %v113, %v127
    %v131 = vadd.f32 %v116, %v127
    %v132 = vadd.f32 %v121, %v127
    %v133 = vadd.f32 %v124, %v127
    %v134 = vld [vmem:[%s9] sm:$0x3f]
    %v135 = vpack.c.bf16 %v129, %v128
    %v136 = vpack.c.bf16 %v131, %v130
    %v137 = vpack.c.bf16 %v133, %v132
    %v138 = vld [vmem:[%s3] sm:$0xff]
    %v139 = vld [vmem:[%s3 + $0x8] sm:$0xff]
    %v140 = vld [vmem:[%s3 + $0x10] sm:$0xff]
    %v141 = vld [vmem:[%s3 + $0x18] sm:$0xff]
    %v142 = vld [vmem:[%s3 + $0x20] sm:$0xff]
    %v143 = vld [vmem:[%s3 + $0x28] sm:$0xff]
    %v144 = vld [vmem:[%s3 + $0x30] sm:$0xff]
    %v145 = vld [vmem:[%s3 + $0x38] sm:$0xff]
    %v146 = vld [vmem:[%s4] sm:$0x3]
    %v148 = vlaneseq
    %v149 = vshrl.u32 %v148, 7
    %v150 = vsub.s32 0, %v149
    %v151 = vrot.slane %v146, %v150
    %v152 = vlaneseq
    %v153 = vshrl.u32 %v152, 7
    %v154 = vsub.s32 1, %v153
    %v155 = vrot.slane %v146, %v154
    %v166 = vunpack.c.l.b16 %v138
    %v167 = vunpack.c.h.b16 %v138
    %v168 = vunpack.c.l.b16 %v139
    %v169 = vunpack.c.h.b16 %v139
    %v170 = vunpack.c.l.b16 %v140
    %v171 = vunpack.c.h.b16 %v140
    %v172 = vunpack.c.l.b16 %v141
    %v173 = vunpack.c.h.b16 %v141
    %v174 = vunpack.c.l.b16 %v142
    %v175 = vunpack.c.h.b16 %v142
    %v176 = vunpack.c.l.b16 %v143
    %v177 = vunpack.c.h.b16 %v143
    %v178 = vunpack.c.l.b16 %v144
    %v179 = vunpack.c.h.b16 %v144
    %v180 = vunpack.c.l.b16 %v145
    %v181 = vunpack.c.h.b16 %v145
    %v182 = vpack.c.b16 %v168, %v166
    %v183 = vpack.c.b16 %v169, %v167
    %v184 = vpack.c.b16 %v172, %v170
    %v185 = vpack.c.b16 %v173, %v171
    %v186 = vpack.c.b16 %v176, %v174
    %v187 = vpack.c.b16 %v177, %v175
    %v188 = vpack.c.b16 %v180, %v178
    %v189 = vpack.c.b16 %v181, %v179
    %vm198 = vcmask 523264
    %v200 = vsel %vm198, %v135, 0
    %v203 = vsel %vm198, %v136, 0
    %v206 = vsel %vm198, %v137, 0
    %208 = vmatprep.subr.bf16.mxu0 %v183
    %209 = vmatpush1.bf16.msra.mxu0 %v182
    %210 = vmatprep.subr.bf16.mxu0 %v185
    %211 = vmatpush1.bf16.msra.mxu0 %v184
    %212 = vmatprep.subr.bf16.mxu0 %v187
    %213 = vmatpush1.bf16.msra.mxu0 %v186
    %214 = vmatprep.subr.bf16.mxu0 %v189
    %215 = vmatpush1.bf16.msra.mxu0 %v188
    %216 = vmatprep.subr.bf16.mxu0 0
    %217 = vmatpush1.bf16.msra.mxu0 0
    %218 = vmatprep.subr.bf16.mxu0 0
    %219 = vmatpush1.bf16.msra.mxu0 0
    %220 = vmatprep.subr.bf16.mxu0 0
    %221 = vmatpush1.bf16.msra.mxu0 0
    %222 = vmatprep.subr.bf16.mxu0 0
    %223 = vmatpush1.bf16.msra.mxu0 0
    %224 = vmatprep.subr.bf16.mxu0 0
    %225 = vmatpush1.bf16.msra.mxu0 0
    %226 = vmatprep.subr.bf16.mxu0 0
    %227 = vmatpush1.bf16.msra.mxu0 0
    %228 = vmatprep.subr.bf16.mxu0 0
    %229 = vmatpush1.bf16.msra.mxu0 0
    %230 = vmatprep.subr.bf16.mxu0 0
    %231 = vmatpush1.bf16.msra.mxu0 0
    %232 = vmatprep.subr.bf16.mxu0 0
    %233 = vmatpush1.bf16.msra.mxu0 0
    %234 = vmatprep.subr.bf16.mxu0 0
    %235 = vmatpush1.bf16.msra.mxu0 0
    %236 = vmatprep.subr.bf16.mxu0 0
    %237 = vmatpush1.bf16.msra.mxu0 0
    %238 = vmatprep.subr.bf16.mxu0 0
    %239 = vmatpush1.bf16.msra.mxu0 0
    %240 = vmatprep.mubr.bf16.mxu0 0
    %241 = vmatmul.mubr.bf16.gmra.mrb[0].mxu0 %v200
    %v242 = vpop.f32.mrb[0].mxu0
    %v243 = vadd.f32 %v151, %v242
    %v244 = vpop.f32.mrb[0].mxu0
    %v245 = vadd.f32 %v155, %v244
    %v246 = vpop.f32.mrb[0].mxu0
    %v247 = vadd.f32 %v151, %v246
    %v248 = vpop.f32.mrb[0].mxu0
    %v249 = vadd.f32 %v155, %v248
    %250 = vmatprep.mubr.bf16.mxu0 0
    %251 = vmatmul.mubr.bf16.gmra.mrb[0].mxu0 %v203
    %v252 = vpop.f32.mrb[0].mxu0
    %v253 = vadd.f32 %v151, %v252
    %v254 = vpop.f32.mrb[0].mxu0
    %v255 = vadd.f32 %v155, %v254
    %v256 = vpop.f32.mrb[0].mxu0
    %v257 = vadd.f32 %v151, %v256
    %v258 = vpop.f32.mrb[0].mxu0
    %v259 = vadd.f32 %v155, %v258
    %260 = vmatprep.mubr.bf16.mxu0 0
    %261 = vmatmul.mubr.bf16.gmra.mrb[0].mxu0 %v206
    %v262 = vpop.f32.mrb[0].mxu0
    %v263 = vadd.f32 %v151, %v262
    %v264 = vpop.f32.mrb[0].mxu0
    %v265 = vadd.f32 %v155, %v264
    %v266 = vpop.f32.mrb[0].mxu0
    %v267 = vadd.f32 %v151, %v266
    %v268 = vpop.f32.mrb[0].mxu0
    %v269 = vadd.f32 %v155, %v268
    %270 = vdwg.mxu0
    %272 = vrot.lane.b32.xlu0 %v243, 64
    %v273 = vpop.permute.xlu0 %272
    %v274 = vsel %vm60, %v243, 0
    %v276 = vsel %vm60, %v273, 0
    %278 = vmatprep.subr.mxu0 0.0
    %279 = vmatpush1.xpose.msra.mxu0 %v276
    %280 = vmatprep.subr.mxu0 0.0
    %281 = vmatpush1.xpose.msra.mxu0 0.0
    %282 = vmatprep.subr.mxu0 0.0
    %283 = vmatpush1.xpose.msra.mxu0 0.0
    %284 = vmatprep.subr.mxu0 0.0
    %285 = vmatpush1.xpose.msra.mxu0 0.0
    %286 = vmatprep.subr.mxu0 0.0
    %287 = vmatpush1.xpose.msra.mxu0 0.0
    %288 = vmatprep.subr.mxu0 0.0
    %289 = vmatpush1.xpose.msra.mxu0 0.0
    %290 = vmatprep.subr.mxu0 0.0
    %291 = vmatpush1.xpose.msra.mxu0 0.0
    %292 = vmatprep.subr.mxu0 0.0
    %293 = vmatpush1.xpose.msra.mxu0 0.0
    %294 = vmatprep.subr.mxu0 0.0
    %295 = vmatpush1.xpose.msra.mxu0 0.0
    %296 = vmatprep.subr.mxu0 0.0
    %297 = vmatpush1.xpose.msra.mxu0 0.0
    %298 = vmatprep.subr.mxu0 0.0
    %299 = vmatpush1.xpose.msra.mxu0 0.0
    %300 = vmatprep.subr.mxu0 0.0
    %301 = vmatpush1.xpose.msra.mxu0 0.0
    %302 = vmatprep.subr.mxu0 0.0
    %303 = vmatpush1.xpose.msra.mxu0 0.0
    %304 = vmatprep.subr.mxu0 0.0
    %305 = vmatpush1.xpose.msra.mxu0 0.0
    %306 = vmatprep.subr.mxu0 0.0
    %307 = vmatpush1.xpose.msra.mxu0 0.0
    %308 = vmatprep.subr.mxu0 0.0
    %309 = vmatpush1.xpose.msra.mxu0 0.0
    %310 = vmatprep.subr.mxu0 0.0
    %311 = vmatpush1.xpose.msra.mxu0 0.0
    %312 = vmatprep.subr.mxu0 0.0
    %313 = vmatpush1.xpose.msra.mxu0 0.0
    %314 = vmatprep.subr.mxu0 0.0
    %315 = vmatpush1.xpose.msra.mxu0 0.0
    %316 = vmatprep.subr.mxu0 0.0
    %317 = vmatpush1.xpose.msra.mxu0 0.0
    %318 = vmatprep.subr.mxu0 0.0
    %319 = vmatpush1.xpose.msra.mxu0 0.0
    %320 = vmatprep.subr.mxu0 0.0
    %321 = vmatpush1.xpose.msra.mxu0 0.0
    %322 = vmatprep.subr.mxu0 0.0
    %323 = vmatpush1.xpose.msra.mxu0 0.0
    %324 = vmatprep.subr.mxu0 0.0
    %325 = vmatpush1.xpose.msra.mxu0 0.0
    %326 = vmatprep.subr.mxu0 0.0
    %327 = vmatpush1.xpose.msra.mxu0 0.0
    %328 = vmatprep.subr.mxu0 0.0
    %329 = vmatpush1.xpose.msra.mxu0 0.0
    %330 = vmatprep.subr.mxu0 0.0
    %331 = vmatpush1.xpose.msra.mxu0 0.0
    %332 = vmatprep.subr.mxu0 0.0
    %333 = vmatpush1.xpose.msra.mxu0 0.0
    %334 = vmatprep.subr.mxu0 0.0
    %335 = vmatpush1.xpose.msra.mxu0 0.0
    %336 = vmatprep.subr.mxu0 0.0
    %337 = vmatpush1.xpose.msra.mxu0 0.0
    %338 = vmatprep.subr.mxu0 0.0
    %339 = vmatpush1.xpose.msra.mxu0 0.0
    %340 = vmatprep.subr.mxu0 0.0
    %341 = vmatpush1.xpose.msra.mxu0 0.0
    %342 = vmatprep.mubr.f32.mxu0 0.0
    %343 = vmatmul.mubr.f32.gmra.mrb[0].mxu0 %v274
    %v344 = vpop.f32.mrb[0].mxu0
    %v345 = vadd.f32 0.0, %v344
    %v346 = vpop.f32.mrb[0].mxu0
    %347 = vdwg.mxu0
    %349 = vrot.lane.b32.xlu0 %v247, 64
    %v350 = vpop.permute.xlu0 %349
    %v351 = vsel %vm60, %v247, 0
    %v353 = vsel %vm60, %v350, 0
    %355 = vmatprep.subr.mxu0 0.0
    %356 = vmatpush1.xpose.msra.mxu0 %v353
    %357 = vmatprep.subr.mxu0 0.0
    %358 = vmatpush1.xpose.msra.mxu0 0.0
    %359 = vmatprep.subr.mxu0 0.0
    %360 = vmatpush1.xpose.msra.mxu0 0.0
    %361 = vmatprep.subr.mxu0 0.0
    %362 = vmatpush1.xpose.msra.mxu0 0.0
    %363 = vmatprep.subr.mxu0 0.0
    %364 = vmatpush1.xpose.msra.mxu0 0.0
    %365 = vmatprep.subr.mxu0 0.0
    %366 = vmatpush1.xpose.msra.mxu0 0.0
    %367 = vmatprep.subr.mxu0 0.0
    %368 = vmatpush1.xpose.msra.mxu0 0.0
    %369 = vmatprep.subr.mxu0 0.0
    %370 = vmatpush1.xpose.msra.mxu0 0.0
    %371 = vmatprep.subr.mxu0 0.0
    %372 = vmatpush1.xpose.msra.mxu0 0.0
    %373 = vmatprep.subr.mxu0 0.0
    %374 = vmatpush1.xpose.msra.mxu0 0.0
    %375 = vmatprep.subr.mxu0 0.0
    %376 = vmatpush1.xpose.msra.mxu0 0.0
    %377 = vmatprep.subr.mxu0 0.0
    %378 = vmatpush1.xpose.msra.mxu0 0.0
    %379 = vmatprep.subr.mxu0 0.0
    %380 = vmatpush1.xpose.msra.mxu0 0.0
    %381 = vmatprep.subr.mxu0 0.0
    %382 = vmatpush1.xpose.msra.mxu0 0.0
    %383 = vmatprep.subr.mxu0 0.0
    %384 = vmatpush1.xpose.msra.mxu0 0.0
    %385 = vmatprep.subr.mxu0 0.0
    %386 = vmatpush1.xpose.msra.mxu0 0.0
    %387 = vmatprep.subr.mxu0 0.0
    %388 = vmatpush1.xpose.msra.mxu0 0.0
    %389 = vmatprep.subr.mxu0 0.0
    %390 = vmatpush1.xpose.msra.mxu0 0.0
    %391 = vmatprep.subr.mxu0 0.0
    %392 = vmatpush1.xpose.msra.mxu0 0.0
    %393 = vmatprep.subr.mxu0 0.0
    %394 = vmatpush1.xpose.msra.mxu0 0.0
    %395 = vmatprep.subr.mxu0 0.0
    %396 = vmatpush1.xpose.msra.mxu0 0.0
    %397 = vmatprep.subr.mxu0 0.0
    %398 = vmatpush1.xpose.msra.mxu0 0.0
    %399 = vmatprep.subr.mxu0 0.0
    %400 = vmatpush1.xpose.msra.mxu0 0.0
    %401 = vmatprep.subr.mxu0 0.0
    %402 = vmatpush1.xpose.msra.mxu0 0.0
    %403 = vmatprep.subr.mxu0 0.0
    %404 = vmatpush1.xpose.msra.mxu0 0.0
    %405 = vmatprep.subr.mxu0 0.0
    %406 = vmatpush1.xpose.msra.mxu0 0.0
    %407 = vmatprep.subr.mxu0 0.0
    %408 = vmatpush1.xpose.msra.mxu0 0.0
    %409 = vmatprep.subr.mxu0 0.0
    %410 = vmatpush1.xpose.msra.mxu0 0.0
    %411 = vmatprep.subr.mxu0 0.0
    %412 = vmatpush1.xpose.msra.mxu0 0.0
    %413 = vmatprep.subr.mxu0 0.0
    %414 = vmatpush1.xpose.msra.mxu0 0.0
    %415 = vmatprep.subr.mxu0 0.0
    %416 = vmatpush1.xpose.msra.mxu0 0.0
    %417 = vmatprep.subr.mxu0 0.0
    %418 = vmatpush1.xpose.msra.mxu0 0.0
    %419 = vmatprep.mubr.f32.mxu0 0.0
    %420 = vmatmul.mubr.f32.gmra.mrb[0].mxu0 %v351
    %v421 = vpop.f32.mrb[0].mxu0
    %v422 = vadd.f32 0.0, %v421
    %v423 = vpop.f32.mrb[0].mxu0
    %424 = vdwg.mxu0
    %426 = vrot.lane.b32.xlu0 %v253, 64
    %v427 = vpop.permute.xlu0 %426
    %v428 = vsel %vm60, %v253, 0
    %v430 = vsel %vm60, %v427, 0
    %432 = vmatprep.subr.mxu0 0.0
    %433 = vmatpush1.xpose.msra.mxu0 %v430
    %434 = vmatprep.subr.mxu0 0.0
    %435 = vmatpush1.xpose.msra.mxu0 0.0
    %436 = vmatprep.subr.mxu0 0.0
    %437 = vmatpush1.xpose.msra.mxu0 0.0
    %438 = vmatprep.subr.mxu0 0.0
    %439 = vmatpush1.xpose.msra.mxu0 0.0
    %440 = vmatprep.subr.mxu0 0.0
    %441 = vmatpush1.xpose.msra.mxu0 0.0
    %442 = vmatprep.subr.mxu0 0.0
    %443 = vmatpush1.xpose.msra.mxu0 0.0
    %444 = vmatprep.subr.mxu0 0.0
    %445 = vmatpush1.xpose.msra.mxu0 0.0
    %446 = vmatprep.subr.mxu0 0.0
    %447 = vmatpush1.xpose.msra.mxu0 0.0
    %448 = vmatprep.subr.mxu0 0.0
    %449 = vmatpush1.xpose.msra.mxu0 0.0
    %450 = vmatprep.subr.mxu0 0.0
    %451 = vmatpush1.xpose.msra.mxu0 0.0
    %452 = vmatprep.subr.mxu0 0.0
    %453 = vmatpush1.xpose.msra.mxu0 0.0
    %454 = vmatprep.subr.mxu0 0.0
    %455 = vmatpush1.xpose.msra.mxu0 0.0
    %456 = vmatprep.subr.mxu0 0.0
    %457 = vmatpush1.xpose.msra.mxu0 0.0
    %458 = vmatprep.subr.mxu0 0.0
    %459 = vmatpush1.xpose.msra.mxu0 0.0
    %460 = vmatprep.subr.mxu0 0.0
    %461 = vmatpush1.xpose.msra.mxu0 0.0
    %462 = vmatprep.subr.mxu0 0.0
    %463 = vmatpush1.xpose.msra.mxu0 0.0
    %464 = vmatprep.subr.mxu0 0.0
    %465 = vmatpush1.xpose.msra.mxu0 0.0
    %466 = vmatprep.subr.mxu0 0.0
    %467 = vmatpush1.xpose.msra.mxu0 0.0
    %468 = vmatprep.subr.mxu0 0.0
    %469 = vmatpush1.xpose.msra.mxu0 0.0
    %470 = vmatprep.subr.mxu0 0.0
    %471 = vmatpush1.xpose.msra.mxu0 0.0
    %472 = vmatprep.subr.mxu0 0.0
    %473 = vmatpush1.xpose.msra.mxu0 0.0
    %474 = vmatprep.subr.mxu0 0.0
    %475 = vmatpush1.xpose.msra.mxu0 0.0
    %476 = vmatprep.subr.mxu0 0.0
    %477 = vmatpush1.xpose.msra.mxu0 0.0
    %478 = vmatprep.subr.mxu0 0.0
    %479 = vmatpush1.xpose.msra.mxu0 0.0
    %480 = vmatprep.subr.mxu0 0.0
    %481 = vmatpush1.xpose.msra.mxu0 0.0
    %482 = vmatprep.subr.mxu0 0.0
    %483 = vmatpush1.xpose.msra.mxu0 0.0
    %484 = vmatprep.subr.mxu0 0.0
    %485 = vmatpush1.xpose.msra.mxu0 0.0
    %486 = vmatprep.subr.mxu0 0.0
    %487 = vmatpush1.xpose.msra.mxu0 0.0
    %488 = vmatprep.subr.mxu0 0.0
    %489 = vmatpush1.xpose.msra.mxu0 0.0
    %490 = vmatprep.subr.mxu0 0.0
    %491 = vmatpush1.xpose.msra.mxu0 0.0
    %492 = vmatprep.subr.mxu0 0.0
    %493 = vmatpush1.xpose.msra.mxu0 0.0
    %494 = vmatprep.subr.mxu0 0.0
    %495 = vmatpush1.xpose.msra.mxu0 0.0
    %496 = vmatprep.mubr.f32.mxu0 0.0
    %497 = vmatmul.mubr.f32.gmra.mrb[0].mxu0 %v428
    %v498 = vpop.f32.mrb[0].mxu0
    %v499 = vadd.f32 0.0, %v498
    %v500 = vpop.f32.mrb[0].mxu0
    %501 = vdwg.mxu0
    %503 = vrot.lane.b32.xlu0 %v257, 64
    %v504 = vpop.permute.xlu0 %503
    %v505 = vsel %vm60, %v257, 0
    %v507 = vsel %vm60, %v504, 0
    %509 = vmatprep.subr.mxu0 0.0
    %510 = vmatpush1.xpose.msra.mxu0 %v507
    %511 = vmatprep.subr.mxu0 0.0
    %512 = vmatpush1.xpose.msra.mxu0 0.0
    %513 = vmatprep.subr.mxu0 0.0
    %514 = vmatpush1.xpose.msra.mxu0 0.0
    %515 = vmatprep.subr.mxu0 0.0
    %516 = vmatpush1.xpose.msra.mxu0 0.0
    %517 = vmatprep.subr.mxu0 0.0
    %518 = vmatpush1.xpose.msra.mxu0 0.0
    %519 = vmatprep.subr.mxu0 0.0
    %520 = vmatpush1.xpose.msra.mxu0 0.0
    %521 = vmatprep.subr.mxu0 0.0
    %522 = vmatpush1.xpose.msra.mxu0 0.0
    %523 = vmatprep.subr.mxu0 0.0
    %524 = vmatpush1.xpose.msra.mxu0 0.0
    %525 = vmatprep.subr.mxu0 0.0
    %526 = vmatpush1.xpose.msra.mxu0 0.0
    %527 = vmatprep.subr.mxu0 0.0
    %528 = vmatpush1.xpose.msra.mxu0 0.0
    %529 = vmatprep.subr.mxu0 0.0
    %530 = vmatpush1.xpose.msra.mxu0 0.0
    %531 = vmatprep.subr.mxu0 0.0
    %532 = vmatpush1.xpose.msra.mxu0 0.0
    %533 = vmatprep.subr.mxu0 0.0
    %534 = vmatpush1.xpose.msra.mxu0 0.0
    %535 = vmatprep.subr.mxu0 0.0
    %536 = vmatpush1.xpose.msra.mxu0 0.0
    %537 = vmatprep.subr.mxu0 0.0
    %538 = vmatpush1.xpose.msra.mxu0 0.0
    %539 = vmatprep.subr.mxu0 0.0
    %540 = vmatpush1.xpose.msra.mxu0 0.0
    %541 = vmatprep.subr.mxu0 0.0
    %542 = vmatpush1.xpose.msra.mxu0 0.0
    %543 = vmatprep.subr.mxu0 0.0
    %544 = vmatpush1.xpose.msra.mxu0 0.0
    %545 = vmatprep.subr.mxu0 0.0
    %546 = vmatpush1.xpose.msra.mxu0 0.0
    %547 = vmatprep.subr.mxu0 0.0
    %548 = vmatpush1.xpose.msra.mxu0 0.0
    %549 = vmatprep.subr.mxu0 0.0
    %550 = vmatpush1.xpose.msra.mxu0 0.0
    %551 = vmatprep.subr.mxu0 0.0
    %552 = vmatpush1.xpose.msra.mxu0 0.0
    %553 = vmatprep.subr.mxu0 0.0
    %554 = vmatpush1.xpose.msra.mxu0 0.0
    %555 = vmatprep.subr.mxu0 0.0
    %556 = vmatpush1.xpose.msra.mxu0 0.0
    %557 = vmatprep.subr.mxu0 0.0
    %558 = vmatpush1.xpose.msra.mxu0 0.0
    %559 = vmatprep.subr.mxu0 0.0
    %560 = vmatpush1.xpose.msra.mxu0 0.0
    %561 = vmatprep.subr.mxu0 0.0
    %562 = vmatpush1.xpose.msra.mxu0 0.0
    %563 = vmatprep.subr.mxu0 0.0
    %564 = vmatpush1.xpose.msra.mxu0 0.0
    %565 = vmatprep.subr.mxu0 0.0
    %566 = vmatpush1.xpose.msra.mxu0 0.0
    %567 = vmatprep.subr.mxu0 0.0
    %568 = vmatpush1.xpose.msra.mxu0 0.0
    %569 = vmatprep.subr.mxu0 0.0
    %570 = vmatpush1.xpose.msra.mxu0 0.0
    %571 = vmatprep.subr.mxu0 0.0
    %572 = vmatpush1.xpose.msra.mxu0 0.0
    %573 = vmatprep.mubr.f32.mxu0 0.0
    %574 = vmatmul.mubr.f32.gmra.mrb[0].mxu0 %v505
    %v575 = vpop.f32.mrb[0].mxu0
    %v576 = vadd.f32 0.0, %v575
    %v577 = vpop.f32.mrb[0].mxu0
    %578 = vdwg.mxu0
    %580 = vrot.lane.b32.xlu0 %v263, 64
    %v581 = vpop.permute.xlu0 %580
    %v582 = vsel %vm60, %v263, 0
    %v584 = vsel %vm60, %v581, 0
    %586 = vmatprep.subr.mxu0 0.0
    %587 = vmatpush1.xpose.msra.mxu0 %v584
    %588 = vmatprep.subr.mxu0 0.0
    %589 = vmatpush1.xpose.msra.mxu0 0.0
    %590 = vmatprep.subr.mxu0 0.0
    %591 = vmatpush1.xpose.msra.mxu0 0.0
    %592 = vmatprep.subr.mxu0 0.0
    %593 = vmatpush1.xpose.msra.mxu0 0.0
    %594 = vmatprep.subr.mxu0 0.0
    %595 = vmatpush1.xpose.msra.mxu0 0.0
    %596 = vmatprep.subr.mxu0 0.0
    %597 = vmatpush1.xpose.msra.mxu0 0.0
    %598 = vmatprep.subr.mxu0 0.0
    %599 = vmatpush1.xpose.msra.mxu0 0.0
    %600 = vmatprep.subr.mxu0 0.0
    %601 = vmatpush1.xpose.msra.mxu0 0.0
    %602 = vmatprep.subr.mxu0 0.0
    %603 = vmatpush1.xpose.msra.mxu0 0.0
    %604 = vmatprep.subr.mxu0 0.0
    %605 = vmatpush1.xpose.msra.mxu0 0.0
    %606 = vmatprep.subr.mxu0 0.0
    %607 = vmatpush1.xpose.msra.mxu0 0.0
    %608 = vmatprep.subr.mxu0 0.0
    %609 = vmatpush1.xpose.msra.mxu0 0.0
    %610 = vmatprep.subr.mxu0 0.0
    %611 = vmatpush1.xpose.msra.mxu0 0.0
    %612 = vmatprep.subr.mxu0 0.0
    %613 = vmatpush1.xpose.msra.mxu0 0.0
    %614 = vmatprep.subr.mxu0 0.0
    %615 = vmatpush1.xpose.msra.mxu0 0.0
    %616 = vmatprep.subr.mxu0 0.0
    %617 = vmatpush1.xpose.msra.mxu0 0.0
    %618 = vmatprep.subr.mxu0 0.0
    %619 = vmatpush1.xpose.msra.mxu0 0.0
    %620 = vmatprep.subr.mxu0 0.0
    %621 = vmatpush1.xpose.msra.mxu0 0.0
    %622 = vmatprep.subr.mxu0 0.0
    %623 = vmatpush1.xpose.msra.mxu0 0.0
    %624 = vmatprep.subr.mxu0 0.0
    %625 = vmatpush1.xpose.msra.mxu0 0.0
    %626 = vmatprep.subr.mxu0 0.0
    %627 = vmatpush1.xpose.msra.mxu0 0.0
    %628 = vmatprep.subr.mxu0 0.0
    %629 = vmatpush1.xpose.msra.mxu0 0.0
    %630 = vmatprep.subr.mxu0 0.0
    %631 = vmatpush1.xpose.msra.mxu0 0.0
    %632 = vmatprep.subr.mxu0 0.0
    %633 = vmatpush1.xpose.msra.mxu0 0.0
    %634 = vmatprep.subr.mxu0 0.0
    %635 = vmatpush1.xpose.msra.mxu0 0.0
    %636 = vmatprep.subr.mxu0 0.0
    %637 = vmatpush1.xpose.msra.mxu0 0.0
    %638 = vmatprep.subr.mxu0 0.0
    %639 = vmatpush1.xpose.msra.mxu0 0.0
    %640 = vmatprep.subr.mxu0 0.0
    %641 = vmatpush1.xpose.msra.mxu0 0.0
    %642 = vmatprep.subr.mxu0 0.0
    %643 = vmatpush1.xpose.msra.mxu0 0.0
    %644 = vmatprep.subr.mxu0 0.0
    %645 = vmatpush1.xpose.msra.mxu0 0.0
    %646 = vmatprep.subr.mxu0 0.0
    %647 = vmatpush1.xpose.msra.mxu0 0.0
    %648 = vmatprep.subr.mxu0 0.0
    %649 = vmatpush1.xpose.msra.mxu0 0.0
    %650 = vmatprep.mubr.f32.mxu0 0.0
    %651 = vmatmul.mubr.f32.gmra.mrb[0].mxu0 %v582
    %v652 = vpop.f32.mrb[0].mxu0
    %v653 = vadd.f32 0.0, %v652
    %v654 = vpop.f32.mrb[0].mxu0
    %655 = vdwg.mxu0
    %657 = vrot.lane.b32.xlu0 %v267, 64
    %v658 = vpop.permute.xlu0 %657
    %v659 = vsel %vm60, %v267, 0
    %v661 = vsel %vm60, %v658, 0
    %663 = vmatprep.subr.mxu0 0.0
    %664 = vmatpush1.xpose.msra.mxu0 %v661
    %665 = vmatprep.subr.mxu0 0.0
    %666 = vmatpush1.xpose.msra.mxu0 0.0
    %667 = vmatprep.subr.mxu0 0.0
    %668 = vmatpush1.xpose.msra.mxu0 0.0
    %669 = vmatprep.subr.mxu0 0.0
    %670 = vmatpush1.xpose.msra.mxu0 0.0
    %671 = vmatprep.subr.mxu0 0.0
    %672 = vmatpush1.xpose.msra.mxu0 0.0
    %673 = vmatprep.subr.mxu0 0.0
    %674 = vmatpush1.xpose.msra.mxu0 0.0
    %675 = vmatprep.subr.mxu0 0.0
    %676 = vmatpush1.xpose.msra.mxu0 0.0
    %677 = vmatprep.subr.mxu0 0.0
    %678 = vmatpush1.xpose.msra.mxu0 0.0
    %679 = vmatprep.subr.mxu0 0.0
    %680 = vmatpush1.xpose.msra.mxu0 0.0
    %681 = vmatprep.subr.mxu0 0.0
    %682 = vmatpush1.xpose.msra.mxu0 0.0
    %683 = vmatprep.subr.mxu0 0.0
    %684 = vmatpush1.xpose.msra.mxu0 0.0
    %685 = vmatprep.subr.mxu0 0.0
    %686 = vmatpush1.xpose.msra.mxu0 0.0
    %687 = vmatprep.subr.mxu0 0.0
    %688 = vmatpush1.xpose.msra.mxu0 0.0
    %689 = vmatprep.subr.mxu0 0.0
    %690 = vmatpush1.xpose.msra.mxu0 0.0
    %691 = vmatprep.subr.mxu0 0.0
    %692 = vmatpush1.xpose.msra.mxu0 0.0
    %693 = vmatprep.subr.mxu0 0.0
    %694 = vmatpush1.xpose.msra.mxu0 0.0
    %695 = vmatprep.subr.mxu0 0.0
    %696 = vmatpush1.xpose.msra.mxu0 0.0
    %697 = vmatprep.subr.mxu0 0.0
    %698 = vmatpush1.xpose.msra.mxu0 0.0
    %699 = vmatprep.subr.mxu0 0.0
    %700 = vmatpush1.xpose.msra.mxu0 0.0
    %701 = vmatprep.subr.mxu0 0.0
    %702 = vmatpush1.xpose.msra.mxu0 0.0
    %703 = vmatprep.subr.mxu0 0.0
    %704 = vmatpush1.xpose.msra.mxu0 0.0
    %705 = vmatprep.subr.mxu0 0.0
    %706 = vmatpush1.xpose.msra.mxu0 0.0
    %707 = vmatprep.subr.mxu0 0.0
    %708 = vmatpush1.xpose.msra.mxu0 0.0
    %709 = vmatprep.subr.mxu0 0.0
    %710 = vmatpush1.xpose.msra.mxu0 0.0
    %711 = vmatprep.subr.mxu0 0.0
    %712 = vmatpush1.xpose.msra.mxu0 0.0
    %713 = vmatprep.subr.mxu0 0.0
    %714 = vmatpush1.xpose.msra.mxu0 0.0
    %715 = vmatprep.subr.mxu0 0.0
    %716 = vmatpush1.xpose.msra.mxu0 0.0
    %717 = vmatprep.subr.mxu0 0.0
    %718 = vmatpush1.xpose.msra.mxu0 0.0
    %719 = vmatprep.subr.mxu0 0.0
    %720 = vmatpush1.xpose.msra.mxu0 0.0
    %721 = vmatprep.subr.mxu0 0.0
    %722 = vmatpush1.xpose.msra.mxu0 0.0
    %723 = vmatprep.subr.mxu0 0.0
    %724 = vmatpush1.xpose.msra.mxu0 0.0
    %725 = vmatprep.subr.mxu0 0.0
    %726 = vmatpush1.xpose.msra.mxu0 0.0
    %727 = vmatprep.mubr.f32.mxu0 0.0
    %728 = vmatmul.mubr.f32.gmra.mrb[0].mxu0 %v659
    %v729 = vpop.f32.mrb[0].mxu0
    %v730 = vadd.f32 0.0, %v729
    %v731 = vpop.f32.mrb[0].mxu0
    %732 = vdwg.mxu0
    %vm733 = vcmask 64512
    %v734 = vsel %vm733, %v345, -inf
    %735 = vmax.xlane.f32.xlu0 %v734
    %v736 = vpop.xlane.xlu0 %735
    %v737 = vsel %vm733, %v422, -inf
    %738 = vmax.xlane.f32.xlu0 %v737
    %v739 = vpop.xlane.xlu0 %738
    %v740 = vsel %vm733, %v499, -inf
    %741 = vmax.xlane.f32.xlu0 %v740
    %v742 = vpop.xlane.xlu0 %741
    %v743 = vsel %vm733, %v576, -inf
    %744 = vmax.xlane.f32.xlu0 %v743
    %v745 = vpop.xlane.xlu0 %744
    %v746 = vsel %vm733, %v653, -inf
    %747 = vmax.xlane.f32.xlu0 %v746
    %v748 = vpop.xlane.xlu0 %747
    %v749 = vsel %vm733, %v730, -inf
    %750 = vmax.xlane.f32.xlu0 %v749
    %v751 = vpop.xlane.xlu0 %750
    %v752 = vsub.f32 %v345, %v736
    %v753 = vsub.f32 %v422, %v739
    %v754 = vsub.f32 %v499, %v742
    %v755 = vsub.f32 %v576, %v745
    %v756 = vsub.f32 %v653, %v748
    %v757 = vsub.f32 %v730, %v751
    %v758 = vmul.f32 %v752, 1.442695
    %v759 = vpow.pop %v758
    %v760 = vmul.f32 %v753, 1.442695
    %v761 = vpow.pop %v760
    %v762 = vmul.f32 %v754, 1.442695
    %v763 = vpow.pop %v762
    %v764 = vmul.f32 %v755, 1.442695
    %v765 = vpow.pop %v764
    %v766 = vmul.f32 %v756, 1.442695
    %v767 = vpow.pop %v766
    %v768 = vmul.f32 %v757, 1.442695
    %v769 = vpow.pop %v768
    %v770 = vsel %vm733, %v759, 0.0
    %771 = vadd.xlane.f32.xlu0 %v770
    %v772 = vpop.xlane.xlu0 %771
    %v773 = vsel %vm733, %v761, 0.0
    %774 = vadd.xlane.f32.xlu0 %v773
    %v775 = vpop.xlane.xlu0 %774
    %v776 = vsel %vm733, %v763, 0.0
    %777 = vadd.xlane.f32.xlu0 %v776
    %v778 = vpop.xlane.xlu0 %777
    %v779 = vsel %vm733, %v765, 0.0
    %780 = vadd.xlane.f32.xlu0 %v779
    %v781 = vpop.xlane.xlu0 %780
    %v782 = vsel %vm733, %v767, 0.0
    %783 = vadd.xlane.f32.xlu0 %v782
    %v784 = vpop.xlane.xlu0 %783
    %v785 = vsel %vm733, %v769, 0.0
    %786 = vadd.xlane.f32.xlu0 %v785
    %v787 = vpop.xlane.xlu0 %786
    %v788 = vrcp.pop %v772
    %v789 = vrcp.pop %v775
    %v790 = vrcp.pop %v778
    %v791 = vrcp.pop %v781
    %v792 = vrcp.pop %v784
    %v793 = vrcp.pop %v787
    %v794 = vmul.f32 %v759, %v788
    %v795 = vmul.f32 %v761, %v789
    %v796 = vmul.f32 %v763, %v790
    %v797 = vmul.f32 %v765, %v791
    %v798 = vmul.f32 %v767, %v792
    %v799 = vmul.f32 %v769, %v793
    %v801 = vsel %vm733, %v794, 0
    %803 = vmatprep.subr.mxu0 0.0
    %804 = vmatpush1.msra.mxu0 %v245
    %805 = vmatprep.subr.mxu0 0.0
    %806 = vmatpush1.msra.mxu0 0.0
    %807 = vmatprep.subr.mxu0 0.0
    %808 = vmatpush1.msra.mxu0 0.0
    %809 = vmatprep.subr.mxu0 0.0
    %810 = vmatpush1.msra.mxu0 0.0
    %811 = vmatprep.subr.mxu0 0.0
    %812 = vmatpush1.msra.mxu0 0.0
    %813 = vmatprep.subr.mxu0 0.0
    %814 = vmatpush1.msra.mxu0 0.0
    %815 = vmatprep.subr.mxu0 0.0
    %816 = vmatpush1.msra.mxu0 0.0
    %817 = vmatprep.subr.mxu0 0.0
    %818 = vmatpush1.msra.mxu0 0.0
    %819 = vmatprep.subr.mxu0 0.0
    %820 = vmatpush1.msra.mxu0 0.0
    %821 = vmatprep.subr.mxu0 0.0
    %822 = vmatpush1.msra.mxu0 0.0
    %823 = vmatprep.subr.mxu0 0.0
    %824 = vmatpush1.msra.mxu0 0.0
    %825 = vmatprep.subr.mxu0 0.0
    %826 = vmatpush1.msra.mxu0 0.0
    %827 = vmatprep.subr.mxu0 0.0
    %828 = vmatpush1.msra.mxu0 0.0
    %829 = vmatprep.subr.mxu0 0.0
    %830 = vmatpush1.msra.mxu0 0.0
    %831 = vmatprep.subr.mxu0 0.0
    %832 = vmatpush1.msra.mxu0 0.0
    %833 = vmatprep.subr.mxu0 0.0
    %834 = vmatpush1.msra.mxu0 0.0
    %835 = vmatprep.subr.mxu0 0.0
    %836 = vmatpush1.msra.mxu0 0.0
    %837 = vmatprep.subr.mxu0 0.0
    %838 = vmatpush1.msra.mxu0 0.0
    %839 = vmatprep.subr.mxu0 0.0
    %840 = vmatpush1.msra.mxu0 0.0
    %841 = vmatprep.subr.mxu0 0.0
    %842 = vmatpush1.msra.mxu0 0.0
    %843 = vmatprep.subr.mxu0 0.0
    %844 = vmatpush1.msra.mxu0 0.0
    %845 = vmatprep.subr.mxu0 0.0
    %846 = vmatpush1.msra.mxu0 0.0
    %847 = vmatprep.subr.mxu0 0.0
    %848 = vmatpush1.msra.mxu0 0.0
    %849 = vmatprep.subr.mxu0 0.0
    %850 = vmatpush1.msra.mxu0 0.0
    %851 = vmatprep.subr.mxu0 0.0
    %852 = vmatpush1.msra.mxu0 0.0
    %853 = vmatprep.subr.mxu0 0.0
    %854 = vmatpush1.msra.mxu0 0.0
    %855 = vmatprep.subr.mxu0 0.0
    %856 = vmatpush1.msra.mxu0 0.0
    %857 = vmatprep.subr.mxu0 0.0
    %858 = vmatpush1.msra.mxu0 0.0
    %859 = vmatprep.subr.mxu0 0.0
    %860 = vmatpush1.msra.mxu0 0.0
    %861 = vmatprep.subr.mxu0 0.0
    %862 = vmatpush1.msra.mxu0 0.0
    %863 = vmatprep.subr.mxu0 0.0
    %864 = vmatpush1.msra.mxu0 0.0
    %865 = vmatprep.subr.mxu0 0.0
    %866 = vmatpush1.msra.mxu0 0.0
    %867 = vmatprep.mubr.f32.mxu0 0.0
    %868 = vmatmul.mubr.f32.gmra.mrb[0].mxu0 %v801
    %v869 = vpop.f32.mrb[0].mxu0
    %v870 = vadd.f32 0.0, %v869
    %v871 = vpop.f32.mrb[0].mxu0
    %872 = vdwg.mxu0
    %v874 = vsel %vm733, %v795, 0
    %876 = vmatprep.subr.mxu0 0.0
    %877 = vmatpush1.msra.mxu0 %v249
    %878 = vmatprep.subr.mxu0 0.0
    %879 = vmatpush1.msra.mxu0 0.0
    %880 = vmatprep.subr.mxu0 0.0
    %881 = vmatpush1.msra.mxu0 0.0
    %882 = vmatprep.subr.mxu0 0.0
    %883 = vmatpush1.msra.mxu0 0.0
    %884 = vmatprep.subr.mxu0 0.0
    %885 = vmatpush1.msra.mxu0 0.0
    %886 = vmatprep.subr.mxu0 0.0
    %887 = vmatpush1.msra.mxu0 0.0
    %888 = vmatprep.subr.mxu0 0.0
    %889 = vmatpush1.msra.mxu0 0.0
    %890 = vmatprep.subr.mxu0 0.0
    %891 = vmatpush1.msra.mxu0 0.0
    %892 = vmatprep.subr.mxu0 0.0
    %893 = vmatpush1.msra.mxu0 0.0
    %894 = vmatprep.subr.mxu0 0.0
    %895 = vmatpush1.msra.mxu0 0.0
    %896 = vmatprep.subr.mxu0 0.0
    %897 = vmatpush1.msra.mxu0 0.0
    %898 = vmatprep.subr.mxu0 0.0
    %899 = vmatpush1.msra.mxu0 0.0
    %900 = vmatprep.subr.mxu0 0.0
    %901 = vmatpush1.msra.mxu0 0.0
    %902 = vmatprep.subr.mxu0 0.0
    %903 = vmatpush1.msra.mxu0 0.0
    %904 = vmatprep.subr.mxu0 0.0
    %905 = vmatpush1.msra.mxu0 0.0
    %906 = vmatprep.subr.mxu0 0.0
    %907 = vmatpush1.msra.mxu0 0.0
    %908 = vmatprep.subr.mxu0 0.0
    %909 = vmatpush1.msra.mxu0 0.0
    %910 = vmatprep.subr.mxu0 0.0
    %911 = vmatpush1.msra.mxu0 0.0
    %912 = vmatprep.subr.mxu0 0.0
    %913 = vmatpush1.msra.mxu0 0.0
    %914 = vmatprep.subr.mxu0 0.0
    %915 = vmatpush1.msra.mxu0 0.0
    %916 = vmatprep.subr.mxu0 0.0
    %917 = vmatpush1.msra.mxu0 0.0
    %918 = vmatprep.subr.mxu0 0.0
    %919 = vmatpush1.msra.mxu0 0.0
    %920 = vmatprep.subr.mxu0 0.0
    %921 = vmatpush1.msra.mxu0 0.0
    %922 = vmatprep.subr.mxu0 0.0
    %923 = vmatpush1.msra.mxu0 0.0
    %924 = vmatprep.subr.mxu0 0.0
    %925 = vmatpush1.msra.mxu0 0.0
    %926 = vmatprep.subr.mxu0 0.0
    %927 = vmatpush1.msra.mxu0 0.0
    %928 = vmatprep.subr.mxu0 0.0
    %929 = vmatpush1.msra.mxu0 0.0
    %930 = vmatprep.subr.mxu0 0.0
    %931 = vmatpush1.msra.mxu0 0.0
    %932 = vmatprep.subr.mxu0 0.0
    %933 = vmatpush1.msra.mxu0 0.0
    %934 = vmatprep.subr.mxu0 0.0
    %935 = vmatpush1.msra.mxu0 0.0
    %936 = vmatprep.subr.mxu0 0.0
    %937 = vmatpush1.msra.mxu0 0.0
    %938 = vmatprep.subr.mxu0 0.0
    %939 = vmatpush1.msra.mxu0 0.0
    %940 = vmatprep.mubr.f32.mxu0 0.0
    %941 = vmatmul.mubr.f32.gmra.mrb[0].mxu0 %v874
    %v942 = vpop.f32.mrb[0].mxu0
    %v943 = vadd.f32 0.0, %v942
    %v944 = vpop.f32.mrb[0].mxu0
    %945 = vdwg.mxu0
    %v947 = vsel %vm733, %v796, 0
    %949 = vmatprep.subr.mxu0 0.0
    %950 = vmatpush1.msra.mxu0 %v255
    %951 = vmatprep.subr.mxu0 0.0
    %952 = vmatpush1.msra.mxu0 0.0
    %953 = vmatprep.subr.mxu0 0.0
    %954 = vmatpush1.msra.mxu0 0.0
    %955 = vmatprep.subr.mxu0 0.0
    %956 = vmatpush1.msra.mxu0 0.0
    %957 = vmatprep.subr.mxu0 0.0
    %958 = vmatpush1.msra.mxu0 0.0
    %959 = vmatprep.subr.mxu0 0.0
    %960 = vmatpush1.msra.mxu0 0.0
    %961 = vmatprep.subr.mxu0 0.0
    %962 = vmatpush1.msra.mxu0 0.0
    %963 = vmatprep.subr.mxu0 0.0
    %964 = vmatpush1.msra.mxu0 0.0
    %965 = vmatprep.subr.mxu0 0.0
    %966 = vmatpush1.msra.mxu0 0.0
    %967 = vmatprep.subr.mxu0 0.0
    %968 = vmatpush1.msra.mxu0 0.0
    %969 = vmatprep.subr.mxu0 0.0
    %970 = vmatpush1.msra.mxu0 0.0
    %971 = vmatprep.subr.mxu0 0.0
    %972 = vmatpush1.msra.mxu0 0.0
    %973 = vmatprep.subr.mxu0 0.0
    %974 = vmatpush1.msra.mxu0 0.0
    %975 = vmatprep.subr.mxu0 0.0
    %976 = vmatpush1.msra.mxu0 0.0
    %977 = vmatprep.subr.mxu0 0.0
    %978 = vmatpush1.msra.mxu0 0.0
    %979 = vmatprep.subr.mxu0 0.0
    %980 = vmatpush1.msra.mxu0 0.0
    %981 = vmatprep.subr.mxu0 0.0
    %982 = vmatpush1.msra.mxu0 0.0
    %983 = vmatprep.subr.mxu0 0.0
    %984 = vmatpush1.msra.mxu0 0.0
    %985 = vmatprep.subr.mxu0 0.0
    %986 = vmatpush1.msra.mxu0 0.0
    %987 = vmatprep.subr.mxu0 0.0
    %988 = vmatpush1.msra.mxu0 0.0
    %989 = vmatprep.subr.mxu0 0.0
    %990 = vmatpush1.msra.mxu0 0.0
    %991 = vmatprep.subr.mxu0 0.0
    %992 = vmatpush1.msra.mxu0 0.0
    %993 = vmatprep.subr.mxu0 0.0
    %994 = vmatpush1.msra.mxu0 0.0
    %995 = vmatprep.subr.mxu0 0.0
    %996 = vmatpush1.msra.mxu0 0.0
    %997 = vmatprep.subr.mxu0 0.0
    %998 = vmatpush1.msra.mxu0 0.0
    %999 = vmatprep.subr.mxu0 0.0
    %1000 = vmatpush1.msra.mxu0 0.0
    %1001 = vmatprep.subr.mxu0 0.0
    %1002 = vmatpush1.msra.mxu0 0.0
    %1003 = vmatprep.subr.mxu0 0.0
    %1004 = vmatpush1.msra.mxu0 0.0
    %1005 = vmatprep.subr.mxu0 0.0
    %1006 = vmatpush1.msra.mxu0 0.0
    %1007 = vmatprep.subr.mxu0 0.0
    %1008 = vmatpush1.msra.mxu0 0.0
    %1009 = vmatprep.subr.mxu0 0.0
    %1010 = vmatpush1.msra.mxu0 0.0
    %1011 = vmatprep.subr.mxu0 0.0
    %1012 = vmatpush1.msra.mxu0 0.0
    %1013 = vmatprep.mubr.f32.mxu0 0.0
    %1014 = vmatmul.mubr.f32.gmra.mrb[0].mxu0 %v947
    %v1015 = vpop.f32.mrb[0].mxu0
    %v1016 = vadd.f32 0.0, %v1015
    %v1017 = vpop.f32.mrb[0].mxu0
    %1018 = vdwg.mxu0
    %v1020 = vsel %vm733, %v797, 0
    %1022 = vmatprep.subr.mxu0 0.0
    %1023 = vmatpush1.msra.mxu0 %v259
    %1024 = vmatprep.subr.mxu0 0.0
    %1025 = vmatpush1.msra.mxu0 0.0
    %1026 = vmatprep.subr.mxu0 0.0
    %1027 = vmatpush1.msra.mxu0 0.0
    %1028 = vmatprep.subr.mxu0 0.0
    %1029 = vmatpush1.msra.mxu0 0.0
    %1030 = vmatprep.subr.mxu0 0.0
    %1031 = vmatpush1.msra.mxu0 0.0
    %1032 = vmatprep.subr.mxu0 0.0
    %1033 = vmatpush1.msra.mxu0 0.0
    %1034 = vmatprep.subr.mxu0 0.0
    %1035 = vmatpush1.msra.mxu0 0.0
    %1036 = vmatprep.subr.mxu0 0.0
    %1037 = vmatpush1.msra.mxu0 0.0
    %1038 = vmatprep.subr.mxu0 0.0
    %1039 = vmatpush1.msra.mxu0 0.0
    %1040 = vmatprep.subr.mxu0 0.0
    %1041 = vmatpush1.msra.mxu0 0.0
    %1042 = vmatprep.subr.mxu0 0.0
    %1043 = vmatpush1.msra.mxu0 0.0
    %1044 = vmatprep.subr.mxu0 0.0
    %1045 = vmatpush1.msra.mxu0 0.0
    %1046 = vmatprep.subr.mxu0 0.0
    %1047 = vmatpush1.msra.mxu0 0.0
    %1048 = vmatprep.subr.mxu0 0.0
    %1049 = vmatpush1.msra.mxu0 0.0
    %1050 = vmatprep.subr.mxu0 0.0
    %1051 = vmatpush1.msra.mxu0 0.0
    %1052 = vmatprep.subr.mxu0 0.0
    %1053 = vmatpush1.msra.mxu0 0.0
    %1054 = vmatprep.subr.mxu0 0.0
    %1055 = vmatpush1.msra.mxu0 0.0
    %1056 = vmatprep.subr.mxu0 0.0
    %1057 = vmatpush1.msra.mxu0 0.0
    %1058 = vmatprep.subr.mxu0 0.0
    %1059 = vmatpush1.msra.mxu0 0.0
    %1060 = vmatprep.subr.mxu0 0.0
    %1061 = vmatpush1.msra.mxu0 0.0
    %1062 = vmatprep.subr.mxu0 0.0
    %1063 = vmatpush1.msra.mxu0 0.0
    %1064 = vmatprep.subr.mxu0 0.0
    %1065 = vmatpush1.msra.mxu0 0.0
    %1066 = vmatprep.subr.mxu0 0.0
    %1067 = vmatpush1.msra.mxu0 0.0
    %1068 = vmatprep.subr.mxu0 0.0
    %1069 = vmatpush1.msra.mxu0 0.0
    %1070 = vmatprep.subr.mxu0 0.0
    %1071 = vmatpush1.msra.mxu0 0.0
    %1072 = vmatprep.subr.mxu0 0.0
    %1073 = vmatpush1.msra.mxu0 0.0
    %1074 = vmatprep.subr.mxu0 0.0
    %1075 = vmatpush1.msra.mxu0 0.0
    %1076 = vmatprep.subr.mxu0 0.0
    %1077 = vmatpush1.msra.mxu0 0.0
    %1078 = vmatprep.subr.mxu0 0.0
    %1079 = vmatpush1.msra.mxu0 0.0
    %1080 = vmatprep.subr.mxu0 0.0
    %1081 = vmatpush1.msra.mxu0 0.0
    %1082 = vmatprep.subr.mxu0 0.0
    %1083 = vmatpush1.msra.mxu0 0.0
    %1084 = vmatprep.subr.mxu0 0.0
    %1085 = vmatpush1.msra.mxu0 0.0
    %1086 = vmatprep.mubr.f32.mxu0 0.0
    %1087 = vmatmul.mubr.f32.gmra.mrb[0].mxu0 %v1020
    %v1088 = vpop.f32.mrb[0].mxu0
    %v1089 = vadd.f32 0.0, %v1088
    %v1090 = vpop.f32.mrb[0].mxu0
    %1091 = vdwg.mxu0
    %v1093 = vsel %vm733, %v798, 0
    %1095 = vmatprep.subr.mxu0 0.0
    %1096 = vmatpush1.msra.mxu0 %v265
    %1097 = vmatprep.subr.mxu0 0.0
    %1098 = vmatpush1.msra.mxu0 0.0
    %1099 = vmatprep.subr.mxu0 0.0
    %1100 = vmatpush1.msra.mxu0 0.0
    %1101 = vmatprep.subr.mxu0 0.0
    %1102 = vmatpush1.msra.mxu0 0.0
    %1103 = vmatprep.subr.mxu0 0.0
    %1104 = vmatpush1.msra.mxu0 0.0
    %1105 = vmatprep.subr.mxu0 0.0
    %1106 = vmatpush1.msra.mxu0 0.0
    %1107 = vmatprep.subr.mxu0 0.0
    %1108 = vmatpush1.msra.mxu0 0.0
    %1109 = vmatprep.subr.mxu0 0.0
    %1110 = vmatpush1.msra.mxu0 0.0
    %1111 = vmatprep.subr.mxu0 0.0
    %1112 = vmatpush1.msra.mxu0 0.0
    %1113 = vmatprep.subr.mxu0 0.0
    %1114 = vmatpush1.msra.mxu0 0.0
    %1115 = vmatprep.subr.mxu0 0.0
    %1116 = vmatpush1.msra.mxu0 0.0
    %1117 = vmatprep.subr.mxu0 0.0
    %1118 = vmatpush1.msra.mxu0 0.0
    %1119 = vmatprep.subr.mxu0 0.0
    %1120 = vmatpush1.msra.mxu0 0.0
    %1121 = vmatprep.subr.mxu0 0.0
    %1122 = vmatpush1.msra.mxu0 0.0
    %1123 = vmatprep.subr.mxu0 0.0
    %1124 = vmatpush1.msra.mxu0 0.0
    %1125 = vmatprep.subr.mxu0 0.0
    %1126 = vmatpush1.msra.mxu0 0.0
    %1127 = vmatprep.subr.mxu0 0.0
    %1128 = vmatpush1.msra.mxu0 0.0
    %1129 = vmatprep.subr.mxu0 0.0
    %1130 = vmatpush1.msra.mxu0 0.0
    %1131 = vmatprep.subr.mxu0 0.0
    %1132 = vmatpush1.msra.mxu0 0.0
    %1133 = vmatprep.subr.mxu0 0.0
    %1134 = vmatpush1.msra.mxu0 0.0
    %1135 = vmatprep.subr.mxu0 0.0
    %1136 = vmatpush1.msra.mxu0 0.0
    %1137 = vmatprep.subr.mxu0 0.0
    %1138 = vmatpush1.msra.mxu0 0.0
    %1139 = vmatprep.subr.mxu0 0.0
    %1140 = vmatpush1.msra.mxu0 0.0
    %1141 = vmatprep.subr.mxu0 0.0
    %1142 = vmatpush1.msra.mxu0 0.0
    %1143 = vmatprep.subr.mxu0 0.0
    %1144 = vmatpush1.msra.mxu0 0.0
    %1145 = vmatprep.subr.mxu0 0.0
    %1146 = vmatpush1.msra.mxu0 0.0
    %1147 = vmatprep.subr.mxu0 0.0
    %1148 = vmatpush1.msra.mxu0 0.0
    %1149 = vmatprep.subr.mxu0 0.0
    %1150 = vmatpush1.msra.mxu0 0.0
    %1151 = vmatprep.subr.mxu0 0.0
    %1152 = vmatpush1.msra.mxu0 0.0
    %1153 = vmatprep.subr.mxu0 0.0
    %1154 = vmatpush1.msra.mxu0 0.0
    %1155 = vmatprep.subr.mxu0 0.0
    %1156 = vmatpush1.msra.mxu0 0.0
    %1157 = vmatprep.subr.mxu0 0.0
    %1158 = vmatpush1.msra.mxu0 0.0
    %1159 = vmatprep.mubr.f32.mxu0 0.0
    %1160 = vmatmul.mubr.f32.gmra.mrb[0].mxu0 %v1093
    %v1161 = vpop.f32.mrb[0].mxu0
    %v1162 = vadd.f32 0.0, %v1161
    %v1163 = vpop.f32.mrb[0].mxu0
    %1164 = vdwg.mxu0
    %v1166 = vsel %vm733, %v799, 0
    %1168 = vmatprep.subr.mxu0 0.0
    %1169 = vmatpush1.msra.mxu0 %v269
    %1170 = vmatprep.subr.mxu0 0.0
    %1171 = vmatpush1.msra.mxu0 0.0
    %1172 = vmatprep.subr.mxu0 0.0
    %1173 = vmatpush1.msra.mxu0 0.0
    %1174 = vmatprep.subr.mxu0 0.0
    %1175 = vmatpush1.msra.mxu0 0.0
    %1176 = vmatprep.subr.mxu0 0.0
    %1177 = vmatpush1.msra.mxu0 0.0
    %1178 = vmatprep.subr.mxu0 0.0
    %1179 = vmatpush1.msra.mxu0 0.0
    %1180 = vmatprep.subr.mxu0 0.0
    %1181 = vmatpush1.msra.mxu0 0.0
    %1182 = vmatprep.subr.mxu0 0.0
    %1183 = vmatpush1.msra.mxu0 0.0
    %1184 = vmatprep.subr.mxu0 0.0
    %1185 = vmatpush1.msra.mxu0 0.0
    %1186 = vmatprep.subr.mxu0 0.0
    %1187 = vmatpush1.msra.mxu0 0.0
    %1188 = vmatprep.subr.mxu0 0.0
    %1189 = vmatpush1.msra.mxu0 0.0
    %1190 = vmatprep.subr.mxu0 0.0
    %1191 = vmatpush1.msra.mxu0 0.0
    %1192 = vmatprep.subr.mxu0 0.0
    %1193 = vmatpush1.msra.mxu0 0.0
    %1194 = vmatprep.subr.mxu0 0.0
    %1195 = vmatpush1.msra.mxu0 0.0
    %1196 = vmatprep.subr.mxu0 0.0
    %1197 = vmatpush1.msra.mxu0 0.0
    %1198 = vmatprep.subr.mxu0 0.0
    %1199 = vmatpush1.msra.mxu0 0.0
    %1200 = vmatprep.subr.mxu0 0.0
    %1201 = vmatpush1.msra.mxu0 0.0
    %1202 = vmatprep.subr.mxu0 0.0
    %1203 = vmatpush1.msra.mxu0 0.0
    %1204 = vmatprep.subr.mxu0 0.0
    %1205 = vmatpush1.msra.mxu0 0.0
    %1206 = vmatprep.subr.mxu0 0.0
    %1207 = vmatpush1.msra.mxu0 0.0
    %1208 = vmatprep.subr.mxu0 0.0
    %1209 = vmatpush1.msra.mxu0 0.0
    %1210 = vmatprep.subr.mxu0 0.0
    %1211 = vmatpush1.msra.mxu0 0.0
    %1212 = vmatprep.subr.mxu0 0.0
    %1213 = vmatpush1.msra.mxu0 0.0
    %1214 = vmatprep.subr.mxu0 0.0
    %1215 = vmatpush1.msra.mxu0 0.0
    %1216 = vmatprep.subr.mxu0 0.0
    %1217 = vmatpush1.msra.mxu0 0.0
    %1218 = vmatprep.subr.mxu0 0.0
    %1219 = vmatpush1.msra.mxu0 0.0
    %1220 = vmatprep.subr.mxu0 0.0
    %1221 = vmatpush1.msra.mxu0 0.0
    %1222 = vmatprep.subr.mxu0 0.0
    %1223 = vmatpush1.msra.mxu0 0.0
    %1224 = vmatprep.subr.mxu0 0.0
    %1225 = vmatpush1.msra.mxu0 0.0
    %1226 = vmatprep.subr.mxu0 0.0
    %1227 = vmatpush1.msra.mxu0 0.0
    %1228 = vmatprep.subr.mxu0 0.0
    %1229 = vmatpush1.msra.mxu0 0.0
    %1230 = vmatprep.subr.mxu0 0.0
    %1231 = vmatpush1.msra.mxu0 0.0
    %1232 = vmatprep.mubr.f32.mxu0 0.0
    %1233 = vmatmul.mubr.f32.gmra.mrb[0].mxu0 %v1166
    %v1234 = vpop.f32.mrb[0].mxu0
    %v1235 = vadd.f32 0.0, %v1234
    %v1236 = vpop.f32.mrb[0].mxu0
    %1237 = vdwg.mxu0
    %1238 = vrot.lane.b32.xlu0 %v243, 112
    %v1239 = vpop.permute.xlu0 %1238
    %1240 = vrot.lane.b32.xlu0 %v243, 48
    %v1241 = vpop.permute.xlu0 %1240
    %v1242 = vsel %vm60, %v1239, 0
    %v1244 = vsel %vm60, %v1241, 0
    %1246 = vmatprep.subr.mxu0 0.0
    %1247 = vmatpush1.xpose.msra.mxu0 %v1244
    %1248 = vmatprep.subr.mxu0 0.0
    %1249 = vmatpush1.xpose.msra.mxu0 0.0
    %1250 = vmatprep.subr.mxu0 0.0
    %1251 = vmatpush1.xpose.msra.mxu0 0.0
    %1252 = vmatprep.subr.mxu0 0.0
    %1253 = vmatpush1.xpose.msra.mxu0 0.0
    %1254 = vmatprep.subr.mxu0 0.0
    %1255 = vmatpush1.xpose.msra.mxu0 0.0
    %1256 = vmatprep.subr.mxu0 0.0
    %1257 = vmatpush1.xpose.msra.mxu0 0.0
    %1258 = vmatprep.subr.mxu0 0.0
    %1259 = vmatpush1.xpose.msra.mxu0 0.0
    %1260 = vmatprep.subr.mxu0 0.0
    %1261 = vmatpush1.xpose.msra.mxu0 0.0
    %1262 = vmatprep.subr.mxu0 0.0
    %1263 = vmatpush1.xpose.msra.mxu0 0.0
    %1264 = vmatprep.subr.mxu0 0.0
    %1265 = vmatpush1.xpose.msra.mxu0 0.0
    %1266 = vmatprep.subr.mxu0 0.0
    %1267 = vmatpush1.xpose.msra.mxu0 0.0
    %1268 = vmatprep.subr.mxu0 0.0
    %1269 = vmatpush1.xpose.msra.mxu0 0.0
    %1270 = vmatprep.subr.mxu0 0.0
    %1271 = vmatpush1.xpose.msra.mxu0 0.0
    %1272 = vmatprep.subr.mxu0 0.0
    %1273 = vmatpush1.xpose.msra.mxu0 0.0
    %1274 = vmatprep.subr.mxu0 0.0
    %1275 = vmatpush1.xpose.msra.mxu0 0.0
    %1276 = vmatprep.subr.mxu0 0.0
    %1277 = vmatpush1.xpose.msra.mxu0 0.0
    %1278 = vmatprep.subr.mxu0 0.0
    %1279 = vmatpush1.xpose.msra.mxu0 0.0
    %1280 = vmatprep.subr.mxu0 0.0
    %1281 = vmatpush1.xpose.msra.mxu0 0.0
    %1282 = vmatprep.subr.mxu0 0.0
    %1283 = vmatpush1.xpose.msra.mxu0 0.0
    %1284 = vmatprep.subr.mxu0 0.0
    %1285 = vmatpush1.xpose.msra.mxu0 0.0
    %1286 = vmatprep.subr.mxu0 0.0
    %1287 = vmatpush1.xpose.msra.mxu0 0.0
    %1288 = vmatprep.subr.mxu0 0.0
    %1289 = vmatpush1.xpose.msra.mxu0 0.0
    %1290 = vmatprep.subr.mxu0 0.0
    %1291 = vmatpush1.xpose.msra.mxu0 0.0
    %1292 = vmatprep.subr.mxu0 0.0
    %1293 = vmatpush1.xpose.msra.mxu0 0.0
    %1294 = vmatprep.subr.mxu0 0.0
    %1295 = vmatpush1.xpose.msra.mxu0 0.0
    %1296 = vmatprep.subr.mxu0 0.0
    %1297 = vmatpush1.xpose.msra.mxu0 0.0
    %1298 = vmatprep.subr.mxu0 0.0
    %1299 = vmatpush1.xpose.msra.mxu0 0.0
    %1300 = vmatprep.subr.mxu0 0.0
    %1301 = vmatpush1.xpose.msra.mxu0 0.0
    %1302 = vmatprep.subr.mxu0 0.0
    %1303 = vmatpush1.xpose.msra.mxu0 0.0
    %1304 = vmatprep.subr.mxu0 0.0
    %1305 = vmatpush1.xpose.msra.mxu0 0.0
    %1306 = vmatprep.subr.mxu0 0.0
    %1307 = vmatpush1.xpose.msra.mxu0 0.0
    %1308 = vmatprep.subr.mxu0 0.0
    %1309 = vmatpush1.xpose.msra.mxu0 0.0
    %1310 = vmatprep.mubr.f32.mxu0 0.0
    %1311 = vmatmul.mubr.f32.gmra.mrb[0].mxu0 %v1242
    %v1312 = vpop.f32.mrb[0].mxu0
    %v1313 = vadd.f32 0.0, %v1312
    %v1314 = vpop.f32.mrb[0].mxu0
    %1315 = vdwg.mxu0
    %1316 = vrot.lane.b32.xlu0 %v247, 112
    %v1317 = vpop.permute.xlu0 %1316
    %1318 = vrot.lane.b32.xlu0 %v247, 48
    %v1319 = vpop.permute.xlu0 %1318
    %v1320 = vsel %vm60, %v1317, 0
    %v1322 = vsel %vm60, %v1319, 0
    %1324 = vmatprep.subr.mxu0 0.0
    %1325 = vmatpush1.xpose.msra.mxu0 %v1322
    %1326 = vmatprep.subr.mxu0 0.0
    %1327 = vmatpush1.xpose.msra.mxu0 0.0
    %1328 = vmatprep.subr.mxu0 0.0
    %1329 = vmatpush1.xpose.msra.mxu0 0.0
    %1330 = vmatprep.subr.mxu0 0.0
    %1331 = vmatpush1.xpose.msra.mxu0 0.0
    %1332 = vmatprep.subr.mxu0 0.0
    %1333 = vmatpush1.xpose.msra.mxu0 0.0
    %1334 = vmatprep.subr.mxu0 0.0
    %1335 = vmatpush1.xpose.msra.mxu0 0.0
    %1336 = vmatprep.subr.mxu0 0.0
    %1337 = vmatpush1.xpose.msra.mxu0 0.0
    %1338 = vmatprep.subr.mxu0 0.0
    %1339 = vmatpush1.xpose.msra.mxu0 0.0
    %1340 = vmatprep.subr.mxu0 0.0
    %1341 = vmatpush1.xpose.msra.mxu0 0.0
    %1342 = vmatprep.subr.mxu0 0.0
    %1343 = vmatpush1.xpose.msra.mxu0 0.0
    %1344 = vmatprep.subr.mxu0 0.0
    %1345 = vmatpush1.xpose.msra.mxu0 0.0
    %1346 = vmatprep.subr.mxu0 0.0
    %1347 = vmatpush1.xpose.msra.mxu0 0.0
    %1348 = vmatprep.subr.mxu0 0.0
    %1349 = vmatpush1.xpose.msra.mxu0 0.0
    %1350 = vmatprep.subr.mxu0 0.0
    %1351 = vmatpush1.xpose.msra.mxu0 0.0
    %1352 = vmatprep.subr.mxu0 0.0
    %1353 = vmatpush1.xpose.msra.mxu0 0.0
    %1354 = vmatprep.subr.mxu0 0.0
    %1355 = vmatpush1.xpose.msra.mxu0 0.0
    %1356 = vmatprep.subr.mxu0 0.0
    %1357 = vmatpush1.xpose.msra.mxu0 0.0
    %1358 = vmatprep.subr.mxu0 0.0
    %1359 = vmatpush1.xpose.msra.mxu0 0.0
    %1360 = vmatprep.subr.mxu0 0.0
    %1361 = vmatpush1.xpose.msra.mxu0 0.0
    %1362 = vmatprep.subr.mxu0 0.0
    %1363 = vmatpush1.xpose.msra.mxu0 0.0
    %1364 = vmatprep.subr.mxu0 0.0
    %1365 = vmatpush1.xpose.msra.mxu0 0.0
    %1366 = vmatprep.subr.mxu0 0.0
    %1367 = vmatpush1.xpose.msra.mxu0 0.0
    %1368 = vmatprep.subr.mxu0 0.0
    %1369 = vmatpush1.xpose.msra.mxu0 0.0
    %1370 = vmatprep.subr.mxu0 0.0
    %1371 = vmatpush1.xpose.msra.mxu0 0.0
    %1372 = vmatprep.subr.mxu0 0.0
    %1373 = vmatpush1.xpose.msra.mxu0 0.0
    %1374 = vmatprep.subr.mxu0 0.0
    %1375 = vmatpush1.xpose.msra.mxu0 0.0
    %1376 = vmatprep.subr.mxu0 0.0
    %1377 = vmatpush1.xpose.msra.mxu0 0.0
    %1378 = vmatprep.subr.mxu0 0.0
    %1379 = vmatpush1.xpose.msra.mxu0 0.0
    %1380 = vmatprep.subr.mxu0 0.0
    %1381 = vmatpush1.xpose.msra.mxu0 0.0
    %1382 = vmatprep.subr.mxu0 0.0
    %1383 = vmatpush1.xpose.msra.mxu0 0.0
    %1384 = vmatprep.subr.mxu0 0.0
    %1385 = vmatpush1.xpose.msra.mxu0 0.0
    %1386 = vmatprep.subr.mxu0 0.0
    %1387 = vmatpush1.xpose.msra.mxu0 0.0
    %1388 = vmatprep.mubr.f32.mxu0 0.0
    %1389 = vmatmul.mubr.f32.gmra.mrb[0].mxu0 %v1320
    %v1390 = vpop.f32.mrb[0].mxu0
    %v1391 = vadd.f32 0.0, %v1390
    %v1392 = vpop.f32.mrb[0].mxu0
    %1393 = vdwg.mxu0
    %1394 = vrot.lane.b32.xlu0 %v253, 112
    %v1395 = vpop.permute.xlu0 %1394
    %1396 = vrot.lane.b32.xlu0 %v253, 48
    %v1397 = vpop.permute.xlu0 %1396
    %v1398 = vsel %vm60, %v1395, 0
    %v1400 = vsel %vm60, %v1397, 0
    %1402 = vmatprep.subr.mxu0 0.0
    %1403 = vmatpush1.xpose.msra.mxu0 %v1400
    %1404 = vmatprep.subr.mxu0 0.0
    %1405 = vmatpush1.xpose.msra.mxu0 0.0
    %1406 = vmatprep.subr.mxu0 0.0
    %1407 = vmatpush1.xpose.msra.mxu0 0.0
    %1408 = vmatprep.subr.mxu0 0.0
    %1409 = vmatpush1.xpose.msra.mxu0 0.0
    %1410 = vmatprep.subr.mxu0 0.0
    %1411 = vmatpush1.xpose.msra.mxu0 0.0
    %1412 = vmatprep.subr.mxu0 0.0
    %1413 = vmatpush1.xpose.msra.mxu0 0.0
    %1414 = vmatprep.subr.mxu0 0.0
    %1415 = vmatpush1.xpose.msra.mxu0 0.0
    %1416 = vmatprep.subr.mxu0 0.0
    %1417 = vmatpush1.xpose.msra.mxu0 0.0
    %1418 = vmatprep.subr.mxu0 0.0
    %1419 = vmatpush1.xpose.msra.mxu0 0.0
    %1420 = vmatprep.subr.mxu0 0.0
    %1421 = vmatpush1.xpose.msra.mxu0 0.0
    %1422 = vmatprep.subr.mxu0 0.0
    %1423 = vmatpush1.xpose.msra.mxu0 0.0
    %1424 = vmatprep.subr.mxu0 0.0
    %1425 = vmatpush1.xpose.msra.mxu0 0.0
    %1426 = vmatprep.subr.mxu0 0.0
    %1427 = vmatpush1.xpose.msra.mxu0 0.0
    %1428 = vmatprep.subr.mxu0 0.0
    %1429 = vmatpush1.xpose.msra.mxu0 0.0
    %1430 = vmatprep.subr.mxu0 0.0
    %1431 = vmatpush1.xpose.msra.mxu0 0.0
    %1432 = vmatprep.subr.mxu0 0.0
    %1433 = vmatpush1.xpose.msra.mxu0 0.0
    %1434 = vmatprep.subr.mxu0 0.0
    %1435 = vmatpush1.xpose.msra.mxu0 0.0
    %1436 = vmatprep.subr.mxu0 0.0
    %1437 = vmatpush1.xpose.msra.mxu0 0.0
    %1438 = vmatprep.subr.mxu0 0.0
    %1439 = vmatpush1.xpose.msra.mxu0 0.0
    %1440 = vmatprep.subr.mxu0 0.0
    %1441 = vmatpush1.xpose.msra.mxu0 0.0
    %1442 = vmatprep.subr.mxu0 0.0
    %1443 = vmatpush1.xpose.msra.mxu0 0.0
    %1444 = vmatprep.subr.mxu0 0.0
    %1445 = vmatpush1.xpose.msra.mxu0 0.0
    %1446 = vmatprep.subr.mxu0 0.0
    %1447 = vmatpush1.xpose.msra.mxu0 0.0
    %1448 = vmatprep.subr.mxu0 0.0
    %1449 = vmatpush1.xpose.msra.mxu0 0.0
    %1450 = vmatprep.subr.mxu0 0.0
    %1451 = vmatpush1.xpose.msra.mxu0 0.0
    %1452 = vmatprep.subr.mxu0 0.0
    %1453 = vmatpush1.xpose.msra.mxu0 0.0
    %1454 = vmatprep.subr.mxu0 0.0
    %1455 = vmatpush1.xpose.msra.mxu0 0.0
    %1456 = vmatprep.subr.mxu0 0.0
    %1457 = vmatpush1.xpose.msra.mxu0 0.0
    %1458 = vmatprep.subr.mxu0 0.0
    %1459 = vmatpush1.xpose.msra.mxu0 0.0
    %1460 = vmatprep.subr.mxu0 0.0
    %1461 = vmatpush1.xpose.msra.mxu0 0.0
    %1462 = vmatprep.subr.mxu0 0.0
    %1463 = vmatpush1.xpose.msra.mxu0 0.0
    %1464 = vmatprep.subr.mxu0 0.0
    %1465 = vmatpush1.xpose.msra.mxu0 0.0
    %1466 = vmatprep.mubr.f32.mxu0 0.0
    %1467 = vmatmul.mubr.f32.gmra.mrb[0].mxu0 %v1398
    %v1468 = vpop.f32.mrb[0].mxu0
    %v1469 = vadd.f32 0.0, %v1468
    %v1470 = vpop.f32.mrb[0].mxu0
    %1471 = vdwg.mxu0
    %1472 = vrot.lane.b32.xlu0 %v257, 112
    %v1473 = vpop.permute.xlu0 %1472
    %1474 = vrot.lane.b32.xlu0 %v257, 48
    %v1475 = vpop.permute.xlu0 %1474
    %v1476 = vsel %vm60, %v1473, 0
    %v1478 = vsel %vm60, %v1475, 0
    %1480 = vmatprep.subr.mxu0 0.0
    %1481 = vmatpush1.xpose.msra.mxu0 %v1478
    %1482 = vmatprep.subr.mxu0 0.0
    %1483 = vmatpush1.xpose.msra.mxu0 0.0
    %1484 = vmatprep.subr.mxu0 0.0
    %1485 = vmatpush1.xpose.msra.mxu0 0.0
    %1486 = vmatprep.subr.mxu0 0.0
    %1487 = vmatpush1.xpose.msra.mxu0 0.0
    %1488 = vmatprep.subr.mxu0 0.0
    %1489 = vmatpush1.xpose.msra.mxu0 0.0
    %1490 = vmatprep.subr.mxu0 0.0
    %1491 = vmatpush1.xpose.msra.mxu0 0.0
    %1492 = vmatprep.subr.mxu0 0.0
    %1493 = vmatpush1.xpose.msra.mxu0 0.0
    %1494 = vmatprep.subr.mxu0 0.0
    %1495 = vmatpush1.xpose.msra.mxu0 0.0
    %1496 = vmatprep.subr.mxu0 0.0
    %1497 = vmatpush1.xpose.msra.mxu0 0.0
    %1498 = vmatprep.subr.mxu0 0.0
    %1499 = vmatpush1.xpose.msra.mxu0 0.0
    %1500 = vmatprep.subr.mxu0 0.0
    %1501 = vmatpush1.xpose.msra.mxu0 0.0
    %1502 = vmatprep.subr.mxu0 0.0
    %1503 = vmatpush1.xpose.msra.mxu0 0.0
    %1504 = vmatprep.subr.mxu0 0.0
    %1505 = vmatpush1.xpose.msra.mxu0 0.0
    %1506 = vmatprep.subr.mxu0 0.0
    %1507 = vmatpush1.xpose.msra.mxu0 0.0
    %1508 = vmatprep.subr.mxu0 0.0
    %1509 = vmatpush1.xpose.msra.mxu0 0.0
    %1510 = vmatprep.subr.mxu0 0.0
    %1511 = vmatpush1.xpose.msra.mxu0 0.0
    %1512 = vmatprep.subr.mxu0 0.0
    %1513 = vmatpush1.xpose.msra.mxu0 0.0
    %1514 = vmatprep.subr.mxu0 0.0
    %1515 = vmatpush1.xpose.msra.mxu0 0.0
    %1516 = vmatprep.subr.mxu0 0.0
    %1517 = vmatpush1.xpose.msra.mxu0 0.0
    %1518 = vmatprep.subr.mxu0 0.0
    %1519 = vmatpush1.xpose.msra.mxu0 0.0
    %1520 = vmatprep.subr.mxu0 0.0
    %1521 = vmatpush1.xpose.msra.mxu0 0.0
    %1522 = vmatprep.subr.mxu0 0.0
    %1523 = vmatpush1.xpose.msra.mxu0 0.0
    %1524 = vmatprep.subr.mxu0 0.0
    %1525 = vmatpush1.xpose.msra.mxu0 0.0
    %1526 = vmatprep.subr.mxu0 0.0
    %1527 = vmatpush1.xpose.msra.mxu0 0.0
    %1528 = vmatprep.subr.mxu0 0.0
    %1529 = vmatpush1.xpose.msra.mxu0 0.0
    %1530 = vmatprep.subr.mxu0 0.0
    %1531 = vmatpush1.xpose.msra.mxu0 0.0
    %1532 = vmatprep.subr.mxu0 0.0
    %1533 = vmatpush1.xpose.msra.mxu0 0.0
    %1534 = vmatprep.subr.mxu0 0.0
    %1535 = vmatpush1.xpose.msra.mxu0 0.0
    %1536 = vmatprep.subr.mxu0 0.0
    %1537 = vmatpush1.xpose.msra.mxu0 0.0
    %1538 = vmatprep.subr.mxu0 0.0
    %1539 = vmatpush1.xpose.msra.mxu0 0.0
    %1540 = vmatprep.subr.mxu0 0.0
    %1541 = vmatpush1.xpose.msra.mxu0 0.0
    %1542 = vmatprep.subr.mxu0 0.0
    %1543 = vmatpush1.xpose.msra.mxu0 0.0
    %1544 = vmatprep.mubr.f32.mxu0 0.0
    %1545 = vmatmul.mubr.f32.gmra.mrb[0].mxu0 %v1476
    %v1546 = vpop.f32.mrb[0].mxu0
    %v1547 = vadd.f32 0.0, %v1546
    %v1548 = vpop.f32.mrb[0].mxu0
    %1549 = vdwg.mxu0
    %1550 = vrot.lane.b32.xlu0 %v263, 112
    %v1551 = vpop.permute.xlu0 %1550
    %1552 = vrot.lane.b32.xlu0 %v263, 48
    %v1553 = vpop.permute.xlu0 %1552
    %v1554 = vsel %vm60, %v1551, 0
    %v1556 = vsel %vm60, %v1553, 0
    %1558 = vmatprep.subr.mxu0 0.0
    %1559 = vmatpush1.xpose.msra.mxu0 %v1556
    %1560 = vmatprep.subr.mxu0 0.0
    %1561 = vmatpush1.xpose.msra.mxu0 0.0
    %1562 = vmatprep.subr.mxu0 0.0
    %1563 = vmatpush1.xpose.msra.mxu0 0.0
    %1564 = vmatprep.subr.mxu0 0.0
    %1565 = vmatpush1.xpose.msra.mxu0 0.0
    %1566 = vmatprep.subr.mxu0 0.0
    %1567 = vmatpush1.xpose.msra.mxu0 0.0
    %1568 = vmatprep.subr.mxu0 0.0
    %1569 = vmatpush1.xpose.msra.mxu0 0.0
    %1570 = vmatprep.subr.mxu0 0.0
    %1571 = vmatpush1.xpose.msra.mxu0 0.0
    %1572 = vmatprep.subr.mxu0 0.0
    %1573 = vmatpush1.xpose.msra.mxu0 0.0
    %1574 = vmatprep.subr.mxu0 0.0
    %1575 = vmatpush1.xpose.msra.mxu0 0.0
    %1576 = vmatprep.subr.mxu0 0.0
    %1577 = vmatpush1.xpose.msra.mxu0 0.0
    %1578 = vmatprep.subr.mxu0 0.0
    %1579 = vmatpush1.xpose.msra.mxu0 0.0
    %1580 = vmatprep.subr.mxu0 0.0
    %1581 = vmatpush1.xpose.msra.mxu0 0.0
    %1582 = vmatprep.subr.mxu0 0.0
    %1583 = vmatpush1.xpose.msra.mxu0 0.0
    %1584 = vmatprep.subr.mxu0 0.0
    %1585 = vmatpush1.xpose.msra.mxu0 0.0
    %1586 = vmatprep.subr.mxu0 0.0
    %1587 = vmatpush1.xpose.msra.mxu0 0.0
    %1588 = vmatprep.subr.mxu0 0.0
    %1589 = vmatpush1.xpose.msra.mxu0 0.0
    %1590 = vmatprep.subr.mxu0 0.0
    %1591 = vmatpush1.xpose.msra.mxu0 0.0
    %1592 = vmatprep.subr.mxu0 0.0
    %1593 = vmatpush1.xpose.msra.mxu0 0.0
    %1594 = vmatprep.subr.mxu0 0.0
    %1595 = vmatpush1.xpose.msra.mxu0 0.0
    %1596 = vmatprep.subr.mxu0 0.0
    %1597 = vmatpush1.xpose.msra.mxu0 0.0
    %1598 = vmatprep.subr.mxu0 0.0
    %1599 = vmatpush1.xpose.msra.mxu0 0.0
    %1600 = vmatprep.subr.mxu0 0.0
    %1601 = vmatpush1.xpose.msra.mxu0 0.0
    %1602 = vmatprep.subr.mxu0 0.0
    %1603 = vmatpush1.xpose.msra.mxu0 0.0
    %1604 = vmatprep.subr.mxu0 0.0
    %1605 = vmatpush1.xpose.msra.mxu0 0.0
    %1606 = vmatprep.subr.mxu0 0.0
    %1607 = vmatpush1.xpose.msra.mxu0 0.0
    %1608 = vmatprep.subr.mxu0 0.0
    %1609 = vmatpush1.xpose.msra.mxu0 0.0
    %1610 = vmatprep.subr.mxu0 0.0
    %1611 = vmatpush1.xpose.msra.mxu0 0.0
    %1612 = vmatprep.subr.mxu0 0.0
    %1613 = vmatpush1.xpose.msra.mxu0 0.0
    %1614 = vmatprep.subr.mxu0 0.0
    %1615 = vmatpush1.xpose.msra.mxu0 0.0
    %1616 = vmatprep.subr.mxu0 0.0
    %1617 = vmatpush1.xpose.msra.mxu0 0.0
    %1618 = vmatprep.subr.mxu0 0.0
    %1619 = vmatpush1.xpose.msra.mxu0 0.0
    %1620 = vmatprep.subr.mxu0 0.0
    %1621 = vmatpush1.xpose.msra.mxu0 0.0
    %1622 = vmatprep.mubr.f32.mxu0 0.0
    %1623 = vmatmul.mubr.f32.gmra.mrb[0].mxu0 %v1554
    %v1624 = vpop.f32.mrb[0].mxu0
    %v1625 = vadd.f32 0.0, %v1624
    %v1626 = vpop.f32.mrb[0].mxu0
    %1627 = vdwg.mxu0
    %1628 = vrot.lane.b32.xlu0 %v267, 112
    %v1629 = vpop.permute.xlu0 %1628
    %1630 = vrot.lane.b32.xlu0 %v267, 48
    %v1631 = vpop.permute.xlu0 %1630
    %v1632 = vsel %vm60, %v1629, 0
    %v1634 = vsel %vm60, %v1631, 0
    %1636 = vmatprep.subr.mxu0 0.0
    %1637 = vmatpush1.xpose.msra.mxu0 %v1634
    %1638 = vmatprep.subr.mxu0 0.0
    %1639 = vmatpush1.xpose.msra.mxu0 0.0
    %1640 = vmatprep.subr.mxu0 0.0
    %1641 = vmatpush1.xpose.msra.mxu0 0.0
    %1642 = vmatprep.subr.mxu0 0.0
    %1643 = vmatpush1.xpose.msra.mxu0 0.0
    %1644 = vmatprep.subr.mxu0 0.0
    %1645 = vmatpush1.xpose.msra.mxu0 0.0
    %1646 = vmatprep.subr.mxu0 0.0
    %1647 = vmatpush1.xpose.msra.mxu0 0.0
    %1648 = vmatprep.subr.mxu0 0.0
    %1649 = vmatpush1.xpose.msra.mxu0 0.0
    %1650 = vmatprep.subr.mxu0 0.0
    %1651 = vmatpush1.xpose.msra.mxu0 0.0
    %1652 = vmatprep.subr.mxu0 0.0
    %1653 = vmatpush1.xpose.msra.mxu0 0.0
    %1654 = vmatprep.subr.mxu0 0.0
    %1655 = vmatpush1.xpose.msra.mxu0 0.0
    %1656 = vmatprep.subr.mxu0 0.0
    %1657 = vmatpush1.xpose.msra.mxu0 0.0
    %1658 = vmatprep.subr.mxu0 0.0
    %1659 = vmatpush1.xpose.msra.mxu0 0.0
    %1660 = vmatprep.subr.mxu0 0.0
    %1661 = vmatpush1.xpose.msra.mxu0 0.0
    %1662 = vmatprep.subr.mxu0 0.0
    %1663 = vmatpush1.xpose.msra.mxu0 0.0
    %1664 = vmatprep.subr.mxu0 0.0
    %1665 = vmatpush1.xpose.msra.mxu0 0.0
    %1666 = vmatprep.subr.mxu0 0.0
    %1667 = vmatpush1.xpose.msra.mxu0 0.0
    %1668 = vmatprep.subr.mxu0 0.0
    %1669 = vmatpush1.xpose.msra.mxu0 0.0
    %1670 = vmatprep.subr.mxu0 0.0
    %1671 = vmatpush1.xpose.msra.mxu0 0.0
    %1672 = vmatprep.subr.mxu0 0.0
    %1673 = vmatpush1.xpose.msra.mxu0 0.0
    %1674 = vmatprep.subr.mxu0 0.0
    %1675 = vmatpush1.xpose.msra.mxu0 0.0
    %1676 = vmatprep.subr.mxu0 0.0
    %1677 = vmatpush1.xpose.msra.mxu0 0.0
    %1678 = vmatprep.subr.mxu0 0.0
    %1679 = vmatpush1.xpose.msra.mxu0 0.0
    %1680 = vmatprep.subr.mxu0 0.0
    %1681 = vmatpush1.xpose.msra.mxu0 0.0
    %1682 = vmatprep.subr.mxu0 0.0
    %1683 = vmatpush1.xpose.msra.mxu0 0.0
    %1684 = vmatprep.subr.mxu0 0.0
    %1685 = vmatpush1.xpose.msra.mxu0 0.0
    %1686 = vmatprep.subr.mxu0 0.0
    %1687 = vmatpush1.xpose.msra.mxu0 0.0
    %1688 = vmatprep.subr.mxu0 0.0
    %1689 = vmatpush1.xpose.msra.mxu0 0.0
    %1690 = vmatprep.subr.mxu0 0.0
    %1691 = vmatpush1.xpose.msra.mxu0 0.0
    %1692 = vmatprep.subr.mxu0 0.0
    %1693 = vmatpush1.xpose.msra.mxu0 0.0
    %1694 = vmatprep.subr.mxu0 0.0
    %1695 = vmatpush1.xpose.msra.mxu0 0.0
    %1696 = vmatprep.subr.mxu0 0.0
    %1697 = vmatpush1.xpose.msra.mxu0 0.0
    %1698 = vmatprep.subr.mxu0 0.0
    %1699 = vmatpush1.xpose.msra.mxu0 0.0
    %1700 = vmatprep.mubr.f32.mxu0 0.0
    %1701 = vmatmul.mubr.f32.gmra.mrb[0].mxu0 %v1632
    %v1702 = vpop.f32.mrb[0].mxu0
    %v1703 = vadd.f32 0.0, %v1702
    %v1704 = vpop.f32.mrb[0].mxu0
    %1705 = vdwg.mxu0
    %v1706 = vsel %vm733, %v1313, -inf
    %1707 = vmax.xlane.f32.xlu0 %v1706
    %v1708 = vpop.xlane.xlu0 %1707
    %v1709 = vsel %vm733, %v1391, -inf
    %1710 = vmax.xlane.f32.xlu0 %v1709
    %v1711 = vpop.xlane.xlu0 %1710
    %v1712 = vsel %vm733, %v1469, -inf
    %1713 = vmax.xlane.f32.xlu0 %v1712
    %v1714 = vpop.xlane.xlu0 %1713
    %v1715 = vsel %vm733, %v1547, -inf
    %1716 = vmax.xlane.f32.xlu0 %v1715
    %v1717 = vpop.xlane.xlu0 %1716
    %v1718 = vsel %vm733, %v1625, -inf
    %1719 = vmax.xlane.f32.xlu0 %v1718
    %v1720 = vpop.xlane.xlu0 %1719
    %v1721 = vsel %vm733, %v1703, -inf
    %1722 = vmax.xlane.f32.xlu0 %v1721
    %v1723 = vpop.xlane.xlu0 %1722
    %v1724 = vsub.f32 %v1313, %v1708
    %v1725 = vsub.f32 %v1391, %v1711
    %v1726 = vsub.f32 %v1469, %v1714
    %v1727 = vsub.f32 %v1547, %v1717
    %v1728 = vsub.f32 %v1625, %v1720
    %v1729 = vsub.f32 %v1703, %v1723
    %v1730 = vmul.f32 %v1724, 1.442695
    %v1731 = vpow.pop %v1730
    %v1732 = vmul.f32 %v1725, 1.442695
    %v1733 = vpow.pop %v1732
    %v1734 = vmul.f32 %v1726, 1.442695
    %v1735 = vpow.pop %v1734
    %v1736 = vmul.f32 %v1727, 1.442695
    %v1737 = vpow.pop %v1736
    %v1738 = vmul.f32 %v1728, 1.442695
    %v1739 = vpow.pop %v1738
    %v1740 = vmul.f32 %v1729, 1.442695
    %v1741 = vpow.pop %v1740
    %v1742 = vsel %vm733, %v1731, 0.0
    %1743 = vadd.xlane.f32.xlu0 %v1742
    %v1744 = vpop.xlane.xlu0 %1743
    %v1745 = vsel %vm733, %v1733, 0.0
    %1746 = vadd.xlane.f32.xlu0 %v1745
    %v1747 = vpop.xlane.xlu0 %1746
    %v1748 = vsel %vm733, %v1735, 0.0
    %1749 = vadd.xlane.f32.xlu0 %v1748
    %v1750 = vpop.xlane.xlu0 %1749
    %v1751 = vsel %vm733, %v1737, 0.0
    %1752 = vadd.xlane.f32.xlu0 %v1751
    %v1753 = vpop.xlane.xlu0 %1752
    %v1754 = vsel %vm733, %v1739, 0.0
    %1755 = vadd.xlane.f32.xlu0 %v1754
    %v1756 = vpop.xlane.xlu0 %1755
    %v1757 = vsel %vm733, %v1741, 0.0
    %1758 = vadd.xlane.f32.xlu0 %v1757
    %v1759 = vpop.xlane.xlu0 %1758
    %v1760 = vrcp.pop %v1744
    %v1761 = vrcp.pop %v1747
    %v1762 = vrcp.pop %v1750
    %v1763 = vrcp.pop %v1753
    %v1764 = vrcp.pop %v1756
    %v1765 = vrcp.pop %v1759
    %v1766 = vmul.f32 %v1731, %v1760
    %v1767 = vmul.f32 %v1733, %v1761
    %v1768 = vmul.f32 %v1735, %v1762
    %v1769 = vmul.f32 %v1737, %v1763
    %v1770 = vmul.f32 %v1739, %v1764
    %v1771 = vmul.f32 %v1741, %v1765
    %1773 = vrot.lane.b32.xlu0 %v245, 112
    %v1774 = vpop.permute.xlu0 %1773
    %v1777 = vsel %vm733, %v1766, 0
    %1779 = vmatprep.subr.mxu0 0.0
    %1780 = vmatpush1.msra.mxu0 %v1774
    %1781 = vmatprep.subr.mxu0 0.0
    %1782 = vmatpush1.msra.mxu0 0.0
    %1783 = vmatprep.subr.mxu0 0.0
    %1784 = vmatpush1.msra.mxu0 0.0
    %1785 = vmatprep.subr.mxu0 0.0
    %1786 = vmatpush1.msra.mxu0 0.0
    %1787 = vmatprep.subr.mxu0 0.0
    %1788 = vmatpush1.msra.mxu0 0.0
    %1789 = vmatprep.subr.mxu0 0.0
    %1790 = vmatpush1.msra.mxu0 0.0
    %1791 = vmatprep.subr.mxu0 0.0
    %1792 = vmatpush1.msra.mxu0 0.0
    %1793 = vmatprep.subr.mxu0 0.0
    %1794 = vmatpush1.msra.mxu0 0.0
    %1795 = vmatprep.subr.mxu0 0.0
    %1796 = vmatpush1.msra.mxu0 0.0
    %1797 = vmatprep.subr.mxu0 0.0
    %1798 = vmatpush1.msra.mxu0 0.0
    %1799 = vmatprep.subr.mxu0 0.0
    %1800 = vmatpush1.msra.mxu0 0.0
    %1801 = vmatprep.subr.mxu0 0.0
    %1802 = vmatpush1.msra.mxu0 0.0
    %1803 = vmatprep.subr.mxu0 0.0
    %1804 = vmatpush1.msra.mxu0 0.0
    %1805 = vmatprep.subr.mxu0 0.0
    %1806 = vmatpush1.msra.mxu0 0.0
    %1807 = vmatprep.subr.mxu0 0.0
    %1808 = vmatpush1.msra.mxu0 0.0
    %1809 = vmatprep.subr.mxu0 0.0
    %1810 = vmatpush1.msra.mxu0 0.0
    %1811 = vmatprep.subr.mxu0 0.0
    %1812 = vmatpush1.msra.mxu0 0.0
    %1813 = vmatprep.subr.mxu0 0.0
    %1814 = vmatpush1.msra.mxu0 0.0
    %1815 = vmatprep.subr.mxu0 0.0
    %1816 = vmatpush1.msra.mxu0 0.0
    %1817 = vmatprep.subr.mxu0 0.0
    %1818 = vmatpush1.msra.mxu0 0.0
    %1819 = vmatprep.subr.mxu0 0.0
    %1820 = vmatpush1.msra.mxu0 0.0
    %1821 = vmatprep.subr.mxu0 0.0
    %1822 = vmatpush1.msra.mxu0 0.0
    %1823 = vmatprep.subr.mxu0 0.0
    %1824 = vmatpush1.msra.mxu0 0.0
    %1825 = vmatprep.subr.mxu0 0.0
    %1826 = vmatpush1.msra.mxu0 0.0
    %1827 = vmatprep.subr.mxu0 0.0
    %1828 = vmatpush1.msra.mxu0 0.0
    %1829 = vmatprep.subr.mxu0 0.0
    %1830 = vmatpush1.msra.mxu0 0.0
    %1831 = vmatprep.subr.mxu0 0.0
    %1832 = vmatpush1.msra.mxu0 0.0
    %1833 = vmatprep.subr.mxu0 0.0
    %1834 = vmatpush1.msra.mxu0 0.0
    %1835 = vmatprep.subr.mxu0 0.0
    %1836 = vmatpush1.msra.mxu0 0.0
    %1837 = vmatprep.subr.mxu0 0.0
    %1838 = vmatpush1.msra.mxu0 0.0
    %1839 = vmatprep.subr.mxu0 0.0
    %1840 = vmatpush1.msra.mxu0 0.0
    %1841 = vmatprep.subr.mxu0 0.0
    %1842 = vmatpush1.msra.mxu0 0.0
    %1843 = vmatprep.mubr.f32.mxu0 0.0
    %1844 = vmatmul.mubr.f32.gmra.mrb[0].mxu0 %v1777
    %v1845 = vpop.f32.mrb[0].mxu0
    %v1846 = vadd.f32 0.0, %v1845
    %v1847 = vpop.f32.mrb[0].mxu0
    %1848 = vdwg.mxu0
    %1850 = vrot.lane.b32.xlu0 %v249, 112
    %v1851 = vpop.permute.xlu0 %1850
    %v1854 = vsel %vm733, %v1767, 0
    %1856 = vmatprep.subr.mxu0 0.0
    %1857 = vmatpush1.msra.mxu0 %v1851
    %1858 = vmatprep.subr.mxu0 0.0
    %1859 = vmatpush1.msra.mxu0 0.0
    %1860 = vmatprep.subr.mxu0 0.0
    %1861 = vmatpush1.msra.mxu0 0.0
    %1862 = vmatprep.subr.mxu0 0.0
    %1863 = vmatpush1.msra.mxu0 0.0
    %1864 = vmatprep.subr.mxu0 0.0
    %1865 = vmatpush1.msra.mxu0 0.0
    %1866 = vmatprep.subr.mxu0 0.0
    %1867 = vmatpush1.msra.mxu0 0.0
    %1868 = vmatprep.subr.mxu0 0.0
    %1869 = vmatpush1.msra.mxu0 0.0
    %1870 = vmatprep.subr.mxu0 0.0
    %1871 = vmatpush1.msra.mxu0 0.0
    %1872 = vmatprep.subr.mxu0 0.0
    %1873 = vmatpush1.msra.mxu0 0.0
    %1874 = vmatprep.subr.mxu0 0.0
    %1875 = vmatpush1.msra.mxu0 0.0
    %1876 = vmatprep.subr.mxu0 0.0
    %1877 = vmatpush1.msra.mxu0 0.0
    %1878 = vmatprep.subr.mxu0 0.0
    %1879 = vmatpush1.msra.mxu0 0.0
    %1880 = vmatprep.subr.mxu0 0.0
    %1881 = vmatpush1.msra.mxu0 0.0
    %1882 = vmatprep.subr.mxu0 0.0
    %1883 = vmatpush1.msra.mxu0 0.0
    %1884 = vmatprep.subr.mxu0 0.0
    %1885 = vmatpush1.msra.mxu0 0.0
    %1886 = vmatprep.subr.mxu0 0.0
    %1887 = vmatpush1.msra.mxu0 0.0
    %1888 = vmatprep.subr.mxu0 0.0
    %1889 = vmatpush1.msra.mxu0 0.0
    %1890 = vmatprep.subr.mxu0 0.0
    %1891 = vmatpush1.msra.mxu0 0.0
    %1892 = vmatprep.subr.mxu0 0.0
    %1893 = vmatpush1.msra.mxu0 0.0
    %1894 = vmatprep.subr.mxu0 0.0
    %1895 = vmatpush1.msra.mxu0 0.0
    %1896 = vmatprep.subr.mxu0 0.0
    %1897 = vmatpush1.msra.mxu0 0.0
    %1898 = vmatprep.subr.mxu0 0.0
    %1899 = vmatpush1.msra.mxu0 0.0
    %1900 = vmatprep.subr.mxu0 0.0
    %1901 = vmatpush1.msra.mxu0 0.0
    %1902 = vmatprep.subr.mxu0 0.0
    %1903 = vmatpush1.msra.mxu0 0.0
    %1904 = vmatprep.subr.mxu0 0.0
    %1905 = vmatpush1.msra.mxu0 0.0
    %1906 = vmatprep.subr.mxu0 0.0
    %1907 = vmatpush1.msra.mxu0 0.0
    %1908 = vmatprep.subr.mxu0 0.0
    %1909 = vmatpush1.msra.mxu0 0.0
    %1910 = vmatprep.subr.mxu0 0.0
    %1911 = vmatpush1.msra.mxu0 0.0
    %1912 = vmatprep.subr.mxu0 0.0
    %1913 = vmatpush1.msra.mxu0 0.0
    %1914 = vmatprep.subr.mxu0 0.0
    %1915 = vmatpush1.msra.mxu0 0.0
    %1916 = vmatprep.subr.mxu0 0.0
    %1917 = vmatpush1.msra.mxu0 0.0
    %1918 = vmatprep.subr.mxu0 0.0
    %1919 = vmatpush1.msra.mxu0 0.0
    %1920 = vmatprep.mubr.f32.mxu0 0.0
    %1921 = vmatmul.mubr.f32.gmra.mrb[0].mxu0 %v1854
    %v1922 = vpop.f32.mrb[0].mxu0
    %v1923 = vadd.f32 0.0, %v1922
    %v1924 = vpop.f32.mrb[0].mxu0
    %1925 = vdwg.mxu0
    %1927 = vrot.lane.b32.xlu0 %v255, 112
    %v1928 = vpop.permute.xlu0 %1927
    %v1931 = vsel %vm733, %v1768, 0
    %1933 = vmatprep.subr.mxu0 0.0
    %1934 = vmatpush1.msra.mxu0 %v1928
    %1935 = vmatprep.subr.mxu0 0.0
    %1936 = vmatpush1.msra.mxu0 0.0
    %1937 = vmatprep.subr.mxu0 0.0
    %1938 = vmatpush1.msra.mxu0 0.0
    %1939 = vmatprep.subr.mxu0 0.0
    %1940 = vmatpush1.msra.mxu0 0.0
    %1941 = vmatprep.subr.mxu0 0.0
    %1942 = vmatpush1.msra.mxu0 0.0
    %1943 = vmatprep.subr.mxu0 0.0
    %1944 = vmatpush1.msra.mxu0 0.0
    %1945 = vmatprep.subr.mxu0 0.0
    %1946 = vmatpush1.msra.mxu0 0.0
    %1947 = vmatprep.subr.mxu0 0.0
    %1948 = vmatpush1.msra.mxu0 0.0
    %1949 = vmatprep.subr.mxu0 0.0
    %1950 = vmatpush1.msra.mxu0 0.0
    %1951 = vmatprep.subr.mxu0 0.0
    %1952 = vmatpush1.msra.mxu0 0.0
    %1953 = vmatprep.subr.mxu0 0.0
    %1954 = vmatpush1.msra.mxu0 0.0
    %1955 = vmatprep.subr.mxu0 0.0
    %1956 = vmatpush1.msra.mxu0 0.0
    %1957 = vmatprep.subr.mxu0 0.0
    %1958 = vmatpush1.msra.mxu0 0.0
    %1959 = vmatprep.subr.mxu0 0.0
    %1960 = vmatpush1.msra.mxu0 0.0
    %1961 = vmatprep.subr.mxu0 0.0
    %1962 = vmatpush1.msra.mxu0 0.0
    %1963 = vmatprep.subr.mxu0 0.0
    %1964 = vmatpush1.msra.mxu0 0.0
    %1965 = vmatprep.subr.mxu0 0.0
    %1966 = vmatpush1.msra.mxu0 0.0
    %1967 = vmatprep.subr.mxu0 0.0
    %1968 = vmatpush1.msra.mxu0 0.0
    %1969 = vmatprep.subr.mxu0 0.0
    %1970 = vmatpush1.msra.mxu0 0.0
    %1971 = vmatprep.subr.mxu0 0.0
    %1972 = vmatpush1.msra.mxu0 0.0
    %1973 = vmatprep.subr.mxu0 0.0
    %1974 = vmatpush1.msra.mxu0 0.0
    %1975 = vmatprep.subr.mxu0 0.0
    %1976 = vmatpush1.msra.mxu0 0.0
    %1977 = vmatprep.subr.mxu0 0.0
    %1978 = vmatpush1.msra.mxu0 0.0
    %1979 = vmatprep.subr.mxu0 0.0
    %1980 = vmatpush1.msra.mxu0 0.0
    %1981 = vmatprep.subr.mxu0 0.0
    %1982 = vmatpush1.msra.mxu0 0.0
    %1983 = vmatprep.subr.mxu0 0.0
    %1984 = vmatpush1.msra.mxu0 0.0
    %1985 = vmatprep.subr.mxu0 0.0
    %1986 = vmatpush1.msra.mxu0 0.0
    %1987 = vmatprep.subr.mxu0 0.0
    %1988 = vmatpush1.msra.mxu0 0.0
    %1989 = vmatprep.subr.mxu0 0.0
    %1990 = vmatpush1.msra.mxu0 0.0
    %1991 = vmatprep.subr.mxu0 0.0
    %1992 = vmatpush1.msra.mxu0 0.0
    %1993 = vmatprep.subr.mxu0 0.0
    %1994 = vmatpush1.msra.mxu0 0.0
    %1995 = vmatprep.subr.mxu0 0.0
    %1996 = vmatpush1.msra.mxu0 0.0
    %1997 = vmatprep.mubr.f32.mxu0 0.0
    %1998 = vmatmul.mubr.f32.gmra.mrb[0].mxu0 %v1931
    %v1999 = vpop.f32.mrb[0].mxu0
    %v2000 = vadd.f32 0.0, %v1999
    %v2001 = vpop.f32.mrb[0].mxu0
    %2002 = vdwg.mxu0
    %2004 = vrot.lane.b32.xlu0 %v259, 112
    %v2005 = vpop.permute.xlu0 %2004
    %v2008 = vsel %vm733, %v1769, 0
    %2010 = vmatprep.subr.mxu0 0.0
    %2011 = vmatpush1.msra.mxu0 %v2005
    %2012 = vmatprep.subr.mxu0 0.0
    %2013 = vmatpush1.msra.mxu0 0.0
    %2014 = vmatprep.subr.mxu0 0.0
    %2015 = vmatpush1.msra.mxu0 0.0
    %2016 = vmatprep.subr.mxu0 0.0
    %2017 = vmatpush1.msra.mxu0 0.0
    %2018 = vmatprep.subr.mxu0 0.0
    %2019 = vmatpush1.msra.mxu0 0.0
    %2020 = vmatprep.subr.mxu0 0.0
    %2021 = vmatpush1.msra.mxu0 0.0
    %2022 = vmatprep.subr.mxu0 0.0
    %2023 = vmatpush1.msra.mxu0 0.0
    %2024 = vmatprep.subr.mxu0 0.0
    %2025 = vmatpush1.msra.mxu0 0.0
    %2026 = vmatprep.subr.mxu0 0.0
    %2027 = vmatpush1.msra.mxu0 0.0
    %2028 = vmatprep.subr.mxu0 0.0
    %2029 = vmatpush1.msra.mxu0 0.0
    %2030 = vmatprep.subr.mxu0 0.0
    %2031 = vmatpush1.msra.mxu0 0.0
    %2032 = vmatprep.subr.mxu0 0.0
    %2033 = vmatpush1.msra.mxu0 0.0
    %2034 = vmatprep.subr.mxu0 0.0
    %2035 = vmatpush1.msra.mxu0 0.0
    %2036 = vmatprep.subr.mxu0 0.0
    %2037 = vmatpush1.msra.mxu0 0.0
    %2038 = vmatprep.subr.mxu0 0.0
    %2039 = vmatpush1.msra.mxu0 0.0
    %2040 = vmatprep.subr.mxu0 0.0
    %2041 = vmatpush1.msra.mxu0 0.0
    %2042 = vmatprep.subr.mxu0 0.0
    %2043 = vmatpush1.msra.mxu0 0.0
    %2044 = vmatprep.subr.mxu0 0.0
    %2045 = vmatpush1.msra.mxu0 0.0
    %2046 = vmatprep.subr.mxu0 0.0
    %2047 = vmatpush1.msra.mxu0 0.0
    %2048 = vmatprep.subr.mxu0 0.0
    %2049 = vmatpush1.msra.mxu0 0.0
    %2050 = vmatprep.subr.mxu0 0.0
    %2051 = vmatpush1.msra.mxu0 0.0
    %2052 = vmatprep.subr.mxu0 0.0
    %2053 = vmatpush1.msra.mxu0 0.0
    %2054 = vmatprep.subr.mxu0 0.0
    %2055 = vmatpush1.msra.mxu0 0.0
    %2056 = vmatprep.subr.mxu0 0.0
    %2057 = vmatpush1.msra.mxu0 0.0
    %2058 = vmatprep.subr.mxu0 0.0
    %2059 = vmatpush1.msra.mxu0 0.0
    %2060 = vmatprep.subr.mxu0 0.0
    %2061 = vmatpush1.msra.mxu0 0.0
    %2062 = vmatprep.subr.mxu0 0.0
    %2063 = vmatpush1.msra.mxu0 0.0
    %2064 = vmatprep.subr.mxu0 0.0
    %2065 = vmatpush1.msra.mxu0 0.0
    %2066 = vmatprep.subr.mxu0 0.0
    %2067 = vmatpush1.msra.mxu0 0.0
    %2068 = vmatprep.subr.mxu0 0.0
    %2069 = vmatpush1.msra.mxu0 0.0
    %2070 = vmatprep.subr.mxu0 0.0
    %2071 = vmatpush1.msra.mxu0 0.0
    %2072 = vmatprep.subr.mxu0 0.0
    %2073 = vmatpush1.msra.mxu0 0.0
    %2074 = vmatprep.mubr.f32.mxu0 0.0
    %2075 = vmatmul.mubr.f32.gmra.mrb[0].mxu0 %v2008
    %v2076 = vpop.f32.mrb[0].mxu0
    %v2077 = vadd.f32 0.0, %v2076
    %v2078 = vpop.f32.mrb[0].mxu0
    %2079 = vdwg.mxu0
    %2081 = vrot.lane.b32.xlu0 %v265, 112
    %v2082 = vpop.permute.xlu0 %2081
    %v2085 = vsel %vm733, %v1770, 0
    %2087 = vmatprep.subr.mxu0 0.0
    %2088 = vmatpush1.msra.mxu0 %v2082
    %2089 = vmatprep.subr.mxu0 0.0
    %2090 = vmatpush1.msra.mxu0 0.0
    %2091 = vmatprep.subr.mxu0 0.0
    %2092 = vmatpush1.msra.mxu0 0.0
    %2093 = vmatprep.subr.mxu0 0.0
    %2094 = vmatpush1.msra.mxu0 0.0
    %2095 = vmatprep.subr.mxu0 0.0
    %2096 = vmatpush1.msra.mxu0 0.0
    %2097 = vmatprep.subr.mxu0 0.0
    %2098 = vmatpush1.msra.mxu0 0.0
    %2099 = vmatprep.subr.mxu0 0.0
    %2100 = vmatpush1.msra.mxu0 0.0
    %2101 = vmatprep.subr.mxu0 0.0
    %2102 = vmatpush1.msra.mxu0 0.0
    %2103 = vmatprep.subr.mxu0 0.0
    %2104 = vmatpush1.msra.mxu0 0.0
    %2105 = vmatprep.subr.mxu0 0.0
    %2106 = vmatpush1.msra.mxu0 0.0
    %2107 = vmatprep.subr.mxu0 0.0
    %2108 = vmatpush1.msra.mxu0 0.0
    %2109 = vmatprep.subr.mxu0 0.0
    %2110 = vmatpush1.msra.mxu0 0.0
    %2111 = vmatprep.subr.mxu0 0.0
    %2112 = vmatpush1.msra.mxu0 0.0
    %2113 = vmatprep.subr.mxu0 0.0
    %2114 = vmatpush1.msra.mxu0 0.0
    %2115 = vmatprep.subr.mxu0 0.0
    %2116 = vmatpush1.msra.mxu0 0.0
    %2117 = vmatprep.subr.mxu0 0.0
    %2118 = vmatpush1.msra.mxu0 0.0
    %2119 = vmatprep.subr.mxu0 0.0
    %2120 = vmatpush1.msra.mxu0 0.0
    %2121 = vmatprep.subr.mxu0 0.0
    %2122 = vmatpush1.msra.mxu0 0.0
    %2123 = vmatprep.subr.mxu0 0.0
    %2124 = vmatpush1.msra.mxu0 0.0
    %2125 = vmatprep.subr.mxu0 0.0
    %2126 = vmatpush1.msra.mxu0 0.0
    %2127 = vmatprep.subr.mxu0 0.0
    %2128 = vmatpush1.msra.mxu0 0.0
    %2129 = vmatprep.subr.mxu0 0.0
    %2130 = vmatpush1.msra.mxu0 0.0
    %2131 = vmatprep.subr.mxu0 0.0
    %2132 = vmatpush1.msra.mxu0 0.0
    %2133 = vmatprep.subr.mxu0 0.0
    %2134 = vmatpush1.msra.mxu0 0.0
    %2135 = vmatprep.subr.mxu0 0.0
    %2136 = vmatpush1.msra.mxu0 0.0
    %2137 = vmatprep.subr.mxu0 0.0
    %2138 = vmatpush1.msra.mxu0 0.0
    %2139 = vmatprep.subr.mxu0 0.0
    %2140 = vmatpush1.msra.mxu0 0.0
    %2141 = vmatprep.subr.mxu0 0.0
    %2142 = vmatpush1.msra.mxu0 0.0
    %2143 = vmatprep.subr.mxu0 0.0
    %2144 = vmatpush1.msra.mxu0 0.0
    %2145 = vmatprep.subr.mxu0 0.0
    %2146 = vmatpush1.msra.mxu0 0.0
    %2147 = vmatprep.subr.mxu0 0.0
    %2148 = vmatpush1.msra.mxu0 0.0
    %2149 = vmatprep.subr.mxu0 0.0
    %2150 = vmatpush1.msra.mxu0 0.0
    %2151 = vmatprep.mubr.f32.mxu0 0.0
    %2152 = vmatmul.mubr.f32.gmra.mrb[0].mxu0 %v2085
    %v2153 = vpop.f32.mrb[0].mxu0
    %v2154 = vadd.f32 0.0, %v2153
    %v2155 = vpop.f32.mrb[0].mxu0
    %2156 = vdwg.mxu0
    %2158 = vrot.lane.b32.xlu0 %v269, 112
    %v2159 = vpop.permute.xlu0 %2158
    %v2162 = vsel %vm733, %v1771, 0
    %2164 = vmatprep.subr.mxu0 0.0
    %2165 = vmatpush1.msra.mxu0 %v2159
    %2166 = vmatprep.subr.mxu0 0.0
    %2167 = vmatpush1.msra.mxu0 0.0
    %2168 = vmatprep.subr.mxu0 0.0
    %2169 = vmatpush1.msra.mxu0 0.0
    %2170 = vmatprep.subr.mxu0 0.0
    %2171 = vmatpush1.msra.mxu0 0.0
    %2172 = vmatprep.subr.mxu0 0.0
    %2173 = vmatpush1.msra.mxu0 0.0
    %2174 = vmatprep.subr.mxu0 0.0
    %2175 = vmatpush1.msra.mxu0 0.0
    %2176 = vmatprep.subr.mxu0 0.0
    %2177 = vmatpush1.msra.mxu0 0.0
    %2178 = vmatprep.subr.mxu0 0.0
    %2179 = vmatpush1.msra.mxu0 0.0
    %2180 = vmatprep.subr.mxu0 0.0
    %2181 = vmatpush1.msra.mxu0 0.0
    %2182 = vmatprep.subr.mxu0 0.0
    %2183 = vmatpush1.msra.mxu0 0.0
    %2184 = vmatprep.subr.mxu0 0.0
    %2185 = vmatpush1.msra.mxu0 0.0
    %2186 = vmatprep.subr.mxu0 0.0
    %2187 = vmatpush1.msra.mxu0 0.0
    %2188 = vmatprep.subr.mxu0 0.0
    %2189 = vmatpush1.msra.mxu0 0.0
    %2190 = vmatprep.subr.mxu0 0.0
    %2191 = vmatpush1.msra.mxu0 0.0
    %2192 = vmatprep.subr.mxu0 0.0
    %2193 = vmatpush1.msra.mxu0 0.0
    %2194 = vmatprep.subr.mxu0 0.0
    %2195 = vmatpush1.msra.mxu0 0.0
    %2196 = vmatprep.subr.mxu0 0.0
    %2197 = vmatpush1.msra.mxu0 0.0
    %2198 = vmatprep.subr.mxu0 0.0
    %2199 = vmatpush1.msra.mxu0 0.0
    %2200 = vmatprep.subr.mxu0 0.0
    %2201 = vmatpush1.msra.mxu0 0.0
    %2202 = vmatprep.subr.mxu0 0.0
    %2203 = vmatpush1.msra.mxu0 0.0
    %2204 = vmatprep.subr.mxu0 0.0
    %2205 = vmatpush1.msra.mxu0 0.0
    %2206 = vmatprep.subr.mxu0 0.0
    %2207 = vmatpush1.msra.mxu0 0.0
    %2208 = vmatprep.subr.mxu0 0.0
    %2209 = vmatpush1.msra.mxu0 0.0
    %2210 = vmatprep.subr.mxu0 0.0
    %2211 = vmatpush1.msra.mxu0 0.0
    %2212 = vmatprep.subr.mxu0 0.0
    %2213 = vmatpush1.msra.mxu0 0.0
    %2214 = vmatprep.subr.mxu0 0.0
    %2215 = vmatpush1.msra.mxu0 0.0
    %2216 = vmatprep.subr.mxu0 0.0
    %2217 = vmatpush1.msra.mxu0 0.0
    %2218 = vmatprep.subr.mxu0 0.0
    %2219 = vmatpush1.msra.mxu0 0.0
    %2220 = vmatprep.subr.mxu0 0.0
    %2221 = vmatpush1.msra.mxu0 0.0
    %2222 = vmatprep.subr.mxu0 0.0
    %2223 = vmatpush1.msra.mxu0 0.0
    %2224 = vmatprep.subr.mxu0 0.0
    %2225 = vmatpush1.msra.mxu0 0.0
    %2226 = vmatprep.subr.mxu0 0.0
    %2227 = vmatpush1.msra.mxu0 0.0
    %2228 = vmatprep.mubr.f32.mxu0 0.0
    %2229 = vmatmul.mubr.f32.gmra.mrb[0].mxu0 %v2162
    %v2230 = vpop.f32.mrb[0].mxu0
    %v2231 = vadd.f32 0.0, %v2230
    %v2232 = vpop.f32.mrb[0].mxu0
    %2233 = vdwg.mxu0
    %2234 = vrot.lane.b32.xlu0 %v243, 96
    %v2235 = vpop.permute.xlu0 %2234
    %2236 = vrot.lane.b32.xlu0 %v243, 32
    %v2237 = vpop.permute.xlu0 %2236
    %v2238 = vsel %vm60, %v2235, 0
    %v2240 = vsel %vm60, %v2237, 0
    %2242 = vmatprep.subr.mxu0 0.0
    %2243 = vmatpush1.xpose.msra.mxu0 %v2240
    %2244 = vmatprep.subr.mxu0 0.0
    %2245 = vmatpush1.xpose.msra.mxu0 0.0
    %2246 = vmatprep.subr.mxu0 0.0
    %2247 = vmatpush1.xpose.msra.mxu0 0.0
    %2248 = vmatprep.subr.mxu0 0.0
    %2249 = vmatpush1.xpose.msra.mxu0 0.0
    %2250 = vmatprep.subr.mxu0 0.0
    %2251 = vmatpush1.xpose.msra.mxu0 0.0
    %2252 = vmatprep.subr.mxu0 0.0
    %2253 = vmatpush1.xpose.msra.mxu0 0.0
    %2254 = vmatprep.subr.mxu0 0.0
    %2255 = vmatpush1.xpose.msra.mxu0 0.0
    %2256 = vmatprep.subr.mxu0 0.0
    %2257 = vmatpush1.xpose.msra.mxu0 0.0
    %2258 = vmatprep.subr.mxu0 0.0
    %2259 = vmatpush1.xpose.msra.mxu0 0.0
    %2260 = vmatprep.subr.mxu0 0.0
    %2261 = vmatpush1.xpose.msra.mxu0 0.0
    %2262 = vmatprep.subr.mxu0 0.0
    %2263 = vmatpush1.xpose.msra.mxu0 0.0
    %2264 = vmatprep.subr.mxu0 0.0
    %2265 = vmatpush1.xpose.msra.mxu0 0.0
    %2266 = vmatprep.subr.mxu0 0.0
    %2267 = vmatpush1.xpose.msra.mxu0 0.0
    %2268 = vmatprep.subr.mxu0 0.0
    %2269 = vmatpush1.xpose.msra.mxu0 0.0
    %2270 = vmatprep.subr.mxu0 0.0
    %2271 = vmatpush1.xpose.msra.mxu0 0.0
    %2272 = vmatprep.subr.mxu0 0.0
    %2273 = vmatpush1.xpose.msra.mxu0 0.0
    %2274 = vmatprep.subr.mxu0 0.0
    %2275 = vmatpush1.xpose.msra.mxu0 0.0
    %2276 = vmatprep.subr.mxu0 0.0
    %2277 = vmatpush1.xpose.msra.mxu0 0.0
    %2278 = vmatprep.subr.mxu0 0.0
    %2279 = vmatpush1.xpose.msra.mxu0 0.0
    %2280 = vmatprep.subr.mxu0 0.0
    %2281 = vmatpush1.xpose.msra.mxu0 0.0
    %2282 = vmatprep.subr.mxu0 0.0
    %2283 = vmatpush1.xpose.msra.mxu0 0.0
    %2284 = vmatprep.subr.mxu0 0.0
    %2285 = vmatpush1.xpose.msra.mxu0 0.0
    %2286 = vmatprep.subr.mxu0 0.0
    %2287 = vmatpush1.xpose.msra.mxu0 0.0
    %2288 = vmatprep.subr.mxu0 0.0
    %2289 = vmatpush1.xpose.msra.mxu0 0.0
    %2290 = vmatprep.subr.mxu0 0.0
    %2291 = vmatpush1.xpose.msra.mxu0 0.0
    %2292 = vmatprep.subr.mxu0 0.0
    %2293 = vmatpush1.xpose.msra.mxu0 0.0
    %2294 = vmatprep.subr.mxu0 0.0
    %2295 = vmatpush1.xpose.msra.mxu0 0.0
    %2296 = vmatprep.subr.mxu0 0.0
    %2297 = vmatpush1.xpose.msra.mxu0 0.0
    %2298 = vmatprep.subr.mxu0 0.0
    %2299 = vmatpush1.xpose.msra.mxu0 0.0
    %2300 = vmatprep.subr.mxu0 0.0
    %2301 = vmatpush1.xpose.msra.mxu0 0.0
    %2302 = vmatprep.subr.mxu0 0.0
    %2303 = vmatpush1.xpose.msra.mxu0 0.0
    %2304 = vmatprep.subr.mxu0 0.0
    %2305 = vmatpush1.xpose.msra.mxu0 0.0
    %2306 = vmatprep.mubr.f32.mxu0 0.0
    %2307 = vmatmul.mubr.f32.gmra.mrb[0].mxu0 %v2238
    %v2308 = vpop.f32.mrb[0].mxu0
    %v2309 = vadd.f32 0.0, %v2308
    %v2310 = vpop.f32.mrb[0].mxu0
    %2311 = vdwg.mxu0
    %2312 = vrot.lane.b32.xlu0 %v247, 96
    %v2313 = vpop.permute.xlu0 %2312
    %2314 = vrot.lane.b32.xlu0 %v247, 32
    %v2315 = vpop.permute.xlu0 %2314
    %v2316 = vsel %vm60, %v2313, 0
    %v2318 = vsel %vm60, %v2315, 0
    %2320 = vmatprep.subr.mxu0 0.0
    %2321 = vmatpush1.xpose.msra.mxu0 %v2318
    %2322 = vmatprep.subr.mxu0 0.0
    %2323 = vmatpush1.xpose.msra.mxu0 0.0
    %2324 = vmatprep.subr.mxu0 0.0
    %2325 = vmatpush1.xpose.msra.mxu0 0.0
    %2326 = vmatprep.subr.mxu0 0.0
    %2327 = vmatpush1.xpose.msra.mxu0 0.0
    %2328 = vmatprep.subr.mxu0 0.0
    %2329 = vmatpush1.xpose.msra.mxu0 0.0
    %2330 = vmatprep.subr.mxu0 0.0
    %2331 = vmatpush1.xpose.msra.mxu0 0.0
    %2332 = vmatprep.subr.mxu0 0.0
    %2333 = vmatpush1.xpose.msra.mxu0 0.0
    %2334 = vmatprep.subr.mxu0 0.0
    %2335 = vmatpush1.xpose.msra.mxu0 0.0
    %2336 = vmatprep.subr.mxu0 0.0
    %2337 = vmatpush1.xpose.msra.mxu0 0.0
    %2338 = vmatprep.subr.mxu0 0.0
    %2339 = vmatpush1.xpose.msra.mxu0 0.0
    %2340 = vmatprep.subr.mxu0 0.0
    %2341 = vmatpush1.xpose.msra.mxu0 0.0
    %2342 = vmatprep.subr.mxu0 0.0
    %2343 = vmatpush1.xpose.msra.mxu0 0.0
    %2344 = vmatprep.subr.mxu0 0.0
    %2345 = vmatpush1.xpose.msra.mxu0 0.0
    %2346 = vmatprep.subr.mxu0 0.0
    %2347 = vmatpush1.xpose.msra.mxu0 0.0
    %2348 = vmatprep.subr.mxu0 0.0
    %2349 = vmatpush1.xpose.msra.mxu0 0.0
    %2350 = vmatprep.subr.mxu0 0.0
    %2351 = vmatpush1.xpose.msra.mxu0 0.0
    %2352 = vmatprep.subr.mxu0 0.0
    %2353 = vmatpush1.xpose.msra.mxu0 0.0
    %2354 = vmatprep.subr.mxu0 0.0
    %2355 = vmatpush1.xpose.msra.mxu0 0.0
    %2356 = vmatprep.subr.mxu0 0.0
    %2357 = vmatpush1.xpose.msra.mxu0 0.0
    %2358 = vmatprep.subr.mxu0 0.0
    %2359 = vmatpush1.xpose.msra.mxu0 0.0
    %2360 = vmatprep.subr.mxu0 0.0
    %2361 = vmatpush1.xpose.msra.mxu0 0.0
    %2362 = vmatprep.subr.mxu0 0.0
    %2363 = vmatpush1.xpose.msra.mxu0 0.0
    %2364 = vmatprep.subr.mxu0 0.0
    %2365 = vmatpush1.xpose.msra.mxu0 0.0
    %2366 = vmatprep.subr.mxu0 0.0
    %2367 = vmatpush1.xpose.msra.mxu0 0.0
    %2368 = vmatprep.subr.mxu0 0.0
    %2369 = vmatpush1.xpose.msra.mxu0 0.0
    %2370 = vmatprep.subr.mxu0 0.0
    %2371 = vmatpush1.xpose.msra.mxu0 0.0
    %2372 = vmatprep.subr.mxu0 0.0
    %2373 = vmatpush1.xpose.msra.mxu0 0.0
    %2374 = vmatprep.subr.mxu0 0.0
    %2375 = vmatpush1.xpose.msra.mxu0 0.0
    %2376 = vmatprep.subr.mxu0 0.0
    %2377 = vmatpush1.xpose.msra.mxu0 0.0
    %2378 = vmatprep.subr.mxu0 0.0
    %2379 = vmatpush1.xpose.msra.mxu0 0.0
    %2380 = vmatprep.subr.mxu0 0.0
    %2381 = vmatpush1.xpose.msra.mxu0 0.0
    %2382 = vmatprep.subr.mxu0 0.0
    %2383 = vmatpush1.xpose.msra.mxu0 0.0
    %2384 = vmatprep.mubr.f32.mxu0 0.0
    %2385 = vmatmul.mubr.f32.gmra.mrb[0].mxu0 %v2316
    %v2386 = vpop.f32.mrb[0].mxu0
    %v2387 = vadd.f32 0.0, %v2386
    %v2388 = vpop.f32.mrb[0].mxu0
    %2389 = vdwg.mxu0
    %2390 = vrot.lane.b32.xlu0 %v253, 96
    %v2391 = vpop.permute.xlu0 %2390
    %2392 = vrot.lane.b32.xlu0 %v253, 32
    %v2393 = vpop.permute.xlu0 %2392
    %v2394 = vsel %vm60, %v2391, 0
    %v2396 = vsel %vm60, %v2393, 0
    %2398 = vmatprep.subr.mxu0 0.0
    %2399 = vmatpush1.xpose.msra.mxu0 %v2396
    %2400 = vmatprep.subr.mxu0 0.0
    %2401 = vmatpush1.xpose.msra.mxu0 0.0
    %2402 = vmatprep.subr.mxu0 0.0
    %2403 = vmatpush1.xpose.msra.mxu0 0.0
    %2404 = vmatprep.subr.mxu0 0.0
    %2405 = vmatpush1.xpose.msra.mxu0 0.0
    %2406 = vmatprep.subr.mxu0 0.0
    %2407 = vmatpush1.xpose.msra.mxu0 0.0
    %2408 = vmatprep.subr.mxu0 0.0
    %2409 = vmatpush1.xpose.msra.mxu0 0.0
    %2410 = vmatprep.subr.mxu0 0.0
    %2411 = vmatpush1.xpose.msra.mxu0 0.0
    %2412 = vmatprep.subr.mxu0 0.0
    %2413 = vmatpush1.xpose.msra.mxu0 0.0
    %2414 = vmatprep.subr.mxu0 0.0
    %2415 = vmatpush1.xpose.msra.mxu0 0.0
    %2416 = vmatprep.subr.mxu0 0.0
    %2417 = vmatpush1.xpose.msra.mxu0 0.0
    %2418 = vmatprep.subr.mxu0 0.0
    %2419 = vmatpush1.xpose.msra.mxu0 0.0
    %2420 = vmatprep.subr.mxu0 0.0
    %2421 = vmatpush1.xpose.msra.mxu0 0.0
    %2422 = vmatprep.subr.mxu0 0.0
    %2423 = vmatpush1.xpose.msra.mxu0 0.0
    %2424 = vmatprep.subr.mxu0 0.0
    %2425 = vmatpush1.xpose.msra.mxu0 0.0
    %2426 = vmatprep.subr.mxu0 0.0
    %2427 = vmatpush1.xpose.msra.mxu0 0.0
    %2428 = vmatprep.subr.mxu0 0.0
    %2429 = vmatpush1.xpose.msra.mxu0 0.0
    %2430 = vmatprep.subr.mxu0 0.0
    %2431 = vmatpush1.xpose.msra.mxu0 0.0
    %2432 = vmatprep.subr.mxu0 0.0
    %2433 = vmatpush1.xpose.msra.mxu0 0.0
    %2434 = vmatprep.subr.mxu0 0.0
    %2435 = vmatpush1.xpose.msra.mxu0 0.0
    %2436 = vmatprep.subr.mxu0 0.0
    %2437 = vmatpush1.xpose.msra.mxu0 0.0
    %2438 = vmatprep.subr.mxu0 0.0
    %2439 = vmatpush1.xpose.msra.mxu0 0.0
    %2440 = vmatprep.subr.mxu0 0.0
    %2441 = vmatpush1.xpose.msra.mxu0 0.0
    %2442 = vmatprep.subr.mxu0 0.0
    %2443 = vmatpush1.xpose.msra.mxu0 0.0
    %2444 = vmatprep.subr.mxu0 0.0
    %2445 = vmatpush1.xpose.msra.mxu0 0.0
    %2446 = vmatprep.subr.mxu0 0.0
    %2447 = vmatpush1.xpose.msra.mxu0 0.0
    %2448 = vmatprep.subr.mxu0 0.0
    %2449 = vmatpush1.xpose.msra.mxu0 0.0
    %2450 = vmatprep.subr.mxu0 0.0
    %2451 = vmatpush1.xpose.msra.mxu0 0.0
    %2452 = vmatprep.subr.mxu0 0.0
    %2453 = vmatpush1.xpose.msra.mxu0 0.0
    %2454 = vmatprep.subr.mxu0 0.0
    %2455 = vmatpush1.xpose.msra.mxu0 0.0
    %2456 = vmatprep.subr.mxu0 0.0
    %2457 = vmatpush1.xpose.msra.mxu0 0.0
    %2458 = vmatprep.subr.mxu0 0.0
    %2459 = vmatpush1.xpose.msra.mxu0 0.0
    %2460 = vmatprep.subr.mxu0 0.0
    %2461 = vmatpush1.xpose.msra.mxu0 0.0
    %2462 = vmatprep.mubr.f32.mxu0 0.0
    %2463 = vmatmul.mubr.f32.gmra.mrb[0].mxu0 %v2394
    %v2464 = vpop.f32.mrb[0].mxu0
    %v2465 = vadd.f32 0.0, %v2464
    %v2466 = vpop.f32.mrb[0].mxu0
    %2467 = vdwg.mxu0
    %2468 = vrot.lane.b32.xlu0 %v257, 96
    %v2469 = vpop.permute.xlu0 %2468
    %2470 = vrot.lane.b32.xlu0 %v257, 32
    %v2471 = vpop.permute.xlu0 %2470
    %v2472 = vsel %vm60, %v2469, 0
    %v2474 = vsel %vm60, %v2471, 0
    %2476 = vmatprep.subr.mxu0 0.0
    %2477 = vmatpush1.xpose.msra.mxu0 %v2474
    %2478 = vmatprep.subr.mxu0 0.0
    %2479 = vmatpush1.xpose.msra.mxu0 0.0
    %2480 = vmatprep.subr.mxu0 0.0
    %2481 = vmatpush1.xpose.msra.mxu0 0.0
    %2482 = vmatprep.subr.mxu0 0.0
    %2483 = vmatpush1.xpose.msra.mxu0 0.0
    %2484 = vmatprep.subr.mxu0 0.0
    %2485 = vmatpush1.xpose.msra.mxu0 0.0
    %2486 = vmatprep.subr.mxu0 0.0
    %2487 = vmatpush1.xpose.msra.mxu0 0.0
    %2488 = vmatprep.subr.mxu0 0.0
    %2489 = vmatpush1.xpose.msra.mxu0 0.0
    %2490 = vmatprep.subr.mxu0 0.0
    %2491 = vmatpush1.xpose.msra.mxu0 0.0
    %2492 = vmatprep.subr.mxu0 0.0
    %2493 = vmatpush1.xpose.msra.mxu0 0.0
    %2494 = vmatprep.subr.mxu0 0.0
    %2495 = vmatpush1.xpose.msra.mxu0 0.0
    %2496 = vmatprep.subr.mxu0 0.0
    %2497 = vmatpush1.xpose.msra.mxu0 0.0
    %2498 = vmatprep.subr.mxu0 0.0
    %2499 = vmatpush1.xpose.msra.mxu0 0.0
    %2500 = vmatprep.subr.mxu0 0.0
    %2501 = vmatpush1.xpose.msra.mxu0 0.0
    %2502 = vmatprep.subr.mxu0 0.0
    %2503 = vmatpush1.xpose.msra.mxu0 0.0
    %2504 = vmatprep.subr.mxu0 0.0
    %2505 = vmatpush1.xpose.msra.mxu0 0.0
    %2506 = vmatprep.subr.mxu0 0.0
    %2507 = vmatpush1.xpose.msra.mxu0 0.0
    %2508 = vmatprep.subr.mxu0 0.0
    %2509 = vmatpush1.xpose.msra.mxu0 0.0
    %2510 = vmatprep.subr.mxu0 0.0
    %2511 = vmatpush1.xpose.msra.mxu0 0.0
    %2512 = vmatprep.subr.mxu0 0.0
    %2513 = vmatpush1.xpose.msra.mxu0 0.0
    %2514 = vmatprep.subr.mxu0 0.0
    %2515 = vmatpush1.xpose.msra.mxu0 0.0
    %2516 = vmatprep.subr.mxu0 0.0
    %2517 = vmatpush1.xpose.msra.mxu0 0.0
    %2518 = vmatprep.subr.mxu0 0.0
    %2519 = vmatpush1.xpose.msra.mxu0 0.0
    %2520 = vmatprep.subr.mxu0 0.0
    %2521 = vmatpush1.xpose.msra.mxu0 0.0
    %2522 = vmatprep.subr.mxu0 0.0
    %2523 = vmatpush1.xpose.msra.mxu0 0.0
    %2524 = vmatprep.subr.mxu0 0.0
    %2525 = vmatpush1.xpose.msra.mxu0 0.0
    %2526 = vmatprep.subr.mxu0 0.0
    %2527 = vmatpush1.xpose.msra.mxu0 0.0
    %2528 = vmatprep.subr.mxu0 0.0
    %2529 = vmatpush1.xpose.msra.mxu0 0.0
    %2530 = vmatprep.subr.mxu0 0.0
    %2531 = vmatpush1.xpose.msra.mxu0 0.0
    %2532 = vmatprep.subr.mxu0 0.0
    %2533 = vmatpush1.xpose.msra.mxu0 0.0
    %2534 = vmatprep.subr.mxu0 0.0
    %2535 = vmatpush1.xpose.msra.mxu0 0.0
    %2536 = vmatprep.subr.mxu0 0.0
    %2537 = vmatpush1.xpose.msra.mxu0 0.0
    %2538 = vmatprep.subr.mxu0 0.0
    %2539 = vmatpush1.xpose.msra.mxu0 0.0
    %2540 = vmatprep.mubr.f32.mxu0 0.0
    %2541 = vmatmul.mubr.f32.gmra.mrb[0].mxu0 %v2472
    %v2542 = vpop.f32.mrb[0].mxu0
    %v2543 = vadd.f32 0.0, %v2542
    %v2544 = vpop.f32.mrb[0].mxu0
    %2545 = vdwg.mxu0
    %2546 = vrot.lane.b32.xlu0 %v263, 96
    %v2547 = vpop.permute.xlu0 %2546
    %2548 = vrot.lane.b32.xlu0 %v263, 32
    %v2549 = vpop.permute.xlu0 %2548
    %v2550 = vsel %vm60, %v2547, 0
    %v2552 = vsel %vm60, %v2549, 0
    %2554 = vmatprep.subr.mxu0 0.0
    %2555 = vmatpush1.xpose.msra.mxu0 %v2552
    %2556 = vmatprep.subr.mxu0 0.0
    %2557 = vmatpush1.xpose.msra.mxu0 0.0
    %2558 = vmatprep.subr.mxu0 0.0
    %2559 = vmatpush1.xpose.msra.mxu0 0.0
    %2560 = vmatprep.subr.mxu0 0.0
    %2561 = vmatpush1.xpose.msra.mxu0 0.0
    %2562 = vmatprep.subr.mxu0 0.0
    %2563 = vmatpush1.xpose.msra.mxu0 0.0
    %2564 = vmatprep.subr.mxu0 0.0
    %2565 = vmatpush1.xpose.msra.mxu0 0.0
    %2566 = vmatprep.subr.mxu0 0.0
    %2567 = vmatpush1.xpose.msra.mxu0 0.0
    %2568 = vmatprep.subr.mxu0 0.0
    %2569 = vmatpush1.xpose.msra.mxu0 0.0
    %2570 = vmatprep.subr.mxu0 0.0
    %2571 = vmatpush1.xpose.msra.mxu0 0.0
    %2572 = vmatprep.subr.mxu0 0.0
    %2573 = vmatpush1.xpose.msra.mxu0 0.0
    %2574 = vmatprep.subr.mxu0 0.0
    %2575 = vmatpush1.xpose.msra.mxu0 0.0
    %2576 = vmatprep.subr.mxu0 0.0
    %2577 = vmatpush1.xpose.msra.mxu0 0.0
    %2578 = vmatprep.subr.mxu0 0.0
    %2579 = vmatpush1.xpose.msra.mxu0 0.0
    %2580 = vmatprep.subr.mxu0 0.0
    %2581 = vmatpush1.xpose.msra.mxu0 0.0
    %2582 = vmatprep.subr.mxu0 0.0
    %2583 = vmatpush1.xpose.msra.mxu0 0.0
    %2584 = vmatprep.subr.mxu0 0.0
    %2585 = vmatpush1.xpose.msra.mxu0 0.0
    %2586 = vmatprep.subr.mxu0 0.0
    %2587 = vmatpush1.xpose.msra.mxu0 0.0
    %2588 = vmatprep.subr.mxu0 0.0
    %2589 = vmatpush1.xpose.msra.mxu0 0.0
    %2590 = vmatprep.subr.mxu0 0.0
    %2591 = vmatpush1.xpose.msra.mxu0 0.0
    %2592 = vmatprep.subr.mxu0 0.0
    %2593 = vmatpush1.xpose.msra.mxu0 0.0
    %2594 = vmatprep.subr.mxu0 0.0
    %2595 = vmatpush1.xpose.msra.mxu0 0.0
    %2596 = vmatprep.subr.mxu0 0.0
    %2597 = vmatpush1.xpose.msra.mxu0 0.0
    %2598 = vmatprep.subr.mxu0 0.0
    %2599 = vmatpush1.xpose.msra.mxu0 0.0
    %2600 = vmatprep.subr.mxu0 0.0
    %2601 = vmatpush1.xpose.msra.mxu0 0.0
    %2602 = vmatprep.subr.mxu0 0.0
    %2603 = vmatpush1.xpose.msra.mxu0 0.0
    %2604 = vmatprep.subr.mxu0 0.0
    %2605 = vmatpush1.xpose.msra.mxu0 0.0
    %2606 = vmatprep.subr.mxu0 0.0
    %2607 = vmatpush1.xpose.msra.mxu0 0.0
    %2608 = vmatprep.subr.mxu0 0.0
    %2609 = vmatpush1.xpose.msra.mxu0 0.0
    %2610 = vmatprep.subr.mxu0 0.0
    %2611 = vmatpush1.xpose.msra.mxu0 0.0
    %2612 = vmatprep.subr.mxu0 0.0
    %2613 = vmatpush1.xpose.msra.mxu0 0.0
    %2614 = vmatprep.subr.mxu0 0.0
    %2615 = vmatpush1.xpose.msra.mxu0 0.0
    %2616 = vmatprep.subr.mxu0 0.0
    %2617 = vmatpush1.xpose.msra.mxu0 0.0
    %2618 = vmatprep.mubr.f32.mxu0 0.0
    %2619 = vmatmul.mubr.f32.gmra.mrb[0].mxu0 %v2550
    %v2620 = vpop.f32.mrb[0].mxu0
    %v2621 = vadd.f32 0.0, %v2620
    %v2622 = vpop.f32.mrb[0].mxu0
    %2623 = vdwg.mxu0
    %2624 = vrot.lane.b32.xlu0 %v267, 96
    %v2625 = vpop.permute.xlu0 %2624
    %2626 = vrot.lane.b32.xlu0 %v267, 32
    %v2627 = vpop.permute.xlu0 %2626
    %v2628 = vsel %vm60, %v2625, 0
    %v2630 = vsel %vm60, %v2627, 0
    %2632 = vmatprep.subr.mxu0 0.0
    %2633 = vmatpush1.xpose.msra.mxu0 %v2630
    %2634 = vmatprep.subr.mxu0 0.0
    %2635 = vmatpush1.xpose.msra.mxu0 0.0
    %2636 = vmatprep.subr.mxu0 0.0
    %2637 = vmatpush1.xpose.msra.mxu0 0.0
    %2638 = vmatprep.subr.mxu0 0.0
    %2639 = vmatpush1.xpose.msra.mxu0 0.0
    %2640 = vmatprep.subr.mxu0 0.0
    %2641 = vmatpush1.xpose.msra.mxu0 0.0
    %2642 = vmatprep.subr.mxu0 0.0
    %2643 = vmatpush1.xpose.msra.mxu0 0.0
    %2644 = vmatprep.subr.mxu0 0.0
    %2645 = vmatpush1.xpose.msra.mxu0 0.0
    %2646 = vmatprep.subr.mxu0 0.0
    %2647 = vmatpush1.xpose.msra.mxu0 0.0
    %2648 = vmatprep.subr.mxu0 0.0
    %2649 = vmatpush1.xpose.msra.mxu0 0.0
    %2650 = vmatprep.subr.mxu0 0.0
    %2651 = vmatpush1.xpose.msra.mxu0 0.0
    %2652 = vmatprep.subr.mxu0 0.0
    %2653 = vmatpush1.xpose.msra.mxu0 0.0
    %2654 = vmatprep.subr.mxu0 0.0
    %2655 = vmatpush1.xpose.msra.mxu0 0.0
    %2656 = vmatprep.subr.mxu0 0.0
    %2657 = vmatpush1.xpose.msra.mxu0 0.0
    %2658 = vmatprep.subr.mxu0 0.0
    %2659 = vmatpush1.xpose.msra.mxu0 0.0
    %2660 = vmatprep.subr.mxu0 0.0
    %2661 = vmatpush1.xpose.msra.mxu0 0.0
    %2662 = vmatprep.subr.mxu0 0.0
    %2663 = vmatpush1.xpose.msra.mxu0 0.0
    %2664 = vmatprep.subr.mxu0 0.0
    %2665 = vmatpush1.xpose.msra.mxu0 0.0
    %2666 = vmatprep.subr.mxu0 0.0
    %2667 = vmatpush1.xpose.msra.mxu0 0.0
    %2668 = vmatprep.subr.mxu0 0.0
    %2669 = vmatpush1.xpose.msra.mxu0 0.0
    %2670 = vmatprep.subr.mxu0 0.0
    %2671 = vmatpush1.xpose.msra.mxu0 0.0
    %2672 = vmatprep.subr.mxu0 0.0
    %2673 = vmatpush1.xpose.msra.mxu0 0.0
    %2674 = vmatprep.subr.mxu0 0.0
    %2675 = vmatpush1.xpose.msra.mxu0 0.0
    %2676 = vmatprep.subr.mxu0 0.0
    %2677 = vmatpush1.xpose.msra.mxu0 0.0
    %2678 = vmatprep.subr.mxu0 0.0
    %2679 = vmatpush1.xpose.msra.mxu0 0.0
    %2680 = vmatprep.subr.mxu0 0.0
    %2681 = vmatpush1.xpose.msra.mxu0 0.0
    %2682 = vmatprep.subr.mxu0 0.0
    %2683 = vmatpush1.xpose.msra.mxu0 0.0
    %2684 = vmatprep.subr.mxu0 0.0
    %2685 = vmatpush1.xpose.msra.mxu0 0.0
    %2686 = vmatprep.subr.mxu0 0.0
    %2687 = vmatpush1.xpose.msra.mxu0 0.0
    %2688 = vmatprep.subr.mxu0 0.0
    %2689 = vmatpush1.xpose.msra.mxu0 0.0
    %2690 = vmatprep.subr.mxu0 0.0
    %2691 = vmatpush1.xpose.msra.mxu0 0.0
    %2692 = vmatprep.subr.mxu0 0.0
    %2693 = vmatpush1.xpose.msra.mxu0 0.0
    %2694 = vmatprep.subr.mxu0 0.0
    %2695 = vmatpush1.xpose.msra.mxu0 0.0
    %2696 = vmatprep.mubr.f32.mxu0 0.0
    %2697 = vmatmul.mubr.f32.gmra.mrb[0].mxu0 %v2628
    %v2698 = vpop.f32.mrb[0].mxu0
    %v2699 = vadd.f32 0.0, %v2698
    %v2700 = vpop.f32.mrb[0].mxu0
    %2701 = vdwg.mxu0
    %v2702 = vsel %vm733, %v2309, -inf
    %2703 = vmax.xlane.f32.xlu0 %v2702
    %v2704 = vpop.xlane.xlu0 %2703
    %v2705 = vsel %vm733, %v2387, -inf
    %2706 = vmax.xlane.f32.xlu0 %v2705
    %v2707 = vpop.xlane.xlu0 %2706
    %v2708 = vsel %vm733, %v2465, -inf
    %2709 = vmax.xlane.f32.xlu0 %v2708
    %v2710 = vpop.xlane.xlu0 %2709
    %v2711 = vsel %vm733, %v2543, -inf
    %2712 = vmax.xlane.f32.xlu0 %v2711
    %v2713 = vpop.xlane.xlu0 %2712
    %v2714 = vsel %vm733, %v2621, -inf
    %2715 = vmax.xlane.f32.xlu0 %v2714
    %v2716 = vpop.xlane.xlu0 %2715
    %v2717 = vsel %vm733, %v2699, -inf
    %2718 = vmax.xlane.f32.xlu0 %v2717
    %v2719 = vpop.xlane.xlu0 %2718
    %v2720 = vsub.f32 %v2309, %v2704
    %v2721 = vsub.f32 %v2387, %v2707
    %v2722 = vsub.f32 %v2465, %v2710
    %v2723 = vsub.f32 %v2543, %v2713
    %v2724 = vsub.f32 %v2621, %v2716
    %v2725 = vsub.f32 %v2699, %v2719
    %v2726 = vmul.f32 %v2720, 1.442695
    %v2727 = vpow.pop %v2726
    %v2728 = vmul.f32 %v2721, 1.442695
    %v2729 = vpow.pop %v2728
    %v2730 = vmul.f32 %v2722, 1.442695
    %v2731 = vpow.pop %v2730
    %v2732 = vmul.f32 %v2723, 1.442695
    %v2733 = vpow.pop %v2732
    %v2734 = vmul.f32 %v2724, 1.442695
    %v2735 = vpow.pop %v2734
    %v2736 = vmul.f32 %v2725, 1.442695
    %v2737 = vpow.pop %v2736
    %v2738 = vsel %vm733, %v2727, 0.0
    %2739 = vadd.xlane.f32.xlu0 %v2738
    %v2740 = vpop.xlane.xlu0 %2739
    %v2741 = vsel %vm733, %v2729, 0.0
    %2742 = vadd.xlane.f32.xlu0 %v2741
    %v2743 = vpop.xlane.xlu0 %2742
    %v2744 = vsel %vm733, %v2731, 0.0
    %2745 = vadd.xlane.f32.xlu0 %v2744
    %v2746 = vpop.xlane.xlu0 %2745
    %v2747 = vsel %vm733, %v2733, 0.0
    %2748 = vadd.xlane.f32.xlu0 %v2747
    %v2749 = vpop.xlane.xlu0 %2748
    %v2750 = vsel %vm733, %v2735, 0.0
    %2751 = vadd.xlane.f32.xlu0 %v2750
    %v2752 = vpop.xlane.xlu0 %2751
    %v2753 = vsel %vm733, %v2737, 0.0
    %2754 = vadd.xlane.f32.xlu0 %v2753
    %v2755 = vpop.xlane.xlu0 %2754
    %v2756 = vrcp.pop %v2740
    %v2757 = vrcp.pop %v2743
    %v2758 = vrcp.pop %v2746
    %v2759 = vrcp.pop %v2749
    %v2760 = vrcp.pop %v2752
    %v2761 = vrcp.pop %v2755
    %v2762 = vmul.f32 %v2727, %v2756
    %v2763 = vmul.f32 %v2729, %v2757
    %v2764 = vmul.f32 %v2731, %v2758
    %v2765 = vmul.f32 %v2733, %v2759
    %v2766 = vmul.f32 %v2735, %v2760
    %v2767 = vmul.f32 %v2737, %v2761
    %2768 = vrot.lane.b32.xlu0 %v245, 96
    %v2769 = vpop.permute.xlu0 %2768
    %v2772 = vsel %vm733, %v2762, 0
    %2774 = vmatprep.subr.mxu0 0.0
    %2775 = vmatpush1.msra.mxu0 %v2769
    %2776 = vmatprep.subr.mxu0 0.0
    %2777 = vmatpush1.msra.mxu0 0.0
    %2778 = vmatprep.subr.mxu0 0.0
    %2779 = vmatpush1.msra.mxu0 0.0
    %2780 = vmatprep.subr.mxu0 0.0
    %2781 = vmatpush1.msra.mxu0 0.0
    %2782 = vmatprep.subr.mxu0 0.0
    %2783 = vmatpush1.msra.mxu0 0.0
    %2784 = vmatprep.subr.mxu0 0.0
    %2785 = vmatpush1.msra.mxu0 0.0
    %2786 = vmatprep.subr.mxu0 0.0
    %2787 = vmatpush1.msra.mxu0 0.0
    %2788 = vmatprep.subr.mxu0 0.0
    %2789 = vmatpush1.msra.mxu0 0.0
    %2790 = vmatprep.subr.mxu0 0.0
    %2791 = vmatpush1.msra.mxu0 0.0
    %2792 = vmatprep.subr.mxu0 0.0
    %2793 = vmatpush1.msra.mxu0 0.0
    %2794 = vmatprep.subr.mxu0 0.0
    %2795 = vmatpush1.msra.mxu0 0.0
    %2796 = vmatprep.subr.mxu0 0.0
    %2797 = vmatpush1.msra.mxu0 0.0
    %2798 = vmatprep.subr.mxu0 0.0
    %2799 = vmatpush1.msra.mxu0 0.0
    %2800 = vmatprep.subr.mxu0 0.0
    %2801 = vmatpush1.msra.mxu0 0.0
    %2802 = vmatprep.subr.mxu0 0.0
    %2803 = vmatpush1.msra.mxu0 0.0
    %2804 = vmatprep.subr.mxu0 0.0
    %2805 = vmatpush1.msra.mxu0 0.0
    %2806 = vmatprep.subr.mxu0 0.0
    %2807 = vmatpush1.msra.mxu0 0.0
    %2808 = vmatprep.subr.mxu0 0.0
    %2809 = vmatpush1.msra.mxu0 0.0
    %2810 = vmatprep.subr.mxu0 0.0
    %2811 = vmatpush1.msra.mxu0 0.0
    %2812 = vmatprep.subr.mxu0 0.0
    %2813 = vmatpush1.msra.mxu0 0.0
    %2814 = vmatprep.subr.mxu0 0.0
    %2815 = vmatpush1.msra.mxu0 0.0
    %2816 = vmatprep.subr.mxu0 0.0
    %2817 = vmatpush1.msra.mxu0 0.0
    %2818 = vmatprep.subr.mxu0 0.0
    %2819 = vmatpush1.msra.mxu0 0.0
    %2820 = vmatprep.subr.mxu0 0.0
    %2821 = vmatpush1.msra.mxu0 0.0
    %2822 = vmatprep.subr.mxu0 0.0
    %2823 = vmatpush1.msra.mxu0 0.0
    %2824 = vmatprep.subr.mxu0 0.0
    %2825 = vmatpush1.msra.mxu0 0.0
    %2826 = vmatprep.subr.mxu0 0.0
    %2827 = vmatpush1.msra.mxu0 0.0
    %2828 = vmatprep.subr.mxu0 0.0
    %2829 = vmatpush1.msra.mxu0 0.0
    %2830 = vmatprep.subr.mxu0 0.0
    %2831 = vmatpush1.msra.mxu0 0.0
    %2832 = vmatprep.subr.mxu0 0.0
    %2833 = vmatpush1.msra.mxu0 0.0
    %2834 = vmatprep.subr.mxu0 0.0
    %2835 = vmatpush1.msra.mxu0 0.0
    %2836 = vmatprep.subr.mxu0 0.0
    %2837 = vmatpush1.msra.mxu0 0.0
    %2838 = vmatprep.mubr.f32.mxu0 0.0
    %2839 = vmatmul.mubr.f32.gmra.mrb[0].mxu0 %v2772
    %v2840 = vpop.f32.mrb[0].mxu0
    %v2841 = vadd.f32 0.0, %v2840
    %v2842 = vpop.f32.mrb[0].mxu0
    %2843 = vdwg.mxu0
    %2844 = vrot.lane.b32.xlu0 %v249, 96
    %v2845 = vpop.permute.xlu0 %2844
    %v2848 = vsel %vm733, %v2763, 0
    %2850 = vmatprep.subr.mxu0 0.0
    %2851 = vmatpush1.msra.mxu0 %v2845
    %2852 = vmatprep.subr.mxu0 0.0
    %2853 = vmatpush1.msra.mxu0 0.0
    %2854 = vmatprep.subr.mxu0 0.0
    %2855 = vmatpush1.msra.mxu0 0.0
    %2856 = vmatprep.subr.mxu0 0.0
    %2857 = vmatpush1.msra.mxu0 0.0
    %2858 = vmatprep.subr.mxu0 0.0
    %2859 = vmatpush1.msra.mxu0 0.0
    %2860 = vmatprep.subr.mxu0 0.0
    %2861 = vmatpush1.msra.mxu0 0.0
    %2862 = vmatprep.subr.mxu0 0.0
    %2863 = vmatpush1.msra.mxu0 0.0
    %2864 = vmatprep.subr.mxu0 0.0
    %2865 = vmatpush1.msra.mxu0 0.0
    %2866 = vmatprep.subr.mxu0 0.0
    %2867 = vmatpush1.msra.mxu0 0.0
    %2868 = vmatprep.subr.mxu0 0.0
    %2869 = vmatpush1.msra.mxu0 0.0
    %2870 = vmatprep.subr.mxu0 0.0
    %2871 = vmatpush1.msra.mxu0 0.0
    %2872 = vmatprep.subr.mxu0 0.0
    %2873 = vmatpush1.msra.mxu0 0.0
    %2874 = vmatprep.subr.mxu0 0.0
    %2875 = vmatpush1.msra.mxu0 0.0
    %2876 = vmatprep.subr.mxu0 0.0
    %2877 = vmatpush1.msra.mxu0 0.0
    %2878 = vmatprep.subr.mxu0 0.0
    %2879 = vmatpush1.msra.mxu0 0.0
    %2880 = vmatprep.subr.mxu0 0.0
    %2881 = vmatpush1.msra.mxu0 0.0
    %2882 = vmatprep.subr.mxu0 0.0
    %2883 = vmatpush1.msra.mxu0 0.0
    %2884 = vmatprep.subr.mxu0 0.0
    %2885 = vmatpush1.msra.mxu0 0.0
    %2886 = vmatprep.subr.mxu0 0.0
    %2887 = vmatpush1.msra.mxu0 0.0
    %2888 = vmatprep.subr.mxu0 0.0
    %2889 = vmatpush1.msra.mxu0 0.0
    %2890 = vmatprep.subr.mxu0 0.0
    %2891 = vmatpush1.msra.mxu0 0.0
    %2892 = vmatprep.subr.mxu0 0.0
    %2893 = vmatpush1.msra.mxu0 0.0
    %2894 = vmatprep.subr.mxu0 0.0
    %2895 = vmatpush1.msra.mxu0 0.0
    %2896 = vmatprep.subr.mxu0 0.0
    %2897 = vmatpush1.msra.mxu0 0.0
    %2898 = vmatprep.subr.mxu0 0.0
    %2899 = vmatpush1.msra.mxu0 0.0
    %2900 = vmatprep.subr.mxu0 0.0
    %2901 = vmatpush1.msra.mxu0 0.0
    %2902 = vmatprep.subr.mxu0 0.0
    %2903 = vmatpush1.msra.mxu0 0.0
    %2904 = vmatprep.subr.mxu0 0.0
    %2905 = vmatpush1.msra.mxu0 0.0
    %2906 = vmatprep.subr.mxu0 0.0
    %2907 = vmatpush1.msra.mxu0 0.0
    %2908 = vmatprep.subr.mxu0 0.0
    %2909 = vmatpush1.msra.mxu0 0.0
    %2910 = vmatprep.subr.mxu0 0.0
    %2911 = vmatpush1.msra.mxu0 0.0
    %2912 = vmatprep.subr.mxu0 0.0
    %2913 = vmatpush1.msra.mxu0 0.0
    %2914 = vmatprep.mubr.f32.mxu0 0.0
    %2915 = vmatmul.mubr.f32.gmra.mrb[0].mxu0 %v2848
    %v2916 = vpop.f32.mrb[0].mxu0
    %v2917 = vadd.f32 0.0, %v2916
    %v2918 = vpop.f32.mrb[0].mxu0
    %2919 = vdwg.mxu0
    %2920 = vrot.lane.b32.xlu0 %v255, 96
    %v2921 = vpop.permute.xlu0 %2920
    %v2924 = vsel %vm733, %v2764, 0
    %2926 = vmatprep.subr.mxu0 0.0
    %2927 = vmatpush1.msra.mxu0 %v2921
    %2928 = vmatprep.subr.mxu0 0.0
    %2929 = vmatpush1.msra.mxu0 0.0
    %2930 = vmatprep.subr.mxu0 0.0
    %2931 = vmatpush1.msra.mxu0 0.0
    %2932 = vmatprep.subr.mxu0 0.0
    %2933 = vmatpush1.msra.mxu0 0.0
    %2934 = vmatprep.subr.mxu0 0.0
    %2935 = vmatpush1.msra.mxu0 0.0
    %2936 = vmatprep.subr.mxu0 0.0
    %2937 = vmatpush1.msra.mxu0 0.0
    %2938 = vmatprep.subr.mxu0 0.0
    %2939 = vmatpush1.msra.mxu0 0.0
    %2940 = vmatprep.subr.mxu0 0.0
    %2941 = vmatpush1.msra.mxu0 0.0
    %2942 = vmatprep.subr.mxu0 0.0
    %2943 = vmatpush1.msra.mxu0 0.0
    %2944 = vmatprep.subr.mxu0 0.0
    %2945 = vmatpush1.msra.mxu0 0.0
    %2946 = vmatprep.subr.mxu0 0.0
    %2947 = vmatpush1.msra.mxu0 0.0
    %2948 = vmatprep.subr.mxu0 0.0
    %2949 = vmatpush1.msra.mxu0 0.0
    %2950 = vmatprep.subr.mxu0 0.0
    %2951 = vmatpush1.msra.mxu0 0.0
    %2952 = vmatprep.subr.mxu0 0.0
    %2953 = vmatpush1.msra.mxu0 0.0
    %2954 = vmatprep.subr.mxu0 0.0
    %2955 = vmatpush1.msra.mxu0 0.0
    %2956 = vmatprep.subr.mxu0 0.0
    %2957 = vmatpush1.msra.mxu0 0.0
    %2958 = vmatprep.subr.mxu0 0.0
    %2959 = vmatpush1.msra.mxu0 0.0
    %2960 = vmatprep.subr.mxu0 0.0
    %2961 = vmatpush1.msra.mxu0 0.0
    %2962 = vmatprep.subr.mxu0 0.0
    %2963 = vmatpush1.msra.mxu0 0.0
    %2964 = vmatprep.subr.mxu0 0.0
    %2965 = vmatpush1.msra.mxu0 0.0
    %2966 = vmatprep.subr.mxu0 0.0
    %2967 = vmatpush1.msra.mxu0 0.0
    %2968 = vmatprep.subr.mxu0 0.0
    %2969 = vmatpush1.msra.mxu0 0.0
    %2970 = vmatprep.subr.mxu0 0.0
    %2971 = vmatpush1.msra.mxu0 0.0
    %2972 = vmatprep.subr.mxu0 0.0
    %2973 = vmatpush1.msra.mxu0 0.0
    %2974 = vmatprep.subr.mxu0 0.0
    %2975 = vmatpush1.msra.mxu0 0.0
    %2976 = vmatprep.subr.mxu0 0.0
    %2977 = vmatpush1.msra.mxu0 0.0
    %2978 = vmatprep.subr.mxu0 0.0
    %2979 = vmatpush1.msra.mxu0 0.0
    %2980 = vmatprep.subr.mxu0 0.0
    %2981 = vmatpush1.msra.mxu0 0.0
    %2982 = vmatprep.subr.mxu0 0.0
    %2983 = vmatpush1.msra.mxu0 0.0
    %2984 = vmatprep.subr.mxu0 0.0
    %2985 = vmatpush1.msra.mxu0 0.0
    %2986 = vmatprep.subr.mxu0 0.0
    %2987 = vmatpush1.msra.mxu0 0.0
    %2988 = vmatprep.subr.mxu0 0.0
    %2989 = vmatpush1.msra.mxu0 0.0
    %2990 = vmatprep.mubr.f32.mxu0 0.0
    %2991 = vmatmul.mubr.f32.gmra.mrb[0].mxu0 %v2924
    %v2992 = vpop.f32.mrb[0].mxu0
    %v2993 = vadd.f32 0.0, %v2992
    %v2994 = vpop.f32.mrb[0].mxu0
    %2995 = vdwg.mxu0
    %2996 = vrot.lane.b32.xlu0 %v259, 96
    %v2997 = vpop.permute.xlu0 %2996
    %v3000 = vsel %vm733, %v2765, 0
    %3002 = vmatprep.subr.mxu0 0.0
    %3003 = vmatpush1.msra.mxu0 %v2997
    %3004 = vmatprep.subr.mxu0 0.0
    %3005 = vmatpush1.msra.mxu0 0.0
    %3006 = vmatprep.subr.mxu0 0.0
    %3007 = vmatpush1.msra.mxu0 0.0
    %3008 = vmatprep.subr.mxu0 0.0
    %3009 = vmatpush1.msra.mxu0 0.0
    %3010 = vmatprep.subr.mxu0 0.0
    %3011 = vmatpush1.msra.mxu0 0.0
    %3012 = vmatprep.subr.mxu0 0.0
    %3013 = vmatpush1.msra.mxu0 0.0
    %3014 = vmatprep.subr.mxu0 0.0
    %3015 = vmatpush1.msra.mxu0 0.0
    %3016 = vmatprep.subr.mxu0 0.0
    %3017 = vmatpush1.msra.mxu0 0.0
    %3018 = vmatprep.subr.mxu0 0.0
    %3019 = vmatpush1.msra.mxu0 0.0
    %3020 = vmatprep.subr.mxu0 0.0
    %3021 = vmatpush1.msra.mxu0 0.0
    %3022 = vmatprep.subr.mxu0 0.0
    %3023 = vmatpush1.msra.mxu0 0.0
    %3024 = vmatprep.subr.mxu0 0.0
    %3025 = vmatpush1.msra.mxu0 0.0
    %3026 = vmatprep.subr.mxu0 0.0
    %3027 = vmatpush1.msra.mxu0 0.0
    %3028 = vmatprep.subr.mxu0 0.0
    %3029 = vmatpush1.msra.mxu0 0.0
    %3030 = vmatprep.subr.mxu0 0.0
    %3031 = vmatpush1.msra.mxu0 0.0
    %3032 = vmatprep.subr.mxu0 0.0
    %3033 = vmatpush1.msra.mxu0 0.0
    %3034 = vmatprep.subr.mxu0 0.0
    %3035 = vmatpush1.msra.mxu0 0.0
    %3036 = vmatprep.subr.mxu0 0.0
    %3037 = vmatpush1.msra.mxu0 0.0
    %3038 = vmatprep.subr.mxu0 0.0
    %3039 = vmatpush1.msra.mxu0 0.0
    %3040 = vmatprep.subr.mxu0 0.0
    %3041 = vmatpush1.msra.mxu0 0.0
    %3042 = vmatprep.subr.mxu0 0.0
    %3043 = vmatpush1.msra.mxu0 0.0
    %3044 = vmatprep.subr.mxu0 0.0
    %3045 = vmatpush1.msra.mxu0 0.0
    %3046 = vmatprep.subr.mxu0 0.0
    %3047 = vmatpush1.msra.mxu0 0.0
    %3048 = vmatprep.subr.mxu0 0.0
    %3049 = vmatpush1.msra.mxu0 0.0
    %3050 = vmatprep.subr.mxu0 0.0
    %3051 = vmatpush1.msra.mxu0 0.0
    %3052 = vmatprep.subr.mxu0 0.0
    %3053 = vmatpush1.msra.mxu0 0.0
    %3054 = vmatprep.subr.mxu0 0.0
    %3055 = vmatpush1.msra.mxu0 0.0
    %3056 = vmatprep.subr.mxu0 0.0
    %3057 = vmatpush1.msra.mxu0 0.0
    %3058 = vmatprep.subr.mxu0 0.0
    %3059 = vmatpush1.msra.mxu0 0.0
    %3060 = vmatprep.subr.mxu0 0.0
    %3061 = vmatpush1.msra.mxu0 0.0
    %3062 = vmatprep.subr.mxu0 0.0
    %3063 = vmatpush1.msra.mxu0 0.0
    %3064 = vmatprep.subr.mxu0 0.0
    %3065 = vmatpush1.msra.mxu0 0.0
    %3066 = vmatprep.mubr.f32.mxu0 0.0
    %3067 = vmatmul.mubr.f32.gmra.mrb[0].mxu0 %v3000
    %v3068 = vpop.f32.mrb[0].mxu0
    %v3069 = vadd.f32 0.0, %v3068
    %v3070 = vpop.f32.mrb[0].mxu0
    %3071 = vdwg.mxu0
    %3072 = vrot.lane.b32.xlu0 %v265, 96
    %v3073 = vpop.permute.xlu0 %3072
    %v3076 = vsel %vm733, %v2766, 0
    %3078 = vmatprep.subr.mxu0 0.0
    %3079 = vmatpush1.msra.mxu0 %v3073
    %3080 = vmatprep.subr.mxu0 0.0
    %3081 = vmatpush1.msra.mxu0 0.0
    %3082 = vmatprep.subr.mxu0 0.0
    %3083 = vmatpush1.msra.mxu0 0.0
    %3084 = vmatprep.subr.mxu0 0.0
    %3085 = vmatpush1.msra.mxu0 0.0
    %3086 = vmatprep.subr.mxu0 0.0
    %3087 = vmatpush1.msra.mxu0 0.0
    %3088 = vmatprep.subr.mxu0 0.0
    %3089 = vmatpush1.msra.mxu0 0.0
    %3090 = vmatprep.subr.mxu0 0.0
    %3091 = vmatpush1.msra.mxu0 0.0
    %3092 = vmatprep.subr.mxu0 0.0
    %3093 = vmatpush1.msra.mxu0 0.0
    %3094 = vmatprep.subr.mxu0 0.0
    %3095 = vmatpush1.msra.mxu0 0.0
    %3096 = vmatprep.subr.mxu0 0.0
    %3097 = vmatpush1.msra.mxu0 0.0
    %3098 = vmatprep.subr.mxu0 0.0
    %3099 = vmatpush1.msra.mxu0 0.0
    %3100 = vmatprep.subr.mxu0 0.0
    %3101 = vmatpush1.msra.mxu0 0.0
    %3102 = vmatprep.subr.mxu0 0.0
    %3103 = vmatpush1.msra.mxu0 0.0
    %3104 = vmatprep.subr.mxu0 0.0
    %3105 = vmatpush1.msra.mxu0 0.0
    %3106 = vmatprep.subr.mxu0 0.0
    %3107 = vmatpush1.msra.mxu0 0.0
    %3108 = vmatprep.subr.mxu0 0.0
    %3109 = vmatpush1.msra.mxu0 0.0
    %3110 = vmatprep.subr.mxu0 0.0
    %3111 = vmatpush1.msra.mxu0 0.0
    %3112 = vmatprep.subr.mxu0 0.0
    %3113 = vmatpush1.msra.mxu0 0.0
    %3114 = vmatprep.subr.mxu0 0.0
    %3115 = vmatpush1.msra.mxu0 0.0
    %3116 = vmatprep.subr.mxu0 0.0
    %3117 = vmatpush1.msra.mxu0 0.0
    %3118 = vmatprep.subr.mxu0 0.0
    %3119 = vmatpush1.msra.mxu0 0.0
    %3120 = vmatprep.subr.mxu0 0.0
    %3121 = vmatpush1.msra.mxu0 0.0
    %3122 = vmatprep.subr.mxu0 0.0
    %3123 = vmatpush1.msra.mxu0 0.0
    %3124 = vmatprep.subr.mxu0 0.0
    %3125 = vmatpush1.msra.mxu0 0.0
    %3126 = vmatprep.subr.mxu0 0.0
    %3127 = vmatpush1.msra.mxu0 0.0
    %3128 = vmatprep.subr.mxu0 0.0
    %3129 = vmatpush1.msra.mxu0 0.0
    %3130 = vmatprep.subr.mxu0 0.0
    %3131 = vmatpush1.msra.mxu0 0.0
    %3132 = vmatprep.subr.mxu0 0.0
    %3133 = vmatpush1.msra.mxu0 0.0
    %3134 = vmatprep.subr.mxu0 0.0
    %3135 = vmatpush1.msra.mxu0 0.0
    %3136 = vmatprep.subr.mxu0 0.0
    %3137 = vmatpush1.msra.mxu0 0.0
    %3138 = vmatprep.subr.mxu0 0.0
    %3139 = vmatpush1.msra.mxu0 0.0
    %3140 = vmatprep.subr.mxu0 0.0
    %3141 = vmatpush1.msra.mxu0 0.0
    %3142 = vmatprep.mubr.f32.mxu0 0.0
    %3143 = vmatmul.mubr.f32.gmra.mrb[0].mxu0 %v3076
    %v3144 = vpop.f32.mrb[0].mxu0
    %v3145 = vadd.f32 0.0, %v3144
    %v3146 = vpop.f32.mrb[0].mxu0
    %3147 = vdwg.mxu0
    %3148 = vrot.lane.b32.xlu0 %v269, 96
    %v3149 = vpop.permute.xlu0 %3148
    %v3152 = vsel %vm733, %v2767, 0
    %3154 = vmatprep.subr.mxu0 0.0
    %3155 = vmatpush1.msra.mxu0 %v3149
    %3156 = vmatprep.subr.mxu0 0.0
    %3157 = vmatpush1.msra.mxu0 0.0
    %3158 = vmatprep.subr.mxu0 0.0
    %3159 = vmatpush1.msra.mxu0 0.0
    %3160 = vmatprep.subr.mxu0 0.0
    %3161 = vmatpush1.msra.mxu0 0.0
    %3162 = vmatprep.subr.mxu0 0.0
    %3163 = vmatpush1.msra.mxu0 0.0
    %3164 = vmatprep.subr.mxu0 0.0
    %3165 = vmatpush1.msra.mxu0 0.0
    %3166 = vmatprep.subr.mxu0 0.0
    %3167 = vmatpush1.msra.mxu0 0.0
    %3168 = vmatprep.subr.mxu0 0.0
    %3169 = vmatpush1.msra.mxu0 0.0
    %3170 = vmatprep.subr.mxu0 0.0
    %3171 = vmatpush1.msra.mxu0 0.0
    %3172 = vmatprep.subr.mxu0 0.0
    %3173 = vmatpush1.msra.mxu0 0.0
    %3174 = vmatprep.subr.mxu0 0.0
    %3175 = vmatpush1.msra.mxu0 0.0
    %3176 = vmatprep.subr.mxu0 0.0
    %3177 = vmatpush1.msra.mxu0 0.0
    %3178 = vmatprep.subr.mxu0 0.0
    %3179 = vmatpush1.msra.mxu0 0.0
    %3180 = vmatprep.subr.mxu0 0.0
    %3181 = vmatpush1.msra.mxu0 0.0
    %3182 = vmatprep.subr.mxu0 0.0
    %3183 = vmatpush1.msra.mxu0 0.0
    %3184 = vmatprep.subr.mxu0 0.0
    %3185 = vmatpush1.msra.mxu0 0.0
    %3186 = vmatprep.subr.mxu0 0.0
    %3187 = vmatpush1.msra.mxu0 0.0
    %3188 = vmatprep.subr.mxu0 0.0
    %3189 = vmatpush1.msra.mxu0 0.0
    %3190 = vmatprep.subr.mxu0 0.0
    %3191 = vmatpush1.msra.mxu0 0.0
    %3192 = vmatprep.subr.mxu0 0.0
    %3193 = vmatpush1.msra.mxu0 0.0
    %3194 = vmatprep.subr.mxu0 0.0
    %3195 = vmatpush1.msra.mxu0 0.0
    %3196 = vmatprep.subr.mxu0 0.0
    %3197 = vmatpush1.msra.mxu0 0.0
    %3198 = vmatprep.subr.mxu0 0.0
    %3199 = vmatpush1.msra.mxu0 0.0
    %3200 = vmatprep.subr.mxu0 0.0
    %3201 = vmatpush1.msra.mxu0 0.0
    %3202 = vmatprep.subr.mxu0 0.0
    %3203 = vmatpush1.msra.mxu0 0.0
    %3204 = vmatprep.subr.mxu0 0.0
    %3205 = vmatpush1.msra.mxu0 0.0
    %3206 = vmatprep.subr.mxu0 0.0
    %3207 = vmatpush1.msra.mxu0 0.0
    %3208 = vmatprep.subr.mxu0 0.0
    %3209 = vmatpush1.msra.mxu0 0.0
    %3210 = vmatprep.subr.mxu0 0.0
    %3211 = vmatpush1.msra.mxu0 0.0
    %3212 = vmatprep.subr.mxu0 0.0
    %3213 = vmatpush1.msra.mxu0 0.0
    %3214 = vmatprep.subr.mxu0 0.0
    %3215 = vmatpush1.msra.mxu0 0.0
    %3216 = vmatprep.subr.mxu0 0.0
    %3217 = vmatpush1.msra.mxu0 0.0
    %3218 = vmatprep.mubr.f32.mxu0 0.0
    %3219 = vmatmul.mubr.f32.gmra.mrb[0].mxu0 %v3152
    %v3220 = vpop.f32.mrb[0].mxu0
    %v3221 = vadd.f32 0.0, %v3220
    %v3222 = vpop.f32.mrb[0].mxu0
    %3223 = vdwg.mxu0
    %3224 = vrot.lane.b32.xlu0 %v243, 80
    %v3225 = vpop.permute.xlu0 %3224
    %3226 = vrot.lane.b32.xlu0 %v243, 16
    %v3227 = vpop.permute.xlu0 %3226
    %v3228 = vsel %vm60, %v3225, 0
    %v3230 = vsel %vm60, %v3227, 0
    %3232 = vmatprep.subr.mxu0 0.0
    %3233 = vmatpush1.xpose.msra.mxu0 %v3230
    %3234 = vmatprep.subr.mxu0 0.0
    %3235 = vmatpush1.xpose.msra.mxu0 0.0
    %3236 = vmatprep.subr.mxu0 0.0
    %3237 = vmatpush1.xpose.msra.mxu0 0.0
    %3238 = vmatprep.subr.mxu0 0.0
    %3239 = vmatpush1.xpose.msra.mxu0 0.0
    %3240 = vmatprep.subr.mxu0 0.0
    %3241 = vmatpush1.xpose.msra.mxu0 0.0
    %3242 = vmatprep.subr.mxu0 0.0
    %3243 = vmatpush1.xpose.msra.mxu0 0.0
    %3244 = vmatprep.subr.mxu0 0.0
    %3245 = vmatpush1.xpose.msra.mxu0 0.0
    %3246 = vmatprep.subr.mxu0 0.0
    %3247 = vmatpush1.xpose.msra.mxu0 0.0
    %3248 = vmatprep.subr.mxu0 0.0
    %3249 = vmatpush1.xpose.msra.mxu0 0.0
    %3250 = vmatprep.subr.mxu0 0.0
    %3251 = vmatpush1.xpose.msra.mxu0 0.0
    %3252 = vmatprep.subr.mxu0 0.0
    %3253 = vmatpush1.xpose.msra.mxu0 0.0
    %3254 = vmatprep.subr.mxu0 0.0
    %3255 = vmatpush1.xpose.msra.mxu0 0.0
    %3256 = vmatprep.subr.mxu0 0.0
    %3257 = vmatpush1.xpose.msra.mxu0 0.0
    %3258 = vmatprep.subr.mxu0 0.0
    %3259 = vmatpush1.xpose.msra.mxu0 0.0
    %3260 = vmatprep.subr.mxu0 0.0
    %3261 = vmatpush1.xpose.msra.mxu0 0.0
    %3262 = vmatprep.subr.mxu0 0.0
    %3263 = vmatpush1.xpose.msra.mxu0 0.0
    %3264 = vmatprep.subr.mxu0 0.0
    %3265 = vmatpush1.xpose.msra.mxu0 0.0
    %3266 = vmatprep.subr.mxu0 0.0
    %3267 = vmatpush1.xpose.msra.mxu0 0.0
    %3268 = vmatprep.subr.mxu0 0.0
    %3269 = vmatpush1.xpose.msra.mxu0 0.0
    %3270 = vmatprep.subr.mxu0 0.0
    %3271 = vmatpush1.xpose.msra.mxu0 0.0
    %3272 = vmatprep.subr.mxu0 0.0
    %3273 = vmatpush1.xpose.msra.mxu0 0.0
    %3274 = vmatprep.subr.mxu0 0.0
    %3275 = vmatpush1.xpose.msra.mxu0 0.0
    %3276 = vmatprep.subr.mxu0 0.0
    %3277 = vmatpush1.xpose.msra.mxu0 0.0
    %3278 = vmatprep.subr.mxu0 0.0
    %3279 = vmatpush1.xpose.msra.mxu0 0.0
    %3280 = vmatprep.subr.mxu0 0.0
    %3281 = vmatpush1.xpose.msra.mxu0 0.0
    %3282 = vmatprep.subr.mxu0 0.0
    %3283 = vmatpush1.xpose.msra.mxu0 0.0
    %3284 = vmatprep.subr.mxu0 0.0
    %3285 = vmatpush1.xpose.msra.mxu0 0.0
    %3286 = vmatprep.subr.mxu0 0.0
    %3287 = vmatpush1.xpose.msra.mxu0 0.0
    %3288 = vmatprep.subr.mxu0 0.0
    %3289 = vmatpush1.xpose.msra.mxu0 0.0
    %3290 = vmatprep.subr.mxu0 0.0
    %3291 = vmatpush1.xpose.msra.mxu0 0.0
    %3292 = vmatprep.subr.mxu0 0.0
    %3293 = vmatpush1.xpose.msra.mxu0 0.0
    %3294 = vmatprep.subr.mxu0 0.0
    %3295 = vmatpush1.xpose.msra.mxu0 0.0
    %3296 = vmatprep.mubr.f32.mxu0 0.0
    %3297 = vmatmul.mubr.f32.gmra.mrb[0].mxu0 %v3228
    %v3298 = vpop.f32.mrb[0].mxu0
    %v3299 = vadd.f32 0.0, %v3298
    %v3300 = vpop.f32.mrb[0].mxu0
    %3301 = vdwg.mxu0
    %3302 = vrot.lane.b32.xlu0 %v247, 80
    %v3303 = vpop.permute.xlu0 %3302
    %3304 = vrot.lane.b32.xlu0 %v247, 16
    %v3305 = vpop.permute.xlu0 %3304
    %v3306 = vsel %vm60, %v3303, 0
    %v3308 = vsel %vm60, %v3305, 0
    %3310 = vmatprep.subr.mxu0 0.0
    %3311 = vmatpush1.xpose.msra.mxu0 %v3308
    %3312 = vmatprep.subr.mxu0 0.0
    %3313 = vmatpush1.xpose.msra.mxu0 0.0
    %3314 = vmatprep.subr.mxu0 0.0
    %3315 = vmatpush1.xpose.msra.mxu0 0.0
    %3316 = vmatprep.subr.mxu0 0.0
    %3317 = vmatpush1.xpose.msra.mxu0 0.0
    %3318 = vmatprep.subr.mxu0 0.0
    %3319 = vmatpush1.xpose.msra.mxu0 0.0
    %3320 = vmatprep.subr.mxu0 0.0
    %3321 = vmatpush1.xpose.msra.mxu0 0.0
    %3322 = vmatprep.subr.mxu0 0.0
    %3323 = vmatpush1.xpose.msra.mxu0 0.0
    %3324 = vmatprep.subr.mxu0 0.0
    %3325 = vmatpush1.xpose.msra.mxu0 0.0
    %3326 = vmatprep.subr.mxu0 0.0
    %3327 = vmatpush1.xpose.msra.mxu0 0.0
    %3328 = vmatprep.subr.mxu0 0.0
    %3329 = vmatpush1.xpose.msra.mxu0 0.0
    %3330 = vmatprep.subr.mxu0 0.0
    %3331 = vmatpush1.xpose.msra.mxu0 0.0
    %3332 = vmatprep.subr.mxu0 0.0
    %3333 = vmatpush1.xpose.msra.mxu0 0.0
    %3334 = vmatprep.subr.mxu0 0.0
    %3335 = vmatpush1.xpose.msra.mxu0 0.0
    %3336 = vmatprep.subr.mxu0 0.0
    %3337 = vmatpush1.xpose.msra.mxu0 0.0
    %3338 = vmatprep.subr.mxu0 0.0
    %3339 = vmatpush1.xpose.msra.mxu0 0.0
    %3340 = vmatprep.subr.mxu0 0.0
    %3341 = vmatpush1.xpose.msra.mxu0 0.0
    %3342 = vmatprep.subr.mxu0 0.0
    %3343 = vmatpush1.xpose.msra.mxu0 0.0
    %3344 = vmatprep.subr.mxu0 0.0
    %3345 = vmatpush1.xpose.msra.mxu0 0.0
    %3346 = vmatprep.subr.mxu0 0.0
    %3347 = vmatpush1.xpose.msra.mxu0 0.0
    %3348 = vmatprep.subr.mxu0 0.0
    %3349 = vmatpush1.xpose.msra.mxu0 0.0
    %3350 = vmatprep.subr.mxu0 0.0
    %3351 = vmatpush1.xpose.msra.mxu0 0.0
    %3352 = vmatprep.subr.mxu0 0.0
    %3353 = vmatpush1.xpose.msra.mxu0 0.0
    %3354 = vmatprep.subr.mxu0 0.0
    %3355 = vmatpush1.xpose.msra.mxu0 0.0
    %3356 = vmatprep.subr.mxu0 0.0
    %3357 = vmatpush1.xpose.msra.mxu0 0.0
    %3358 = vmatprep.subr.mxu0 0.0
    %3359 = vmatpush1.xpose.msra.mxu0 0.0
    %3360 = vmatprep.subr.mxu0 0.0
    %3361 = vmatpush1.xpose.msra.mxu0 0.0
    %3362 = vmatprep.subr.mxu0 0.0
    %3363 = vmatpush1.xpose.msra.mxu0 0.0
    %3364 = vmatprep.subr.mxu0 0.0
    %3365 = vmatpush1.xpose.msra.mxu0 0.0
    %3366 = vmatprep.subr.mxu0 0.0
    %3367 = vmatpush1.xpose.msra.mxu0 0.0
    %3368 = vmatprep.subr.mxu0 0.0
    %3369 = vmatpush1.xpose.msra.mxu0 0.0
    %3370 = vmatprep.subr.mxu0 0.0
    %3371 = vmatpush1.xpose.msra.mxu0 0.0
    %3372 = vmatprep.subr.mxu0 0.0
    %3373 = vmatpush1.xpose.msra.mxu0 0.0
    %3374 = vmatprep.mubr.f32.mxu0 0.0
    %3375 = vmatmul.mubr.f32.gmra.mrb[0].mxu0 %v3306
    %v3376 = vpop.f32.mrb[0].mxu0
    %v3377 = vadd.f32 0.0, %v3376
    %v3378 = vpop.f32.mrb[0].mxu0
    %3379 = vdwg.mxu0
    %3380 = vrot.lane.b32.xlu0 %v253, 80
    %v3381 = vpop.permute.xlu0 %3380
    %3382 = vrot.lane.b32.xlu0 %v253, 16
    %v3383 = vpop.permute.xlu0 %3382
    %v3384 = vsel %vm60, %v3381, 0
    %v3386 = vsel %vm60, %v3383, 0
    %3388 = vmatprep.subr.mxu0 0.0
    %3389 = vmatpush1.xpose.msra.mxu0 %v3386
    %3390 = vmatprep.subr.mxu0 0.0
    %3391 = vmatpush1.xpose.msra.mxu0 0.0
    %3392 = vmatprep.subr.mxu0 0.0
    %3393 = vmatpush1.xpose.msra.mxu0 0.0
    %3394 = vmatprep.subr.mxu0 0.0
    %3395 = vmatpush1.xpose.msra.mxu0 0.0
    %3396 = vmatprep.subr.mxu0 0.0
    %3397 = vmatpush1.xpose.msra.mxu0 0.0
    %3398 = vmatprep.subr.mxu0 0.0
    %3399 = vmatpush1.xpose.msra.mxu0 0.0
    %3400 = vmatprep.subr.mxu0 0.0
    %3401 = vmatpush1.xpose.msra.mxu0 0.0
    %3402 = vmatprep.subr.mxu0 0.0
    %3403 = vmatpush1.xpose.msra.mxu0 0.0
    %3404 = vmatprep.subr.mxu0 0.0
    %3405 = vmatpush1.xpose.msra.mxu0 0.0
    %3406 = vmatprep.subr.mxu0 0.0
    %3407 = vmatpush1.xpose.msra.mxu0 0.0
    %3408 = vmatprep.subr.mxu0 0.0
    %3409 = vmatpush1.xpose.msra.mxu0 0.0
    %3410 = vmatprep.subr.mxu0 0.0
    %3411 = vmatpush1.xpose.msra.mxu0 0.0
    %3412 = vmatprep.subr.mxu0 0.0
    %3413 = vmatpush1.xpose.msra.mxu0 0.0
    %3414 = vmatprep.subr.mxu0 0.0
    %3415 = vmatpush1.xpose.msra.mxu0 0.0
    %3416 = vmatprep.subr.mxu0 0.0
    %3417 = vmatpush1.xpose.msra.mxu0 0.0
    %3418 = vmatprep.subr.mxu0 0.0
    %3419 = vmatpush1.xpose.msra.mxu0 0.0
    %3420 = vmatprep.subr.mxu0 0.0
    %3421 = vmatpush1.xpose.msra.mxu0 0.0
    %3422 = vmatprep.subr.mxu0 0.0
    %3423 = vmatpush1.xpose.msra.mxu0 0.0
    %3424 = vmatprep.subr.mxu0 0.0
    %3425 = vmatpush1.xpose.msra.mxu0 0.0
    %3426 = vmatprep.subr.mxu0 0.0
    %3427 = vmatpush1.xpose.msra.mxu0 0.0
    %3428 = vmatprep.subr.mxu0 0.0
    %3429 = vmatpush1.xpose.msra.mxu0 0.0
    %3430 = vmatprep.subr.mxu0 0.0
    %3431 = vmatpush1.xpose.msra.mxu0 0.0
    %3432 = vmatprep.subr.mxu0 0.0
    %3433 = vmatpush1.xpose.msra.mxu0 0.0
    %3434 = vmatprep.subr.mxu0 0.0
    %3435 = vmatpush1.xpose.msra.mxu0 0.0
    %3436 = vmatprep.subr.mxu0 0.0
    %3437 = vmatpush1.xpose.msra.mxu0 0.0
    %3438 = vmatprep.subr.mxu0 0.0
    %3439 = vmatpush1.xpose.msra.mxu0 0.0
    %3440 = vmatprep.subr.mxu0 0.0
    %3441 = vmatpush1.xpose.msra.mxu0 0.0
    %3442 = vmatprep.subr.mxu0 0.0
    %3443 = vmatpush1.xpose.msra.mxu0 0.0
    %3444 = vmatprep.subr.mxu0 0.0
    %3445 = vmatpush1.xpose.msra.mxu0 0.0
    %3446 = vmatprep.subr.mxu0 0.0
    %3447 = vmatpush1.xpose.msra.mxu0 0.0
    %3448 = vmatprep.subr.mxu0 0.0
    %3449 = vmatpush1.xpose.msra.mxu0 0.0
    %3450 = vmatprep.subr.mxu0 0.0
    %3451 = vmatpush1.xpose.msra.mxu0 0.0
    %3452 = vmatprep.mubr.f32.mxu0 0.0
    %3453 = vmatmul.mubr.f32.gmra.mrb[0].mxu0 %v3384
    %v3454 = vpop.f32.mrb[0].mxu0
    %v3455 = vadd.f32 0.0, %v3454
    %v3456 = vpop.f32.mrb[0].mxu0
    %3457 = vdwg.mxu0
    %3458 = vrot.lane.b32.xlu0 %v257, 80
    %v3459 = vpop.permute.xlu0 %3458
    %3460 = vrot.lane.b32.xlu0 %v257, 16
    %v3461 = vpop.permute.xlu0 %3460
    %v3462 = vsel %vm60, %v3459, 0
    %v3464 = vsel %vm60, %v3461, 0
    %3466 = vmatprep.subr.mxu0 0.0
    %3467 = vmatpush1.xpose.msra.mxu0 %v3464
    %3468 = vmatprep.subr.mxu0 0.0
    %3469 = vmatpush1.xpose.msra.mxu0 0.0
    %3470 = vmatprep.subr.mxu0 0.0
    %3471 = vmatpush1.xpose.msra.mxu0 0.0
    %3472 = vmatprep.subr.mxu0 0.0
    %3473 = vmatpush1.xpose.msra.mxu0 0.0
    %3474 = vmatprep.subr.mxu0 0.0
    %3475 = vmatpush1.xpose.msra.mxu0 0.0
    %3476 = vmatprep.subr.mxu0 0.0
    %3477 = vmatpush1.xpose.msra.mxu0 0.0
    %3478 = vmatprep.subr.mxu0 0.0
    %3479 = vmatpush1.xpose.msra.mxu0 0.0
    %3480 = vmatprep.subr.mxu0 0.0
    %3481 = vmatpush1.xpose.msra.mxu0 0.0
    %3482 = vmatprep.subr.mxu0 0.0
    %3483 = vmatpush1.xpose.msra.mxu0 0.0
    %3484 = vmatprep.subr.mxu0 0.0
    %3485 = vmatpush1.xpose.msra.mxu0 0.0
    %3486 = vmatprep.subr.mxu0 0.0
    %3487 = vmatpush1.xpose.msra.mxu0 0.0
    %3488 = vmatprep.subr.mxu0 0.0
    %3489 = vmatpush1.xpose.msra.mxu0 0.0
    %3490 = vmatprep.subr.mxu0 0.0
    %3491 = vmatpush1.xpose.msra.mxu0 0.0
    %3492 = vmatprep.subr.mxu0 0.0
    %3493 = vmatpush1.xpose.msra.mxu0 0.0
    %3494 = vmatprep.subr.mxu0 0.0
    %3495 = vmatpush1.xpose.msra.mxu0 0.0
    %3496 = vmatprep.subr.mxu0 0.0
    %3497 = vmatpush1.xpose.msra.mxu0 0.0
    %3498 = vmatprep.subr.mxu0 0.0
    %3499 = vmatpush1.xpose.msra.mxu0 0.0
    %3500 = vmatprep.subr.mxu0 0.0
    %3501 = vmatpush1.xpose.msra.mxu0 0.0
    %3502 = vmatprep.subr.mxu0 0.0
    %3503 = vmatpush1.xpose.msra.mxu0 0.0
    %3504 = vmatprep.subr.mxu0 0.0
    %3505 = vmatpush1.xpose.msra.mxu0 0.0
    %3506 = vmatprep.subr.mxu0 0.0
    %3507 = vmatpush1.xpose.msra.mxu0 0.0
    %3508 = vmatprep.subr.mxu0 0.0
    %3509 = vmatpush1.xpose.msra.mxu0 0.0
    %3510 = vmatprep.subr.mxu0 0.0
    %3511 = vmatpush1.xpose.msra.mxu0 0.0
    %3512 = vmatprep.subr.mxu0 0.0
    %3513 = vmatpush1.xpose.msra.mxu0 0.0
    %3514 = vmatprep.subr.mxu0 0.0
    %3515 = vmatpush1.xpose.msra.mxu0 0.0
    %3516 = vmatprep.subr.mxu0 0.0
    %3517 = vmatpush1.xpose.msra.mxu0 0.0
    %3518 = vmatprep.subr.mxu0 0.0
    %3519 = vmatpush1.xpose.msra.mxu0 0.0
    %3520 = vmatprep.subr.mxu0 0.0
    %3521 = vmatpush1.xpose.msra.mxu0 0.0
    %3522 = vmatprep.subr.mxu0 0.0
    %3523 = vmatpush1.xpose.msra.mxu0 0.0
    %3524 = vmatprep.subr.mxu0 0.0
    %3525 = vmatpush1.xpose.msra.mxu0 0.0
    %3526 = vmatprep.subr.mxu0 0.0
    %3527 = vmatpush1.xpose.msra.mxu0 0.0
    %3528 = vmatprep.subr.mxu0 0.0
    %3529 = vmatpush1.xpose.msra.mxu0 0.0
    %3530 = vmatprep.mubr.f32.mxu0 0.0
    %3531 = vmatmul.mubr.f32.gmra.mrb[0].mxu0 %v3462
    %v3532 = vpop.f32.mrb[0].mxu0
    %v3533 = vadd.f32 0.0, %v3532
    %v3534 = vpop.f32.mrb[0].mxu0
    %3535 = vdwg.mxu0
    %3536 = vrot.lane.b32.xlu0 %v263, 80
    %v3537 = vpop.permute.xlu0 %3536
    %3538 = vrot.lane.b32.xlu0 %v263, 16
    %v3539 = vpop.permute.xlu0 %3538
    %v3540 = vsel %vm60, %v3537, 0
    %v3542 = vsel %vm60, %v3539, 0
    %3544 = vmatprep.subr.mxu0 0.0
    %3545 = vmatpush1.xpose.msra.mxu0 %v3542
    %3546 = vmatprep.subr.mxu0 0.0
    %3547 = vmatpush1.xpose.msra.mxu0 0.0
    %3548 = vmatprep.subr.mxu0 0.0
    %3549 = vmatpush1.xpose.msra.mxu0 0.0
    %3550 = vmatprep.subr.mxu0 0.0
    %3551 = vmatpush1.xpose.msra.mxu0 0.0
    %3552 = vmatprep.subr.mxu0 0.0
    %3553 = vmatpush1.xpose.msra.mxu0 0.0
    %3554 = vmatprep.subr.mxu0 0.0
    %3555 = vmatpush1.xpose.msra.mxu0 0.0
    %3556 = vmatprep.subr.mxu0 0.0
    %3557 = vmatpush1.xpose.msra.mxu0 0.0
    %3558 = vmatprep.subr.mxu0 0.0
    %3559 = vmatpush1.xpose.msra.mxu0 0.0
    %3560 = vmatprep.subr.mxu0 0.0
    %3561 = vmatpush1.xpose.msra.mxu0 0.0
    %3562 = vmatprep.subr.mxu0 0.0
    %3563 = vmatpush1.xpose.msra.mxu0 0.0
    %3564 = vmatprep.subr.mxu0 0.0
    %3565 = vmatpush1.xpose.msra.mxu0 0.0
    %3566 = vmatprep.subr.mxu0 0.0
    %3567 = vmatpush1.xpose.msra.mxu0 0.0
    %3568 = vmatprep.subr.mxu0 0.0
    %3569 = vmatpush1.xpose.msra.mxu0 0.0
    %3570 = vmatprep.subr.mxu0 0.0
    %3571 = vmatpush1.xpose.msra.mxu0 0.0
    %3572 = vmatprep.subr.mxu0 0.0
    %3573 = vmatpush1.xpose.msra.mxu0 0.0
    %3574 = vmatprep.subr.mxu0 0.0
    %3575 = vmatpush1.xpose.msra.mxu0 0.0
    %3576 = vmatprep.subr.mxu0 0.0
    %3577 = vmatpush1.xpose.msra.mxu0 0.0
    %3578 = vmatprep.subr.mxu0 0.0
    %3579 = vmatpush1.xpose.msra.mxu0 0.0
    %3580 = vmatprep.subr.mxu0 0.0
    %3581 = vmatpush1.xpose.msra.mxu0 0.0
    %3582 = vmatprep.subr.mxu0 0.0
    %3583 = vmatpush1.xpose.msra.mxu0 0.0
    %3584 = vmatprep.subr.mxu0 0.0
    %3585 = vmatpush1.xpose.msra.mxu0 0.0
    %3586 = vmatprep.subr.mxu0 0.0
    %3587 = vmatpush1.xpose.msra.mxu0 0.0
    %3588 = vmatprep.subr.mxu0 0.0
    %3589 = vmatpush1.xpose.msra.mxu0 0.0
    %3590 = vmatprep.subr.mxu0 0.0
    %3591 = vmatpush1.xpose.msra.mxu0 0.0
    %3592 = vmatprep.subr.mxu0 0.0
    %3593 = vmatpush1.xpose.msra.mxu0 0.0
    %3594 = vmatprep.subr.mxu0 0.0
    %3595 = vmatpush1.xpose.msra.mxu0 0.0
    %3596 = vmatprep.subr.mxu0 0.0
    %3597 = vmatpush1.xpose.msra.mxu0 0.0
    %3598 = vmatprep.subr.mxu0 0.0
    %3599 = vmatpush1.xpose.msra.mxu0 0.0
    %3600 = vmatprep.subr.mxu0 0.0
    %3601 = vmatpush1.xpose.msra.mxu0 0.0
    %3602 = vmatprep.subr.mxu0 0.0
    %3603 = vmatpush1.xpose.msra.mxu0 0.0
    %3604 = vmatprep.subr.mxu0 0.0
    %3605 = vmatpush1.xpose.msra.mxu0 0.0
    %3606 = vmatprep.subr.mxu0 0.0
    %3607 = vmatpush1.xpose.msra.mxu0 0.0
    %3608 = vmatprep.mubr.f32.mxu0 0.0
    %3609 = vmatmul.mubr.f32.gmra.mrb[0].mxu0 %v3540
    %v3610 = vpop.f32.mrb[0].mxu0
    %v3611 = vadd.f32 0.0, %v3610
    %v3612 = vpop.f32.mrb[0].mxu0
    %3613 = vdwg.mxu0
    %3614 = vrot.lane.b32.xlu0 %v267, 80
    %v3615 = vpop.permute.xlu0 %3614
    %3616 = vrot.lane.b32.xlu0 %v267, 16
    %v3617 = vpop.permute.xlu0 %3616
    %v3618 = vsel %vm60, %v3615, 0
    %v3620 = vsel %vm60, %v3617, 0
    %3622 = vmatprep.subr.mxu0 0.0
    %3623 = vmatpush1.xpose.msra.mxu0 %v3620
    %3624 = vmatprep.subr.mxu0 0.0
    %3625 = vmatpush1.xpose.msra.mxu0 0.0
    %3626 = vmatprep.subr.mxu0 0.0
    %3627 = vmatpush1.xpose.msra.mxu0 0.0
    %3628 = vmatprep.subr.mxu0 0.0
    %3629 = vmatpush1.xpose.msra.mxu0 0.0
    %3630 = vmatprep.subr.mxu0 0.0
    %3631 = vmatpush1.xpose.msra.mxu0 0.0
    %3632 = vmatprep.subr.mxu0 0.0
    %3633 = vmatpush1.xpose.msra.mxu0 0.0
    %3634 = vmatprep.subr.mxu0 0.0
    %3635 = vmatpush1.xpose.msra.mxu0 0.0
    %3636 = vmatprep.subr.mxu0 0.0
    %3637 = vmatpush1.xpose.msra.mxu0 0.0
    %3638 = vmatprep.subr.mxu0 0.0
    %3639 = vmatpush1.xpose.msra.mxu0 0.0
    %3640 = vmatprep.subr.mxu0 0.0
    %3641 = vmatpush1.xpose.msra.mxu0 0.0
    %3642 = vmatprep.subr.mxu0 0.0
    %3643 = vmatpush1.xpose.msra.mxu0 0.0
    %3644 = vmatprep.subr.mxu0 0.0
    %3645 = vmatpush1.xpose.msra.mxu0 0.0
    %3646 = vmatprep.subr.mxu0 0.0
    %3647 = vmatpush1.xpose.msra.mxu0 0.0
    %3648 = vmatprep.subr.mxu0 0.0
    %3649 = vmatpush1.xpose.msra.mxu0 0.0
    %3650 = vmatprep.subr.mxu0 0.0
    %3651 = vmatpush1.xpose.msra.mxu0 0.0
    %3652 = vmatprep.subr.mxu0 0.0
    %3653 = vmatpush1.xpose.msra.mxu0 0.0
    %3654 = vmatprep.subr.mxu0 0.0
    %3655 = vmatpush1.xpose.msra.mxu0 0.0
    %3656 = vmatprep.subr.mxu0 0.0
    %3657 = vmatpush1.xpose.msra.mxu0 0.0
    %3658 = vmatprep.subr.mxu0 0.0
    %3659 = vmatpush1.xpose.msra.mxu0 0.0
    %3660 = vmatprep.subr.mxu0 0.0
    %3661 = vmatpush1.xpose.msra.mxu0 0.0
    %3662 = vmatprep.subr.mxu0 0.0
    %3663 = vmatpush1.xpose.msra.mxu0 0.0
    %3664 = vmatprep.subr.mxu0 0.0
    %3665 = vmatpush1.xpose.msra.mxu0 0.0
    %3666 = vmatprep.subr.mxu0 0.0
    %3667 = vmatpush1.xpose.msra.mxu0 0.0
    %3668 = vmatprep.subr.mxu0 0.0
    %3669 = vmatpush1.xpose.msra.mxu0 0.0
    %3670 = vmatprep.subr.mxu0 0.0
    %3671 = vmatpush1.xpose.msra.mxu0 0.0
    %3672 = vmatprep.subr.mxu0 0.0
    %3673 = vmatpush1.xpose.msra.mxu0 0.0
    %3674 = vmatprep.subr.mxu0 0.0
    %3675 = vmatpush1.xpose.msra.mxu0 0.0
    %3676 = vmatprep.subr.mxu0 0.0
    %3677 = vmatpush1.xpose.msra.mxu0 0.0
    %3678 = vmatprep.subr.mxu0 0.0
    %3679 = vmatpush1.xpose.msra.mxu0 0.0
    %3680 = vmatprep.subr.mxu0 0.0
    %3681 = vmatpush1.xpose.msra.mxu0 0.0
    %3682 = vmatprep.subr.mxu0 0.0
    %3683 = vmatpush1.xpose.msra.mxu0 0.0
    %3684 = vmatprep.subr.mxu0 0.0
    %3685 = vmatpush1.xpose.msra.mxu0 0.0
    %3686 = vmatprep.mubr.f32.mxu0 0.0
    %3687 = vmatmul.mubr.f32.gmra.mrb[0].mxu0 %v3618
    %v3688 = vpop.f32.mrb[0].mxu0
    %v3689 = vadd.f32 0.0, %v3688
    %v3690 = vpop.f32.mrb[0].mxu0
    %3691 = vdwg.mxu0
    %v3692 = vsel %vm733, %v3299, -inf
    %3693 = vmax.xlane.f32.xlu0 %v3692
    %v3694 = vpop.xlane.xlu0 %3693
    %v3695 = vsel %vm733, %v3377, -inf
    %3696 = vmax.xlane.f32.xlu0 %v3695
    %v3697 = vpop.xlane.xlu0 %3696
    %v3698 = vsel %vm733, %v3455, -inf
    %3699 = vmax.xlane.f32.xlu0 %v3698
    %v3700 = vpop.xlane.xlu0 %3699
    %v3701 = vsel %vm733, %v3533, -inf
    %3702 = vmax.xlane.f32.xlu0 %v3701
    %v3703 = vpop.xlane.xlu0 %3702
    %v3704 = vsel %vm733, %v3611, -inf
    %3705 = vmax.xlane.f32.xlu0 %v3704
    %v3706 = vpop.xlane.xlu0 %3705
    %v3707 = vsel %vm733, %v3689, -inf
    %3708 = vmax.xlane.f32.xlu0 %v3707
    %v3709 = vpop.xlane.xlu0 %3708
    %v3710 = vsub.f32 %v3299, %v3694
    %v3711 = vsub.f32 %v3377, %v3697
    %v3712 = vsub.f32 %v3455, %v3700
    %v3713 = vsub.f32 %v3533, %v3703
    %v3714 = vsub.f32 %v3611, %v3706
    %v3715 = vsub.f32 %v3689, %v3709
    %v3716 = vmul.f32 %v3710, 1.442695
    %v3717 = vpow.pop %v3716
    %v3718 = vmul.f32 %v3711, 1.442695
    %v3719 = vpow.pop %v3718
    %v3720 = vmul.f32 %v3712, 1.442695
    %v3721 = vpow.pop %v3720
    %v3722 = vmul.f32 %v3713, 1.442695
    %v3723 = vpow.pop %v3722
    %v3724 = vmul.f32 %v3714, 1.442695
    %v3725 = vpow.pop %v3724
    %v3726 = vmul.f32 %v3715, 1.442695
    %v3727 = vpow.pop %v3726
    %v3728 = vsel %vm733, %v3717, 0.0
    %3729 = vadd.xlane.f32.xlu0 %v3728
    %v3730 = vpop.xlane.xlu0 %3729
    %v3731 = vsel %vm733, %v3719, 0.0
    %3732 = vadd.xlane.f32.xlu0 %v3731
    %v3733 = vpop.xlane.xlu0 %3732
    %v3734 = vsel %vm733, %v3721, 0.0
    %3735 = vadd.xlane.f32.xlu0 %v3734
    %v3736 = vpop.xlane.xlu0 %3735
    %v3737 = vsel %vm733, %v3723, 0.0
    %3738 = vadd.xlane.f32.xlu0 %v3737
    %v3739 = vpop.xlane.xlu0 %3738
    %v3740 = vsel %vm733, %v3725, 0.0
    %3741 = vadd.xlane.f32.xlu0 %v3740
    %v3742 = vpop.xlane.xlu0 %3741
    %v3743 = vsel %vm733, %v3727, 0.0
    %3744 = vadd.xlane.f32.xlu0 %v3743
    %v3745 = vpop.xlane.xlu0 %3744
    %v3746 = vrcp.pop %v3730
    %v3747 = vrcp.pop %v3733
    %v3748 = vrcp.pop %v3736
    %v3749 = vrcp.pop %v3739
    %v3750 = vrcp.pop %v3742
    %v3751 = vrcp.pop %v3745
    %v3752 = vmul.f32 %v3717, %v3746
    %v3753 = vmul.f32 %v3719, %v3747
    %v3754 = vmul.f32 %v3721, %v3748
    %v3755 = vmul.f32 %v3723, %v3749
    %v3756 = vmul.f32 %v3725, %v3750
    %v3757 = vmul.f32 %v3727, %v3751
    %3758 = vrot.lane.b32.xlu0 %v245, 80
    %v3759 = vpop.permute.xlu0 %3758
    %v3762 = vsel %vm733, %v3752, 0
    %3764 = vmatprep.subr.mxu0 0.0
    %3765 = vmatpush1.msra.mxu0 %v3759
    %3766 = vmatprep.subr.mxu0 0.0
    %3767 = vmatpush1.msra.mxu0 0.0
    %3768 = vmatprep.subr.mxu0 0.0
    %3769 = vmatpush1.msra.mxu0 0.0
    %3770 = vmatprep.subr.mxu0 0.0
    %3771 = vmatpush1.msra.mxu0 0.0
    %3772 = vmatprep.subr.mxu0 0.0
    %3773 = vmatpush1.msra.mxu0 0.0
    %3774 = vmatprep.subr.mxu0 0.0
    %3775 = vmatpush1.msra.mxu0 0.0
    %3776 = vmatprep.subr.mxu0 0.0
    %3777 = vmatpush1.msra.mxu0 0.0
    %3778 = vmatprep.subr.mxu0 0.0
    %3779 = vmatpush1.msra.mxu0 0.0
    %3780 = vmatprep.subr.mxu0 0.0
    %3781 = vmatpush1.msra.mxu0 0.0
    %3782 = vmatprep.subr.mxu0 0.0
    %3783 = vmatpush1.msra.mxu0 0.0
    %3784 = vmatprep.subr.mxu0 0.0
    %3785 = vmatpush1.msra.mxu0 0.0
    %3786 = vmatprep.subr.mxu0 0.0
    %3787 = vmatpush1.msra.mxu0 0.0
    %3788 = vmatprep.subr.mxu0 0.0
    %3789 = vmatpush1.msra.mxu0 0.0
    %3790 = vmatprep.subr.mxu0 0.0
    %3791 = vmatpush1.msra.mxu0 0.0
    %3792 = vmatprep.subr.mxu0 0.0
    %3793 = vmatpush1.msra.mxu0 0.0
    %3794 = vmatprep.subr.mxu0 0.0
    %3795 = vmatpush1.msra.mxu0 0.0
    %3796 = vmatprep.subr.mxu0 0.0
    %3797 = vmatpush1.msra.mxu0 0.0
    %3798 = vmatprep.subr.mxu0 0.0
    %3799 = vmatpush1.msra.mxu0 0.0
    %3800 = vmatprep.subr.mxu0 0.0
    %3801 = vmatpush1.msra.mxu0 0.0
    %3802 = vmatprep.subr.mxu0 0.0
    %3803 = vmatpush1.msra.mxu0 0.0
    %3804 = vmatprep.subr.mxu0 0.0
    %3805 = vmatpush1.msra.mxu0 0.0
    %3806 = vmatprep.subr.mxu0 0.0
    %3807 = vmatpush1.msra.mxu0 0.0
    %3808 = vmatprep.subr.mxu0 0.0
    %3809 = vmatpush1.msra.mxu0 0.0
    %3810 = vmatprep.subr.mxu0 0.0
    %3811 = vmatpush1.msra.mxu0 0.0
    %3812 = vmatprep.subr.mxu0 0.0
    %3813 = vmatpush1.msra.mxu0 0.0
    %3814 = vmatprep.subr.mxu0 0.0
    %3815 = vmatpush1.msra.mxu0 0.0
    %3816 = vmatprep.subr.mxu0 0.0
    %3817 = vmatpush1.msra.mxu0 0.0
    %3818 = vmatprep.subr.mxu0 0.0
    %3819 = vmatpush1.msra.mxu0 0.0
    %3820 = vmatprep.subr.mxu0 0.0
    %3821 = vmatpush1.msra.mxu0 0.0
    %3822 = vmatprep.subr.mxu0 0.0
    %3823 = vmatpush1.msra.mxu0 0.0
    %3824 = vmatprep.subr.mxu0 0.0
    %3825 = vmatpush1.msra.mxu0 0.0
    %3826 = vmatprep.subr.mxu0 0.0
    %3827 = vmatpush1.msra.mxu0 0.0
    %3828 = vmatprep.mubr.f32.mxu0 0.0
    %3829 = vmatmul.mubr.f32.gmra.mrb[0].mxu0 %v3762
    %v3830 = vpop.f32.mrb[0].mxu0
    %v3831 = vadd.f32 0.0, %v3830
    %v3832 = vpop.f32.mrb[0].mxu0
    %3833 = vdwg.mxu0
    %3834 = vrot.lane.b32.xlu0 %v249, 80
    %v3835 = vpop.permute.xlu0 %3834
    %v3838 = vsel %vm733, %v3753, 0
    %3840 = vmatprep.subr.mxu0 0.0
    %3841 = vmatpush1.msra.mxu0 %v3835
    %3842 = vmatprep.subr.mxu0 0.0
    %3843 = vmatpush1.msra.mxu0 0.0
    %3844 = vmatprep.subr.mxu0 0.0
    %3845 = vmatpush1.msra.mxu0 0.0
    %3846 = vmatprep.subr.mxu0 0.0
    %3847 = vmatpush1.msra.mxu0 0.0
    %3848 = vmatprep.subr.mxu0 0.0
    %3849 = vmatpush1.msra.mxu0 0.0
    %3850 = vmatprep.subr.mxu0 0.0
    %3851 = vmatpush1.msra.mxu0 0.0
    %3852 = vmatprep.subr.mxu0 0.0
    %3853 = vmatpush1.msra.mxu0 0.0
    %3854 = vmatprep.subr.mxu0 0.0
    %3855 = vmatpush1.msra.mxu0 0.0
    %3856 = vmatprep.subr.mxu0 0.0
    %3857 = vmatpush1.msra.mxu0 0.0
    %3858 = vmatprep.subr.mxu0 0.0
    %3859 = vmatpush1.msra.mxu0 0.0
    %3860 = vmatprep.subr.mxu0 0.0
    %3861 = vmatpush1.msra.mxu0 0.0
    %3862 = vmatprep.subr.mxu0 0.0
    %3863 = vmatpush1.msra.mxu0 0.0
    %3864 = vmatprep.subr.mxu0 0.0
    %3865 = vmatpush1.msra.mxu0 0.0
    %3866 = vmatprep.subr.mxu0 0.0
    %3867 = vmatpush1.msra.mxu0 0.0
    %3868 = vmatprep.subr.mxu0 0.0
    %3869 = vmatpush1.msra.mxu0 0.0
    %3870 = vmatprep.subr.mxu0 0.0
    %3871 = vmatpush1.msra.mxu0 0.0
    %3872 = vmatprep.subr.mxu0 0.0
    %3873 = vmatpush1.msra.mxu0 0.0
    %3874 = vmatprep.subr.mxu0 0.0
    %3875 = vmatpush1.msra.mxu0 0.0
    %3876 = vmatprep.subr.mxu0 0.0
    %3877 = vmatpush1.msra.mxu0 0.0
    %3878 = vmatprep.subr.mxu0 0.0
    %3879 = vmatpush1.msra.mxu0 0.0
    %3880 = vmatprep.subr.mxu0 0.0
    %3881 = vmatpush1.msra.mxu0 0.0
    %3882 = vmatprep.subr.mxu0 0.0
    %3883 = vmatpush1.msra.mxu0 0.0
    %3884 = vmatprep.subr.mxu0 0.0
    %3885 = vmatpush1.msra.mxu0 0.0
    %3886 = vmatprep.subr.mxu0 0.0
    %3887 = vmatpush1.msra.mxu0 0.0
    %3888 = vmatprep.subr.mxu0 0.0
    %3889 = vmatpush1.msra.mxu0 0.0
    %3890 = vmatprep.subr.mxu0 0.0
    %3891 = vmatpush1.msra.mxu0 0.0
    %3892 = vmatprep.subr.mxu0 0.0
    %3893 = vmatpush1.msra.mxu0 0.0
    %3894 = vmatprep.subr.mxu0 0.0
    %3895 = vmatpush1.msra.mxu0 0.0
    %3896 = vmatprep.subr.mxu0 0.0
    %3897 = vmatpush1.msra.mxu0 0.0
    %3898 = vmatprep.subr.mxu0 0.0
    %3899 = vmatpush1.msra.mxu0 0.0
    %3900 = vmatprep.subr.mxu0 0.0
    %3901 = vmatpush1.msra.mxu0 0.0
    %3902 = vmatprep.subr.mxu0 0.0
    %3903 = vmatpush1.msra.mxu0 0.0
    %3904 = vmatprep.mubr.f32.mxu0 0.0
    %3905 = vmatmul.mubr.f32.gmra.mrb[0].mxu0 %v3838
    %v3906 = vpop.f32.mrb[0].mxu0
    %v3907 = vadd.f32 0.0, %v3906
    %v3908 = vpop.f32.mrb[0].mxu0
    %3909 = vdwg.mxu0
    %3910 = vrot.lane.b32.xlu0 %v255, 80
    %v3911 = vpop.permute.xlu0 %3910
    %v3914 = vsel %vm733, %v3754, 0
    %3916 = vmatprep.subr.mxu0 0.0
    %3917 = vmatpush1.msra.mxu0 %v3911
    %3918 = vmatprep.subr.mxu0 0.0
    %3919 = vmatpush1.msra.mxu0 0.0
    %3920 = vmatprep.subr.mxu0 0.0
    %3921 = vmatpush1.msra.mxu0 0.0
    %3922 = vmatprep.subr.mxu0 0.0
    %3923 = vmatpush1.msra.mxu0 0.0
    %3924 = vmatprep.subr.mxu0 0.0
    %3925 = vmatpush1.msra.mxu0 0.0
    %3926 = vmatprep.subr.mxu0 0.0
    %3927 = vmatpush1.msra.mxu0 0.0
    %3928 = vmatprep.subr.mxu0 0.0
    %3929 = vmatpush1.msra.mxu0 0.0
    %3930 = vmatprep.subr.mxu0 0.0
    %3931 = vmatpush1.msra.mxu0 0.0
    %3932 = vmatprep.subr.mxu0 0.0
    %3933 = vmatpush1.msra.mxu0 0.0
    %3934 = vmatprep.subr.mxu0 0.0
    %3935 = vmatpush1.msra.mxu0 0.0
    %3936 = vmatprep.subr.mxu0 0.0
    %3937 = vmatpush1.msra.mxu0 0.0
    %3938 = vmatprep.subr.mxu0 0.0
    %3939 = vmatpush1.msra.mxu0 0.0
    %3940 = vmatprep.subr.mxu0 0.0
    %3941 = vmatpush1.msra.mxu0 0.0
    %3942 = vmatprep.subr.mxu0 0.0
    %3943 = vmatpush1.msra.mxu0 0.0
    %3944 = vmatprep.subr.mxu0 0.0
    %3945 = vmatpush1.msra.mxu0 0.0
    %3946 = vmatprep.subr.mxu0 0.0
    %3947 = vmatpush1.msra.mxu0 0.0
    %3948 = vmatprep.subr.mxu0 0.0
    %3949 = vmatpush1.msra.mxu0 0.0
    %3950 = vmatprep.subr.mxu0 0.0
    %3951 = vmatpush1.msra.mxu0 0.0
    %3952 = vmatprep.subr.mxu0 0.0
    %3953 = vmatpush1.msra.mxu0 0.0
    %3954 = vmatprep.subr.mxu0 0.0
    %3955 = vmatpush1.msra.mxu0 0.0
    %3956 = vmatprep.subr.mxu0 0.0
    %3957 = vmatpush1.msra.mxu0 0.0
    %3958 = vmatprep.subr.mxu0 0.0
    %3959 = vmatpush1.msra.mxu0 0.0
    %3960 = vmatprep.subr.mxu0 0.0
    %3961 = vmatpush1.msra.mxu0 0.0
    %3962 = vmatprep.subr.mxu0 0.0
    %3963 = vmatpush1.msra.mxu0 0.0
    %3964 = vmatprep.subr.mxu0 0.0
    %3965 = vmatpush1.msra.mxu0 0.0
    %3966 = vmatprep.subr.mxu0 0.0
    %3967 = vmatpush1.msra.mxu0 0.0
    %3968 = vmatprep.subr.mxu0 0.0
    %3969 = vmatpush1.msra.mxu0 0.0
    %3970 = vmatprep.subr.mxu0 0.0
    %3971 = vmatpush1.msra.mxu0 0.0
    %3972 = vmatprep.subr.mxu0 0.0
    %3973 = vmatpush1.msra.mxu0 0.0
    %3974 = vmatprep.subr.mxu0 0.0
    %3975 = vmatpush1.msra.mxu0 0.0
    %3976 = vmatprep.subr.mxu0 0.0
    %3977 = vmatpush1.msra.mxu0 0.0
    %3978 = vmatprep.subr.mxu0 0.0
    %3979 = vmatpush1.msra.mxu0 0.0
    %3980 = vmatprep.mubr.f32.mxu0 0.0
    %3981 = vmatmul.mubr.f32.gmra.mrb[0].mxu0 %v3914
    %v3982 = vpop.f32.mrb[0].mxu0
    %v3983 = vadd.f32 0.0, %v3982
    %v3984 = vpop.f32.mrb[0].mxu0
    %3985 = vdwg.mxu0
    %3986 = vrot.lane.b32.xlu0 %v259, 80
    %v3987 = vpop.permute.xlu0 %3986
    %v3990 = vsel %vm733, %v3755, 0
    %3992 = vmatprep.subr.mxu0 0.0
    %3993 = vmatpush1.msra.mxu0 %v3987
    %3994 = vmatprep.subr.mxu0 0.0
    %3995 = vmatpush1.msra.mxu0 0.0
    %3996 = vmatprep.subr.mxu0 0.0
    %3997 = vmatpush1.msra.mxu0 0.0
    %3998 = vmatprep.subr.mxu0 0.0
    %3999 = vmatpush1.msra.mxu0 0.0
    %4000 = vmatprep.subr.mxu0 0.0
    %4001 = vmatpush1.msra.mxu0 0.0
    %4002 = vmatprep.subr.mxu0 0.0
    %4003 = vmatpush1.msra.mxu0 0.0
    %4004 = vmatprep.subr.mxu0 0.0
    %4005 = vmatpush1.msra.mxu0 0.0
    %4006 = vmatprep.subr.mxu0 0.0
    %4007 = vmatpush1.msra.mxu0 0.0
    %4008 = vmatprep.subr.mxu0 0.0
    %4009 = vmatpush1.msra.mxu0 0.0
    %4010 = vmatprep.subr.mxu0 0.0
    %4011 = vmatpush1.msra.mxu0 0.0
    %4012 = vmatprep.subr.mxu0 0.0
    %4013 = vmatpush1.msra.mxu0 0.0
    %4014 = vmatprep.subr.mxu0 0.0
    %4015 = vmatpush1.msra.mxu0 0.0
    %4016 = vmatprep.subr.mxu0 0.0
    %4017 = vmatpush1.msra.mxu0 0.0
    %4018 = vmatprep.subr.mxu0 0.0
    %4019 = vmatpush1.msra.mxu0 0.0
    %4020 = vmatprep.subr.mxu0 0.0
    %4021 = vmatpush1.msra.mxu0 0.0
    %4022 = vmatprep.subr.mxu0 0.0
    %4023 = vmatpush1.msra.mxu0 0.0
    %4024 = vmatprep.subr.mxu0 0.0
    %4025 = vmatpush1.msra.mxu0 0.0
    %4026 = vmatprep.subr.mxu0 0.0
    %4027 = vmatpush1.msra.mxu0 0.0
    %4028 = vmatprep.subr.mxu0 0.0
    %4029 = vmatpush1.msra.mxu0 0.0
    %4030 = vmatprep.subr.mxu0 0.0
    %4031 = vmatpush1.msra.mxu0 0.0
    %4032 = vmatprep.subr.mxu0 0.0
    %4033 = vmatpush1.msra.mxu0 0.0
    %4034 = vmatprep.subr.mxu0 0.0
    %4035 = vmatpush1.msra.mxu0 0.0
    %4036 = vmatprep.subr.mxu0 0.0
    %4037 = vmatpush1.msra.mxu0 0.0
    %4038 = vmatprep.subr.mxu0 0.0
    %4039 = vmatpush1.msra.mxu0 0.0
    %4040 = vmatprep.subr.mxu0 0.0
    %4041 = vmatpush1.msra.mxu0 0.0
    %4042 = vmatprep.subr.mxu0 0.0
    %4043 = vmatpush1.msra.mxu0 0.0
    %4044 = vmatprep.subr.mxu0 0.0
    %4045 = vmatpush1.msra.mxu0 0.0
    %4046 = vmatprep.subr.mxu0 0.0
    %4047 = vmatpush1.msra.mxu0 0.0
    %4048 = vmatprep.subr.mxu0 0.0
    %4049 = vmatpush1.msra.mxu0 0.0
    %4050 = vmatprep.subr.mxu0 0.0
    %4051 = vmatpush1.msra.mxu0 0.0
    %4052 = vmatprep.subr.mxu0 0.0
    %4053 = vmatpush1.msra.mxu0 0.0
    %4054 = vmatprep.subr.mxu0 0.0
    %4055 = vmatpush1.msra.mxu0 0.0
    %4056 = vmatprep.mubr.f32.mxu0 0.0
    %4057 = vmatmul.mubr.f32.gmra.mrb[0].mxu0 %v3990
    %v4058 = vpop.f32.mrb[0].mxu0
    %v4059 = vadd.f32 0.0, %v4058
    %v4060 = vpop.f32.mrb[0].mxu0
    %4061 = vdwg.mxu0
    %4062 = vrot.lane.b32.xlu0 %v265, 80
    %v4063 = vpop.permute.xlu0 %4062
    %v4066 = vsel %vm733, %v3756, 0
    %4068 = vmatprep.subr.mxu0 0.0
    %4069 = vmatpush1.msra.mxu0 %v4063
    %4070 = vmatprep.subr.mxu0 0.0
    %4071 = vmatpush1.msra.mxu0 0.0
    %4072 = vmatprep.subr.mxu0 0.0
    %4073 = vmatpush1.msra.mxu0 0.0
    %4074 = vmatprep.subr.mxu0 0.0
    %4075 = vmatpush1.msra.mxu0 0.0
    %4076 = vmatprep.subr.mxu0 0.0
    %4077 = vmatpush1.msra.mxu0 0.0
    %4078 = vmatprep.subr.mxu0 0.0
    %4079 = vmatpush1.msra.mxu0 0.0
    %4080 = vmatprep.subr.mxu0 0.0
    %4081 = vmatpush1.msra.mxu0 0.0
    %4082 = vmatprep.subr.mxu0 0.0
    %4083 = vmatpush1.msra.mxu0 0.0
    %4084 = vmatprep.subr.mxu0 0.0
    %4085 = vmatpush1.msra.mxu0 0.0
    %4086 = vmatprep.subr.mxu0 0.0
    %4087 = vmatpush1.msra.mxu0 0.0
    %4088 = vmatprep.subr.mxu0 0.0
    %4089 = vmatpush1.msra.mxu0 0.0
    %4090 = vmatprep.subr.mxu0 0.0
    %4091 = vmatpush1.msra.mxu0 0.0
    %4092 = vmatprep.subr.mxu0 0.0
    %4093 = vmatpush1.msra.mxu0 0.0
    %4094 = vmatprep.subr.mxu0 0.0
    %4095 = vmatpush1.msra.mxu0 0.0
    %4096 = vmatprep.subr.mxu0 0.0
    %4097 = vmatpush1.msra.mxu0 0.0
    %4098 = vmatprep.subr.mxu0 0.0
    %4099 = vmatpush1.msra.mxu0 0.0
    %4100 = vmatprep.subr.mxu0 0.0
    %4101 = vmatpush1.msra.mxu0 0.0
    %4102 = vmatprep.subr.mxu0 0.0
    %4103 = vmatpush1.msra.mxu0 0.0
    %4104 = vmatprep.subr.mxu0 0.0
    %4105 = vmatpush1.msra.mxu0 0.0
    %4106 = vmatprep.subr.mxu0 0.0
    %4107 = vmatpush1.msra.mxu0 0.0
    %4108 = vmatprep.subr.mxu0 0.0
    %4109 = vmatpush1.msra.mxu0 0.0
    %4110 = vmatprep.subr.mxu0 0.0
    %4111 = vmatpush1.msra.mxu0 0.0
    %4112 = vmatprep.subr.mxu0 0.0
    %4113 = vmatpush1.msra.mxu0 0.0
    %4114 = vmatprep.subr.mxu0 0.0
    %4115 = vmatpush1.msra.mxu0 0.0
    %4116 = vmatprep.subr.mxu0 0.0
    %4117 = vmatpush1.msra.mxu0 0.0
    %4118 = vmatprep.subr.mxu0 0.0
    %4119 = vmatpush1.msra.mxu0 0.0
    %4120 = vmatprep.subr.mxu0 0.0
    %4121 = vmatpush1.msra.mxu0 0.0
    %4122 = vmatprep.subr.mxu0 0.0
    %4123 = vmatpush1.msra.mxu0 0.0
    %4124 = vmatprep.subr.mxu0 0.0
    %4125 = vmatpush1.msra.mxu0 0.0
    %4126 = vmatprep.subr.mxu0 0.0
    %4127 = vmatpush1.msra.mxu0 0.0
    %4128 = vmatprep.subr.mxu0 0.0
    %4129 = vmatpush1.msra.mxu0 0.0
    %4130 = vmatprep.subr.mxu0 0.0
    %4131 = vmatpush1.msra.mxu0 0.0
    %4132 = vmatprep.mubr.f32.mxu0 0.0
    %4133 = vmatmul.mubr.f32.gmra.mrb[0].mxu0 %v4066
    %v4134 = vpop.f32.mrb[0].mxu0
    %v4135 = vadd.f32 0.0, %v4134
    %v4136 = vpop.f32.mrb[0].mxu0
    %4137 = vdwg.mxu0
    %4138 = vrot.lane.b32.xlu0 %v269, 80
    %v4139 = vpop.permute.xlu0 %4138
    %v4142 = vsel %vm733, %v3757, 0
    %4144 = vmatprep.subr.mxu0 0.0
    %4145 = vmatpush1.msra.mxu0 %v4139
    %4146 = vmatprep.subr.mxu0 0.0
    %4147 = vmatpush1.msra.mxu0 0.0
    %4148 = vmatprep.subr.mxu0 0.0
    %4149 = vmatpush1.msra.mxu0 0.0
    %4150 = vmatprep.subr.mxu0 0.0
    %4151 = vmatpush1.msra.mxu0 0.0
    %4152 = vmatprep.subr.mxu0 0.0
    %4153 = vmatpush1.msra.mxu0 0.0
    %4154 = vmatprep.subr.mxu0 0.0
    %4155 = vmatpush1.msra.mxu0 0.0
    %4156 = vmatprep.subr.mxu0 0.0
    %4157 = vmatpush1.msra.mxu0 0.0
    %4158 = vmatprep.subr.mxu0 0.0
    %4159 = vmatpush1.msra.mxu0 0.0
    %4160 = vmatprep.subr.mxu0 0.0
    %4161 = vmatpush1.msra.mxu0 0.0
    %4162 = vmatprep.subr.mxu0 0.0
    %4163 = vmatpush1.msra.mxu0 0.0
    %4164 = vmatprep.subr.mxu0 0.0
    %4165 = vmatpush1.msra.mxu0 0.0
    %4166 = vmatprep.subr.mxu0 0.0
    %4167 = vmatpush1.msra.mxu0 0.0
    %4168 = vmatprep.subr.mxu0 0.0
    %4169 = vmatpush1.msra.mxu0 0.0
    %4170 = vmatprep.subr.mxu0 0.0
    %4171 = vmatpush1.msra.mxu0 0.0
    %4172 = vmatprep.subr.mxu0 0.0
    %4173 = vmatpush1.msra.mxu0 0.0
    %4174 = vmatprep.subr.mxu0 0.0
    %4175 = vmatpush1.msra.mxu0 0.0
    %4176 = vmatprep.subr.mxu0 0.0
    %4177 = vmatpush1.msra.mxu0 0.0
    %4178 = vmatprep.subr.mxu0 0.0
    %4179 = vmatpush1.msra.mxu0 0.0
    %4180 = vmatprep.subr.mxu0 0.0
    %4181 = vmatpush1.msra.mxu0 0.0
    %4182 = vmatprep.subr.mxu0 0.0
    %4183 = vmatpush1.msra.mxu0 0.0
    %4184 = vmatprep.subr.mxu0 0.0
    %4185 = vmatpush1.msra.mxu0 0.0
    %4186 = vmatprep.subr.mxu0 0.0
    %4187 = vmatpush1.msra.mxu0 0.0
    %4188 = vmatprep.subr.mxu0 0.0
    %4189 = vmatpush1.msra.mxu0 0.0
    %4190 = vmatprep.subr.mxu0 0.0
    %4191 = vmatpush1.msra.mxu0 0.0
    %4192 = vmatprep.subr.mxu0 0.0
    %4193 = vmatpush1.msra.mxu0 0.0
    %4194 = vmatprep.subr.mxu0 0.0
    %4195 = vmatpush1.msra.mxu0 0.0
    %4196 = vmatprep.subr.mxu0 0.0
    %4197 = vmatpush1.msra.mxu0 0.0
    %4198 = vmatprep.subr.mxu0 0.0
    %4199 = vmatpush1.msra.mxu0 0.0
    %4200 = vmatprep.subr.mxu0 0.0
    %4201 = vmatpush1.msra.mxu0 0.0
    %4202 = vmatprep.subr.mxu0 0.0
    %4203 = vmatpush1.msra.mxu0 0.0
    %4204 = vmatprep.subr.mxu0 0.0
    %4205 = vmatpush1.msra.mxu0 0.0
    %4206 = vmatprep.subr.mxu0 0.0
    %4207 = vmatpush1.msra.mxu0 0.0
    %4208 = vmatprep.mubr.f32.mxu0 0.0
    %4209 = vmatmul.mubr.f32.gmra.mrb[0].mxu0 %v4142
    %v4210 = vpop.f32.mrb[0].mxu0
    %v4211 = vadd.f32 0.0, %v4210
    %v4212 = vpop.f32.mrb[0].mxu0
    %4213 = vdwg.mxu0
    %4220 = vrot.lane.b32.xlu0 %v1846, 16
    %v4221 = vpop.permute.xlu0 %4220
    %4222 = vrot.lane.b32.xlu0 %v1923, 16
    %v4223 = vpop.permute.xlu0 %4222
    %4224 = vrot.lane.b32.xlu0 %v2000, 16
    %v4225 = vpop.permute.xlu0 %4224
    %4226 = vrot.lane.b32.xlu0 %v2077, 16
    %v4227 = vpop.permute.xlu0 %4226
    %4228 = vrot.lane.b32.xlu0 %v2154, 16
    %v4229 = vpop.permute.xlu0 %4228
    %4230 = vrot.lane.b32.xlu0 %v2231, 16
    %v4231 = vpop.permute.xlu0 %4230
    %4244 = vrot.lane.b32.xlu0 %v2841, 32
    %v4245 = vpop.permute.xlu0 %4244
    %4246 = vrot.lane.b32.xlu0 %v2917, 32
    %v4247 = vpop.permute.xlu0 %4246
    %4248 = vrot.lane.b32.xlu0 %v2993, 32
    %v4249 = vpop.permute.xlu0 %4248
    %4250 = vrot.lane.b32.xlu0 %v3069, 32
    %v4251 = vpop.permute.xlu0 %4250
    %4252 = vrot.lane.b32.xlu0 %v3145, 32
    %v4253 = vpop.permute.xlu0 %4252
    %4254 = vrot.lane.b32.xlu0 %v3221, 32
    %v4255 = vpop.permute.xlu0 %4254
    %4268 = vrot.lane.b32.xlu0 %v3831, 48
    %v4269 = vpop.permute.xlu0 %4268
    %4270 = vrot.lane.b32.xlu0 %v3907, 48
    %v4271 = vpop.permute.xlu0 %4270
    %4272 = vrot.lane.b32.xlu0 %v3983, 48
    %v4273 = vpop.permute.xlu0 %4272
    %4274 = vrot.lane.b32.xlu0 %v4059, 48
    %v4275 = vpop.permute.xlu0 %4274
    %4276 = vrot.lane.b32.xlu0 %v4135, 48
    %v4277 = vpop.permute.xlu0 %4276
    %4278 = vrot.lane.b32.xlu0 %v4211, 48
    %v4279 = vpop.permute.xlu0 %4278
    %v4286 = vsel %vm60, %v870, %v4221
    %v4287 = vsel %vm60, %v943, %v4223
    %v4288 = vsel %vm60, %v1016, %v4225
    %v4289 = vsel %vm60, %v1089, %v4227
    %v4290 = vsel %vm60, %v1162, %v4229
    %v4291 = vsel %vm60, %v1235, %v4231
    %vm4292 = vcmask 261120
    %v4293 = vsel %vm4292, %v4286, %v4245
    %v4294 = vsel %vm4292, %v4287, %v4247
    %v4295 = vsel %vm4292, %v4288, %v4249
    %v4296 = vsel %vm4292, %v4289, %v4251
    %v4297 = vsel %vm4292, %v4290, %v4253
    %v4298 = vsel %vm4292, %v4291, %v4255
    %vm4299 = vcmask 392192
    %v4300 = vsel %vm4299, %v4293, %v4269
    %v4301 = vsel %vm4299, %v4294, %v4271
    %v4302 = vsel %vm4299, %v4295, %v4273
    %v4303 = vsel %vm4299, %v4296, %v4275
    %v4304 = vsel %vm4299, %v4297, %v4277
    %v4305 = vsel %vm4299, %v4298, %v4279
    %v4306 = vpack.c.bf16 %v4301, %v4300
    %v4307 = vpack.c.bf16 %v4303, %v4302
    %v4308 = vpack.c.bf16 %v4305, %v4304
    %v4309 = vld [vmem:[%s5] sm:$0xf]
    %v4310 = vld [vmem:[%s5 + $0x4] sm:$0xf]
    %v4311 = vld [vmem:[%s5 + $0x8] sm:$0xf]
    %v4312 = vld [vmem:[%s5 + $0xc] sm:$0xf]
    %v4313 = vld [vmem:[%s5 + $0x10] sm:$0xf]
    %v4314 = vld [vmem:[%s5 + $0x14] sm:$0xf]
    %v4315 = vld [vmem:[%s5 + $0x18] sm:$0xf]
    %v4316 = vld [vmem:[%s5 + $0x1c] sm:$0xf]
    %v4317 = vlaneseq
    %v4318 = vshrl.u32 %v4317, 7
    %v4319 = vsub.s32 0, %v4318
    %v4320 = vrot.slane %v134, %v4319
    %v4329 = vunpack.c.l.b16 %v4309
    %v4330 = vunpack.c.l.b16 %v4310
    %v4331 = vunpack.c.l.b16 %v4311
    %v4332 = vunpack.c.l.b16 %v4312
    %v4333 = vunpack.c.l.b16 %v4313
    %v4334 = vunpack.c.l.b16 %v4314
    %v4335 = vunpack.c.l.b16 %v4315
    %v4336 = vunpack.c.l.b16 %v4316
    %v4337 = vpack.c.b16 %v4330, %v4329
    %v4338 = vpack.c.b16 %v4332, %v4331
    %v4339 = vpack.c.b16 %v4334, %v4333
    %v4340 = vpack.c.b16 %v4336, %v4335
    %v4346 = vsel %vm198, %v4306, 0
    %v4349 = vsel %vm198, %v4307, 0
    %v4352 = vsel %vm198, %v4308, 0
    %4354 = vmatprep.subr.bf16.mxu0 0
    %4355 = vmatpush1.bf16.msra.mxu0 %v4337
    %4356 = vmatprep.subr.bf16.mxu0 0
    %4357 = vmatpush1.bf16.msra.mxu0 %v4338
    %4358 = vmatprep.subr.bf16.mxu0 0
    %4359 = vmatpush1.bf16.msra.mxu0 %v4339
    %4360 = vmatprep.subr.bf16.mxu0 0
    %4361 = vmatpush1.bf16.msra.mxu0 %v4340
    %4362 = vmatprep.subr.bf16.mxu0 0
    %4363 = vmatpush1.bf16.msra.mxu0 0
    %4364 = vmatprep.subr.bf16.mxu0 0
    %4365 = vmatpush1.bf16.msra.mxu0 0
    %4366 = vmatprep.subr.bf16.mxu0 0
    %4367 = vmatpush1.bf16.msra.mxu0 0
    %4368 = vmatprep.subr.bf16.mxu0 0
    %4369 = vmatpush1.bf16.msra.mxu0 0
    %4370 = vmatprep.subr.bf16.mxu0 0
    %4371 = vmatpush1.bf16.msra.mxu0 0
    %4372 = vmatprep.subr.bf16.mxu0 0
    %4373 = vmatpush1.bf16.msra.mxu0 0
    %4374 = vmatprep.subr.bf16.mxu0 0
    %4375 = vmatpush1.bf16.msra.mxu0 0
    %4376 = vmatprep.subr.bf16.mxu0 0
    %4377 = vmatpush1.bf16.msra.mxu0 0
    %4378 = vmatprep.subr.bf16.mxu0 0
    %4379 = vmatpush1.bf16.msra.mxu0 0
    %4380 = vmatprep.subr.bf16.mxu0 0
    %4381 = vmatpush1.bf16.msra.mxu0 0
    %4382 = vmatprep.subr.bf16.mxu0 0
    %4383 = vmatpush1.bf16.msra.mxu0 0
    %4384 = vmatprep.subr.bf16.mxu0 0
    %4385 = vmatpush1.bf16.msra.mxu0 0
    %4386 = vmatprep.mubr.bf16.mxu0 0
    %4387 = vmatmul.mubr.bf16.gmra.mrb[0].mxu0 %v4346
    %v4388 = vpop.f32.mrb[0].mxu0
    %v4389 = vadd.f32 %v4320, %v4388
    %v4390 = vpop.f32.mrb[0].mxu0
    %v4391 = vpop.f32.mrb[0].mxu0
    %v4392 = vadd.f32 %v4320, %v4391
    %v4393 = vpop.f32.mrb[0].mxu0
    %4394 = vmatprep.mubr.bf16.mxu0 0
    %4395 = vmatmul.mubr.bf16.gmra.mrb[0].mxu0 %v4349
    %v4396 = vpop.f32.mrb[0].mxu0
    %v4397 = vadd.f32 %v4320, %v4396
    %v4398 = vpop.f32.mrb[0].mxu0
    %v4399 = vpop.f32.mrb[0].mxu0
    %v4400 = vadd.f32 %v4320, %v4399
    %v4401 = vpop.f32.mrb[0].mxu0
    %4402 = vmatprep.mubr.bf16.mxu0 0
    %4403 = vmatmul.mubr.bf16.gmra.mrb[0].mxu0 %v4352
    %v4404 = vpop.f32.mrb[0].mxu0
    %v4405 = vadd.f32 %v4320, %v4404
    %v4406 = vpop.f32.mrb[0].mxu0
    %v4407 = vpop.f32.mrb[0].mxu0
    %v4408 = vadd.f32 %v4320, %v4407
    %v4409 = vpop.f32.mrb[0].mxu0
    %4410 = vdwg.mxu0
    %v4411 = vadd.f32 %v128, %v4389
    %v4412 = vadd.f32 %v129, %v4392
    %v4413 = vadd.f32 %v130, %v4397
    %v4414 = vadd.f32 %v131, %v4400
    %v4415 = vadd.f32 %v132, %v4405
    %v4416 = vadd.f32 %v133, %v4408
    %v4417 = vsel %vm198, %v4411, 0.0
    %4418 = vadd.xlane.f32.xlu0 %v4417
    %v4419 = vpop.xlane.xlu0 %4418
    %v4420 = vsel %vm198, %v4412, 0.0
    %4421 = vadd.xlane.f32.xlu0 %v4420
    %v4422 = vpop.xlane.xlu0 %4421
    %v4423 = vsel %vm198, %v4413, 0.0
    %4424 = vadd.xlane.f32.xlu0 %v4423
    %v4425 = vpop.xlane.xlu0 %4424
    %v4426 = vsel %vm198, %v4414, 0.0
    %4427 = vadd.xlane.f32.xlu0 %v4426
    %v4428 = vpop.xlane.xlu0 %4427
    %v4429 = vsel %vm198, %v4415, 0.0
    %4430 = vadd.xlane.f32.xlu0 %v4429
    %v4431 = vpop.xlane.xlu0 %4430
    %v4432 = vsel %vm198, %v4416, 0.0
    %4433 = vadd.xlane.f32.xlu0 %v4432
    %v4434 = vpop.xlane.xlu0 %4433
    %v4435 = vrcp.pop 64.0
    %v4436 = vmul.f32 %v4419, %v4435
    %v4437 = vmul.f32 %v4422, %v4435
    %v4438 = vmul.f32 %v4425, %v4435
    %v4439 = vmul.f32 %v4428, %v4435
    %v4440 = vmul.f32 %v4431, %v4435
    %v4441 = vmul.f32 %v4434, %v4435
    %v4442 = vsub.f32 %v4411, %v4436
    %v4443 = vsub.f32 %v4412, %v4437
    %v4444 = vsub.f32 %v4413, %v4438
    %v4445 = vsub.f32 %v4414, %v4439
    %v4446 = vsub.f32 %v4415, %v4440
    %v4447 = vsub.f32 %v4416, %v4441
    %v4448 = vmul.f32 %v4442, %v4442
    %v4449 = vmul.f32 %v4443, %v4443
    %v4450 = vmul.f32 %v4444, %v4444
    %v4451 = vmul.f32 %v4445, %v4445
    %v4452 = vmul.f32 %v4446, %v4446
    %v4453 = vmul.f32 %v4447, %v4447
    %v4454 = vsel %vm198, %v4448, 0.0
    %4455 = vadd.xlane.f32.xlu0 %v4454
    %v4456 = vpop.xlane.xlu0 %4455
    %v4457 = vsel %vm198, %v4449, 0.0
    %4458 = vadd.xlane.f32.xlu0 %v4457
    %v4459 = vpop.xlane.xlu0 %4458
    %v4460 = vsel %vm198, %v4450, 0.0
    %4461 = vadd.xlane.f32.xlu0 %v4460
    %v4462 = vpop.xlane.xlu0 %4461
    %v4463 = vsel %vm198, %v4451, 0.0
    %4464 = vadd.xlane.f32.xlu0 %v4463
    %v4465 = vpop.xlane.xlu0 %4464
    %v4466 = vsel %vm198, %v4452, 0.0
    %4467 = vadd.xlane.f32.xlu0 %v4466
    %v4468 = vpop.xlane.xlu0 %4467
    %v4469 = vsel %vm198, %v4453, 0.0
    %4470 = vadd.xlane.f32.xlu0 %v4469
    %v4471 = vpop.xlane.xlu0 %4470
    %v4472 = vmul.f32 %v4456, %v4435
    %v4473 = vmul.f32 %v4459, %v4435
    %v4474 = vmul.f32 %v4462, %v4435
    %v4475 = vmul.f32 %v4465, %v4435
    %v4476 = vmul.f32 %v4468, %v4435
    %v4477 = vmul.f32 %v4471, %v4435
    %v4478 = vadd.f32 %v4472, 1e-05
    %v4479 = vadd.f32 %v4473, 1e-05
    %v4480 = vadd.f32 %v4474, 1e-05
    %v4481 = vadd.f32 %v4475, 1e-05
    %v4482 = vadd.f32 %v4476, 1e-05
    %v4483 = vadd.f32 %v4477, 1e-05
    %v4484 = vrsqrt.pop %v4478
    %v4485 = vrsqrt.pop %v4479
    %v4486 = vrsqrt.pop %v4480
    %v4487 = vrsqrt.pop %v4481
    %v4488 = vrsqrt.pop %v4482
    %v4489 = vrsqrt.pop %v4483
    %v4490 = vmul.f32 %v4442, %v4484
    %v4491 = vmul.f32 %v4443, %v4485
    %v4492 = vmul.f32 %v4444, %v4486
    %v4493 = vmul.f32 %v4445, %v4487
    %v4494 = vmul.f32 %v4446, %v4488
    %v4495 = vmul.f32 %v4447, %v4489
    %v4496 = vlaneseq
    %v4497 = vshrl.u32 %v4496, 7
    %v4498 = vsub.s32 1, %v4497
    %v4499 = vrot.slane %v134, %v4498
    %v4500 = vmul.f32 %v4490, %v4499
    %v4501 = vmul.f32 %v4491, %v4499
    %v4502 = vmul.f32 %v4492, %v4499
    %v4503 = vmul.f32 %v4493, %v4499
    %v4504 = vmul.f32 %v4494, %v4499
    %v4505 = vmul.f32 %v4495, %v4499
    %v4506 = vlaneseq
    %v4507 = vshrl.u32 %v4506, 7
    %v4508 = vsub.s32 2, %v4507
    %v4509 = vrot.slane %v134, %v4508
    %v4510 = vadd.f32 %v4500, %v4509
    %v4511 = vadd.f32 %v4501, %v4509
    %v4512 = vadd.f32 %v4502, %v4509
    %v4513 = vadd.f32 %v4503, %v4509
    %v4514 = vadd.f32 %v4504, %v4509
    %v4515 = vadd.f32 %v4505, %v4509
    %v4516 = vpack.c.bf16 %v4511, %v4510
    %v4517 = vpack.c.bf16 %v4513, %v4512
    %v4518 = vpack.c.bf16 %v4515, %v4514
    %v4519 = vld [vmem:[%s6] sm:$0xf]
    %v4520 = vld [vmem:[%s6 + $0x4] sm:$0xf]
    %v4521 = vld [vmem:[%s6 + $0x8] sm:$0xf]
    %v4522 = vld [vmem:[%s6 + $0xc] sm:$0xf]
    %v4523 = vld [vmem:[%s6 + $0x10] sm:$0xf]
    %v4524 = vld [vmem:[%s6 + $0x14] sm:$0xf]
    %v4525 = vld [vmem:[%s6 + $0x18] sm:$0xf]
    %v4526 = vld [vmem:[%s6 + $0x1c] sm:$0xf]
    %v4527 = vld [vmem:[%s7] sm:$0x1]
    %v4529 = vlaneseq
    %v4530 = vshrl.u32 %v4529, 7
    %v4531 = vsub.s32 0, %v4530
    %v4532 = vrot.slane %v4527, %v4531
    %v4542 = vunpack.c.l.b16 %v4519
    %v4543 = vunpack.c.l.b16 %v4520
    %v4544 = vunpack.c.l.b16 %v4521
    %v4545 = vunpack.c.l.b16 %v4522
    %v4546 = vunpack.c.l.b16 %v4523
    %v4547 = vunpack.c.l.b16 %v4524
    %v4548 = vunpack.c.l.b16 %v4525
    %v4549 = vunpack.c.l.b16 %v4526
    %v4550 = vpack.c.b16 %v4543, %v4542
    %v4551 = vpack.c.b16 %v4545, %v4544
    %v4552 = vpack.c.b16 %v4547, %v4546
    %v4553 = vpack.c.b16 %v4549, %v4548
    %v4559 = vsel %vm198, %v4516, 0
    %v4562 = vsel %vm198, %v4517, 0
    %v4565 = vsel %vm198, %v4518, 0
    %4567 = vmatprep.subr.bf16.mxu0 0
    %4568 = vmatpush1.bf16.msra.mxu0 %v4550
    %4569 = vmatprep.subr.bf16.mxu0 0
    %4570 = vmatpush1.bf16.msra.mxu0 %v4551
    %4571 = vmatprep.subr.bf16.mxu0 0
    %4572 = vmatpush1.bf16.msra.mxu0 %v4552
    %4573 = vmatprep.subr.bf16.mxu0 0
    %4574 = vmatpush1.bf16.msra.mxu0 %v4553
    %4575 = vmatprep.subr.bf16.mxu0 0
    %4576 = vmatpush1.bf16.msra.mxu0 0
    %4577 = vmatprep.subr.bf16.mxu0 0
    %4578 = vmatpush1.bf16.msra.mxu0 0
    %4579 = vmatprep.subr.bf16.mxu0 0
    %4580 = vmatpush1.bf16.msra.mxu0 0
    %4581 = vmatprep.subr.bf16.mxu0 0
    %4582 = vmatpush1.bf16.msra.mxu0 0
    %4583 = vmatprep.subr.bf16.mxu0 0
    %4584 = vmatpush1.bf16.msra.mxu0 0
    %4585 = vmatprep.subr.bf16.mxu0 0
    %4586 = vmatpush1.bf16.msra.mxu0 0
    %4587 = vmatprep.subr.bf16.mxu0 0
    %4588 = vmatpush1.bf16.msra.mxu0 0
    %4589 = vmatprep.subr.bf16.mxu0 0
    %4590 = vmatpush1.bf16.msra.mxu0 0
    %4591 = vmatprep.subr.bf16.mxu0 0
    %4592 = vmatpush1.bf16.msra.mxu0 0
    %4593 = vmatprep.subr.bf16.mxu0 0
    %4594 = vmatpush1.bf16.msra.mxu0 0
    %4595 = vmatprep.subr.bf16.mxu0 0
    %4596 = vmatpush1.bf16.msra.mxu0 0
    %4597 = vmatprep.subr.bf16.mxu0 0
    %4598 = vmatpush1.bf16.msra.mxu0 0
    %4599 = vmatprep.mubr.bf16.mxu0 0
    %4600 = vmatmul.mubr.bf16.gmra.mrb[0].mxu0 %v4559
    %v4601 = vpop.f32.mrb[0].mxu0
    %v4602 = vadd.f32 %v4532, %v4601
    %v4603 = vpop.f32.mrb[0].mxu0
    %v4604 = vpop.f32.mrb[0].mxu0
    %v4605 = vadd.f32 %v4532, %v4604
    %v4606 = vpop.f32.mrb[0].mxu0
    %4607 = vmatprep.mubr.bf16.mxu0 0
    %4608 = vmatmul.mubr.bf16.gmra.mrb[0].mxu0 %v4562
    %v4609 = vpop.f32.mrb[0].mxu0
    %v4610 = vadd.f32 %v4532, %v4609
    %v4611 = vpop.f32.mrb[0].mxu0
    %v4612 = vpop.f32.mrb[0].mxu0
    %v4613 = vadd.f32 %v4532, %v4612
    %v4614 = vpop.f32.mrb[0].mxu0
    %4615 = vmatprep.mubr.bf16.mxu0 0
    %4616 = vmatmul.mubr.bf16.gmra.mrb[0].mxu0 %v4565
    %v4617 = vpop.f32.mrb[0].mxu0
    %v4618 = vadd.f32 %v4532, %v4617
    %v4619 = vpop.f32.mrb[0].mxu0
    %v4620 = vpop.f32.mrb[0].mxu0
    %v4621 = vadd.f32 %v4532, %v4620
    %v4622 = vpop.f32.mrb[0].mxu0
    %4623 = vdwg.mxu0
    %v4624 = vmax.f32 %v4602, 0.0
    %v4625 = vmax.f32 %v4605, 0.0
    %v4626 = vmax.f32 %v4610, 0.0
    %v4627 = vmax.f32 %v4613, 0.0
    %v4628 = vmax.f32 %v4618, 0.0
    %v4629 = vmax.f32 %v4621, 0.0
    %v4630 = vpack.c.bf16 %v4625, %v4624
    %v4631 = vpack.c.bf16 %v4627, %v4626
    %v4632 = vpack.c.bf16 %v4629, %v4628
    %v4633 = vld [vmem:[%s8] sm:$0xf]
    %v4634 = vld [vmem:[%s8 + $0x4] sm:$0xf]
    %v4635 = vld [vmem:[%s8 + $0x8] sm:$0xf]
    %v4636 = vld [vmem:[%s8 + $0xc] sm:$0xf]
    %v4637 = vld [vmem:[%s8 + $0x10] sm:$0xf]
    %v4638 = vld [vmem:[%s8 + $0x14] sm:$0xf]
    %v4639 = vld [vmem:[%s8 + $0x18] sm:$0xf]
    %v4640 = vld [vmem:[%s8 + $0x1c] sm:$0xf]
    %v4641 = vld [vmem:[%s8 + $0x20] sm:$0xf]
    %v4642 = vld [vmem:[%s8 + $0x24] sm:$0xf]
    %v4643 = vld [vmem:[%s8 + $0x28] sm:$0xf]
    %v4644 = vld [vmem:[%s8 + $0x2c] sm:$0xf]
    %v4645 = vld [vmem:[%s8 + $0x30] sm:$0xf]
    %v4646 = vld [vmem:[%s8 + $0x34] sm:$0xf]
    %v4647 = vld [vmem:[%s8 + $0x38] sm:$0xf]
    %v4648 = vld [vmem:[%s8 + $0x3c] sm:$0xf]
    %v4649 = vlaneseq
    %v4650 = vshrl.u32 %v4649, 7
    %v4651 = vsub.s32 3, %v4650
    %v4652 = vrot.slane %v134, %v4651
    %v4669 = vunpack.c.l.b16 %v4633
    %v4670 = vunpack.c.l.b16 %v4634
    %v4671 = vunpack.c.l.b16 %v4635
    %v4672 = vunpack.c.l.b16 %v4636
    %v4673 = vunpack.c.l.b16 %v4637
    %v4674 = vunpack.c.l.b16 %v4638
    %v4675 = vunpack.c.l.b16 %v4639
    %v4676 = vunpack.c.l.b16 %v4640
    %v4677 = vunpack.c.l.b16 %v4641
    %v4678 = vunpack.c.l.b16 %v4642
    %v4679 = vunpack.c.l.b16 %v4643
    %v4680 = vunpack.c.l.b16 %v4644
    %v4681 = vunpack.c.l.b16 %v4645
    %v4682 = vunpack.c.l.b16 %v4646
    %v4683 = vunpack.c.l.b16 %v4647
    %v4684 = vunpack.c.l.b16 %v4648
    %v4685 = vpack.c.b16 %v4670, %v4669
    %v4686 = vpack.c.b16 %v4672, %v4671
    %v4687 = vpack.c.b16 %v4674, %v4673
    %v4688 = vpack.c.b16 %v4676, %v4675
    %v4689 = vpack.c.b16 %v4678, %v4677
    %v4690 = vpack.c.b16 %v4680, %v4679
    %v4691 = vpack.c.b16 %v4682, %v4681
    %v4692 = vpack.c.b16 %v4684, %v4683
    %4701 = vmatprep.subr.bf16.mxu0 0
    %4702 = vmatpush1.bf16.msra.mxu0 %v4685
    %4703 = vmatprep.subr.bf16.mxu0 0
    %4704 = vmatpush1.bf16.msra.mxu0 %v4686
    %4705 = vmatprep.subr.bf16.mxu0 0
    %4706 = vmatpush1.bf16.msra.mxu0 %v4687
    %4707 = vmatprep.subr.bf16.mxu0 0
    %4708 = vmatpush1.bf16.msra.mxu0 %v4688
    %4709 = vmatprep.subr.bf16.mxu0 0
    %4710 = vmatpush1.bf16.msra.mxu0 %v4689
    %4711 = vmatprep.subr.bf16.mxu0 0
    %4712 = vmatpush1.bf16.msra.mxu0 %v4690
    %4713 = vmatprep.subr.bf16.mxu0 0
    %4714 = vmatpush1.bf16.msra.mxu0 %v4691
    %4715 = vmatprep.subr.bf16.mxu0 0
    %4716 = vmatpush1.bf16.msra.mxu0 %v4692
    %4717 = vmatprep.subr.bf16.mxu0 0
    %4718 = vmatpush1.bf16.msra.mxu0 0
    %4719 = vmatprep.subr.bf16.mxu0 0
    %4720 = vmatpush1.bf16.msra.mxu0 0
    %4721 = vmatprep.subr.bf16.mxu0 0
    %4722 = vmatpush1.bf16.msra.mxu0 0
    %4723 = vmatprep.subr.bf16.mxu0 0
    %4724 = vmatpush1.bf16.msra.mxu0 0
    %4725 = vmatprep.subr.bf16.mxu0 0
    %4726 = vmatpush1.bf16.msra.mxu0 0
    %4727 = vmatprep.subr.bf16.mxu0 0
    %4728 = vmatpush1.bf16.msra.mxu0 0
    %4729 = vmatprep.subr.bf16.mxu0 0
    %4730 = vmatpush1.bf16.msra.mxu0 0
    %4731 = vmatprep.subr.bf16.mxu0 0
    %4732 = vmatpush1.bf16.msra.mxu0 0
    %4733 = vmatprep.mubr.bf16.mxu0 0
    %4734 = vmatmul.mubr.bf16.gmra.mrb[0].mxu0 %v4630
    %v4735 = vpop.f32.mrb[0].mxu0
    %v4736 = vadd.f32 %v4652, %v4735
    %v4737 = vpop.f32.mrb[0].mxu0
    %v4738 = vpop.f32.mrb[0].mxu0
    %v4739 = vadd.f32 %v4652, %v4738
    %v4740 = vpop.f32.mrb[0].mxu0
    %4741 = vmatprep.mubr.bf16.mxu0 0
    %4742 = vmatmul.mubr.bf16.gmra.mrb[0].mxu0 %v4631
    %v4743 = vpop.f32.mrb[0].mxu0
    %v4744 = vadd.f32 %v4652, %v4743
    %v4745 = vpop.f32.mrb[0].mxu0
    %v4746 = vpop.f32.mrb[0].mxu0
    %v4747 = vadd.f32 %v4652, %v4746
    %v4748 = vpop.f32.mrb[0].mxu0
    %4749 = vmatprep.mubr.bf16.mxu0 0
    %4750 = vmatmul.mubr.bf16.gmra.mrb[0].mxu0 %v4632
    %v4751 = vpop.f32.mrb[0].mxu0
    %v4752 = vadd.f32 %v4652, %v4751
    %v4753 = vpop.f32.mrb[0].mxu0
    %v4754 = vpop.f32.mrb[0].mxu0
    %v4755 = vadd.f32 %v4652, %v4754
    %v4756 = vpop.f32.mrb[0].mxu0
    %4757 = vdwg.mxu0
    %v4758 = vadd.f32 %v4510, %v4736
    %v4759 = vadd.f32 %v4511, %v4739
    %v4760 = vadd.f32 %v4512, %v4744
    %v4761 = vadd.f32 %v4513, %v4747
    %v4762 = vadd.f32 %v4514, %v4752
    %v4763 = vadd.f32 %v4515, %v4755
    %v4764 = vsel %vm198, %v4758, 0.0
    %4765 = vadd.xlane.f32.xlu0 %v4764
    %v4766 = vpop.xlane.xlu0 %4765
    %v4767 = vsel %vm198, %v4759, 0.0
    %4768 = vadd.xlane.f32.xlu0 %v4767
    %v4769 = vpop.xlane.xlu0 %4768
    %v4770 = vsel %vm198, %v4760, 0.0
    %4771 = vadd.xlane.f32.xlu0 %v4770
    %v4772 = vpop.xlane.xlu0 %4771
    %v4773 = vsel %vm198, %v4761, 0.0
    %4774 = vadd.xlane.f32.xlu0 %v4773
    %v4775 = vpop.xlane.xlu0 %4774
    %v4776 = vsel %vm198, %v4762, 0.0
    %4777 = vadd.xlane.f32.xlu0 %v4776
    %v4778 = vpop.xlane.xlu0 %4777
    %v4779 = vsel %vm198, %v4763, 0.0
    %4780 = vadd.xlane.f32.xlu0 %v4779
    %v4781 = vpop.xlane.xlu0 %4780
    %v4782 = vmul.f32 %v4766, %v4435
    %v4783 = vmul.f32 %v4769, %v4435
    %v4784 = vmul.f32 %v4772, %v4435
    %v4785 = vmul.f32 %v4775, %v4435
    %v4786 = vmul.f32 %v4778, %v4435
    %v4787 = vmul.f32 %v4781, %v4435
    %v4788 = vsub.f32 %v4758, %v4782
    %v4789 = vsub.f32 %v4759, %v4783
    %v4790 = vsub.f32 %v4760, %v4784
    %v4791 = vsub.f32 %v4761, %v4785
    %v4792 = vsub.f32 %v4762, %v4786
    %v4793 = vsub.f32 %v4763, %v4787
    %v4794 = vmul.f32 %v4788, %v4788
    %v4795 = vmul.f32 %v4789, %v4789
    %v4796 = vmul.f32 %v4790, %v4790
    %v4797 = vmul.f32 %v4791, %v4791
    %v4798 = vmul.f32 %v4792, %v4792
    %v4799 = vmul.f32 %v4793, %v4793
    %v4800 = vsel %vm198, %v4794, 0.0
    %4801 = vadd.xlane.f32.xlu0 %v4800
    %v4802 = vpop.xlane.xlu0 %4801
    %v4803 = vsel %vm198, %v4795, 0.0
    %4804 = vadd.xlane.f32.xlu0 %v4803
    %v4805 = vpop.xlane.xlu0 %4804
    %v4806 = vsel %vm198, %v4796, 0.0
    %4807 = vadd.xlane.f32.xlu0 %v4806
    %v4808 = vpop.xlane.xlu0 %4807
    %v4809 = vsel %vm198, %v4797, 0.0
    %4810 = vadd.xlane.f32.xlu0 %v4809
    %v4811 = vpop.xlane.xlu0 %4810
    %v4812 = vsel %vm198, %v4798, 0.0
    %4813 = vadd.xlane.f32.xlu0 %v4812
    %v4814 = vpop.xlane.xlu0 %4813
    %v4815 = vsel %vm198, %v4799, 0.0
    %4816 = vadd.xlane.f32.xlu0 %v4815
    %v4817 = vpop.xlane.xlu0 %4816
    %v4818 = vmul.f32 %v4802, %v4435
    %v4819 = vmul.f32 %v4805, %v4435
    %v4820 = vmul.f32 %v4808, %v4435
    %v4821 = vmul.f32 %v4811, %v4435
    %v4822 = vmul.f32 %v4814, %v4435
    %v4823 = vmul.f32 %v4817, %v4435
    %v4824 = vadd.f32 %v4818, 1e-05
    %v4825 = vadd.f32 %v4819, 1e-05
    %v4826 = vadd.f32 %v4820, 1e-05
    %v4827 = vadd.f32 %v4821, 1e-05
    %v4828 = vadd.f32 %v4822, 1e-05
    %v4829 = vadd.f32 %v4823, 1e-05
    %v4830 = vrsqrt.pop %v4824
    %v4831 = vrsqrt.pop %v4825
    %v4832 = vrsqrt.pop %v4826
    %v4833 = vrsqrt.pop %v4827
    %v4834 = vrsqrt.pop %v4828
    %v4835 = vrsqrt.pop %v4829
    %v4836 = vmul.f32 %v4788, %v4830
    %v4837 = vmul.f32 %v4789, %v4831
    %v4838 = vmul.f32 %v4790, %v4832
    %v4839 = vmul.f32 %v4791, %v4833
    %v4840 = vmul.f32 %v4792, %v4834
    %v4841 = vmul.f32 %v4793, %v4835
    %v4842 = vlaneseq
    %v4843 = vshrl.u32 %v4842, 7
    %v4844 = vsub.s32 4, %v4843
    %v4845 = vrot.slane %v134, %v4844
    %v4846 = vmul.f32 %v4836, %v4845
    %v4847 = vmul.f32 %v4837, %v4845
    %v4848 = vmul.f32 %v4838, %v4845
    %v4849 = vmul.f32 %v4839, %v4845
    %v4850 = vmul.f32 %v4840, %v4845
    %v4851 = vmul.f32 %v4841, %v4845
    %v4852 = vlaneseq
    %v4853 = vshrl.u32 %v4852, 7
    %v4854 = vsub.s32 5, %v4853
    %v4855 = vrot.slane %v134, %v4854
    %v4856 = vadd.f32 %v4846, %v4855
    %v4857 = vadd.f32 %v4847, %v4855
    %v4858 = vadd.f32 %v4848, %v4855
    %v4859 = vadd.f32 %v4849, %v4855
    %v4860 = vadd.f32 %v4850, %v4855
    %v4861 = vadd.f32 %v4851, %v4855
    %s4862 = scalar_lea.vmem %s9, 8
    %v4863 = vld [vmem:[%s4862] sm:$0x3f]
    %v4864 = vpack.c.bf16 %v4857, %v4856
    %v4865 = vpack.c.bf16 %v4859, %v4858
    %v4866 = vpack.c.bf16 %v4861, %v4860
    %s4867 = scalar_lea.vmem %s3, 64
    %v4868 = vld [vmem:[%s4867] sm:$0xff]
    %v4869 = vld [vmem:[%s4867 + $0x8] sm:$0xff]
    %v4870 = vld [vmem:[%s4867 + $0x10] sm:$0xff]
    %v4871 = vld [vmem:[%s4867 + $0x18] sm:$0xff]
    %v4872 = vld [vmem:[%s4867 + $0x20] sm:$0xff]
    %v4873 = vld [vmem:[%s4867 + $0x28] sm:$0xff]
    %v4874 = vld [vmem:[%s4867 + $0x30] sm:$0xff]
    %v4875 = vld [vmem:[%s4867 + $0x38] sm:$0xff]
    %s4876 = scalar_lea.vmem %s4, 2
    %v4877 = vld [vmem:[%s4876] sm:$0x3]
    %v4879 = vlaneseq
    %v4880 = vshrl.u32 %v4879, 7
    %v4881 = vsub.s32 0, %v4880
    %v4882 = vrot.slane %v4877, %v4881
    %v4883 = vlaneseq
    %v4884 = vshrl.u32 %v4883, 7
    %v4885 = vsub.s32 1, %v4884
    %v4886 = vrot.slane %v4877, %v4885
    %v4897 = vunpack.c.l.b16 %v4868
    %v4898 = vunpack.c.h.b16 %v4868
    %v4899 = vunpack.c.l.b16 %v4869
    %v4900 = vunpack.c.h.b16 %v4869
    %v4901 = vunpack.c.l.b16 %v4870
    %v4902 = vunpack.c.h.b16 %v4870
    %v4903 = vunpack.c.l.b16 %v4871
    %v4904 = vunpack.c.h.b16 %v4871
    %v4905 = vunpack.c.l.b16 %v4872
    %v4906 = vunpack.c.h.b16 %v4872
    %v4907 = vunpack.c.l.b16 %v4873
    %v4908 = vunpack.c.h.b16 %v4873
    %v4909 = vunpack.c.l.b16 %v4874
    %v4910 = vunpack.c.h.b16 %v4874
    %v4911 = vunpack.c.l.b16 %v4875
    %v4912 = vunpack.c.h.b16 %v4875
    %v4913 = vpack.c.b16 %v4899, %v4897
    %v4914 = vpack.c.b16 %v4900, %v4898
    %v4915 = vpack.c.b16 %v4903, %v4901
    %v4916 = vpack.c.b16 %v4904, %v4902
    %v4917 = vpack.c.b16 %v4907, %v4905
    %v4918 = vpack.c.b16 %v4908, %v4906
    %v4919 = vpack.c.b16 %v4911, %v4909
    %v4920 = vpack.c.b16 %v4912, %v4910
    %v4930 = vsel %vm198, %v4864, 0
    %v4933 = vsel %vm198, %v4865, 0
    %v4936 = vsel %vm198, %v4866, 0
    %4938 = vmatprep.subr.bf16.mxu0 %v4914
    %4939 = vmatpush1.bf16.msra.mxu0 %v4913
    %4940 = vmatprep.subr.bf16.mxu0 %v4916
    %4941 = vmatpush1.bf16.msra.mxu0 %v4915
    %4942 = vmatprep.subr.bf16.mxu0 %v4918
    %4943 = vmatpush1.bf16.msra.mxu0 %v4917
    %4944 = vmatprep.subr.bf16.mxu0 %v4920
    %4945 = vmatpush1.bf16.msra.mxu0 %v4919
    %4946 = vmatprep.subr.bf16.mxu0 0
    %4947 = vmatpush1.bf16.msra.mxu0 0
    %4948 = vmatprep.subr.bf16.mxu0 0
    %4949 = vmatpush1.bf16.msra.mxu0 0
    %4950 = vmatprep.subr.bf16.mxu0 0
    %4951 = vmatpush1.bf16.msra.mxu0 0
    %4952 = vmatprep.subr.bf16.mxu0 0
    %4953 = vmatpush1.bf16.msra.mxu0 0
    %4954 = vmatprep.subr.bf16.mxu0 0
    %4955 = vmatpush1.bf16.msra.mxu0 0
    %4956 = vmatprep.subr.bf16.mxu0 0
    %4957 = vmatpush1.bf16.msra.mxu0 0
    %4958 = vmatprep.subr.bf16.mxu0 0
    %4959 = vmatpush1.bf16.msra.mxu0 0
    %4960 = vmatprep.subr.bf16.mxu0 0
    %4961 = vmatpush1.bf16.msra.mxu0 0
    %4962 = vmatprep.subr.bf16.mxu0 0
    %4963 = vmatpush1.bf16.msra.mxu0 0
    %4964 = vmatprep.subr.bf16.mxu0 0
    %4965 = vmatpush1.bf16.msra.mxu0 0
    %4966 = vmatprep.subr.bf16.mxu0 0
    %4967 = vmatpush1.bf16.msra.mxu0 0
    %4968 = vmatprep.subr.bf16.mxu0 0
    %4969 = vmatpush1.bf16.msra.mxu0 0
    %4970 = vmatprep.mubr.bf16.mxu0 0
    %4971 = vmatmul.mubr.bf16.gmra.mrb[0].mxu0 %v4930
    %v4972 = vpop.f32.mrb[0].mxu0
    %v4973 = vadd.f32 %v4882, %v4972
    %v4974 = vpop.f32.mrb[0].mxu0
    %v4975 = vadd.f32 %v4886, %v4974
    %v4976 = vpop.f32.mrb[0].mxu0
    %v4977 = vadd.f32 %v4882, %v4976
    %v4978 = vpop.f32.mrb[0].mxu0
    %v4979 = vadd.f32 %v4886, %v4978
    %4980 = vmatprep.mubr.bf16.mxu0 0
    %4981 = vmatmul.mubr.bf16.gmra.mrb[0].mxu0 %v4933
    %v4982 = vpop.f32.mrb[0].mxu0
    %v4983 = vadd.f32 %v4882, %v4982
    %v4984 = vpop.f32.mrb[0].mxu0
    %v4985 = vadd.f32 %v4886, %v4984
    %v4986 = vpop.f32.mrb[0].mxu0
    %v4987 = vadd.f32 %v4882, %v4986
    %v4988 = vpop.f32.mrb[0].mxu0
    %v4989 = vadd.f32 %v4886, %v4988
    %4990 = vmatprep.mubr.bf16.mxu0 0
    %4991 = vmatmul.mubr.bf16.gmra.mrb[0].mxu0 %v4936
    %v4992 = vpop.f32.mrb[0].mxu0
    %v4993 = vadd.f32 %v4882, %v4992
    %v4994 = vpop.f32.mrb[0].mxu0
    %v4995 = vadd.f32 %v4886, %v4994
    %v4996 = vpop.f32.mrb[0].mxu0
    %v4997 = vadd.f32 %v4882, %v4996
    %v4998 = vpop.f32.mrb[0].mxu0
    %v4999 = vadd.f32 %v4886, %v4998
    %5000 = vdwg.mxu0
    %5002 = vrot.lane.b32.xlu0 %v4973, 64
    %v5003 = vpop.permute.xlu0 %5002
    %v5004 = vsel %vm60, %v4973, 0
    %v5006 = vsel %vm60, %v5003, 0
    %5008 = vmatprep.subr.mxu0 0.0
    %5009 = vmatpush1.xpose.msra.mxu0 %v5006
    %5010 = vmatprep.subr.mxu0 0.0
    %5011 = vmatpush1.xpose.msra.mxu0 0.0
    %5012 = vmatprep.subr.mxu0 0.0
    %5013 = vmatpush1.xpose.msra.mxu0 0.0
    %5014 = vmatprep.subr.mxu0 0.0
    %5015 = vmatpush1.xpose.msra.mxu0 0.0
    %5016 = vmatprep.subr.mxu0 0.0
    %5017 = vmatpush1.xpose.msra.mxu0 0.0
    %5018 = vmatprep.subr.mxu0 0.0
    %5019 = vmatpush1.xpose.msra.mxu0 0.0
    %5020 = vmatprep.subr.mxu0 0.0
    %5021 = vmatpush1.xpose.msra.mxu0 0.0
    %5022 = vmatprep.subr.mxu0 0.0
    %5023 = vmatpush1.xpose.msra.mxu0 0.0
    %5024 = vmatprep.subr.mxu0 0.0
    %5025 = vmatpush1.xpose.msra.mxu0 0.0
    %5026 = vmatprep.subr.mxu0 0.0
    %5027 = vmatpush1.xpose.msra.mxu0 0.0
    %5028 = vmatprep.subr.mxu0 0.0
    %5029 = vmatpush1.xpose.msra.mxu0 0.0
    %5030 = vmatprep.subr.mxu0 0.0
    %5031 = vmatpush1.xpose.msra.mxu0 0.0
    %5032 = vmatprep.subr.mxu0 0.0
    %5033 = vmatpush1.xpose.msra.mxu0 0.0
    %5034 = vmatprep.subr.mxu0 0.0
    %5035 = vmatpush1.xpose.msra.mxu0 0.0
    %5036 = vmatprep.subr.mxu0 0.0
    %5037 = vmatpush1.xpose.msra.mxu0 0.0
    %5038 = vmatprep.subr.mxu0 0.0
    %5039 = vmatpush1.xpose.msra.mxu0 0.0
    %5040 = vmatprep.subr.mxu0 0.0
    %5041 = vmatpush1.xpose.msra.mxu0 0.0
    %5042 = vmatprep.subr.mxu0 0.0
    %5043 = vmatpush1.xpose.msra.mxu0 0.0
    %5044 = vmatprep.subr.mxu0 0.0
    %5045 = vmatpush1.xpose.msra.mxu0 0.0
    %5046 = vmatprep.subr.mxu0 0.0
    %5047 = vmatpush1.xpose.msra.mxu0 0.0
    %5048 = vmatprep.subr.mxu0 0.0
    %5049 = vmatpush1.xpose.msra.mxu0 0.0
    %5050 = vmatprep.subr.mxu0 0.0
    %5051 = vmatpush1.xpose.msra.mxu0 0.0
    %5052 = vmatprep.subr.mxu0 0.0
    %5053 = vmatpush1.xpose.msra.mxu0 0.0
    %5054 = vmatprep.subr.mxu0 0.0
    %5055 = vmatpush1.xpose.msra.mxu0 0.0
    %5056 = vmatprep.subr.mxu0 0.0
    %5057 = vmatpush1.xpose.msra.mxu0 0.0
    %5058 = vmatprep.subr.mxu0 0.0
    %5059 = vmatpush1.xpose.msra.mxu0 0.0
    %5060 = vmatprep.subr.mxu0 0.0
    %5061 = vmatpush1.xpose.msra.mxu0 0.0
    %5062 = vmatprep.subr.mxu0 0.0
    %5063 = vmatpush1.xpose.msra.mxu0 0.0
    %5064 = vmatprep.subr.mxu0 0.0
    %5065 = vmatpush1.xpose.msra.mxu0 0.0
    %5066 = vmatprep.subr.mxu0 0.0
    %5067 = vmatpush1.xpose.msra.mxu0 0.0
    %5068 = vmatprep.subr.mxu0 0.0
    %5069 = vmatpush1.xpose.msra.mxu0 0.0
    %5070 = vmatprep.subr.mxu0 0.0
    %5071 = vmatpush1.xpose.msra.mxu0 0.0
    %5072 = vmatprep.mubr.f32.mxu0 0.0
    %5073 = vmatmul.mubr.f32.gmra.mrb[0].mxu0 %v5004
    %v5074 = vpop.f32.mrb[0].mxu0
    %v5075 = vadd.f32 0.0, %v5074
    %v5076 = vpop.f32.mrb[0].mxu0
    %5077 = vdwg.mxu0
    %5079 = vrot.lane.b32.xlu0 %v4977, 64
    %v5080 = vpop.permute.xlu0 %5079
    %v5081 = vsel %vm60, %v4977, 0
    %v5083 = vsel %vm60, %v5080, 0
    %5085 = vmatprep.subr.mxu0 0.0
    %5086 = vmatpush1.xpose.msra.mxu0 %v5083
    %5087 = vmatprep.subr.mxu0 0.0
    %5088 = vmatpush1.xpose.msra.mxu0 0.0
    %5089 = vmatprep.subr.mxu0 0.0
    %5090 = vmatpush1.xpose.msra.mxu0 0.0
    %5091 = vmatprep.subr.mxu0 0.0
    %5092 = vmatpush1.xpose.msra.mxu0 0.0
    %5093 = vmatprep.subr.mxu0 0.0
    %5094 = vmatpush1.xpose.msra.mxu0 0.0
    %5095 = vmatprep.subr.mxu0 0.0
    %5096 = vmatpush1.xpose.msra.mxu0 0.0
    %5097 = vmatprep.subr.mxu0 0.0
    %5098 = vmatpush1.xpose.msra.mxu0 0.0
    %5099 = vmatprep.subr.mxu0 0.0
    %5100 = vmatpush1.xpose.msra.mxu0 0.0
    %5101 = vmatprep.subr.mxu0 0.0
    %5102 = vmatpush1.xpose.msra.mxu0 0.0
    %5103 = vmatprep.subr.mxu0 0.0
    %5104 = vmatpush1.xpose.msra.mxu0 0.0
    %5105 = vmatprep.subr.mxu0 0.0
    %5106 = vmatpush1.xpose.msra.mxu0 0.0
    %5107 = vmatprep.subr.mxu0 0.0
    %5108 = vmatpush1.xpose.msra.mxu0 0.0
    %5109 = vmatprep.subr.mxu0 0.0
    %5110 = vmatpush1.xpose.msra.mxu0 0.0
    %5111 = vmatprep.subr.mxu0 0.0
    %5112 = vmatpush1.xpose.msra.mxu0 0.0
    %5113 = vmatprep.subr.mxu0 0.0
    %5114 = vmatpush1.xpose.msra.mxu0 0.0
    %5115 = vmatprep.subr.mxu0 0.0
    %5116 = vmatpush1.xpose.msra.mxu0 0.0
    %5117 = vmatprep.subr.mxu0 0.0
    %5118 = vmatpush1.xpose.msra.mxu0 0.0
    %5119 = vmatprep.subr.mxu0 0.0
    %5120 = vmatpush1.xpose.msra.mxu0 0.0
    %5121 = vmatprep.subr.mxu0 0.0
    %5122 = vmatpush1.xpose.msra.mxu0 0.0
    %5123 = vmatprep.subr.mxu0 0.0
    %5124 = vmatpush1.xpose.msra.mxu0 0.0
    %5125 = vmatprep.subr.mxu0 0.0
    %5126 = vmatpush1.xpose.msra.mxu0 0.0
    %5127 = vmatprep.subr.mxu0 0.0
    %5128 = vmatpush1.xpose.msra.mxu0 0.0
    %5129 = vmatprep.subr.mxu0 0.0
    %5130 = vmatpush1.xpose.msra.mxu0 0.0
    %5131 = vmatprep.subr.mxu0 0.0
    %5132 = vmatpush1.xpose.msra.mxu0 0.0
    %5133 = vmatprep.subr.mxu0 0.0
    %5134 = vmatpush1.xpose.msra.mxu0 0.0
    %5135 = vmatprep.subr.mxu0 0.0
    %5136 = vmatpush1.xpose.msra.mxu0 0.0
    %5137 = vmatprep.subr.mxu0 0.0
    %5138 = vmatpush1.xpose.msra.mxu0 0.0
    %5139 = vmatprep.subr.mxu0 0.0
    %5140 = vmatpush1.xpose.msra.mxu0 0.0
    %5141 = vmatprep.subr.mxu0 0.0
    %5142 = vmatpush1.xpose.msra.mxu0 0.0
    %5143 = vmatprep.subr.mxu0 0.0
    %5144 = vmatpush1.xpose.msra.mxu0 0.0
    %5145 = vmatprep.subr.mxu0 0.0
    %5146 = vmatpush1.xpose.msra.mxu0 0.0
    %5147 = vmatprep.subr.mxu0 0.0
    %5148 = vmatpush1.xpose.msra.mxu0 0.0
    %5149 = vmatprep.mubr.f32.mxu0 0.0
    %5150 = vmatmul.mubr.f32.gmra.mrb[0].mxu0 %v5081
    %v5151 = vpop.f32.mrb[0].mxu0
    %v5152 = vadd.f32 0.0, %v5151
    %v5153 = vpop.f32.mrb[0].mxu0
    %5154 = vdwg.mxu0
    %5156 = vrot.lane.b32.xlu0 %v4983, 64
    %v5157 = vpop.permute.xlu0 %5156
    %v5158 = vsel %vm60, %v4983, 0
    %v5160 = vsel %vm60, %v5157, 0
    %5162 = vmatprep.subr.mxu0 0.0
    %5163 = vmatpush1.xpose.msra.mxu0 %v5160
    %5164 = vmatprep.subr.mxu0 0.0
    %5165 = vmatpush1.xpose.msra.mxu0 0.0
    %5166 = vmatprep.subr.mxu0 0.0
    %5167 = vmatpush1.xpose.msra.mxu0 0.0
    %5168 = vmatprep.subr.mxu0 0.0
    %5169 = vmatpush1.xpose.msra.mxu0 0.0
    %5170 = vmatprep.subr.mxu0 0.0
    %5171 = vmatpush1.xpose.msra.mxu0 0.0
    %5172 = vmatprep.subr.mxu0 0.0
    %5173 = vmatpush1.xpose.msra.mxu0 0.0
    %5174 = vmatprep.subr.mxu0 0.0
    %5175 = vmatpush1.xpose.msra.mxu0 0.0
    %5176 = vmatprep.subr.mxu0 0.0
    %5177 = vmatpush1.xpose.msra.mxu0 0.0
    %5178 = vmatprep.subr.mxu0 0.0
    %5179 = vmatpush1.xpose.msra.mxu0 0.0
    %5180 = vmatprep.subr.mxu0 0.0
    %5181 = vmatpush1.xpose.msra.mxu0 0.0
    %5182 = vmatprep.subr.mxu0 0.0
    %5183 = vmatpush1.xpose.msra.mxu0 0.0
    %5184 = vmatprep.subr.mxu0 0.0
    %5185 = vmatpush1.xpose.msra.mxu0 0.0
    %5186 = vmatprep.subr.mxu0 0.0
    %5187 = vmatpush1.xpose.msra.mxu0 0.0
    %5188 = vmatprep.subr.mxu0 0.0
    %5189 = vmatpush1.xpose.msra.mxu0 0.0
    %5190 = vmatprep.subr.mxu0 0.0
    %5191 = vmatpush1.xpose.msra.mxu0 0.0
    %5192 = vmatprep.subr.mxu0 0.0
    %5193 = vmatpush1.xpose.msra.mxu0 0.0
    %5194 = vmatprep.subr.mxu0 0.0
    %5195 = vmatpush1.xpose.msra.mxu0 0.0
    %5196 = vmatprep.subr.mxu0 0.0
    %5197 = vmatpush1.xpose.msra.mxu0 0.0
    %5198 = vmatprep.subr.mxu0 0.0
    %5199 = vmatpush1.xpose.msra.mxu0 0.0
    %5200 = vmatprep.subr.mxu0 0.0
    %5201 = vmatpush1.xpose.msra.mxu0 0.0
    %5202 = vmatprep.subr.mxu0 0.0
    %5203 = vmatpush1.xpose.msra.mxu0 0.0
    %5204 = vmatprep.subr.mxu0 0.0
    %5205 = vmatpush1.xpose.msra.mxu0 0.0
    %5206 = vmatprep.subr.mxu0 0.0
    %5207 = vmatpush1.xpose.msra.mxu0 0.0
    %5208 = vmatprep.subr.mxu0 0.0
    %5209 = vmatpush1.xpose.msra.mxu0 0.0
    %5210 = vmatprep.subr.mxu0 0.0
    %5211 = vmatpush1.xpose.msra.mxu0 0.0
    %5212 = vmatprep.subr.mxu0 0.0
    %5213 = vmatpush1.xpose.msra.mxu0 0.0
    %5214 = vmatprep.subr.mxu0 0.0
    %5215 = vmatpush1.xpose.msra.mxu0 0.0
    %5216 = vmatprep.subr.mxu0 0.0
    %5217 = vmatpush1.xpose.msra.mxu0 0.0
    %5218 = vmatprep.subr.mxu0 0.0
    %5219 = vmatpush1.xpose.msra.mxu0 0.0
    %5220 = vmatprep.subr.mxu0 0.0
    %5221 = vmatpush1.xpose.msra.mxu0 0.0
    %5222 = vmatprep.subr.mxu0 0.0
    %5223 = vmatpush1.xpose.msra.mxu0 0.0
    %5224 = vmatprep.subr.mxu0 0.0
    %5225 = vmatpush1.xpose.msra.mxu0 0.0
    %5226 = vmatprep.mubr.f32.mxu0 0.0
    %5227 = vmatmul.mubr.f32.gmra.mrb[0].mxu0 %v5158
    %v5228 = vpop.f32.mrb[0].mxu0
    %v5229 = vadd.f32 0.0, %v5228
    %v5230 = vpop.f32.mrb[0].mxu0
    %5231 = vdwg.mxu0
    %5233 = vrot.lane.b32.xlu0 %v4987, 64
    %v5234 = vpop.permute.xlu0 %5233
    %v5235 = vsel %vm60, %v4987, 0
    %v5237 = vsel %vm60, %v5234, 0
    %5239 = vmatprep.subr.mxu0 0.0
    %5240 = vmatpush1.xpose.msra.mxu0 %v5237
    %5241 = vmatprep.subr.mxu0 0.0
    %5242 = vmatpush1.xpose.msra.mxu0 0.0
    %5243 = vmatprep.subr.mxu0 0.0
    %5244 = vmatpush1.xpose.msra.mxu0 0.0
    %5245 = vmatprep.subr.mxu0 0.0
    %5246 = vmatpush1.xpose.msra.mxu0 0.0
    %5247 = vmatprep.subr.mxu0 0.0
    %5248 = vmatpush1.xpose.msra.mxu0 0.0
    %5249 = vmatprep.subr.mxu0 0.0
    %5250 = vmatpush1.xpose.msra.mxu0 0.0
    %5251 = vmatprep.subr.mxu0 0.0
    %5252 = vmatpush1.xpose.msra.mxu0 0.0
    %5253 = vmatprep.subr.mxu0 0.0
    %5254 = vmatpush1.xpose.msra.mxu0 0.0
    %5255 = vmatprep.subr.mxu0 0.0
    %5256 = vmatpush1.xpose.msra.mxu0 0.0
    %5257 = vmatprep.subr.mxu0 0.0
    %5258 = vmatpush1.xpose.msra.mxu0 0.0
    %5259 = vmatprep.subr.mxu0 0.0
    %5260 = vmatpush1.xpose.msra.mxu0 0.0
    %5261 = vmatprep.subr.mxu0 0.0
    %5262 = vmatpush1.xpose.msra.mxu0 0.0
    %5263 = vmatprep.subr.mxu0 0.0
    %5264 = vmatpush1.xpose.msra.mxu0 0.0
    %5265 = vmatprep.subr.mxu0 0.0
    %5266 = vmatpush1.xpose.msra.mxu0 0.0
    %5267 = vmatprep.subr.mxu0 0.0
    %5268 = vmatpush1.xpose.msra.mxu0 0.0
    %5269 = vmatprep.subr.mxu0 0.0
    %5270 = vmatpush1.xpose.msra.mxu0 0.0
    %5271 = vmatprep.subr.mxu0 0.0
    %5272 = vmatpush1.xpose.msra.mxu0 0.0
    %5273 = vmatprep.subr.mxu0 0.0
    %5274 = vmatpush1.xpose.msra.mxu0 0.0
    %5275 = vmatprep.subr.mxu0 0.0
    %5276 = vmatpush1.xpose.msra.mxu0 0.0
    %5277 = vmatprep.subr.mxu0 0.0
    %5278 = vmatpush1.xpose.msra.mxu0 0.0
    %5279 = vmatprep.subr.mxu0 0.0
    %5280 = vmatpush1.xpose.msra.mxu0 0.0
    %5281 = vmatprep.subr.mxu0 0.0
    %5282 = vmatpush1.xpose.msra.mxu0 0.0
    %5283 = vmatprep.subr.mxu0 0.0
    %5284 = vmatpush1.xpose.msra.mxu0 0.0
    %5285 = vmatprep.subr.mxu0 0.0
    %5286 = vmatpush1.xpose.msra.mxu0 0.0
    %5287 = vmatprep.subr.mxu0 0.0
    %5288 = vmatpush1.xpose.msra.mxu0 0.0
    %5289 = vmatprep.subr.mxu0 0.0
    %5290 = vmatpush1.xpose.msra.mxu0 0.0
    %5291 = vmatprep.subr.mxu0 0.0
    %5292 = vmatpush1.xpose.msra.mxu0 0.0
    %5293 = vmatprep.subr.mxu0 0.0
    %5294 = vmatpush1.xpose.msra.mxu0 0.0
    %5295 = vmatprep.subr.mxu0 0.0
    %5296 = vmatpush1.xpose.msra.mxu0 0.0
    %5297 = vmatprep.subr.mxu0 0.0
    %5298 = vmatpush1.xpose.msra.mxu0 0.0
    %5299 = vmatprep.subr.mxu0 0.0
    %5300 = vmatpush1.xpose.msra.mxu0 0.0
    %5301 = vmatprep.subr.mxu0 0.0
    %5302 = vmatpush1.xpose.msra.mxu0 0.0
    %5303 = vmatprep.mubr.f32.mxu0 0.0
    %5304 = vmatmul.mubr.f32.gmra.mrb[0].mxu0 %v5235
    %v5305 = vpop.f32.mrb[0].mxu0
    %v5306 = vadd.f32 0.0, %v5305
    %v5307 = vpop.f32.mrb[0].mxu0
    %5308 = vdwg.mxu0
    %5310 = vrot.lane.b32.xlu0 %v4993, 64
    %v5311 = vpop.permute.xlu0 %5310
    %v5312 = vsel %vm60, %v4993, 0
    %v5314 = vsel %vm60, %v5311, 0
    %5316 = vmatprep.subr.mxu0 0.0
    %5317 = vmatpush1.xpose.msra.mxu0 %v5314
    %5318 = vmatprep.subr.mxu0 0.0
    %5319 = vmatpush1.xpose.msra.mxu0 0.0
    %5320 = vmatprep.subr.mxu0 0.0
    %5321 = vmatpush1.xpose.msra.mxu0 0.0
    %5322 = vmatprep.subr.mxu0 0.0
    %5323 = vmatpush1.xpose.msra.mxu0 0.0
    %5324 = vmatprep.subr.mxu0 0.0
    %5325 = vmatpush1.xpose.msra.mxu0 0.0
    %5326 = vmatprep.subr.mxu0 0.0
    %5327 = vmatpush1.xpose.msra.mxu0 0.0
    %5328 = vmatprep.subr.mxu0 0.0
    %5329 = vmatpush1.xpose.msra.mxu0 0.0
    %5330 = vmatprep.subr.mxu0 0.0
    %5331 = vmatpush1.xpose.msra.mxu0 0.0
    %5332 = vmatprep.subr.mxu0 0.0
    %5333 = vmatpush1.xpose.msra.mxu0 0.0
    %5334 = vmatprep.subr.mxu0 0.0
    %5335 = vmatpush1.xpose.msra.mxu0 0.0
    %5336 = vmatprep.subr.mxu0 0.0
    %5337 = vmatpush1.xpose.msra.mxu0 0.0
    %5338 = vmatprep.subr.mxu0 0.0
    %5339 = vmatpush1.xpose.msra.mxu0 0.0
    %5340 = vmatprep.subr.mxu0 0.0
    %5341 = vmatpush1.xpose.msra.mxu0 0.0
    %5342 = vmatprep.subr.mxu0 0.0
    %5343 = vmatpush1.xpose.msra.mxu0 0.0
    %5344 = vmatprep.subr.mxu0 0.0
    %5345 = vmatpush1.xpose.msra.mxu0 0.0
    %5346 = vmatprep.subr.mxu0 0.0
    %5347 = vmatpush1.xpose.msra.mxu0 0.0
    %5348 = vmatprep.subr.mxu0 0.0
    %5349 = vmatpush1.xpose.msra.mxu0 0.0
    %5350 = vmatprep.subr.mxu0 0.0
    %5351 = vmatpush1.xpose.msra.mxu0 0.0
    %5352 = vmatprep.subr.mxu0 0.0
    %5353 = vmatpush1.xpose.msra.mxu0 0.0
    %5354 = vmatprep.subr.mxu0 0.0
    %5355 = vmatpush1.xpose.msra.mxu0 0.0
    %5356 = vmatprep.subr.mxu0 0.0
    %5357 = vmatpush1.xpose.msra.mxu0 0.0
    %5358 = vmatprep.subr.mxu0 0.0
    %5359 = vmatpush1.xpose.msra.mxu0 0.0
    %5360 = vmatprep.subr.mxu0 0.0
    %5361 = vmatpush1.xpose.msra.mxu0 0.0
    %5362 = vmatprep.subr.mxu0 0.0
    %5363 = vmatpush1.xpose.msra.mxu0 0.0
    %5364 = vmatprep.subr.mxu0 0.0
    %5365 = vmatpush1.xpose.msra.mxu0 0.0
    %5366 = vmatprep.subr.mxu0 0.0
    %5367 = vmatpush1.xpose.msra.mxu0 0.0
    %5368 = vmatprep.subr.mxu0 0.0
    %5369 = vmatpush1.xpose.msra.mxu0 0.0
    %5370 = vmatprep.subr.mxu0 0.0
    %5371 = vmatpush1.xpose.msra.mxu0 0.0
    %5372 = vmatprep.subr.mxu0 0.0
    %5373 = vmatpush1.xpose.msra.mxu0 0.0
    %5374 = vmatprep.subr.mxu0 0.0
    %5375 = vmatpush1.xpose.msra.mxu0 0.0
    %5376 = vmatprep.subr.mxu0 0.0
    %5377 = vmatpush1.xpose.msra.mxu0 0.0
    %5378 = vmatprep.subr.mxu0 0.0
    %5379 = vmatpush1.xpose.msra.mxu0 0.0
    %5380 = vmatprep.mubr.f32.mxu0 0.0
    %5381 = vmatmul.mubr.f32.gmra.mrb[0].mxu0 %v5312
    %v5382 = vpop.f32.mrb[0].mxu0
    %v5383 = vadd.f32 0.0, %v5382
    %v5384 = vpop.f32.mrb[0].mxu0
    %5385 = vdwg.mxu0
    %5387 = vrot.lane.b32.xlu0 %v4997, 64
    %v5388 = vpop.permute.xlu0 %5387
    %v5389 = vsel %vm60, %v4997, 0
    %v5391 = vsel %vm60, %v5388, 0
    %5393 = vmatprep.subr.mxu0 0.0
    %5394 = vmatpush1.xpose.msra.mxu0 %v5391
    %5395 = vmatprep.subr.mxu0 0.0
    %5396 = vmatpush1.xpose.msra.mxu0 0.0
    %5397 = vmatprep.subr.mxu0 0.0
    %5398 = vmatpush1.xpose.msra.mxu0 0.0
    %5399 = vmatprep.subr.mxu0 0.0
    %5400 = vmatpush1.xpose.msra.mxu0 0.0
    %5401 = vmatprep.subr.mxu0 0.0
    %5402 = vmatpush1.xpose.msra.mxu0 0.0
    %5403 = vmatprep.subr.mxu0 0.0
    %5404 = vmatpush1.xpose.msra.mxu0 0.0
    %5405 = vmatprep.subr.mxu0 0.0
    %5406 = vmatpush1.xpose.msra.mxu0 0.0
    %5407 = vmatprep.subr.mxu0 0.0
    %5408 = vmatpush1.xpose.msra.mxu0 0.0
    %5409 = vmatprep.subr.mxu0 0.0
    %5410 = vmatpush1.xpose.msra.mxu0 0.0
    %5411 = vmatprep.subr.mxu0 0.0
    %5412 = vmatpush1.xpose.msra.mxu0 0.0
    %5413 = vmatprep.subr.mxu0 0.0
    %5414 = vmatpush1.xpose.msra.mxu0 0.0
    %5415 = vmatprep.subr.mxu0 0.0
    %5416 = vmatpush1.xpose.msra.mxu0 0.0
    %5417 = vmatprep.subr.mxu0 0.0
    %5418 = vmatpush1.xpose.msra.mxu0 0.0
    %5419 = vmatprep.subr.mxu0 0.0
    %5420 = vmatpush1.xpose.msra.mxu0 0.0
    %5421 = vmatprep.subr.mxu0 0.0
    %5422 = vmatpush1.xpose.msra.mxu0 0.0
    %5423 = vmatprep.subr.mxu0 0.0
    %5424 = vmatpush1.xpose.msra.mxu0 0.0
    %5425 = vmatprep.subr.mxu0 0.0
    %5426 = vmatpush1.xpose.msra.mxu0 0.0
    %5427 = vmatprep.subr.mxu0 0.0
    %5428 = vmatpush1.xpose.msra.mxu0 0.0
    %5429 = vmatprep.subr.mxu0 0.0
    %5430 = vmatpush1.xpose.msra.mxu0 0.0
    %5431 = vmatprep.subr.mxu0 0.0
    %5432 = vmatpush1.xpose.msra.mxu0 0.0
    %5433 = vmatprep.subr.mxu0 0.0
    %5434 = vmatpush1.xpose.msra.mxu0 0.0
    %5435 = vmatprep.subr.mxu0 0.0
    %5436 = vmatpush1.xpose.msra.mxu0 0.0
    %5437 = vmatprep.subr.mxu0 0.0
    %5438 = vmatpush1.xpose.msra.mxu0 0.0
    %5439 = vmatprep.subr.mxu0 0.0
    %5440 = vmatpush1.xpose.msra.mxu0 0.0
    %5441 = vmatprep.subr.mxu0 0.0
    %5442 = vmatpush1.xpose.msra.mxu0 0.0
    %5443 = vmatprep.subr.mxu0 0.0
    %5444 = vmatpush1.xpose.msra.mxu0 0.0
    %5445 = vmatprep.subr.mxu0 0.0
    %5446 = vmatpush1.xpose.msra.mxu0 0.0
    %5447 = vmatprep.subr.mxu0 0.0
    %5448 = vmatpush1.xpose.msra.mxu0 0.0
    %5449 = vmatprep.subr.mxu0 0.0
    %5450 = vmatpush1.xpose.msra.mxu0 0.0
    %5451 = vmatprep.subr.mxu0 0.0
    %5452 = vmatpush1.xpose.msra.mxu0 0.0
    %5453 = vmatprep.subr.mxu0 0.0
    %5454 = vmatpush1.xpose.msra.mxu0 0.0
    %5455 = vmatprep.subr.mxu0 0.0
    %5456 = vmatpush1.xpose.msra.mxu0 0.0
    %5457 = vmatprep.mubr.f32.mxu0 0.0
    %5458 = vmatmul.mubr.f32.gmra.mrb[0].mxu0 %v5389
    %v5459 = vpop.f32.mrb[0].mxu0
    %v5460 = vadd.f32 0.0, %v5459
    %v5461 = vpop.f32.mrb[0].mxu0
    %5462 = vdwg.mxu0
    %v5463 = vsel %vm733, %v5075, -inf
    %5464 = vmax.xlane.f32.xlu0 %v5463
    %v5465 = vpop.xlane.xlu0 %5464
    %v5466 = vsel %vm733, %v5152, -inf
    %5467 = vmax.xlane.f32.xlu0 %v5466
    %v5468 = vpop.xlane.xlu0 %5467
    %v5469 = vsel %vm733, %v5229, -inf
    %5470 = vmax.xlane.f32.xlu0 %v5469
    %v5471 = vpop.xlane.xlu0 %5470
    %v5472 = vsel %vm733, %v5306, -inf
    %5473 = vmax.xlane.f32.xlu0 %v5472
    %v5474 = vpop.xlane.xlu0 %5473
    %v5475 = vsel %vm733, %v5383, -inf
    %5476 = vmax.xlane.f32.xlu0 %v5475
    %v5477 = vpop.xlane.xlu0 %5476
    %v5478 = vsel %vm733, %v5460, -inf
    %5479 = vmax.xlane.f32.xlu0 %v5478
    %v5480 = vpop.xlane.xlu0 %5479
    %v5481 = vsub.f32 %v5075, %v5465
    %v5482 = vsub.f32 %v5152, %v5468
    %v5483 = vsub.f32 %v5229, %v5471
    %v5484 = vsub.f32 %v5306, %v5474
    %v5485 = vsub.f32 %v5383, %v5477
    %v5486 = vsub.f32 %v5460, %v5480
    %v5487 = vmul.f32 %v5481, 1.442695
    %v5488 = vpow.pop %v5487
    %v5489 = vmul.f32 %v5482, 1.442695
    %v5490 = vpow.pop %v5489
    %v5491 = vmul.f32 %v5483, 1.442695
    %v5492 = vpow.pop %v5491
    %v5493 = vmul.f32 %v5484, 1.442695
    %v5494 = vpow.pop %v5493
    %v5495 = vmul.f32 %v5485, 1.442695
    %v5496 = vpow.pop %v5495
    %v5497 = vmul.f32 %v5486, 1.442695
    %v5498 = vpow.pop %v5497
    %v5499 = vsel %vm733, %v5488, 0.0
    %5500 = vadd.xlane.f32.xlu0 %v5499
    %v5501 = vpop.xlane.xlu0 %5500
    %v5502 = vsel %vm733, %v5490, 0.0
    %5503 = vadd.xlane.f32.xlu0 %v5502
    %v5504 = vpop.xlane.xlu0 %5503
    %v5505 = vsel %vm733, %v5492, 0.0
    %5506 = vadd.xlane.f32.xlu0 %v5505
    %v5507 = vpop.xlane.xlu0 %5506
    %v5508 = vsel %vm733, %v5494, 0.0
    %5509 = vadd.xlane.f32.xlu0 %v5508
    %v5510 = vpop.xlane.xlu0 %5509
    %v5511 = vsel %vm733, %v5496, 0.0
    %5512 = vadd.xlane.f32.xlu0 %v5511
    %v5513 = vpop.xlane.xlu0 %5512
    %v5514 = vsel %vm733, %v5498, 0.0
    %5515 = vadd.xlane.f32.xlu0 %v5514
    %v5516 = vpop.xlane.xlu0 %5515
    %v5517 = vrcp.pop %v5501
    %v5518 = vrcp.pop %v5504
    %v5519 = vrcp.pop %v5507
    %v5520 = vrcp.pop %v5510
    %v5521 = vrcp.pop %v5513
    %v5522 = vrcp.pop %v5516
    %v5523 = vmul.f32 %v5488, %v5517
    %v5524 = vmul.f32 %v5490, %v5518
    %v5525 = vmul.f32 %v5492, %v5519
    %v5526 = vmul.f32 %v5494, %v5520
    %v5527 = vmul.f32 %v5496, %v5521
    %v5528 = vmul.f32 %v5498, %v5522
    %v5530 = vsel %vm733, %v5523, 0
    %5532 = vmatprep.subr.mxu0 0.0
    %5533 = vmatpush1.msra.mxu0 %v4975
    %5534 = vmatprep.subr.mxu0 0.0
    %5535 = vmatpush1.msra.mxu0 0.0
    %5536 = vmatprep.subr.mxu0 0.0
    %5537 = vmatpush1.msra.mxu0 0.0
    %5538 = vmatprep.subr.mxu0 0.0
    %5539 = vmatpush1.msra.mxu0 0.0
    %5540 = vmatprep.subr.mxu0 0.0
    %5541 = vmatpush1.msra.mxu0 0.0
    %5542 = vmatprep.subr.mxu0 0.0
    %5543 = vmatpush1.msra.mxu0 0.0
    %5544 = vmatprep.subr.mxu0 0.0
    %5545 = vmatpush1.msra.mxu0 0.0
    %5546 = vmatprep.subr.mxu0 0.0
    %5547 = vmatpush1.msra.mxu0 0.0
    %5548 = vmatprep.subr.mxu0 0.0
    %5549 = vmatpush1.msra.mxu0 0.0
    %5550 = vmatprep.subr.mxu0 0.0
    %5551 = vmatpush1.msra.mxu0 0.0
    %5552 = vmatprep.subr.mxu0 0.0
    %5553 = vmatpush1.msra.mxu0 0.0
    %5554 = vmatprep.subr.mxu0 0.0
    %5555 = vmatpush1.msra.mxu0 0.0
    %5556 = vmatprep.subr.mxu0 0.0
    %5557 = vmatpush1.msra.mxu0 0.0
    %5558 = vmatprep.subr.mxu0 0.0
    %5559 = vmatpush1.msra.mxu0 0.0
    %5560 = vmatprep.subr.mxu0 0.0
    %5561 = vmatpush1.msra.mxu0 0.0
    %5562 = vmatprep.subr.mxu0 0.0
    %5563 = vmatpush1.msra.mxu0 0.0
    %5564 = vmatprep.subr.mxu0 0.0
    %5565 = vmatpush1.msra.mxu0 0.0
    %5566 = vmatprep.subr.mxu0 0.0
    %5567 = vmatpush1.msra.mxu0 0.0
    %5568 = vmatprep.subr.mxu0 0.0
    %5569 = vmatpush1.msra.mxu0 0.0
    %5570 = vmatprep.subr.mxu0 0.0
    %5571 = vmatpush1.msra.mxu0 0.0
    %5572 = vmatprep.subr.mxu0 0.0
    %5573 = vmatpush1.msra.mxu0 0.0
    %5574 = vmatprep.subr.mxu0 0.0
    %5575 = vmatpush1.msra.mxu0 0.0
    %5576 = vmatprep.subr.mxu0 0.0
    %5577 = vmatpush1.msra.mxu0 0.0
    %5578 = vmatprep.subr.mxu0 0.0
    %5579 = vmatpush1.msra.mxu0 0.0
    %5580 = vmatprep.subr.mxu0 0.0
    %5581 = vmatpush1.msra.mxu0 0.0
    %5582 = vmatprep.subr.mxu0 0.0
    %5583 = vmatpush1.msra.mxu0 0.0
    %5584 = vmatprep.subr.mxu0 0.0
    %5585 = vmatpush1.msra.mxu0 0.0
    %5586 = vmatprep.subr.mxu0 0.0
    %5587 = vmatpush1.msra.mxu0 0.0
    %5588 = vmatprep.subr.mxu0 0.0
    %5589 = vmatpush1.msra.mxu0 0.0
    %5590 = vmatprep.subr.mxu0 0.0
    %5591 = vmatpush1.msra.mxu0 0.0
    %5592 = vmatprep.subr.mxu0 0.0
    %5593 = vmatpush1.msra.mxu0 0.0
    %5594 = vmatprep.subr.mxu0 0.0
    %5595 = vmatpush1.msra.mxu0 0.0
    %5596 = vmatprep.mubr.f32.mxu0 0.0
    %5597 = vmatmul.mubr.f32.gmra.mrb[0].mxu0 %v5530
    %v5598 = vpop.f32.mrb[0].mxu0
    %v5599 = vadd.f32 0.0, %v5598
    %v5600 = vpop.f32.mrb[0].mxu0
    %5601 = vdwg.mxu0
    %v5603 = vsel %vm733, %v5524, 0
    %5605 = vmatprep.subr.mxu0 0.0
    %5606 = vmatpush1.msra.mxu0 %v4979
    %5607 = vmatprep.subr.mxu0 0.0
    %5608 = vmatpush1.msra.mxu0 0.0
    %5609 = vmatprep.subr.mxu0 0.0
    %5610 = vmatpush1.msra.mxu0 0.0
    %5611 = vmatprep.subr.mxu0 0.0
    %5612 = vmatpush1.msra.mxu0 0.0
    %5613 = vmatprep.subr.mxu0 0.0
    %5614 = vmatpush1.msra.mxu0 0.0
    %5615 = vmatprep.subr.mxu0 0.0
    %5616 = vmatpush1.msra.mxu0 0.0
    %5617 = vmatprep.subr.mxu0 0.0
    %5618 = vmatpush1.msra.mxu0 0.0
    %5619 = vmatprep.subr.mxu0 0.0
    %5620 = vmatpush1.msra.mxu0 0.0
    %5621 = vmatprep.subr.mxu0 0.0
    %5622 = vmatpush1.msra.mxu0 0.0
    %5623 = vmatprep.subr.mxu0 0.0
    %5624 = vmatpush1.msra.mxu0 0.0
    %5625 = vmatprep.subr.mxu0 0.0
    %5626 = vmatpush1.msra.mxu0 0.0
    %5627 = vmatprep.subr.mxu0 0.0
    %5628 = vmatpush1.msra.mxu0 0.0
    %5629 = vmatprep.subr.mxu0 0.0
    %5630 = vmatpush1.msra.mxu0 0.0
    %5631 = vmatprep.subr.mxu0 0.0
    %5632 = vmatpush1.msra.mxu0 0.0
    %5633 = vmatprep.subr.mxu0 0.0
    %5634 = vmatpush1.msra.mxu0 0.0
    %5635 = vmatprep.subr.mxu0 0.0
    %5636 = vmatpush1.msra.mxu0 0.0
    %5637 = vmatprep.subr.mxu0 0.0
    %5638 = vmatpush1.msra.mxu0 0.0
    %5639 = vmatprep.subr.mxu0 0.0
    %5640 = vmatpush1.msra.mxu0 0.0
    %5641 = vmatprep.subr.mxu0 0.0
    %5642 = vmatpush1.msra.mxu0 0.0
    %5643 = vmatprep.subr.mxu0 0.0
    %5644 = vmatpush1.msra.mxu0 0.0
    %5645 = vmatprep.subr.mxu0 0.0
    %5646 = vmatpush1.msra.mxu0 0.0
    %5647 = vmatprep.subr.mxu0 0.0
    %5648 = vmatpush1.msra.mxu0 0.0
    %5649 = vmatprep.subr.mxu0 0.0
    %5650 = vmatpush1.msra.mxu0 0.0
    %5651 = vmatprep.subr.mxu0 0.0
    %5652 = vmatpush1.msra.mxu0 0.0
    %5653 = vmatprep.subr.mxu0 0.0
    %5654 = vmatpush1.msra.mxu0 0.0
    %5655 = vmatprep.subr.mxu0 0.0
    %5656 = vmatpush1.msra.mxu0 0.0
    %5657 = vmatprep.subr.mxu0 0.0
    %5658 = vmatpush1.msra.mxu0 0.0
    %5659 = vmatprep.subr.mxu0 0.0
    %5660 = vmatpush1.msra.mxu0 0.0
    %5661 = vmatprep.subr.mxu0 0.0
    %5662 = vmatpush1.msra.mxu0 0.0
    %5663 = vmatprep.subr.mxu0 0.0
    %5664 = vmatpush1.msra.mxu0 0.0
    %5665 = vmatprep.subr.mxu0 0.0
    %5666 = vmatpush1.msra.mxu0 0.0
    %5667 = vmatprep.subr.mxu0 0.0
    %5668 = vmatpush1.msra.mxu0 0.0
    %5669 = vmatprep.mubr.f32.mxu0 0.0
    %5670 = vmatmul.mubr.f32.gmra.mrb[0].mxu0 %v5603
    %v5671 = vpop.f32.mrb[0].mxu0
    %v5672 = vadd.f32 0.0, %v5671
    %v5673 = vpop.f32.mrb[0].mxu0
    %5674 = vdwg.mxu0
    %v5676 = vsel %vm733, %v5525, 0
    %5678 = vmatprep.subr.mxu0 0.0
    %5679 = vmatpush1.msra.mxu0 %v4985
    %5680 = vmatprep.subr.mxu0 0.0
    %5681 = vmatpush1.msra.mxu0 0.0
    %5682 = vmatprep.subr.mxu0 0.0
    %5683 = vmatpush1.msra.mxu0 0.0
    %5684 = vmatprep.subr.mxu0 0.0
    %5685 = vmatpush1.msra.mxu0 0.0
    %5686 = vmatprep.subr.mxu0 0.0
    %5687 = vmatpush1.msra.mxu0 0.0
    %5688 = vmatprep.subr.mxu0 0.0
    %5689 = vmatpush1.msra.mxu0 0.0
    %5690 = vmatprep.subr.mxu0 0.0
    %5691 = vmatpush1.msra.mxu0 0.0
    %5692 = vmatprep.subr.mxu0 0.0
    %5693 = vmatpush1.msra.mxu0 0.0
    %5694 = vmatprep.subr.mxu0 0.0
    %5695 = vmatpush1.msra.mxu0 0.0
    %5696 = vmatprep.subr.mxu0 0.0
    %5697 = vmatpush1.msra.mxu0 0.0
    %5698 = vmatprep.subr.mxu0 0.0
    %5699 = vmatpush1.msra.mxu0 0.0
    %5700 = vmatprep.subr.mxu0 0.0
    %5701 = vmatpush1.msra.mxu0 0.0
    %5702 = vmatprep.subr.mxu0 0.0
    %5703 = vmatpush1.msra.mxu0 0.0
    %5704 = vmatprep.subr.mxu0 0.0
    %5705 = vmatpush1.msra.mxu0 0.0
    %5706 = vmatprep.subr.mxu0 0.0
    %5707 = vmatpush1.msra.mxu0 0.0
    %5708 = vmatprep.subr.mxu0 0.0
    %5709 = vmatpush1.msra.mxu0 0.0
    %5710 = vmatprep.subr.mxu0 0.0
    %5711 = vmatpush1.msra.mxu0 0.0
    %5712 = vmatprep.subr.mxu0 0.0
    %5713 = vmatpush1.msra.mxu0 0.0
    %5714 = vmatprep.subr.mxu0 0.0
    %5715 = vmatpush1.msra.mxu0 0.0
    %5716 = vmatprep.subr.mxu0 0.0
    %5717 = vmatpush1.msra.mxu0 0.0
    %5718 = vmatprep.subr.mxu0 0.0
    %5719 = vmatpush1.msra.mxu0 0.0
    %5720 = vmatprep.subr.mxu0 0.0
    %5721 = vmatpush1.msra.mxu0 0.0
    %5722 = vmatprep.subr.mxu0 0.0
    %5723 = vmatpush1.msra.mxu0 0.0
    %5724 = vmatprep.subr.mxu0 0.0
    %5725 = vmatpush1.msra.mxu0 0.0
    %5726 = vmatprep.subr.mxu0 0.0
    %5727 = vmatpush1.msra.mxu0 0.0
    %5728 = vmatprep.subr.mxu0 0.0
    %5729 = vmatpush1.msra.mxu0 0.0
    %5730 = vmatprep.subr.mxu0 0.0
    %5731 = vmatpush1.msra.mxu0 0.0
    %5732 = vmatprep.subr.mxu0 0.0
    %5733 = vmatpush1.msra.mxu0 0.0
    %5734 = vmatprep.subr.mxu0 0.0
    %5735 = vmatpush1.msra.mxu0 0.0
    %5736 = vmatprep.subr.mxu0 0.0
    %5737 = vmatpush1.msra.mxu0 0.0
    %5738 = vmatprep.subr.mxu0 0.0
    %5739 = vmatpush1.msra.mxu0 0.0
    %5740 = vmatprep.subr.mxu0 0.0
    %5741 = vmatpush1.msra.mxu0 0.0
    %5742 = vmatprep.mubr.f32.mxu0 0.0
    %5743 = vmatmul.mubr.f32.gmra.mrb[0].mxu0 %v5676
    %v5744 = vpop.f32.mrb[0].mxu0
    %v5745 = vadd.f32 0.0, %v5744
    %v5746 = vpop.f32.mrb[0].mxu0
    %5747 = vdwg.mxu0
    %v5749 = vsel %vm733, %v5526, 0
    %5751 = vmatprep.subr.mxu0 0.0
    %5752 = vmatpush1.msra.mxu0 %v4989
    %5753 = vmatprep.subr.mxu0 0.0
    %5754 = vmatpush1.msra.mxu0 0.0
    %5755 = vmatprep.subr.mxu0 0.0
    %5756 = vmatpush1.msra.mxu0 0.0
    %5757 = vmatprep.subr.mxu0 0.0
    %5758 = vmatpush1.msra.mxu0 0.0
    %5759 = vmatprep.subr.mxu0 0.0
    %5760 = vmatpush1.msra.mxu0 0.0
    %5761 = vmatprep.subr.mxu0 0.0
    %5762 = vmatpush1.msra.mxu0 0.0
    %5763 = vmatprep.subr.mxu0 0.0
    %5764 = vmatpush1.msra.mxu0 0.0
    %5765 = vmatprep.subr.mxu0 0.0
    %5766 = vmatpush1.msra.mxu0 0.0
    %5767 = vmatprep.subr.mxu0 0.0
    %5768 = vmatpush1.msra.mxu0 0.0
    %5769 = vmatprep.subr.mxu0 0.0
    %5770 = vmatpush1.msra.mxu0 0.0
    %5771 = vmatprep.subr.mxu0 0.0
    %5772 = vmatpush1.msra.mxu0 0.0
    %5773 = vmatprep.subr.mxu0 0.0
    %5774 = vmatpush1.msra.mxu0 0.0
    %5775 = vmatprep.subr.mxu0 0.0
    %5776 = vmatpush1.msra.mxu0 0.0
    %5777 = vmatprep.subr.mxu0 0.0
    %5778 = vmatpush1.msra.mxu0 0.0
    %5779 = vmatprep.subr.mxu0 0.0
    %5780 = vmatpush1.msra.mxu0 0.0
    %5781 = vmatprep.subr.mxu0 0.0
    %5782 = vmatpush1.msra.mxu0 0.0
    %5783 = vmatprep.subr.mxu0 0.0
    %5784 = vmatpush1.msra.mxu0 0.0
    %5785 = vmatprep.subr.mxu0 0.0
    %5786 = vmatpush1.msra.mxu0 0.0
    %5787 = vmatprep.subr.mxu0 0.0
    %5788 = vmatpush1.msra.mxu0 0.0
    %5789 = vmatprep.subr.mxu0 0.0
    %5790 = vmatpush1.msra.mxu0 0.0
    %5791 = vmatprep.subr.mxu0 0.0
    %5792 = vmatpush1.msra.mxu0 0.0
    %5793 = vmatprep.subr.mxu0 0.0
    %5794 = vmatpush1.msra.mxu0 0.0
    %5795 = vmatprep.subr.mxu0 0.0
    %5796 = vmatpush1.msra.mxu0 0.0
    %5797 = vmatprep.subr.mxu0 0.0
    %5798 = vmatpush1.msra.mxu0 0.0
    %5799 = vmatprep.subr.mxu0 0.0
    %5800 = vmatpush1.msra.mxu0 0.0
    %5801 = vmatprep.subr.mxu0 0.0
    %5802 = vmatpush1.msra.mxu0 0.0
    %5803 = vmatprep.subr.mxu0 0.0
    %5804 = vmatpush1.msra.mxu0 0.0
    %5805 = vmatprep.subr.mxu0 0.0
    %5806 = vmatpush1.msra.mxu0 0.0
    %5807 = vmatprep.subr.mxu0 0.0
    %5808 = vmatpush1.msra.mxu0 0.0
    %5809 = vmatprep.subr.mxu0 0.0
    %5810 = vmatpush1.msra.mxu0 0.0
    %5811 = vmatprep.subr.mxu0 0.0
    %5812 = vmatpush1.msra.mxu0 0.0
    %5813 = vmatprep.subr.mxu0 0.0
    %5814 = vmatpush1.msra.mxu0 0.0
    %5815 = vmatprep.mubr.f32.mxu0 0.0
    %5816 = vmatmul.mubr.f32.gmra.mrb[0].mxu0 %v5749
    %v5817 = vpop.f32.mrb[0].mxu0
    %v5818 = vadd.f32 0.0, %v5817
    %v5819 = vpop.f32.mrb[0].mxu0
    %5820 = vdwg.mxu0
    %v5822 = vsel %vm733, %v5527, 0
    %5824 = vmatprep.subr.mxu0 0.0
    %5825 = vmatpush1.msra.mxu0 %v4995
    %5826 = vmatprep.subr.mxu0 0.0
    %5827 = vmatpush1.msra.mxu0 0.0
    %5828 = vmatprep.subr.mxu0 0.0
    %5829 = vmatpush1.msra.mxu0 0.0
    %5830 = vmatprep.subr.mxu0 0.0
    %5831 = vmatpush1.msra.mxu0 0.0
    %5832 = vmatprep.subr.mxu0 0.0
    %5833 = vmatpush1.msra.mxu0 0.0
    %5834 = vmatprep.subr.mxu0 0.0
    %5835 = vmatpush1.msra.mxu0 0.0
    %5836 = vmatprep.subr.mxu0 0.0
    %5837 = vmatpush1.msra.mxu0 0.0
    %5838 = vmatprep.subr.mxu0 0.0
    %5839 = vmatpush1.msra.mxu0 0.0
    %5840 = vmatprep.subr.mxu0 0.0
    %5841 = vmatpush1.msra.mxu0 0.0
    %5842 = vmatprep.subr.mxu0 0.0
    %5843 = vmatpush1.msra.mxu0 0.0
    %5844 = vmatprep.subr.mxu0 0.0
    %5845 = vmatpush1.msra.mxu0 0.0
    %5846 = vmatprep.subr.mxu0 0.0
    %5847 = vmatpush1.msra.mxu0 0.0
    %5848 = vmatprep.subr.mxu0 0.0
    %5849 = vmatpush1.msra.mxu0 0.0
    %5850 = vmatprep.subr.mxu0 0.0
    %5851 = vmatpush1.msra.mxu0 0.0
    %5852 = vmatprep.subr.mxu0 0.0
    %5853 = vmatpush1.msra.mxu0 0.0
    %5854 = vmatprep.subr.mxu0 0.0
    %5855 = vmatpush1.msra.mxu0 0.0
    %5856 = vmatprep.subr.mxu0 0.0
    %5857 = vmatpush1.msra.mxu0 0.0
    %5858 = vmatprep.subr.mxu0 0.0
    %5859 = vmatpush1.msra.mxu0 0.0
    %5860 = vmatprep.subr.mxu0 0.0
    %5861 = vmatpush1.msra.mxu0 0.0
    %5862 = vmatprep.subr.mxu0 0.0
    %5863 = vmatpush1.msra.mxu0 0.0
    %5864 = vmatprep.subr.mxu0 0.0
    %5865 = vmatpush1.msra.mxu0 0.0
    %5866 = vmatprep.subr.mxu0 0.0
    %5867 = vmatpush1.msra.mxu0 0.0
    %5868 = vmatprep.subr.mxu0 0.0
    %5869 = vmatpush1.msra.mxu0 0.0
    %5870 = vmatprep.subr.mxu0 0.0
    %5871 = vmatpush1.msra.mxu0 0.0
    %5872 = vmatprep.subr.mxu0 0.0
    %5873 = vmatpush1.msra.mxu0 0.0
    %5874 = vmatprep.subr.mxu0 0.0
    %5875 = vmatpush1.msra.mxu0 0.0
    %5876 = vmatprep.subr.mxu0 0.0
    %5877 = vmatpush1.msra.mxu0 0.0
    %5878 = vmatprep.subr.mxu0 0.0
    %5879 = vmatpush1.msra.mxu0 0.0
    %5880 = vmatprep.subr.mxu0 0.0
    %5881 = vmatpush1.msra.mxu0 0.0
    %5882 = vmatprep.subr.mxu0 0.0
    %5883 = vmatpush1.msra.mxu0 0.0
    %5884 = vmatprep.subr.mxu0 0.0
    %5885 = vmatpush1.msra.mxu0 0.0
    %5886 = vmatprep.subr.mxu0 0.0
    %5887 = vmatpush1.msra.mxu0 0.0
    %5888 = vmatprep.mubr.f32.mxu0 0.0
    %5889 = vmatmul.mubr.f32.gmra.mrb[0].mxu0 %v5822
    %v5890 = vpop.f32.mrb[0].mxu0
    %v5891 = vadd.f32 0.0, %v5890
    %v5892 = vpop.f32.mrb[0].mxu0
    %5893 = vdwg.mxu0
    %v5895 = vsel %vm733, %v5528, 0
    %5897 = vmatprep.subr.mxu0 0.0
    %5898 = vmatpush1.msra.mxu0 %v4999
    %5899 = vmatprep.subr.mxu0 0.0
    %5900 = vmatpush1.msra.mxu0 0.0
    %5901 = vmatprep.subr.mxu0 0.0
    %5902 = vmatpush1.msra.mxu0 0.0
    %5903 = vmatprep.subr.mxu0 0.0
    %5904 = vmatpush1.msra.mxu0 0.0
    %5905 = vmatprep.subr.mxu0 0.0
    %5906 = vmatpush1.msra.mxu0 0.0
    %5907 = vmatprep.subr.mxu0 0.0
    %5908 = vmatpush1.msra.mxu0 0.0
    %5909 = vmatprep.subr.mxu0 0.0
    %5910 = vmatpush1.msra.mxu0 0.0
    %5911 = vmatprep.subr.mxu0 0.0
    %5912 = vmatpush1.msra.mxu0 0.0
    %5913 = vmatprep.subr.mxu0 0.0
    %5914 = vmatpush1.msra.mxu0 0.0
    %5915 = vmatprep.subr.mxu0 0.0
    %5916 = vmatpush1.msra.mxu0 0.0
    %5917 = vmatprep.subr.mxu0 0.0
    %5918 = vmatpush1.msra.mxu0 0.0
    %5919 = vmatprep.subr.mxu0 0.0
    %5920 = vmatpush1.msra.mxu0 0.0
    %5921 = vmatprep.subr.mxu0 0.0
    %5922 = vmatpush1.msra.mxu0 0.0
    %5923 = vmatprep.subr.mxu0 0.0
    %5924 = vmatpush1.msra.mxu0 0.0
    %5925 = vmatprep.subr.mxu0 0.0
    %5926 = vmatpush1.msra.mxu0 0.0
    %5927 = vmatprep.subr.mxu0 0.0
    %5928 = vmatpush1.msra.mxu0 0.0
    %5929 = vmatprep.subr.mxu0 0.0
    %5930 = vmatpush1.msra.mxu0 0.0
    %5931 = vmatprep.subr.mxu0 0.0
    %5932 = vmatpush1.msra.mxu0 0.0
    %5933 = vmatprep.subr.mxu0 0.0
    %5934 = vmatpush1.msra.mxu0 0.0
    %5935 = vmatprep.subr.mxu0 0.0
    %5936 = vmatpush1.msra.mxu0 0.0
    %5937 = vmatprep.subr.mxu0 0.0
    %5938 = vmatpush1.msra.mxu0 0.0
    %5939 = vmatprep.subr.mxu0 0.0
    %5940 = vmatpush1.msra.mxu0 0.0
    %5941 = vmatprep.subr.mxu0 0.0
    %5942 = vmatpush1.msra.mxu0 0.0
    %5943 = vmatprep.subr.mxu0 0.0
    %5944 = vmatpush1.msra.mxu0 0.0
    %5945 = vmatprep.subr.mxu0 0.0
    %5946 = vmatpush1.msra.mxu0 0.0
    %5947 = vmatprep.subr.mxu0 0.0
    %5948 = vmatpush1.msra.mxu0 0.0
    %5949 = vmatprep.subr.mxu0 0.0
    %5950 = vmatpush1.msra.mxu0 0.0
    %5951 = vmatprep.subr.mxu0 0.0
    %5952 = vmatpush1.msra.mxu0 0.0
    %5953 = vmatprep.subr.mxu0 0.0
    %5954 = vmatpush1.msra.mxu0 0.0
    %5955 = vmatprep.subr.mxu0 0.0
    %5956 = vmatpush1.msra.mxu0 0.0
    %5957 = vmatprep.subr.mxu0 0.0
    %5958 = vmatpush1.msra.mxu0 0.0
    %5959 = vmatprep.subr.mxu0 0.0
    %5960 = vmatpush1.msra.mxu0 0.0
    %5961 = vmatprep.mubr.f32.mxu0 0.0
    %5962 = vmatmul.mubr.f32.gmra.mrb[0].mxu0 %v5895
    %v5963 = vpop.f32.mrb[0].mxu0
    %v5964 = vadd.f32 0.0, %v5963
    %v5965 = vpop.f32.mrb[0].mxu0
    %5966 = vdwg.mxu0
    %5967 = vrot.lane.b32.xlu0 %v4973, 112
    %v5968 = vpop.permute.xlu0 %5967
    %5969 = vrot.lane.b32.xlu0 %v4973, 48
    %v5970 = vpop.permute.xlu0 %5969
    %v5971 = vsel %vm60, %v5968, 0
    %v5973 = vsel %vm60, %v5970, 0
    %5975 = vmatprep.subr.mxu0 0.0
    %5976 = vmatpush1.xpose.msra.mxu0 %v5973
    %5977 = vmatprep.subr.mxu0 0.0
    %5978 = vmatpush1.xpose.msra.mxu0 0.0
    %5979 = vmatprep.subr.mxu0 0.0
    %5980 = vmatpush1.xpose.msra.mxu0 0.0
    %5981 = vmatprep.subr.mxu0 0.0
    %5982 = vmatpush1.xpose.msra.mxu0 0.0
    %5983 = vmatprep.subr.mxu0 0.0
    %5984 = vmatpush1.xpose.msra.mxu0 0.0
    %5985 = vmatprep.subr.mxu0 0.0
    %5986 = vmatpush1.xpose.msra.mxu0 0.0
    %5987 = vmatprep.subr.mxu0 0.0
    %5988 = vmatpush1.xpose.msra.mxu0 0.0
    %5989 = vmatprep.subr.mxu0 0.0
    %5990 = vmatpush1.xpose.msra.mxu0 0.0
    %5991 = vmatprep.subr.mxu0 0.0
    %5992 = vmatpush1.xpose.msra.mxu0 0.0
    %5993 = vmatprep.subr.mxu0 0.0
    %5994 = vmatpush1.xpose.msra.mxu0 0.0
    %5995 = vmatprep.subr.mxu0 0.0
    %5996 = vmatpush1.xpose.msra.mxu0 0.0
    %5997 = vmatprep.subr.mxu0 0.0
    %5998 = vmatpush1.xpose.msra.mxu0 0.0
    %5999 = vmatprep.subr.mxu0 0.0
    %6000 = vmatpush1.xpose.msra.mxu0 0.0
    %6001 = vmatprep.subr.mxu0 0.0
    %6002 = vmatpush1.xpose.msra.mxu0 0.0
    %6003 = vmatprep.subr.mxu0 0.0
    %6004 = vmatpush1.xpose.msra.mxu0 0.0
    %6005 = vmatprep.subr.mxu0 0.0
    %6006 = vmatpush1.xpose.msra.mxu0 0.0
    %6007 = vmatprep.subr.mxu0 0.0
    %6008 = vmatpush1.xpose.msra.mxu0 0.0
    %6009 = vmatprep.subr.mxu0 0.0
    %6010 = vmatpush1.xpose.msra.mxu0 0.0
    %6011 = vmatprep.subr.mxu0 0.0
    %6012 = vmatpush1.xpose.msra.mxu0 0.0
    %6013 = vmatprep.subr.mxu0 0.0
    %6014 = vmatpush1.xpose.msra.mxu0 0.0
    %6015 = vmatprep.subr.mxu0 0.0
    %6016 = vmatpush1.xpose.msra.mxu0 0.0
    %6017 = vmatprep.subr.mxu0 0.0
    %6018 = vmatpush1.xpose.msra.mxu0 0.0
    %6019 = vmatprep.subr.mxu0 0.0
    %6020 = vmatpush1.xpose.msra.mxu0 0.0
    %6021 = vmatprep.subr.mxu0 0.0
    %6022 = vmatpush1.xpose.msra.mxu0 0.0
    %6023 = vmatprep.subr.mxu0 0.0
    %6024 = vmatpush1.xpose.msra.mxu0 0.0
    %6025 = vmatprep.subr.mxu0 0.0
    %6026 = vmatpush1.xpose.msra.mxu0 0.0
    %6027 = vmatprep.subr.mxu0 0.0
    %6028 = vmatpush1.xpose.msra.mxu0 0.0
    %6029 = vmatprep.subr.mxu0 0.0
    %6030 = vmatpush1.xpose.msra.mxu0 0.0
    %6031 = vmatprep.subr.mxu0 0.0
    %6032 = vmatpush1.xpose.msra.mxu0 0.0
    %6033 = vmatprep.subr.mxu0 0.0
    %6034 = vmatpush1.xpose.msra.mxu0 0.0
    %6035 = vmatprep.subr.mxu0 0.0
    %6036 = vmatpush1.xpose.msra.mxu0 0.0
    %6037 = vmatprep.subr.mxu0 0.0
    %6038 = vmatpush1.xpose.msra.mxu0 0.0
    %6039 = vmatprep.mubr.f32.mxu0 0.0
    %6040 = vmatmul.mubr.f32.gmra.mrb[0].mxu0 %v5971
    %v6041 = vpop.f32.mrb[0].mxu0
    %v6042 = vadd.f32 0.0, %v6041
    %v6043 = vpop.f32.mrb[0].mxu0
    %6044 = vdwg.mxu0
    %6045 = vrot.lane.b32.xlu0 %v4977, 112
    %v6046 = vpop.permute.xlu0 %6045
    %6047 = vrot.lane.b32.xlu0 %v4977, 48
    %v6048 = vpop.permute.xlu0 %6047
    %v6049 = vsel %vm60, %v6046, 0
    %v6051 = vsel %vm60, %v6048, 0
    %6053 = vmatprep.subr.mxu0 0.0
    %6054 = vmatpush1.xpose.msra.mxu0 %v6051
    %6055 = vmatprep.subr.mxu0 0.0
    %6056 = vmatpush1.xpose.msra.mxu0 0.0
    %6057 = vmatprep.subr.mxu0 0.0
    %6058 = vmatpush1.xpose.msra.mxu0 0.0
    %6059 = vmatprep.subr.mxu0 0.0
    %6060 = vmatpush1.xpose.msra.mxu0 0.0
    %6061 = vmatprep.subr.mxu0 0.0
    %6062 = vmatpush1.xpose.msra.mxu0 0.0
    %6063 = vmatprep.subr.mxu0 0.0
    %6064 = vmatpush1.xpose.msra.mxu0 0.0
    %6065 = vmatprep.subr.mxu0 0.0
    %6066 = vmatpush1.xpose.msra.mxu0 0.0
    %6067 = vmatprep.subr.mxu0 0.0
    %6068 = vmatpush1.xpose.msra.mxu0 0.0
    %6069 = vmatprep.subr.mxu0 0.0
    %6070 = vmatpush1.xpose.msra.mxu0 0.0
    %6071 = vmatprep.subr.mxu0 0.0
    %6072 = vmatpush1.xpose.msra.mxu0 0.0
    %6073 = vmatprep.subr.mxu0 0.0
    %6074 = vmatpush1.xpose.msra.mxu0 0.0
    %6075 = vmatprep.subr.mxu0 0.0
    %6076 = vmatpush1.xpose.msra.mxu0 0.0
    %6077 = vmatprep.subr.mxu0 0.0
    %6078 = vmatpush1.xpose.msra.mxu0 0.0
    %6079 = vmatprep.subr.mxu0 0.0
    %6080 = vmatpush1.xpose.msra.mxu0 0.0
    %6081 = vmatprep.subr.mxu0 0.0
    %6082 = vmatpush1.xpose.msra.mxu0 0.0
    %6083 = vmatprep.subr.mxu0 0.0
    %6084 = vmatpush1.xpose.msra.mxu0 0.0
    %6085 = vmatprep.subr.mxu0 0.0
    %6086 = vmatpush1.xpose.msra.mxu0 0.0
    %6087 = vmatprep.subr.mxu0 0.0
    %6088 = vmatpush1.xpose.msra.mxu0 0.0
    %6089 = vmatprep.subr.mxu0 0.0
    %6090 = vmatpush1.xpose.msra.mxu0 0.0
    %6091 = vmatprep.subr.mxu0 0.0
    %6092 = vmatpush1.xpose.msra.mxu0 0.0
    %6093 = vmatprep.subr.mxu0 0.0
    %6094 = vmatpush1.xpose.msra.mxu0 0.0
    %6095 = vmatprep.subr.mxu0 0.0
    %6096 = vmatpush1.xpose.msra.mxu0 0.0
    %6097 = vmatprep.subr.mxu0 0.0
    %6098 = vmatpush1.xpose.msra.mxu0 0.0
    %6099 = vmatprep.subr.mxu0 0.0
    %6100 = vmatpush1.xpose.msra.mxu0 0.0
    %6101 = vmatprep.subr.mxu0 0.0
    %6102 = vmatpush1.xpose.msra.mxu0 0.0
    %6103 = vmatprep.subr.mxu0 0.0
    %6104 = vmatpush1.xpose.msra.mxu0 0.0
    %6105 = vmatprep.subr.mxu0 0.0
    %6106 = vmatpush1.xpose.msra.mxu0 0.0
    %6107 = vmatprep.subr.mxu0 0.0
    %6108 = vmatpush1.xpose.msra.mxu0 0.0
    %6109 = vmatprep.subr.mxu0 0.0
    %6110 = vmatpush1.xpose.msra.mxu0 0.0
    %6111 = vmatprep.subr.mxu0 0.0
    %6112 = vmatpush1.xpose.msra.mxu0 0.0
    %6113 = vmatprep.subr.mxu0 0.0
    %6114 = vmatpush1.xpose.msra.mxu0 0.0
    %6115 = vmatprep.subr.mxu0 0.0
    %6116 = vmatpush1.xpose.msra.mxu0 0.0
    %6117 = vmatprep.mubr.f32.mxu0 0.0
    %6118 = vmatmul.mubr.f32.gmra.mrb[0].mxu0 %v6049
    %v6119 = vpop.f32.mrb[0].mxu0
    %v6120 = vadd.f32 0.0, %v6119
    %v6121 = vpop.f32.mrb[0].mxu0
    %6122 = vdwg.mxu0
    %6123 = vrot.lane.b32.xlu0 %v4983, 112
    %v6124 = vpop.permute.xlu0 %6123
    %6125 = vrot.lane.b32.xlu0 %v4983, 48
    %v6126 = vpop.permute.xlu0 %6125
    %v6127 = vsel %vm60, %v6124, 0
    %v6129 = vsel %vm60, %v6126, 0
    %6131 = vmatprep.subr.mxu0 0.0
    %6132 = vmatpush1.xpose.msra.mxu0 %v6129
    %6133 = vmatprep.subr.mxu0 0.0
    %6134 = vmatpush1.xpose.msra.mxu0 0.0
    %6135 = vmatprep.subr.mxu0 0.0
    %6136 = vmatpush1.xpose.msra.mxu0 0.0
    %6137 = vmatprep.subr.mxu0 0.0
    %6138 = vmatpush1.xpose.msra.mxu0 0.0
    %6139 = vmatprep.subr.mxu0 0.0
    %6140 = vmatpush1.xpose.msra.mxu0 0.0
    %6141 = vmatprep.subr.mxu0 0.0
    %6142 = vmatpush1.xpose.msra.mxu0 0.0
    %6143 = vmatprep.subr.mxu0 0.0
    %6144 = vmatpush1.xpose.msra.mxu0 0.0
    %6145 = vmatprep.subr.mxu0 0.0
    %6146 = vmatpush1.xpose.msra.mxu0 0.0
    %6147 = vmatprep.subr.mxu0 0.0
    %6148 = vmatpush1.xpose.msra.mxu0 0.0
    %6149 = vmatprep.subr.mxu0 0.0
    %6150 = vmatpush1.xpose.msra.mxu0 0.0
    %6151 = vmatprep.subr.mxu0 0.0
    %6152 = vmatpush1.xpose.msra.mxu0 0.0
    %6153 = vmatprep.subr.mxu0 0.0
    %6154 = vmatpush1.xpose.msra.mxu0 0.0
    %6155 = vmatprep.subr.mxu0 0.0
    %6156 = vmatpush1.xpose.msra.mxu0 0.0
    %6157 = vmatprep.subr.mxu0 0.0
    %6158 = vmatpush1.xpose.msra.mxu0 0.0
    %6159 = vmatprep.subr.mxu0 0.0
    %6160 = vmatpush1.xpose.msra.mxu0 0.0
    %6161 = vmatprep.subr.mxu0 0.0
    %6162 = vmatpush1.xpose.msra.mxu0 0.0
    %6163 = vmatprep.subr.mxu0 0.0
    %6164 = vmatpush1.xpose.msra.mxu0 0.0
    %6165 = vmatprep.subr.mxu0 0.0
    %6166 = vmatpush1.xpose.msra.mxu0 0.0
    %6167 = vmatprep.subr.mxu0 0.0
    %6168 = vmatpush1.xpose.msra.mxu0 0.0
    %6169 = vmatprep.subr.mxu0 0.0
    %6170 = vmatpush1.xpose.msra.mxu0 0.0
    %6171 = vmatprep.subr.mxu0 0.0
    %6172 = vmatpush1.xpose.msra.mxu0 0.0
    %6173 = vmatprep.subr.mxu0 0.0
    %6174 = vmatpush1.xpose.msra.mxu0 0.0
    %6175 = vmatprep.subr.mxu0 0.0
    %6176 = vmatpush1.xpose.msra.mxu0 0.0
    %6177 = vmatprep.subr.mxu0 0.0
    %6178 = vmatpush1.xpose.msra.mxu0 0.0
    %6179 = vmatprep.subr.mxu0 0.0
    %6180 = vmatpush1.xpose.msra.mxu0 0.0
    %6181 = vmatprep.subr.mxu0 0.0
    %6182 = vmatpush1.xpose.msra.mxu0 0.0
    %6183 = vmatprep.subr.mxu0 0.0
    %6184 = vmatpush1.xpose.msra.mxu0 0.0
    %6185 = vmatprep.subr.mxu0 0.0
    %6186 = vmatpush1.xpose.msra.mxu0 0.0
    %6187 = vmatprep.subr.mxu0 0.0
    %6188 = vmatpush1.xpose.msra.mxu0 0.0
    %6189 = vmatprep.subr.mxu0 0.0
    %6190 = vmatpush1.xpose.msra.mxu0 0.0
    %6191 = vmatprep.subr.mxu0 0.0
    %6192 = vmatpush1.xpose.msra.mxu0 0.0
    %6193 = vmatprep.subr.mxu0 0.0
    %6194 = vmatpush1.xpose.msra.mxu0 0.0
    %6195 = vmatprep.mubr.f32.mxu0 0.0
    %6196 = vmatmul.mubr.f32.gmra.mrb[0].mxu0 %v6127
    %v6197 = vpop.f32.mrb[0].mxu0
    %v6198 = vadd.f32 0.0, %v6197
    %v6199 = vpop.f32.mrb[0].mxu0
    %6200 = vdwg.mxu0
    %6201 = vrot.lane.b32.xlu0 %v4987, 112
    %v6202 = vpop.permute.xlu0 %6201
    %6203 = vrot.lane.b32.xlu0 %v4987, 48
    %v6204 = vpop.permute.xlu0 %6203
    %v6205 = vsel %vm60, %v6202, 0
    %v6207 = vsel %vm60, %v6204, 0
    %6209 = vmatprep.subr.mxu0 0.0
    %6210 = vmatpush1.xpose.msra.mxu0 %v6207
    %6211 = vmatprep.subr.mxu0 0.0
    %6212 = vmatpush1.xpose.msra.mxu0 0.0
    %6213 = vmatprep.subr.mxu0 0.0
    %6214 = vmatpush1.xpose.msra.mxu0 0.0
    %6215 = vmatprep.subr.mxu0 0.0
    %6216 = vmatpush1.xpose.msra.mxu0 0.0
    %6217 = vmatprep.subr.mxu0 0.0
    %6218 = vmatpush1.xpose.msra.mxu0 0.0
    %6219 = vmatprep.subr.mxu0 0.0
    %6220 = vmatpush1.xpose.msra.mxu0 0.0
    %6221 = vmatprep.subr.mxu0 0.0
    %6222 = vmatpush1.xpose.msra.mxu0 0.0
    %6223 = vmatprep.subr.mxu0 0.0
    %6224 = vmatpush1.xpose.msra.mxu0 0.0
    %6225 = vmatprep.subr.mxu0 0.0
    %6226 = vmatpush1.xpose.msra.mxu0 0.0
    %6227 = vmatprep.subr.mxu0 0.0
    %6228 = vmatpush1.xpose.msra.mxu0 0.0
    %6229 = vmatprep.subr.mxu0 0.0
    %6230 = vmatpush1.xpose.msra.mxu0 0.0
    %6231 = vmatprep.subr.mxu0 0.0
    %6232 = vmatpush1.xpose.msra.mxu0 0.0
    %6233 = vmatprep.subr.mxu0 0.0
    %6234 = vmatpush1.xpose.msra.mxu0 0.0
    %6235 = vmatprep.subr.mxu0 0.0
    %6236 = vmatpush1.xpose.msra.mxu0 0.0
    %6237 = vmatprep.subr.mxu0 0.0
    %6238 = vmatpush1.xpose.msra.mxu0 0.0
    %6239 = vmatprep.subr.mxu0 0.0
    %6240 = vmatpush1.xpose.msra.mxu0 0.0
    %6241 = vmatprep.subr.mxu0 0.0
    %6242 = vmatpush1.xpose.msra.mxu0 0.0
    %6243 = vmatprep.subr.mxu0 0.0
    %6244 = vmatpush1.xpose.msra.mxu0 0.0
    %6245 = vmatprep.subr.mxu0 0.0
    %6246 = vmatpush1.xpose.msra.mxu0 0.0
    %6247 = vmatprep.subr.mxu0 0.0
    %6248 = vmatpush1.xpose.msra.mxu0 0.0
    %6249 = vmatprep.subr.mxu0 0.0
    %6250 = vmatpush1.xpose.msra.mxu0 0.0
    %6251 = vmatprep.subr.mxu0 0.0
    %6252 = vmatpush1.xpose.msra.mxu0 0.0
    %6253 = vmatprep.subr.mxu0 0.0
    %6254 = vmatpush1.xpose.msra.mxu0 0.0
    %6255 = vmatprep.subr.mxu0 0.0
    %6256 = vmatpush1.xpose.msra.mxu0 0.0
    %6257 = vmatprep.subr.mxu0 0.0
    %6258 = vmatpush1.xpose.msra.mxu0 0.0
    %6259 = vmatprep.subr.mxu0 0.0
    %6260 = vmatpush1.xpose.msra.mxu0 0.0
    %6261 = vmatprep.subr.mxu0 0.0
    %6262 = vmatpush1.xpose.msra.mxu0 0.0
    %6263 = vmatprep.subr.mxu0 0.0
    %6264 = vmatpush1.xpose.msra.mxu0 0.0
    %6265 = vmatprep.subr.mxu0 0.0
    %6266 = vmatpush1.xpose.msra.mxu0 0.0
    %6267 = vmatprep.subr.mxu0 0.0
    %6268 = vmatpush1.xpose.msra.mxu0 0.0
    %6269 = vmatprep.subr.mxu0 0.0
    %6270 = vmatpush1.xpose.msra.mxu0 0.0
    %6271 = vmatprep.subr.mxu0 0.0
    %6272 = vmatpush1.xpose.msra.mxu0 0.0
    %6273 = vmatprep.mubr.f32.mxu0 0.0
    %6274 = vmatmul.mubr.f32.gmra.mrb[0].mxu0 %v6205
    %v6275 = vpop.f32.mrb[0].mxu0
    %v6276 = vadd.f32 0.0, %v6275
    %v6277 = vpop.f32.mrb[0].mxu0
    %6278 = vdwg.mxu0
    %6279 = vrot.lane.b32.xlu0 %v4993, 112
    %v6280 = vpop.permute.xlu0 %6279
    %6281 = vrot.lane.b32.xlu0 %v4993, 48
    %v6282 = vpop.permute.xlu0 %6281
    %v6283 = vsel %vm60, %v6280, 0
    %v6285 = vsel %vm60, %v6282, 0
    %6287 = vmatprep.subr.mxu0 0.0
    %6288 = vmatpush1.xpose.msra.mxu0 %v6285
    %6289 = vmatprep.subr.mxu0 0.0
    %6290 = vmatpush1.xpose.msra.mxu0 0.0
    %6291 = vmatprep.subr.mxu0 0.0
    %6292 = vmatpush1.xpose.msra.mxu0 0.0
    %6293 = vmatprep.subr.mxu0 0.0
    %6294 = vmatpush1.xpose.msra.mxu0 0.0
    %6295 = vmatprep.subr.mxu0 0.0
    %6296 = vmatpush1.xpose.msra.mxu0 0.0
    %6297 = vmatprep.subr.mxu0 0.0
    %6298 = vmatpush1.xpose.msra.mxu0 0.0
    %6299 = vmatprep.subr.mxu0 0.0
    %6300 = vmatpush1.xpose.msra.mxu0 0.0
    %6301 = vmatprep.subr.mxu0 0.0
    %6302 = vmatpush1.xpose.msra.mxu0 0.0
    %6303 = vmatprep.subr.mxu0 0.0
    %6304 = vmatpush1.xpose.msra.mxu0 0.0
    %6305 = vmatprep.subr.mxu0 0.0
    %6306 = vmatpush1.xpose.msra.mxu0 0.0
    %6307 = vmatprep.subr.mxu0 0.0
    %6308 = vmatpush1.xpose.msra.mxu0 0.0
    %6309 = vmatprep.subr.mxu0 0.0
    %6310 = vmatpush1.xpose.msra.mxu0 0.0
    %6311 = vmatprep.subr.mxu0 0.0
    %6312 = vmatpush1.xpose.msra.mxu0 0.0
    %6313 = vmatprep.subr.mxu0 0.0
    %6314 = vmatpush1.xpose.msra.mxu0 0.0
    %6315 = vmatprep.subr.mxu0 0.0
    %6316 = vmatpush1.xpose.msra.mxu0 0.0
    %6317 = vmatprep.subr.mxu0 0.0
    %6318 = vmatpush1.xpose.msra.mxu0 0.0
    %6319 = vmatprep.subr.mxu0 0.0
    %6320 = vmatpush1.xpose.msra.mxu0 0.0
    %6321 = vmatprep.subr.mxu0 0.0
    %6322 = vmatpush1.xpose.msra.mxu0 0.0
    %6323 = vmatprep.subr.mxu0 0.0
    %6324 = vmatpush1.xpose.msra.mxu0 0.0
    %6325 = vmatprep.subr.mxu0 0.0
    %6326 = vmatpush1.xpose.msra.mxu0 0.0
    %6327 = vmatprep.subr.mxu0 0.0
    %6328 = vmatpush1.xpose.msra.mxu0 0.0
    %6329 = vmatprep.subr.mxu0 0.0
    %6330 = vmatpush1.xpose.msra.mxu0 0.0
    %6331 = vmatprep.subr.mxu0 0.0
    %6332 = vmatpush1.xpose.msra.mxu0 0.0
    %6333 = vmatprep.subr.mxu0 0.0
    %6334 = vmatpush1.xpose.msra.mxu0 0.0
    %6335 = vmatprep.subr.mxu0 0.0
    %6336 = vmatpush1.xpose.msra.mxu0 0.0
    %6337 = vmatprep.subr.mxu0 0.0
    %6338 = vmatpush1.xpose.msra.mxu0 0.0
    %6339 = vmatprep.subr.mxu0 0.0
    %6340 = vmatpush1.xpose.msra.mxu0 0.0
    %6341 = vmatprep.subr.mxu0 0.0
    %6342 = vmatpush1.xpose.msra.mxu0 0.0
    %6343 = vmatprep.subr.mxu0 0.0
    %6344 = vmatpush1.xpose.msra.mxu0 0.0
    %6345 = vmatprep.subr.mxu0 0.0
    %6346 = vmatpush1.xpose.msra.mxu0 0.0
    %6347 = vmatprep.subr.mxu0 0.0
    %6348 = vmatpush1.xpose.msra.mxu0 0.0
    %6349 = vmatprep.subr.mxu0 0.0
    %6350 = vmatpush1.xpose.msra.mxu0 0.0
    %6351 = vmatprep.mubr.f32.mxu0 0.0
    %6352 = vmatmul.mubr.f32.gmra.mrb[0].mxu0 %v6283
    %v6353 = vpop.f32.mrb[0].mxu0
    %v6354 = vadd.f32 0.0, %v6353
    %v6355 = vpop.f32.mrb[0].mxu0
    %6356 = vdwg.mxu0
    %6357 = vrot.lane.b32.xlu0 %v4997, 112
    %v6358 = vpop.permute.xlu0 %6357
    %6359 = vrot.lane.b32.xlu0 %v4997, 48
    %v6360 = vpop.permute.xlu0 %6359
    %v6361 = vsel %vm60, %v6358, 0
    %v6363 = vsel %vm60, %v6360, 0
    %6365 = vmatprep.subr.mxu0 0.0
    %6366 = vmatpush1.xpose.msra.mxu0 %v6363
    %6367 = vmatprep.subr.mxu0 0.0
    %6368 = vmatpush1.xpose.msra.mxu0 0.0
    %6369 = vmatprep.subr.mxu0 0.0
    %6370 = vmatpush1.xpose.msra.mxu0 0.0
    %6371 = vmatprep.subr.mxu0 0.0
    %6372 = vmatpush1.xpose.msra.mxu0 0.0
    %6373 = vmatprep.subr.mxu0 0.0
    %6374 = vmatpush1.xpose.msra.mxu0 0.0
    %6375 = vmatprep.subr.mxu0 0.0
    %6376 = vmatpush1.xpose.msra.mxu0 0.0
    %6377 = vmatprep.subr.mxu0 0.0
    %6378 = vmatpush1.xpose.msra.mxu0 0.0
    %6379 = vmatprep.subr.mxu0 0.0
    %6380 = vmatpush1.xpose.msra.mxu0 0.0
    %6381 = vmatprep.subr.mxu0 0.0
    %6382 = vmatpush1.xpose.msra.mxu0 0.0
    %6383 = vmatprep.subr.mxu0 0.0
    %6384 = vmatpush1.xpose.msra.mxu0 0.0
    %6385 = vmatprep.subr.mxu0 0.0
    %6386 = vmatpush1.xpose.msra.mxu0 0.0
    %6387 = vmatprep.subr.mxu0 0.0
    %6388 = vmatpush1.xpose.msra.mxu0 0.0
    %6389 = vmatprep.subr.mxu0 0.0
    %6390 = vmatpush1.xpose.msra.mxu0 0.0
    %6391 = vmatprep.subr.mxu0 0.0
    %6392 = vmatpush1.xpose.msra.mxu0 0.0
    %6393 = vmatprep.subr.mxu0 0.0
    %6394 = vmatpush1.xpose.msra.mxu0 0.0
    %6395 = vmatprep.subr.mxu0 0.0
    %6396 = vmatpush1.xpose.msra.mxu0 0.0
    %6397 = vmatprep.subr.mxu0 0.0
    %6398 = vmatpush1.xpose.msra.mxu0 0.0
    %6399 = vmatprep.subr.mxu0 0.0
    %6400 = vmatpush1.xpose.msra.mxu0 0.0
    %6401 = vmatprep.subr.mxu0 0.0
    %6402 = vmatpush1.xpose.msra.mxu0 0.0
    %6403 = vmatprep.subr.mxu0 0.0
    %6404 = vmatpush1.xpose.msra.mxu0 0.0
    %6405 = vmatprep.subr.mxu0 0.0
    %6406 = vmatpush1.xpose.msra.mxu0 0.0
    %6407 = vmatprep.subr.mxu0 0.0
    %6408 = vmatpush1.xpose.msra.mxu0 0.0
    %6409 = vmatprep.subr.mxu0 0.0
    %6410 = vmatpush1.xpose.msra.mxu0 0.0
    %6411 = vmatprep.subr.mxu0 0.0
    %6412 = vmatpush1.xpose.msra.mxu0 0.0
    %6413 = vmatprep.subr.mxu0 0.0
    %6414 = vmatpush1.xpose.msra.mxu0 0.0
    %6415 = vmatprep.subr.mxu0 0.0
    %6416 = vmatpush1.xpose.msra.mxu0 0.0
    %6417 = vmatprep.subr.mxu0 0.0
    %6418 = vmatpush1.xpose.msra.mxu0 0.0
    %6419 = vmatprep.subr.mxu0 0.0
    %6420 = vmatpush1.xpose.msra.mxu0 0.0
    %6421 = vmatprep.subr.mxu0 0.0
    %6422 = vmatpush1.xpose.msra.mxu0 0.0
    %6423 = vmatprep.subr.mxu0 0.0
    %6424 = vmatpush1.xpose.msra.mxu0 0.0
    %6425 = vmatprep.subr.mxu0 0.0
    %6426 = vmatpush1.xpose.msra.mxu0 0.0
    %6427 = vmatprep.subr.mxu0 0.0
    %6428 = vmatpush1.xpose.msra.mxu0 0.0
    %6429 = vmatprep.mubr.f32.mxu0 0.0
    %6430 = vmatmul.mubr.f32.gmra.mrb[0].mxu0 %v6361
    %v6431 = vpop.f32.mrb[0].mxu0
    %v6432 = vadd.f32 0.0, %v6431
    %v6433 = vpop.f32.mrb[0].mxu0
    %6434 = vdwg.mxu0
    %v6435 = vsel %vm733, %v6042, -inf
    %6436 = vmax.xlane.f32.xlu0 %v6435
    %v6437 = vpop.xlane.xlu0 %6436
    %v6438 = vsel %vm733, %v6120, -inf
    %6439 = vmax.xlane.f32.xlu0 %v6438
    %v6440 = vpop.xlane.xlu0 %6439
    %v6441 = vsel %vm733, %v6198, -inf
    %6442 = vmax.xlane.f32.xlu0 %v6441
    %v6443 = vpop.xlane.xlu0 %6442
    %v6444 = vsel %vm733, %v6276, -inf
    %6445 = vmax.xlane.f32.xlu0 %v6444
    %v6446 = vpop.xlane.xlu0 %6445
    %v6447 = vsel %vm733, %v6354, -inf
    %6448 = vmax.xlane.f32.xlu0 %v6447
    %v6449 = vpop.xlane.xlu0 %6448
    %v6450 = vsel %vm733, %v6432, -inf
    %6451 = vmax.xlane.f32.xlu0 %v6450
    %v6452 = vpop.xlane.xlu0 %6451
    %v6453 = vsub.f32 %v6042, %v6437
    %v6454 = vsub.f32 %v6120, %v6440
    %v6455 = vsub.f32 %v6198, %v6443
    %v6456 = vsub.f32 %v6276, %v6446
    %v6457 = vsub.f32 %v6354, %v6449
    %v6458 = vsub.f32 %v6432, %v6452
    %v6459 = vmul.f32 %v6453, 1.442695
    %v6460 = vpow.pop %v6459
    %v6461 = vmul.f32 %v6454, 1.442695
    %v6462 = vpow.pop %v6461
    %v6463 = vmul.f32 %v6455, 1.442695
    %v6464 = vpow.pop %v6463
    %v6465 = vmul.f32 %v6456, 1.442695
    %v6466 = vpow.pop %v6465
    %v6467 = vmul.f32 %v6457, 1.442695
    %v6468 = vpow.pop %v6467
    %v6469 = vmul.f32 %v6458, 1.442695
    %v6470 = vpow.pop %v6469
    %v6471 = vsel %vm733, %v6460, 0.0
    %6472 = vadd.xlane.f32.xlu0 %v6471
    %v6473 = vpop.xlane.xlu0 %6472
    %v6474 = vsel %vm733, %v6462, 0.0
    %6475 = vadd.xlane.f32.xlu0 %v6474
    %v6476 = vpop.xlane.xlu0 %6475
    %v6477 = vsel %vm733, %v6464, 0.0
    %6478 = vadd.xlane.f32.xlu0 %v6477
    %v6479 = vpop.xlane.xlu0 %6478
    %v6480 = vsel %vm733, %v6466, 0.0
    %6481 = vadd.xlane.f32.xlu0 %v6480
    %v6482 = vpop.xlane.xlu0 %6481
    %v6483 = vsel %vm733, %v6468, 0.0
    %6484 = vadd.xlane.f32.xlu0 %v6483
    %v6485 = vpop.xlane.xlu0 %6484
    %v6486 = vsel %vm733, %v6470, 0.0
    %6487 = vadd.xlane.f32.xlu0 %v6486
    %v6488 = vpop.xlane.xlu0 %6487
    %v6489 = vrcp.pop %v6473
    %v6490 = vrcp.pop %v6476
    %v6491 = vrcp.pop %v6479
    %v6492 = vrcp.pop %v6482
    %v6493 = vrcp.pop %v6485
    %v6494 = vrcp.pop %v6488
    %v6495 = vmul.f32 %v6460, %v6489
    %v6496 = vmul.f32 %v6462, %v6490
    %v6497 = vmul.f32 %v6464, %v6491
    %v6498 = vmul.f32 %v6466, %v6492
    %v6499 = vmul.f32 %v6468, %v6493
    %v6500 = vmul.f32 %v6470, %v6494
    %6502 = vrot.lane.b32.xlu0 %v4975, 112
    %v6503 = vpop.permute.xlu0 %6502
    %v6506 = vsel %vm733, %v6495, 0
    %6508 = vmatprep.subr.mxu0 0.0
    %6509 = vmatpush1.msra.mxu0 %v6503
    %6510 = vmatprep.subr.mxu0 0.0
    %6511 = vmatpush1.msra.mxu0 0.0
    %6512 = vmatprep.subr.mxu0 0.0
    %6513 = vmatpush1.msra.mxu0 0.0
    %6514 = vmatprep.subr.mxu0 0.0
    %6515 = vmatpush1.msra.mxu0 0.0
    %6516 = vmatprep.subr.mxu0 0.0
    %6517 = vmatpush1.msra.mxu0 0.0
    %6518 = vmatprep.subr.mxu0 0.0
    %6519 = vmatpush1.msra.mxu0 0.0
    %6520 = vmatprep.subr.mxu0 0.0
    %6521 = vmatpush1.msra.mxu0 0.0
    %6522 = vmatprep.subr.mxu0 0.0
    %6523 = vmatpush1.msra.mxu0 0.0
    %6524 = vmatprep.subr.mxu0 0.0
    %6525 = vmatpush1.msra.mxu0 0.0
    %6526 = vmatprep.subr.mxu0 0.0
    %6527 = vmatpush1.msra.mxu0 0.0
    %6528 = vmatprep.subr.mxu0 0.0
    %6529 = vmatpush1.msra.mxu0 0.0
    %6530 = vmatprep.subr.mxu0 0.0
    %6531 = vmatpush1.msra.mxu0 0.0
    %6532 = vmatprep.subr.mxu0 0.0
    %6533 = vmatpush1.msra.mxu0 0.0
    %6534 = vmatprep.subr.mxu0 0.0
    %6535 = vmatpush1.msra.mxu0 0.0
    %6536 = vmatprep.subr.mxu0 0.0
    %6537 = vmatpush1.msra.mxu0 0.0
    %6538 = vmatprep.subr.mxu0 0.0
    %6539 = vmatpush1.msra.mxu0 0.0
    %6540 = vmatprep.subr.mxu0 0.0
    %6541 = vmatpush1.msra.mxu0 0.0
    %6542 = vmatprep.subr.mxu0 0.0
    %6543 = vmatpush1.msra.mxu0 0.0
    %6544 = vmatprep.subr.mxu0 0.0
    %6545 = vmatpush1.msra.mxu0 0.0
    %6546 = vmatprep.subr.mxu0 0.0
    %6547 = vmatpush1.msra.mxu0 0.0
    %6548 = vmatprep.subr.mxu0 0.0
    %6549 = vmatpush1.msra.mxu0 0.0
    %6550 = vmatprep.subr.mxu0 0.0
    %6551 = vmatpush1.msra.mxu0 0.0
    %6552 = vmatprep.subr.mxu0 0.0
    %6553 = vmatpush1.msra.mxu0 0.0
    %6554 = vmatprep.subr.mxu0 0.0
    %6555 = vmatpush1.msra.mxu0 0.0
    %6556 = vmatprep.subr.mxu0 0.0
    %6557 = vmatpush1.msra.mxu0 0.0
    %6558 = vmatprep.subr.mxu0 0.0
    %6559 = vmatpush1.msra.mxu0 0.0
    %6560 = vmatprep.subr.mxu0 0.0
    %6561 = vmatpush1.msra.mxu0 0.0
    %6562 = vmatprep.subr.mxu0 0.0
    %6563 = vmatpush1.msra.mxu0 0.0
    %6564 = vmatprep.subr.mxu0 0.0
    %6565 = vmatpush1.msra.mxu0 0.0
    %6566 = vmatprep.subr.mxu0 0.0
    %6567 = vmatpush1.msra.mxu0 0.0
    %6568 = vmatprep.subr.mxu0 0.0
    %6569 = vmatpush1.msra.mxu0 0.0
    %6570 = vmatprep.subr.mxu0 0.0
    %6571 = vmatpush1.msra.mxu0 0.0
    %6572 = vmatprep.mubr.f32.mxu0 0.0
    %6573 = vmatmul.mubr.f32.gmra.mrb[0].mxu0 %v6506
    %v6574 = vpop.f32.mrb[0].mxu0
    %v6575 = vadd.f32 0.0, %v6574
    %v6576 = vpop.f32.mrb[0].mxu0
    %6577 = vdwg.mxu0
    %6579 = vrot.lane.b32.xlu0 %v4979, 112
    %v6580 = vpop.permute.xlu0 %6579
    %v6583 = vsel %vm733, %v6496, 0
    %6585 = vmatprep.subr.mxu0 0.0
    %6586 = vmatpush1.msra.mxu0 %v6580
    %6587 = vmatprep.subr.mxu0 0.0
    %6588 = vmatpush1.msra.mxu0 0.0
    %6589 = vmatprep.subr.mxu0 0.0
    %6590 = vmatpush1.msra.mxu0 0.0
    %6591 = vmatprep.subr.mxu0 0.0
    %6592 = vmatpush1.msra.mxu0 0.0
    %6593 = vmatprep.subr.mxu0 0.0
    %6594 = vmatpush1.msra.mxu0 0.0
    %6595 = vmatprep.subr.mxu0 0.0
    %6596 = vmatpush1.msra.mxu0 0.0
    %6597 = vmatprep.subr.mxu0 0.0
    %6598 = vmatpush1.msra.mxu0 0.0
    %6599 = vmatprep.subr.mxu0 0.0
    %6600 = vmatpush1.msra.mxu0 0.0
    %6601 = vmatprep.subr.mxu0 0.0
    %6602 = vmatpush1.msra.mxu0 0.0
    %6603 = vmatprep.subr.mxu0 0.0
    %6604 = vmatpush1.msra.mxu0 0.0
    %6605 = vmatprep.subr.mxu0 0.0
    %6606 = vmatpush1.msra.mxu0 0.0
    %6607 = vmatprep.subr.mxu0 0.0
    %6608 = vmatpush1.msra.mxu0 0.0
    %6609 = vmatprep.subr.mxu0 0.0
    %6610 = vmatpush1.msra.mxu0 0.0
    %6611 = vmatprep.subr.mxu0 0.0
    %6612 = vmatpush1.msra.mxu0 0.0
    %6613 = vmatprep.subr.mxu0 0.0
    %6614 = vmatpush1.msra.mxu0 0.0
    %6615 = vmatprep.subr.mxu0 0.0
    %6616 = vmatpush1.msra.mxu0 0.0
    %6617 = vmatprep.subr.mxu0 0.0
    %6618 = vmatpush1.msra.mxu0 0.0
    %6619 = vmatprep.subr.mxu0 0.0
    %6620 = vmatpush1.msra.mxu0 0.0
    %6621 = vmatprep.subr.mxu0 0.0
    %6622 = vmatpush1.msra.mxu0 0.0
    %6623 = vmatprep.subr.mxu0 0.0
    %6624 = vmatpush1.msra.mxu0 0.0
    %6625 = vmatprep.subr.mxu0 0.0
    %6626 = vmatpush1.msra.mxu0 0.0
    %6627 = vmatprep.subr.mxu0 0.0
    %6628 = vmatpush1.msra.mxu0 0.0
    %6629 = vmatprep.subr.mxu0 0.0
    %6630 = vmatpush1.msra.mxu0 0.0
    %6631 = vmatprep.subr.mxu0 0.0
    %6632 = vmatpush1.msra.mxu0 0.0
    %6633 = vmatprep.subr.mxu0 0.0
    %6634 = vmatpush1.msra.mxu0 0.0
    %6635 = vmatprep.subr.mxu0 0.0
    %6636 = vmatpush1.msra.mxu0 0.0
    %6637 = vmatprep.subr.mxu0 0.0
    %6638 = vmatpush1.msra.mxu0 0.0
    %6639 = vmatprep.subr.mxu0 0.0
    %6640 = vmatpush1.msra.mxu0 0.0
    %6641 = vmatprep.subr.mxu0 0.0
    %6642 = vmatpush1.msra.mxu0 0.0
    %6643 = vmatprep.subr.mxu0 0.0
    %6644 = vmatpush1.msra.mxu0 0.0
    %6645 = vmatprep.subr.mxu0 0.0
    %6646 = vmatpush1.msra.mxu0 0.0
    %6647 = vmatprep.subr.mxu0 0.0
    %6648 = vmatpush1.msra.mxu0 0.0
    %6649 = vmatprep.mubr.f32.mxu0 0.0
    %6650 = vmatmul.mubr.f32.gmra.mrb[0].mxu0 %v6583
    %v6651 = vpop.f32.mrb[0].mxu0
    %v6652 = vadd.f32 0.0, %v6651
    %v6653 = vpop.f32.mrb[0].mxu0
    %6654 = vdwg.mxu0
    %6656 = vrot.lane.b32.xlu0 %v4985, 112
    %v6657 = vpop.permute.xlu0 %6656
    %v6660 = vsel %vm733, %v6497, 0
    %6662 = vmatprep.subr.mxu0 0.0
    %6663 = vmatpush1.msra.mxu0 %v6657
    %6664 = vmatprep.subr.mxu0 0.0
    %6665 = vmatpush1.msra.mxu0 0.0
    %6666 = vmatprep.subr.mxu0 0.0
    %6667 = vmatpush1.msra.mxu0 0.0
    %6668 = vmatprep.subr.mxu0 0.0
    %6669 = vmatpush1.msra.mxu0 0.0
    %6670 = vmatprep.subr.mxu0 0.0
    %6671 = vmatpush1.msra.mxu0 0.0
    %6672 = vmatprep.subr.mxu0 0.0
    %6673 = vmatpush1.msra.mxu0 0.0
    %6674 = vmatprep.subr.mxu0 0.0
    %6675 = vmatpush1.msra.mxu0 0.0
    %6676 = vmatprep.subr.mxu0 0.0
    %6677 = vmatpush1.msra.mxu0 0.0
    %6678 = vmatprep.subr.mxu0 0.0
    %6679 = vmatpush1.msra.mxu0 0.0
    %6680 = vmatprep.subr.mxu0 0.0
    %6681 = vmatpush1.msra.mxu0 0.0
    %6682 = vmatprep.subr.mxu0 0.0
    %6683 = vmatpush1.msra.mxu0 0.0
    %6684 = vmatprep.subr.mxu0 0.0
    %6685 = vmatpush1.msra.mxu0 0.0
    %6686 = vmatprep.subr.mxu0 0.0
    %6687 = vmatpush1.msra.mxu0 0.0
    %6688 = vmatprep.subr.mxu0 0.0
    %6689 = vmatpush1.msra.mxu0 0.0
    %6690 = vmatprep.subr.mxu0 0.0
    %6691 = vmatpush1.msra.mxu0 0.0
    %6692 = vmatprep.subr.mxu0 0.0
    %6693 = vmatpush1.msra.mxu0 0.0
    %6694 = vmatprep.subr.mxu0 0.0
    %6695 = vmatpush1.msra.mxu0 0.0
    %6696 = vmatprep.subr.mxu0 0.0
    %6697 = vmatpush1.msra.mxu0 0.0
    %6698 = vmatprep.subr.mxu0 0.0
    %6699 = vmatpush1.msra.mxu0 0.0
    %6700 = vmatprep.subr.mxu0 0.0
    %6701 = vmatpush1.msra.mxu0 0.0
    %6702 = vmatprep.subr.mxu0 0.0
    %6703 = vmatpush1.msra.mxu0 0.0
    %6704 = vmatprep.subr.mxu0 0.0
    %6705 = vmatpush1.msra.mxu0 0.0
    %6706 = vmatprep.subr.mxu0 0.0
    %6707 = vmatpush1.msra.mxu0 0.0
    %6708 = vmatprep.subr.mxu0 0.0
    %6709 = vmatpush1.msra.mxu0 0.0
    %6710 = vmatprep.subr.mxu0 0.0
    %6711 = vmatpush1.msra.mxu0 0.0
    %6712 = vmatprep.subr.mxu0 0.0
    %6713 = vmatpush1.msra.mxu0 0.0
    %6714 = vmatprep.subr.mxu0 0.0
    %6715 = vmatpush1.msra.mxu0 0.0
    %6716 = vmatprep.subr.mxu0 0.0
    %6717 = vmatpush1.msra.mxu0 0.0
    %6718 = vmatprep.subr.mxu0 0.0
    %6719 = vmatpush1.msra.mxu0 0.0
    %6720 = vmatprep.subr.mxu0 0.0
    %6721 = vmatpush1.msra.mxu0 0.0
    %6722 = vmatprep.subr.mxu0 0.0
    %6723 = vmatpush1.msra.mxu0 0.0
    %6724 = vmatprep.subr.mxu0 0.0
    %6725 = vmatpush1.msra.mxu0 0.0
    %6726 = vmatprep.mubr.f32.mxu0 0.0
    %6727 = vmatmul.mubr.f32.gmra.mrb[0].mxu0 %v6660
    %v6728 = vpop.f32.mrb[0].mxu0
    %v6729 = vadd.f32 0.0, %v6728
    %v6730 = vpop.f32.mrb[0].mxu0
    %6731 = vdwg.mxu0
    %6733 = vrot.lane.b32.xlu0 %v4989, 112
    %v6734 = vpop.permute.xlu0 %6733
    %v6737 = vsel %vm733, %v6498, 0
    %6739 = vmatprep.subr.mxu0 0.0
    %6740 = vmatpush1.msra.mxu0 %v6734
    %6741 = vmatprep.subr.mxu0 0.0
    %6742 = vmatpush1.msra.mxu0 0.0
    %6743 = vmatprep.subr.mxu0 0.0
    %6744 = vmatpush1.msra.mxu0 0.0
    %6745 = vmatprep.subr.mxu0 0.0
    %6746 = vmatpush1.msra.mxu0 0.0
    %6747 = vmatprep.subr.mxu0 0.0
    %6748 = vmatpush1.msra.mxu0 0.0
    %6749 = vmatprep.subr.mxu0 0.0
    %6750 = vmatpush1.msra.mxu0 0.0
    %6751 = vmatprep.subr.mxu0 0.0
    %6752 = vmatpush1.msra.mxu0 0.0
    %6753 = vmatprep.subr.mxu0 0.0
    %6754 = vmatpush1.msra.mxu0 0.0
    %6755 = vmatprep.subr.mxu0 0.0
    %6756 = vmatpush1.msra.mxu0 0.0
    %6757 = vmatprep.subr.mxu0 0.0
    %6758 = vmatpush1.msra.mxu0 0.0
    %6759 = vmatprep.subr.mxu0 0.0
    %6760 = vmatpush1.msra.mxu0 0.0
    %6761 = vmatprep.subr.mxu0 0.0
    %6762 = vmatpush1.msra.mxu0 0.0
    %6763 = vmatprep.subr.mxu0 0.0
    %6764 = vmatpush1.msra.mxu0 0.0
    %6765 = vmatprep.subr.mxu0 0.0
    %6766 = vmatpush1.msra.mxu0 0.0
    %6767 = vmatprep.subr.mxu0 0.0
    %6768 = vmatpush1.msra.mxu0 0.0
    %6769 = vmatprep.subr.mxu0 0.0
    %6770 = vmatpush1.msra.mxu0 0.0
    %6771 = vmatprep.subr.mxu0 0.0
    %6772 = vmatpush1.msra.mxu0 0.0
    %6773 = vmatprep.subr.mxu0 0.0
    %6774 = vmatpush1.msra.mxu0 0.0
    %6775 = vmatprep.subr.mxu0 0.0
    %6776 = vmatpush1.msra.mxu0 0.0
    %6777 = vmatprep.subr.mxu0 0.0
    %6778 = vmatpush1.msra.mxu0 0.0
    %6779 = vmatprep.subr.mxu0 0.0
    %6780 = vmatpush1.msra.mxu0 0.0
    %6781 = vmatprep.subr.mxu0 0.0
    %6782 = vmatpush1.msra.mxu0 0.0
    %6783 = vmatprep.subr.mxu0 0.0
    %6784 = vmatpush1.msra.mxu0 0.0
    %6785 = vmatprep.subr.mxu0 0.0
    %6786 = vmatpush1.msra.mxu0 0.0
    %6787 = vmatprep.subr.mxu0 0.0
    %6788 = vmatpush1.msra.mxu0 0.0
    %6789 = vmatprep.subr.mxu0 0.0
    %6790 = vmatpush1.msra.mxu0 0.0
    %6791 = vmatprep.subr.mxu0 0.0
    %6792 = vmatpush1.msra.mxu0 0.0
    %6793 = vmatprep.subr.mxu0 0.0
    %6794 = vmatpush1.msra.mxu0 0.0
    %6795 = vmatprep.subr.mxu0 0.0
    %6796 = vmatpush1.msra.mxu0 0.0
    %6797 = vmatprep.subr.mxu0 0.0
    %6798 = vmatpush1.msra.mxu0 0.0
    %6799 = vmatprep.subr.mxu0 0.0
    %6800 = vmatpush1.msra.mxu0 0.0
    %6801 = vmatprep.subr.mxu0 0.0
    %6802 = vmatpush1.msra.mxu0 0.0
    %6803 = vmatprep.mubr.f32.mxu0 0.0
    %6804 = vmatmul.mubr.f32.gmra.mrb[0].mxu0 %v6737
    %v6805 = vpop.f32.mrb[0].mxu0
    %v6806 = vadd.f32 0.0, %v6805
    %v6807 = vpop.f32.mrb[0].mxu0
    %6808 = vdwg.mxu0
    %6810 = vrot.lane.b32.xlu0 %v4995, 112
    %v6811 = vpop.permute.xlu0 %6810
    %v6814 = vsel %vm733, %v6499, 0
    %6816 = vmatprep.subr.mxu0 0.0
    %6817 = vmatpush1.msra.mxu0 %v6811
    %6818 = vmatprep.subr.mxu0 0.0
    %6819 = vmatpush1.msra.mxu0 0.0
    %6820 = vmatprep.subr.mxu0 0.0
    %6821 = vmatpush1.msra.mxu0 0.0
    %6822 = vmatprep.subr.mxu0 0.0
    %6823 = vmatpush1.msra.mxu0 0.0
    %6824 = vmatprep.subr.mxu0 0.0
    %6825 = vmatpush1.msra.mxu0 0.0
    %6826 = vmatprep.subr.mxu0 0.0
    %6827 = vmatpush1.msra.mxu0 0.0
    %6828 = vmatprep.subr.mxu0 0.0
    %6829 = vmatpush1.msra.mxu0 0.0
    %6830 = vmatprep.subr.mxu0 0.0
    %6831 = vmatpush1.msra.mxu0 0.0
    %6832 = vmatprep.subr.mxu0 0.0
    %6833 = vmatpush1.msra.mxu0 0.0
    %6834 = vmatprep.subr.mxu0 0.0
    %6835 = vmatpush1.msra.mxu0 0.0
    %6836 = vmatprep.subr.mxu0 0.0
    %6837 = vmatpush1.msra.mxu0 0.0
    %6838 = vmatprep.subr.mxu0 0.0
    %6839 = vmatpush1.msra.mxu0 0.0
    %6840 = vmatprep.subr.mxu0 0.0
    %6841 = vmatpush1.msra.mxu0 0.0
    %6842 = vmatprep.subr.mxu0 0.0
    %6843 = vmatpush1.msra.mxu0 0.0
    %6844 = vmatprep.subr.mxu0 0.0
    %6845 = vmatpush1.msra.mxu0 0.0
    %6846 = vmatprep.subr.mxu0 0.0
    %6847 = vmatpush1.msra.mxu0 0.0
    %6848 = vmatprep.subr.mxu0 0.0
    %6849 = vmatpush1.msra.mxu0 0.0
    %6850 = vmatprep.subr.mxu0 0.0
    %6851 = vmatpush1.msra.mxu0 0.0
    %6852 = vmatprep.subr.mxu0 0.0
    %6853 = vmatpush1.msra.mxu0 0.0
    %6854 = vmatprep.subr.mxu0 0.0
    %6855 = vmatpush1.msra.mxu0 0.0
    %6856 = vmatprep.subr.mxu0 0.0
    %6857 = vmatpush1.msra.mxu0 0.0
    %6858 = vmatprep.subr.mxu0 0.0
    %6859 = vmatpush1.msra.mxu0 0.0
    %6860 = vmatprep.subr.mxu0 0.0
    %6861 = vmatpush1.msra.mxu0 0.0
    %6862 = vmatprep.subr.mxu0 0.0
    %6863 = vmatpush1.msra.mxu0 0.0
    %6864 = vmatprep.subr.mxu0 0.0
    %6865 = vmatpush1.msra.mxu0 0.0
    %6866 = vmatprep.subr.mxu0 0.0
    %6867 = vmatpush1.msra.mxu0 0.0
    %6868 = vmatprep.subr.mxu0 0.0
    %6869 = vmatpush1.msra.mxu0 0.0
    %6870 = vmatprep.subr.mxu0 0.0
    %6871 = vmatpush1.msra.mxu0 0.0
    %6872 = vmatprep.subr.mxu0 0.0
    %6873 = vmatpush1.msra.mxu0 0.0
    %6874 = vmatprep.subr.mxu0 0.0
    %6875 = vmatpush1.msra.mxu0 0.0
    %6876 = vmatprep.subr.mxu0 0.0
    %6877 = vmatpush1.msra.mxu0 0.0
    %6878 = vmatprep.subr.mxu0 0.0
    %6879 = vmatpush1.msra.mxu0 0.0
    %6880 = vmatprep.mubr.f32.mxu0 0.0
    %6881 = vmatmul.mubr.f32.gmra.mrb[0].mxu0 %v6814
    %v6882 = vpop.f32.mrb[0].mxu0
    %v6883 = vadd.f32 0.0, %v6882
    %v6884 = vpop.f32.mrb[0].mxu0
    %6885 = vdwg.mxu0
    %6887 = vrot.lane.b32.xlu0 %v4999, 112
    %v6888 = vpop.permute.xlu0 %6887
    %v6891 = vsel %vm733, %v6500, 0
    %6893 = vmatprep.subr.mxu0 0.0
    %6894 = vmatpush1.msra.mxu0 %v6888
    %6895 = vmatprep.subr.mxu0 0.0
    %6896 = vmatpush1.msra.mxu0 0.0
    %6897 = vmatprep.subr.mxu0 0.0
    %6898 = vmatpush1.msra.mxu0 0.0
    %6899 = vmatprep.subr.mxu0 0.0
    %6900 = vmatpush1.msra.mxu0 0.0
    %6901 = vmatprep.subr.mxu0 0.0
    %6902 = vmatpush1.msra.mxu0 0.0
    %6903 = vmatprep.subr.mxu0 0.0
    %6904 = vmatpush1.msra.mxu0 0.0
    %6905 = vmatprep.subr.mxu0 0.0
    %6906 = vmatpush1.msra.mxu0 0.0
    %6907 = vmatprep.subr.mxu0 0.0
    %6908 = vmatpush1.msra.mxu0 0.0
    %6909 = vmatprep.subr.mxu0 0.0
    %6910 = vmatpush1.msra.mxu0 0.0
    %6911 = vmatprep.subr.mxu0 0.0
    %6912 = vmatpush1.msra.mxu0 0.0
    %6913 = vmatprep.subr.mxu0 0.0
    %6914 = vmatpush1.msra.mxu0 0.0
    %6915 = vmatprep.subr.mxu0 0.0
    %6916 = vmatpush1.msra.mxu0 0.0
    %6917 = vmatprep.subr.mxu0 0.0
    %6918 = vmatpush1.msra.mxu0 0.0
    %6919 = vmatprep.subr.mxu0 0.0
    %6920 = vmatpush1.msra.mxu0 0.0
    %6921 = vmatprep.subr.mxu0 0.0
    %6922 = vmatpush1.msra.mxu0 0.0
    %6923 = vmatprep.subr.mxu0 0.0
    %6924 = vmatpush1.msra.mxu0 0.0
    %6925 = vmatprep.subr.mxu0 0.0
    %6926 = vmatpush1.msra.mxu0 0.0
    %6927 = vmatprep.subr.mxu0 0.0
    %6928 = vmatpush1.msra.mxu0 0.0
    %6929 = vmatprep.subr.mxu0 0.0
    %6930 = vmatpush1.msra.mxu0 0.0
    %6931 = vmatprep.subr.mxu0 0.0
    %6932 = vmatpush1.msra.mxu0 0.0
    %6933 = vmatprep.subr.mxu0 0.0
    %6934 = vmatpush1.msra.mxu0 0.0
    %6935 = vmatprep.subr.mxu0 0.0
    %6936 = vmatpush1.msra.mxu0 0.0
    %6937 = vmatprep.subr.mxu0 0.0
    %6938 = vmatpush1.msra.mxu0 0.0
    %6939 = vmatprep.subr.mxu0 0.0
    %6940 = vmatpush1.msra.mxu0 0.0
    %6941 = vmatprep.subr.mxu0 0.0
    %6942 = vmatpush1.msra.mxu0 0.0
    %6943 = vmatprep.subr.mxu0 0.0
    %6944 = vmatpush1.msra.mxu0 0.0
    %6945 = vmatprep.subr.mxu0 0.0
    %6946 = vmatpush1.msra.mxu0 0.0
    %6947 = vmatprep.subr.mxu0 0.0
    %6948 = vmatpush1.msra.mxu0 0.0
    %6949 = vmatprep.subr.mxu0 0.0
    %6950 = vmatpush1.msra.mxu0 0.0
    %6951 = vmatprep.subr.mxu0 0.0
    %6952 = vmatpush1.msra.mxu0 0.0
    %6953 = vmatprep.subr.mxu0 0.0
    %6954 = vmatpush1.msra.mxu0 0.0
    %6955 = vmatprep.subr.mxu0 0.0
    %6956 = vmatpush1.msra.mxu0 0.0
    %6957 = vmatprep.mubr.f32.mxu0 0.0
    %6958 = vmatmul.mubr.f32.gmra.mrb[0].mxu0 %v6891
    %v6959 = vpop.f32.mrb[0].mxu0
    %v6960 = vadd.f32 0.0, %v6959
    %v6961 = vpop.f32.mrb[0].mxu0
    %6962 = vdwg.mxu0
    %6963 = vrot.lane.b32.xlu0 %v4973, 96
    %v6964 = vpop.permute.xlu0 %6963
    %6965 = vrot.lane.b32.xlu0 %v4973, 32
    %v6966 = vpop.permute.xlu0 %6965
    %v6967 = vsel %vm60, %v6964, 0
    %v6969 = vsel %vm60, %v6966, 0
    %6971 = vmatprep.subr.mxu0 0.0
    %6972 = vmatpush1.xpose.msra.mxu0 %v6969
    %6973 = vmatprep.subr.mxu0 0.0
    %6974 = vmatpush1.xpose.msra.mxu0 0.0
    %6975 = vmatprep.subr.mxu0 0.0
    %6976 = vmatpush1.xpose.msra.mxu0 0.0
    %6977 = vmatprep.subr.mxu0 0.0
    %6978 = vmatpush1.xpose.msra.mxu0 0.0
    %6979 = vmatprep.subr.mxu0 0.0
    %6980 = vmatpush1.xpose.msra.mxu0 0.0
    %6981 = vmatprep.subr.mxu0 0.0
    %6982 = vmatpush1.xpose.msra.mxu0 0.0
    %6983 = vmatprep.subr.mxu0 0.0
    %6984 = vmatpush1.xpose.msra.mxu0 0.0
    %6985 = vmatprep.subr.mxu0 0.0
    %6986 = vmatpush1.xpose.msra.mxu0 0.0
    %6987 = vmatprep.subr.mxu0 0.0
    %6988 = vmatpush1.xpose.msra.mxu0 0.0
    %6989 = vmatprep.subr.mxu0 0.0
    %6990 = vmatpush1.xpose.msra.mxu0 0.0
    %6991 = vmatprep.subr.mxu0 0.0
    %6992 = vmatpush1.xpose.msra.mxu0 0.0
    %6993 = vmatprep.subr.mxu0 0.0
    %6994 = vmatpush1.xpose.msra.mxu0 0.0
    %6995 = vmatprep.subr.mxu0 0.0
    %6996 = vmatpush1.xpose.msra.mxu0 0.0
    %6997 = vmatprep.subr.mxu0 0.0
    %6998 = vmatpush1.xpose.msra.mxu0 0.0
    %6999 = vmatprep.subr.mxu0 0.0
    %7000 = vmatpush1.xpose.msra.mxu0 0.0
    %7001 = vmatprep.subr.mxu0 0.0
    %7002 = vmatpush1.xpose.msra.mxu0 0.0
    %7003 = vmatprep.subr.mxu0 0.0
    %7004 = vmatpush1.xpose.msra.mxu0 0.0
    %7005 = vmatprep.subr.mxu0 0.0
    %7006 = vmatpush1.xpose.msra.mxu0 0.0
    %7007 = vmatprep.subr.mxu0 0.0
    %7008 = vmatpush1.xpose.msra.mxu0 0.0
    %7009 = vmatprep.subr.mxu0 0.0
    %7010 = vmatpush1.xpose.msra.mxu0 0.0
    %7011 = vmatprep.subr.mxu0 0.0
    %7012 = vmatpush1.xpose.msra.mxu0 0.0
    %7013 = vmatprep.subr.mxu0 0.0
    %7014 = vmatpush1.xpose.msra.mxu0 0.0
    %7015 = vmatprep.subr.mxu0 0.0
    %7016 = vmatpush1.xpose.msra.mxu0 0.0
    %7017 = vmatprep.subr.mxu0 0.0
    %7018 = vmatpush1.xpose.msra.mxu0 0.0
    %7019 = vmatprep.subr.mxu0 0.0
    %7020 = vmatpush1.xpose.msra.mxu0 0.0
    %7021 = vmatprep.subr.mxu0 0.0
    %7022 = vmatpush1.xpose.msra.mxu0 0.0
    %7023 = vmatprep.subr.mxu0 0.0
    %7024 = vmatpush1.xpose.msra.mxu0 0.0
    %7025 = vmatprep.subr.mxu0 0.0
    %7026 = vmatpush1.xpose.msra.mxu0 0.0
    %7027 = vmatprep.subr.mxu0 0.0
    %7028 = vmatpush1.xpose.msra.mxu0 0.0
    %7029 = vmatprep.subr.mxu0 0.0
    %7030 = vmatpush1.xpose.msra.mxu0 0.0
    %7031 = vmatprep.subr.mxu0 0.0
    %7032 = vmatpush1.xpose.msra.mxu0 0.0
    %7033 = vmatprep.subr.mxu0 0.0
    %7034 = vmatpush1.xpose.msra.mxu0 0.0
    %7035 = vmatprep.mubr.f32.mxu0 0.0
    %7036 = vmatmul.mubr.f32.gmra.mrb[0].mxu0 %v6967
    %v7037 = vpop.f32.mrb[0].mxu0
    %v7038 = vadd.f32 0.0, %v7037
    %v7039 = vpop.f32.mrb[0].mxu0
    %7040 = vdwg.mxu0
    %7041 = vrot.lane.b32.xlu0 %v4977, 96
    %v7042 = vpop.permute.xlu0 %7041
    %7043 = vrot.lane.b32.xlu0 %v4977, 32
    %v7044 = vpop.permute.xlu0 %7043
    %v7045 = vsel %vm60, %v7042, 0
    %v7047 = vsel %vm60, %v7044, 0
    %7049 = vmatprep.subr.mxu0 0.0
    %7050 = vmatpush1.xpose.msra.mxu0 %v7047
    %7051 = vmatprep.subr.mxu0 0.0
    %7052 = vmatpush1.xpose.msra.mxu0 0.0
    %7053 = vmatprep.subr.mxu0 0.0
    %7054 = vmatpush1.xpose.msra.mxu0 0.0
    %7055 = vmatprep.subr.mxu0 0.0
    %7056 = vmatpush1.xpose.msra.mxu0 0.0
    %7057 = vmatprep.subr.mxu0 0.0
    %7058 = vmatpush1.xpose.msra.mxu0 0.0
    %7059 = vmatprep.subr.mxu0 0.0
    %7060 = vmatpush1.xpose.msra.mxu0 0.0
    %7061 = vmatprep.subr.mxu0 0.0
    %7062 = vmatpush1.xpose.msra.mxu0 0.0
    %7063 = vmatprep.subr.mxu0 0.0
    %7064 = vmatpush1.xpose.msra.mxu0 0.0
    %7065 = vmatprep.subr.mxu0 0.0
    %7066 = vmatpush1.xpose.msra.mxu0 0.0
    %7067 = vmatprep.subr.mxu0 0.0
    %7068 = vmatpush1.xpose.msra.mxu0 0.0
    %7069 = vmatprep.subr.mxu0 0.0
    %7070 = vmatpush1.xpose.msra.mxu0 0.0
    %7071 = vmatprep.subr.mxu0 0.0
    %7072 = vmatpush1.xpose.msra.mxu0 0.0
    %7073 = vmatprep.subr.mxu0 0.0
    %7074 = vmatpush1.xpose.msra.mxu0 0.0
    %7075 = vmatprep.subr.mxu0 0.0
    %7076 = vmatpush1.xpose.msra.mxu0 0.0
    %7077 = vmatprep.subr.mxu0 0.0
    %7078 = vmatpush1.xpose.msra.mxu0 0.0
    %7079 = vmatprep.subr.mxu0 0.0
    %7080 = vmatpush1.xpose.msra.mxu0 0.0
    %7081 = vmatprep.subr.mxu0 0.0
    %7082 = vmatpush1.xpose.msra.mxu0 0.0
    %7083 = vmatprep.subr.mxu0 0.0
    %7084 = vmatpush1.xpose.msra.mxu0 0.0
    %7085 = vmatprep.subr.mxu0 0.0
    %7086 = vmatpush1.xpose.msra.mxu0 0.0
    %7087 = vmatprep.subr.mxu0 0.0
    %7088 = vmatpush1.xpose.msra.mxu0 0.0
    %7089 = vmatprep.subr.mxu0 0.0
    %7090 = vmatpush1.xpose.msra.mxu0 0.0
    %7091 = vmatprep.subr.mxu0 0.0
    %7092 = vmatpush1.xpose.msra.mxu0 0.0
    %7093 = vmatprep.subr.mxu0 0.0
    %7094 = vmatpush1.xpose.msra.mxu0 0.0
    %7095 = vmatprep.subr.mxu0 0.0
    %7096 = vmatpush1.xpose.msra.mxu0 0.0
    %7097 = vmatprep.subr.mxu0 0.0
    %7098 = vmatpush1.xpose.msra.mxu0 0.0
    %7099 = vmatprep.subr.mxu0 0.0
    %7100 = vmatpush1.xpose.msra.mxu0 0.0
    %7101 = vmatprep.subr.mxu0 0.0
    %7102 = vmatpush1.xpose.msra.mxu0 0.0
    %7103 = vmatprep.subr.mxu0 0.0
    %7104 = vmatpush1.xpose.msra.mxu0 0.0
    %7105 = vmatprep.subr.mxu0 0.0
    %7106 = vmatpush1.xpose.msra.mxu0 0.0
    %7107 = vmatprep.subr.mxu0 0.0
    %7108 = vmatpush1.xpose.msra.mxu0 0.0
    %7109 = vmatprep.subr.mxu0 0.0
    %7110 = vmatpush1.xpose.msra.mxu0 0.0
    %7111 = vmatprep.subr.mxu0 0.0
    %7112 = vmatpush1.xpose.msra.mxu0 0.0
    %7113 = vmatprep.mubr.f32.mxu0 0.0
    %7114 = vmatmul.mubr.f32.gmra.mrb[0].mxu0 %v7045
    %v7115 = vpop.f32.mrb[0].mxu0
    %v7116 = vadd.f32 0.0, %v7115
    %v7117 = vpop.f32.mrb[0].mxu0
    %7118 = vdwg.mxu0
    %7119 = vrot.lane.b32.xlu0 %v4983, 96
    %v7120 = vpop.permute.xlu0 %7119
    %7121 = vrot.lane.b32.xlu0 %v4983, 32
    %v7122 = vpop.permute.xlu0 %7121
    %v7123 = vsel %vm60, %v7120, 0
    %v7125 = vsel %vm60, %v7122, 0
    %7127 = vmatprep.subr.mxu0 0.0
    %7128 = vmatpush1.xpose.msra.mxu0 %v7125
    %7129 = vmatprep.subr.mxu0 0.0
    %7130 = vmatpush1.xpose.msra.mxu0 0.0
    %7131 = vmatprep.subr.mxu0 0.0
    %7132 = vmatpush1.xpose.msra.mxu0 0.0
    %7133 = vmatprep.subr.mxu0 0.0
    %7134 = vmatpush1.xpose.msra.mxu0 0.0
    %7135 = vmatprep.subr.mxu0 0.0
    %7136 = vmatpush1.xpose.msra.mxu0 0.0
    %7137 = vmatprep.subr.mxu0 0.0
    %7138 = vmatpush1.xpose.msra.mxu0 0.0
    %7139 = vmatprep.subr.mxu0 0.0
    %7140 = vmatpush1.xpose.msra.mxu0 0.0
    %7141 = vmatprep.subr.mxu0 0.0
    %7142 = vmatpush1.xpose.msra.mxu0 0.0
    %7143 = vmatprep.subr.mxu0 0.0
    %7144 = vmatpush1.xpose.msra.mxu0 0.0
    %7145 = vmatprep.subr.mxu0 0.0
    %7146 = vmatpush1.xpose.msra.mxu0 0.0
    %7147 = vmatprep.subr.mxu0 0.0
    %7148 = vmatpush1.xpose.msra.mxu0 0.0
    %7149 = vmatprep.subr.mxu0 0.0
    %7150 = vmatpush1.xpose.msra.mxu0 0.0
    %7151 = vmatprep.subr.mxu0 0.0
    %7152 = vmatpush1.xpose.msra.mxu0 0.0
    %7153 = vmatprep.subr.mxu0 0.0
    %7154 = vmatpush1.xpose.msra.mxu0 0.0
    %7155 = vmatprep.subr.mxu0 0.0
    %7156 = vmatpush1.xpose.msra.mxu0 0.0
    %7157 = vmatprep.subr.mxu0 0.0
    %7158 = vmatpush1.xpose.msra.mxu0 0.0
    %7159 = vmatprep.subr.mxu0 0.0
    %7160 = vmatpush1.xpose.msra.mxu0 0.0
    %7161 = vmatprep.subr.mxu0 0.0
    %7162 = vmatpush1.xpose.msra.mxu0 0.0
    %7163 = vmatprep.subr.mxu0 0.0
    %7164 = vmatpush1.xpose.msra.mxu0 0.0
    %7165 = vmatprep.subr.mxu0 0.0
    %7166 = vmatpush1.xpose.msra.mxu0 0.0
    %7167 = vmatprep.subr.mxu0 0.0
    %7168 = vmatpush1.xpose.msra.mxu0 0.0
    %7169 = vmatprep.subr.mxu0 0.0
    %7170 = vmatpush1.xpose.msra.mxu0 0.0
    %7171 = vmatprep.subr.mxu0 0.0
    %7172 = vmatpush1.xpose.msra.mxu0 0.0
    %7173 = vmatprep.subr.mxu0 0.0
    %7174 = vmatpush1.xpose.msra.mxu0 0.0
    %7175 = vmatprep.subr.mxu0 0.0
    %7176 = vmatpush1.xpose.msra.mxu0 0.0
    %7177 = vmatprep.subr.mxu0 0.0
    %7178 = vmatpush1.xpose.msra.mxu0 0.0
    %7179 = vmatprep.subr.mxu0 0.0
    %7180 = vmatpush1.xpose.msra.mxu0 0.0
    %7181 = vmatprep.subr.mxu0 0.0
    %7182 = vmatpush1.xpose.msra.mxu0 0.0
    %7183 = vmatprep.subr.mxu0 0.0
    %7184 = vmatpush1.xpose.msra.mxu0 0.0
    %7185 = vmatprep.subr.mxu0 0.0
    %7186 = vmatpush1.xpose.msra.mxu0 0.0
    %7187 = vmatprep.subr.mxu0 0.0
    %7188 = vmatpush1.xpose.msra.mxu0 0.0
    %7189 = vmatprep.subr.mxu0 0.0
    %7190 = vmatpush1.xpose.msra.mxu0 0.0
    %7191 = vmatprep.mubr.f32.mxu0 0.0
    %7192 = vmatmul.mubr.f32.gmra.mrb[0].mxu0 %v7123
    %v7193 = vpop.f32.mrb[0].mxu0
    %v7194 = vadd.f32 0.0, %v7193
    %v7195 = vpop.f32.mrb[0].mxu0
    %7196 = vdwg.mxu0
    %7197 = vrot.lane.b32.xlu0 %v4987, 96
    %v7198 = vpop.permute.xlu0 %7197
    %7199 = vrot.lane.b32.xlu0 %v4987, 32
    %v7200 = vpop.permute.xlu0 %7199
    %v7201 = vsel %vm60, %v7198, 0
    %v7203 = vsel %vm60, %v7200, 0
    %7205 = vmatprep.subr.mxu0 0.0
    %7206 = vmatpush1.xpose.msra.mxu0 %v7203
    %7207 = vmatprep.subr.mxu0 0.0
    %7208 = vmatpush1.xpose.msra.mxu0 0.0
    %7209 = vmatprep.subr.mxu0 0.0
    %7210 = vmatpush1.xpose.msra.mxu0 0.0
    %7211 = vmatprep.subr.mxu0 0.0
    %7212 = vmatpush1.xpose.msra.mxu0 0.0
    %7213 = vmatprep.subr.mxu0 0.0
    %7214 = vmatpush1.xpose.msra.mxu0 0.0
    %7215 = vmatprep.subr.mxu0 0.0
    %7216 = vmatpush1.xpose.msra.mxu0 0.0
    %7217 = vmatprep.subr.mxu0 0.0
    %7218 = vmatpush1.xpose.msra.mxu0 0.0
    %7219 = vmatprep.subr.mxu0 0.0
    %7220 = vmatpush1.xpose.msra.mxu0 0.0
    %7221 = vmatprep.subr.mxu0 0.0
    %7222 = vmatpush1.xpose.msra.mxu0 0.0
    %7223 = vmatprep.subr.mxu0 0.0
    %7224 = vmatpush1.xpose.msra.mxu0 0.0
    %7225 = vmatprep.subr.mxu0 0.0
    %7226 = vmatpush1.xpose.msra.mxu0 0.0
    %7227 = vmatprep.subr.mxu0 0.0
    %7228 = vmatpush1.xpose.msra.mxu0 0.0
    %7229 = vmatprep.subr.mxu0 0.0
    %7230 = vmatpush1.xpose.msra.mxu0 0.0
    %7231 = vmatprep.subr.mxu0 0.0
    %7232 = vmatpush1.xpose.msra.mxu0 0.0
    %7233 = vmatprep.subr.mxu0 0.0
    %7234 = vmatpush1.xpose.msra.mxu0 0.0
    %7235 = vmatprep.subr.mxu0 0.0
    %7236 = vmatpush1.xpose.msra.mxu0 0.0
    %7237 = vmatprep.subr.mxu0 0.0
    %7238 = vmatpush1.xpose.msra.mxu0 0.0
    %7239 = vmatprep.subr.mxu0 0.0
    %7240 = vmatpush1.xpose.msra.mxu0 0.0
    %7241 = vmatprep.subr.mxu0 0.0
    %7242 = vmatpush1.xpose.msra.mxu0 0.0
    %7243 = vmatprep.subr.mxu0 0.0
    %7244 = vmatpush1.xpose.msra.mxu0 0.0
    %7245 = vmatprep.subr.mxu0 0.0
    %7246 = vmatpush1.xpose.msra.mxu0 0.0
    %7247 = vmatprep.subr.mxu0 0.0
    %7248 = vmatpush1.xpose.msra.mxu0 0.0
    %7249 = vmatprep.subr.mxu0 0.0
    %7250 = vmatpush1.xpose.msra.mxu0 0.0
    %7251 = vmatprep.subr.mxu0 0.0
    %7252 = vmatpush1.xpose.msra.mxu0 0.0
    %7253 = vmatprep.subr.mxu0 0.0
    %7254 = vmatpush1.xpose.msra.mxu0 0.0
    %7255 = vmatprep.subr.mxu0 0.0
    %7256 = vmatpush1.xpose.msra.mxu0 0.0
    %7257 = vmatprep.subr.mxu0 0.0
    %7258 = vmatpush1.xpose.msra.mxu0 0.0
    %7259 = vmatprep.subr.mxu0 0.0
    %7260 = vmatpush1.xpose.msra.mxu0 0.0
    %7261 = vmatprep.subr.mxu0 0.0
    %7262 = vmatpush1.xpose.msra.mxu0 0.0
    %7263 = vmatprep.subr.mxu0 0.0
    %7264 = vmatpush1.xpose.msra.mxu0 0.0
    %7265 = vmatprep.subr.mxu0 0.0
    %7266 = vmatpush1.xpose.msra.mxu0 0.0
    %7267 = vmatprep.subr.mxu0 0.0
    %7268 = vmatpush1.xpose.msra.mxu0 0.0
    %7269 = vmatprep.mubr.f32.mxu0 0.0
    %7270 = vmatmul.mubr.f32.gmra.mrb[0].mxu0 %v7201
    %v7271 = vpop.f32.mrb[0].mxu0
    %v7272 = vadd.f32 0.0, %v7271
    %v7273 = vpop.f32.mrb[0].mxu0
    %7274 = vdwg.mxu0
    %7275 = vrot.lane.b32.xlu0 %v4993, 96
    %v7276 = vpop.permute.xlu0 %7275
    %7277 = vrot.lane.b32.xlu0 %v4993, 32
    %v7278 = vpop.permute.xlu0 %7277
    %v7279 = vsel %vm60, %v7276, 0
    %v7281 = vsel %vm60, %v7278, 0
    %7283 = vmatprep.subr.mxu0 0.0
    %7284 = vmatpush1.xpose.msra.mxu0 %v7281
    %7285 = vmatprep.subr.mxu0 0.0
    %7286 = vmatpush1.xpose.msra.mxu0 0.0
    %7287 = vmatprep.subr.mxu0 0.0
    %7288 = vmatpush1.xpose.msra.mxu0 0.0
    %7289 = vmatprep.subr.mxu0 0.0
    %7290 = vmatpush1.xpose.msra.mxu0 0.0
    %7291 = vmatprep.subr.mxu0 0.0
    %7292 = vmatpush1.xpose.msra.mxu0 0.0
    %7293 = vmatprep.subr.mxu0 0.0
    %7294 = vmatpush1.xpose.msra.mxu0 0.0
    %7295 = vmatprep.subr.mxu0 0.0
    %7296 = vmatpush1.xpose.msra.mxu0 0.0
    %7297 = vmatprep.subr.mxu0 0.0
    %7298 = vmatpush1.xpose.msra.mxu0 0.0
    %7299 = vmatprep.subr.mxu0 0.0
    %7300 = vmatpush1.xpose.msra.mxu0 0.0
    %7301 = vmatprep.subr.mxu0 0.0
    %7302 = vmatpush1.xpose.msra.mxu0 0.0
    %7303 = vmatprep.subr.mxu0 0.0
    %7304 = vmatpush1.xpose.msra.mxu0 0.0
    %7305 = vmatprep.subr.mxu0 0.0
    %7306 = vmatpush1.xpose.msra.mxu0 0.0
    %7307 = vmatprep.subr.mxu0 0.0
    %7308 = vmatpush1.xpose.msra.mxu0 0.0
    %7309 = vmatprep.subr.mxu0 0.0
    %7310 = vmatpush1.xpose.msra.mxu0 0.0
    %7311 = vmatprep.subr.mxu0 0.0
    %7312 = vmatpush1.xpose.msra.mxu0 0.0
    %7313 = vmatprep.subr.mxu0 0.0
    %7314 = vmatpush1.xpose.msra.mxu0 0.0
    %7315 = vmatprep.subr.mxu0 0.0
    %7316 = vmatpush1.xpose.msra.mxu0 0.0
    %7317 = vmatprep.subr.mxu0 0.0
    %7318 = vmatpush1.xpose.msra.mxu0 0.0
    %7319 = vmatprep.subr.mxu0 0.0
    %7320 = vmatpush1.xpose.msra.mxu0 0.0
    %7321 = vmatprep.subr.mxu0 0.0
    %7322 = vmatpush1.xpose.msra.mxu0 0.0
    %7323 = vmatprep.subr.mxu0 0.0
    %7324 = vmatpush1.xpose.msra.mxu0 0.0
    %7325 = vmatprep.subr.mxu0 0.0
    %7326 = vmatpush1.xpose.msra.mxu0 0.0
    %7327 = vmatprep.subr.mxu0 0.0
    %7328 = vmatpush1.xpose.msra.mxu0 0.0
    %7329 = vmatprep.subr.mxu0 0.0
    %7330 = vmatpush1.xpose.msra.mxu0 0.0
    %7331 = vmatprep.subr.mxu0 0.0
    %7332 = vmatpush1.xpose.msra.mxu0 0.0
    %7333 = vmatprep.subr.mxu0 0.0
    %7334 = vmatpush1.xpose.msra.mxu0 0.0
    %7335 = vmatprep.subr.mxu0 0.0
    %7336 = vmatpush1.xpose.msra.mxu0 0.0
    %7337 = vmatprep.subr.mxu0 0.0
    %7338 = vmatpush1.xpose.msra.mxu0 0.0
    %7339 = vmatprep.subr.mxu0 0.0
    %7340 = vmatpush1.xpose.msra.mxu0 0.0
    %7341 = vmatprep.subr.mxu0 0.0
    %7342 = vmatpush1.xpose.msra.mxu0 0.0
    %7343 = vmatprep.subr.mxu0 0.0
    %7344 = vmatpush1.xpose.msra.mxu0 0.0
    %7345 = vmatprep.subr.mxu0 0.0
    %7346 = vmatpush1.xpose.msra.mxu0 0.0
    %7347 = vmatprep.mubr.f32.mxu0 0.0
    %7348 = vmatmul.mubr.f32.gmra.mrb[0].mxu0 %v7279
    %v7349 = vpop.f32.mrb[0].mxu0
    %v7350 = vadd.f32 0.0, %v7349
    %v7351 = vpop.f32.mrb[0].mxu0
    %7352 = vdwg.mxu0
    %7353 = vrot.lane.b32.xlu0 %v4997, 96
    %v7354 = vpop.permute.xlu0 %7353
    %7355 = vrot.lane.b32.xlu0 %v4997, 32
    %v7356 = vpop.permute.xlu0 %7355
    %v7357 = vsel %vm60, %v7354, 0
    %v7359 = vsel %vm60, %v7356, 0
    %7361 = vmatprep.subr.mxu0 0.0
    %7362 = vmatpush1.xpose.msra.mxu0 %v7359
    %7363 = vmatprep.subr.mxu0 0.0
    %7364 = vmatpush1.xpose.msra.mxu0 0.0
    %7365 = vmatprep.subr.mxu0 0.0
    %7366 = vmatpush1.xpose.msra.mxu0 0.0
    %7367 = vmatprep.subr.mxu0 0.0
    %7368 = vmatpush1.xpose.msra.mxu0 0.0
    %7369 = vmatprep.subr.mxu0 0.0
    %7370 = vmatpush1.xpose.msra.mxu0 0.0
    %7371 = vmatprep.subr.mxu0 0.0
    %7372 = vmatpush1.xpose.msra.mxu0 0.0
    %7373 = vmatprep.subr.mxu0 0.0
    %7374 = vmatpush1.xpose.msra.mxu0 0.0
    %7375 = vmatprep.subr.mxu0 0.0
    %7376 = vmatpush1.xpose.msra.mxu0 0.0
    %7377 = vmatprep.subr.mxu0 0.0
    %7378 = vmatpush1.xpose.msra.mxu0 0.0
    %7379 = vmatprep.subr.mxu0 0.0
    %7380 = vmatpush1.xpose.msra.mxu0 0.0
    %7381 = vmatprep.subr.mxu0 0.0
    %7382 = vmatpush1.xpose.msra.mxu0 0.0
    %7383 = vmatprep.subr.mxu0 0.0
    %7384 = vmatpush1.xpose.msra.mxu0 0.0
    %7385 = vmatprep.subr.mxu0 0.0
    %7386 = vmatpush1.xpose.msra.mxu0 0.0
    %7387 = vmatprep.subr.mxu0 0.0
    %7388 = vmatpush1.xpose.msra.mxu0 0.0
    %7389 = vmatprep.subr.mxu0 0.0
    %7390 = vmatpush1.xpose.msra.mxu0 0.0
    %7391 = vmatprep.subr.mxu0 0.0
    %7392 = vmatpush1.xpose.msra.mxu0 0.0
    %7393 = vmatprep.subr.mxu0 0.0
    %7394 = vmatpush1.xpose.msra.mxu0 0.0
    %7395 = vmatprep.subr.mxu0 0.0
    %7396 = vmatpush1.xpose.msra.mxu0 0.0
    %7397 = vmatprep.subr.mxu0 0.0
    %7398 = vmatpush1.xpose.msra.mxu0 0.0
    %7399 = vmatprep.subr.mxu0 0.0
    %7400 = vmatpush1.xpose.msra.mxu0 0.0
    %7401 = vmatprep.subr.mxu0 0.0
    %7402 = vmatpush1.xpose.msra.mxu0 0.0
    %7403 = vmatprep.subr.mxu0 0.0
    %7404 = vmatpush1.xpose.msra.mxu0 0.0
    %7405 = vmatprep.subr.mxu0 0.0
    %7406 = vmatpush1.xpose.msra.mxu0 0.0
    %7407 = vmatprep.subr.mxu0 0.0
    %7408 = vmatpush1.xpose.msra.mxu0 0.0
    %7409 = vmatprep.subr.mxu0 0.0
    %7410 = vmatpush1.xpose.msra.mxu0 0.0
    %7411 = vmatprep.subr.mxu0 0.0
    %7412 = vmatpush1.xpose.msra.mxu0 0.0
    %7413 = vmatprep.subr.mxu0 0.0
    %7414 = vmatpush1.xpose.msra.mxu0 0.0
    %7415 = vmatprep.subr.mxu0 0.0
    %7416 = vmatpush1.xpose.msra.mxu0 0.0
    %7417 = vmatprep.subr.mxu0 0.0
    %7418 = vmatpush1.xpose.msra.mxu0 0.0
    %7419 = vmatprep.subr.mxu0 0.0
    %7420 = vmatpush1.xpose.msra.mxu0 0.0
    %7421 = vmatprep.subr.mxu0 0.0
    %7422 = vmatpush1.xpose.msra.mxu0 0.0
    %7423 = vmatprep.subr.mxu0 0.0
    %7424 = vmatpush1.xpose.msra.mxu0 0.0
    %7425 = vmatprep.mubr.f32.mxu0 0.0
    %7426 = vmatmul.mubr.f32.gmra.mrb[0].mxu0 %v7357
    %v7427 = vpop.f32.mrb[0].mxu0
    %v7428 = vadd.f32 0.0, %v7427
    %v7429 = vpop.f32.mrb[0].mxu0
    %7430 = vdwg.mxu0
    %v7431 = vsel %vm733, %v7038, -inf
    %7432 = vmax.xlane.f32.xlu0 %v7431
    %v7433 = vpop.xlane.xlu0 %7432
    %v7434 = vsel %vm733, %v7116, -inf
    %7435 = vmax.xlane.f32.xlu0 %v7434
    %v7436 = vpop.xlane.xlu0 %7435
    %v7437 = vsel %vm733, %v7194, -inf
    %7438 = vmax.xlane.f32.xlu0 %v7437
    %v7439 = vpop.xlane.xlu0 %7438
    %v7440 = vsel %vm733, %v7272, -inf
    %7441 = vmax.xlane.f32.xlu0 %v7440
    %v7442 = vpop.xlane.xlu0 %7441
    %v7443 = vsel %vm733, %v7350, -inf
    %7444 = vmax.xlane.f32.xlu0 %v7443
    %v7445 = vpop.xlane.xlu0 %7444
    %v7446 = vsel %vm733, %v7428, -inf
    %7447 = vmax.xlane.f32.xlu0 %v7446
    %v7448 = vpop.xlane.xlu0 %7447
    %v7449 = vsub.f32 %v7038, %v7433
    %v7450 = vsub.f32 %v7116, %v7436
    %v7451 = vsub.f32 %v7194, %v7439
    %v7452 = vsub.f32 %v7272, %v7442
    %v7453 = vsub.f32 %v7350, %v7445
    %v7454 = vsub.f32 %v7428, %v7448
    %v7455 = vmul.f32 %v7449, 1.442695
    %v7456 = vpow.pop %v7455
    %v7457 = vmul.f32 %v7450, 1.442695
    %v7458 = vpow.pop %v7457
    %v7459 = vmul.f32 %v7451, 1.442695
    %v7460 = vpow.pop %v7459
    %v7461 = vmul.f32 %v7452, 1.442695
    %v7462 = vpow.pop %v7461
    %v7463 = vmul.f32 %v7453, 1.442695
    %v7464 = vpow.pop %v7463
    %v7465 = vmul.f32 %v7454, 1.442695
    %v7466 = vpow.pop %v7465
    %v7467 = vsel %vm733, %v7456, 0.0
    %7468 = vadd.xlane.f32.xlu0 %v7467
    %v7469 = vpop.xlane.xlu0 %7468
    %v7470 = vsel %vm733, %v7458, 0.0
    %7471 = vadd.xlane.f32.xlu0 %v7470
    %v7472 = vpop.xlane.xlu0 %7471
    %v7473 = vsel %vm733, %v7460, 0.0
    %7474 = vadd.xlane.f32.xlu0 %v7473
    %v7475 = vpop.xlane.xlu0 %7474
    %v7476 = vsel %vm733, %v7462, 0.0
    %7477 = vadd.xlane.f32.xlu0 %v7476
    %v7478 = vpop.xlane.xlu0 %7477
    %v7479 = vsel %vm733, %v7464, 0.0
    %7480 = vadd.xlane.f32.xlu0 %v7479
    %v7481 = vpop.xlane.xlu0 %7480
    %v7482 = vsel %vm733, %v7466, 0.0
    %7483 = vadd.xlane.f32.xlu0 %v7482
    %v7484 = vpop.xlane.xlu0 %7483
    %v7485 = vrcp.pop %v7469
    %v7486 = vrcp.pop %v7472
    %v7487 = vrcp.pop %v7475
    %v7488 = vrcp.pop %v7478
    %v7489 = vrcp.pop %v7481
    %v7490 = vrcp.pop %v7484
    %v7491 = vmul.f32 %v7456, %v7485
    %v7492 = vmul.f32 %v7458, %v7486
    %v7493 = vmul.f32 %v7460, %v7487
    %v7494 = vmul.f32 %v7462, %v7488
    %v7495 = vmul.f32 %v7464, %v7489
    %v7496 = vmul.f32 %v7466, %v7490
    %7497 = vrot.lane.b32.xlu0 %v4975, 96
    %v7498 = vpop.permute.xlu0 %7497
    %v7501 = vsel %vm733, %v7491, 0
    %7503 = vmatprep.subr.mxu0 0.0
    %7504 = vmatpush1.msra.mxu0 %v7498
    %7505 = vmatprep.subr.mxu0 0.0
    %7506 = vmatpush1.msra.mxu0 0.0
    %7507 = vmatprep.subr.mxu0 0.0
    %7508 = vmatpush1.msra.mxu0 0.0
    %7509 = vmatprep.subr.mxu0 0.0
    %7510 = vmatpush1.msra.mxu0 0.0
    %7511 = vmatprep.subr.mxu0 0.0
    %7512 = vmatpush1.msra.mxu0 0.0
    %7513 = vmatprep.subr.mxu0 0.0
    %7514 = vmatpush1.msra.mxu0 0.0
    %7515 = vmatprep.subr.mxu0 0.0
    %7516 = vmatpush1.msra.mxu0 0.0
    %7517 = vmatprep.subr.mxu0 0.0
    %7518 = vmatpush1.msra.mxu0 0.0
    %7519 = vmatprep.subr.mxu0 0.0
    %7520 = vmatpush1.msra.mxu0 0.0
    %7521 = vmatprep.subr.mxu0 0.0
    %7522 = vmatpush1.msra.mxu0 0.0
    %7523 = vmatprep.subr.mxu0 0.0
    %7524 = vmatpush1.msra.mxu0 0.0
    %7525 = vmatprep.subr.mxu0 0.0
    %7526 = vmatpush1.msra.mxu0 0.0
    %7527 = vmatprep.subr.mxu0 0.0
    %7528 = vmatpush1.msra.mxu0 0.0
    %7529 = vmatprep.subr.mxu0 0.0
    %7530 = vmatpush1.msra.mxu0 0.0
    %7531 = vmatprep.subr.mxu0 0.0
    %7532 = vmatpush1.msra.mxu0 0.0
    %7533 = vmatprep.subr.mxu0 0.0
    %7534 = vmatpush1.msra.mxu0 0.0
    %7535 = vmatprep.subr.mxu0 0.0
    %7536 = vmatpush1.msra.mxu0 0.0
    %7537 = vmatprep.subr.mxu0 0.0
    %7538 = vmatpush1.msra.mxu0 0.0
    %7539 = vmatprep.subr.mxu0 0.0
    %7540 = vmatpush1.msra.mxu0 0.0
    %7541 = vmatprep.subr.mxu0 0.0
    %7542 = vmatpush1.msra.mxu0 0.0
    %7543 = vmatprep.subr.mxu0 0.0
    %7544 = vmatpush1.msra.mxu0 0.0
    %7545 = vmatprep.subr.mxu0 0.0
    %7546 = vmatpush1.msra.mxu0 0.0
    %7547 = vmatprep.subr.mxu0 0.0
    %7548 = vmatpush1.msra.mxu0 0.0
    %7549 = vmatprep.subr.mxu0 0.0
    %7550 = vmatpush1.msra.mxu0 0.0
    %7551 = vmatprep.subr.mxu0 0.0
    %7552 = vmatpush1.msra.mxu0 0.0
    %7553 = vmatprep.subr.mxu0 0.0
    %7554 = vmatpush1.msra.mxu0 0.0
    %7555 = vmatprep.subr.mxu0 0.0
    %7556 = vmatpush1.msra.mxu0 0.0
    %7557 = vmatprep.subr.mxu0 0.0
    %7558 = vmatpush1.msra.mxu0 0.0
    %7559 = vmatprep.subr.mxu0 0.0
    %7560 = vmatpush1.msra.mxu0 0.0
    %7561 = vmatprep.subr.mxu0 0.0
    %7562 = vmatpush1.msra.mxu0 0.0
    %7563 = vmatprep.subr.mxu0 0.0
    %7564 = vmatpush1.msra.mxu0 0.0
    %7565 = vmatprep.subr.mxu0 0.0
    %7566 = vmatpush1.msra.mxu0 0.0
    %7567 = vmatprep.mubr.f32.mxu0 0.0
    %7568 = vmatmul.mubr.f32.gmra.mrb[0].mxu0 %v7501
    %v7569 = vpop.f32.mrb[0].mxu0
    %v7570 = vadd.f32 0.0, %v7569
    %v7571 = vpop.f32.mrb[0].mxu0
    %7572 = vdwg.mxu0
    %7573 = vrot.lane.b32.xlu0 %v4979, 96
    %v7574 = vpop.permute.xlu0 %7573
    %v7577 = vsel %vm733, %v7492, 0
    %7579 = vmatprep.subr.mxu0 0.0
    %7580 = vmatpush1.msra.mxu0 %v7574
    %7581 = vmatprep.subr.mxu0 0.0
    %7582 = vmatpush1.msra.mxu0 0.0
    %7583 = vmatprep.subr.mxu0 0.0
    %7584 = vmatpush1.msra.mxu0 0.0
    %7585 = vmatprep.subr.mxu0 0.0
    %7586 = vmatpush1.msra.mxu0 0.0
    %7587 = vmatprep.subr.mxu0 0.0
    %7588 = vmatpush1.msra.mxu0 0.0
    %7589 = vmatprep.subr.mxu0 0.0
    %7590 = vmatpush1.msra.mxu0 0.0
    %7591 = vmatprep.subr.mxu0 0.0
    %7592 = vmatpush1.msra.mxu0 0.0
    %7593 = vmatprep.subr.mxu0 0.0
    %7594 = vmatpush1.msra.mxu0 0.0
    %7595 = vmatprep.subr.mxu0 0.0
    %7596 = vmatpush1.msra.mxu0 0.0
    %7597 = vmatprep.subr.mxu0 0.0
    %7598 = vmatpush1.msra.mxu0 0.0
    %7599 = vmatprep.subr.mxu0 0.0
    %7600 = vmatpush1.msra.mxu0 0.0
    %7601 = vmatprep.subr.mxu0 0.0
    %7602 = vmatpush1.msra.mxu0 0.0
    %7603 = vmatprep.subr.mxu0 0.0
    %7604 = vmatpush1.msra.mxu0 0.0
    %7605 = vmatprep.subr.mxu0 0.0
    %7606 = vmatpush1.msra.mxu0 0.0
    %7607 = vmatprep.subr.mxu0 0.0
    %7608 = vmatpush1.msra.mxu0 0.0
    %7609 = vmatprep.subr.mxu0 0.0
    %7610 = vmatpush1.msra.mxu0 0.0
    %7611 = vmatprep.subr.mxu0 0.0
    %7612 = vmatpush1.msra.mxu0 0.0
    %7613 = vmatprep.subr.mxu0 0.0
    %7614 = vmatpush1.msra.mxu0 0.0
    %7615 = vmatprep.subr.mxu0 0.0
    %7616 = vmatpush1.msra.mxu0 0.0
    %7617 = vmatprep.subr.mxu0 0.0
    %7618 = vmatpush1.msra.mxu0 0.0
    %7619 = vmatprep.subr.mxu0 0.0
    %7620 = vmatpush1.msra.mxu0 0.0
    %7621 = vmatprep.subr.mxu0 0.0
    %7622 = vmatpush1.msra.mxu0 0.0
    %7623 = vmatprep.subr.mxu0 0.0
    %7624 = vmatpush1.msra.mxu0 0.0
    %7625 = vmatprep.subr.mxu0 0.0
    %7626 = vmatpush1.msra.mxu0 0.0
    %7627 = vmatprep.subr.mxu0 0.0
    %7628 = vmatpush1.msra.mxu0 0.0
    %7629 = vmatprep.subr.mxu0 0.0
    %7630 = vmatpush1.msra.mxu0 0.0
    %7631 = vmatprep.subr.mxu0 0.0
    %7632 = vmatpush1.msra.mxu0 0.0
    %7633 = vmatprep.subr.mxu0 0.0
    %7634 = vmatpush1.msra.mxu0 0.0
    %7635 = vmatprep.subr.mxu0 0.0
    %7636 = vmatpush1.msra.mxu0 0.0
    %7637 = vmatprep.subr.mxu0 0.0
    %7638 = vmatpush1.msra.mxu0 0.0
    %7639 = vmatprep.subr.mxu0 0.0
    %7640 = vmatpush1.msra.mxu0 0.0
    %7641 = vmatprep.subr.mxu0 0.0
    %7642 = vmatpush1.msra.mxu0 0.0
    %7643 = vmatprep.mubr.f32.mxu0 0.0
    %7644 = vmatmul.mubr.f32.gmra.mrb[0].mxu0 %v7577
    %v7645 = vpop.f32.mrb[0].mxu0
    %v7646 = vadd.f32 0.0, %v7645
    %v7647 = vpop.f32.mrb[0].mxu0
    %7648 = vdwg.mxu0
    %7649 = vrot.lane.b32.xlu0 %v4985, 96
    %v7650 = vpop.permute.xlu0 %7649
    %v7653 = vsel %vm733, %v7493, 0
    %7655 = vmatprep.subr.mxu0 0.0
    %7656 = vmatpush1.msra.mxu0 %v7650
    %7657 = vmatprep.subr.mxu0 0.0
    %7658 = vmatpush1.msra.mxu0 0.0
    %7659 = vmatprep.subr.mxu0 0.0
    %7660 = vmatpush1.msra.mxu0 0.0
    %7661 = vmatprep.subr.mxu0 0.0
    %7662 = vmatpush1.msra.mxu0 0.0
    %7663 = vmatprep.subr.mxu0 0.0
    %7664 = vmatpush1.msra.mxu0 0.0
    %7665 = vmatprep.subr.mxu0 0.0
    %7666 = vmatpush1.msra.mxu0 0.0
    %7667 = vmatprep.subr.mxu0 0.0
    %7668 = vmatpush1.msra.mxu0 0.0
    %7669 = vmatprep.subr.mxu0 0.0
    %7670 = vmatpush1.msra.mxu0 0.0
    %7671 = vmatprep.subr.mxu0 0.0
    %7672 = vmatpush1.msra.mxu0 0.0
    %7673 = vmatprep.subr.mxu0 0.0
    %7674 = vmatpush1.msra.mxu0 0.0
    %7675 = vmatprep.subr.mxu0 0.0
    %7676 = vmatpush1.msra.mxu0 0.0
    %7677 = vmatprep.subr.mxu0 0.0
    %7678 = vmatpush1.msra.mxu0 0.0
    %7679 = vmatprep.subr.mxu0 0.0
    %7680 = vmatpush1.msra.mxu0 0.0
    %7681 = vmatprep.subr.mxu0 0.0
    %7682 = vmatpush1.msra.mxu0 0.0
    %7683 = vmatprep.subr.mxu0 0.0
    %7684 = vmatpush1.msra.mxu0 0.0
    %7685 = vmatprep.subr.mxu0 0.0
    %7686 = vmatpush1.msra.mxu0 0.0
    %7687 = vmatprep.subr.mxu0 0.0
    %7688 = vmatpush1.msra.mxu0 0.0
    %7689 = vmatprep.subr.mxu0 0.0
    %7690 = vmatpush1.msra.mxu0 0.0
    %7691 = vmatprep.subr.mxu0 0.0
    %7692 = vmatpush1.msra.mxu0 0.0
    %7693 = vmatprep.subr.mxu0 0.0
    %7694 = vmatpush1.msra.mxu0 0.0
    %7695 = vmatprep.subr.mxu0 0.0
    %7696 = vmatpush1.msra.mxu0 0.0
    %7697 = vmatprep.subr.mxu0 0.0
    %7698 = vmatpush1.msra.mxu0 0.0
    %7699 = vmatprep.subr.mxu0 0.0
    %7700 = vmatpush1.msra.mxu0 0.0
    %7701 = vmatprep.subr.mxu0 0.0
    %7702 = vmatpush1.msra.mxu0 0.0
    %7703 = vmatprep.subr.mxu0 0.0
    %7704 = vmatpush1.msra.mxu0 0.0
    %7705 = vmatprep.subr.mxu0 0.0
    %7706 = vmatpush1.msra.mxu0 0.0
    %7707 = vmatprep.subr.mxu0 0.0
    %7708 = vmatpush1.msra.mxu0 0.0
    %7709 = vmatprep.subr.mxu0 0.0
    %7710 = vmatpush1.msra.mxu0 0.0
    %7711 = vmatprep.subr.mxu0 0.0
    %7712 = vmatpush1.msra.mxu0 0.0
    %7713 = vmatprep.subr.mxu0 0.0
    %7714 = vmatpush1.msra.mxu0 0.0
    %7715 = vmatprep.subr.mxu0 0.0
    %7716 = vmatpush1.msra.mxu0 0.0
    %7717 = vmatprep.subr.mxu0 0.0
    %7718 = vmatpush1.msra.mxu0 0.0
    %7719 = vmatprep.mubr.f32.mxu0 0.0
    %7720 = vmatmul.mubr.f32.gmra.mrb[0].mxu0 %v7653
    %v7721 = vpop.f32.mrb[0].mxu0
    %v7722 = vadd.f32 0.0, %v7721
    %v7723 = vpop.f32.mrb[0].mxu0
    %7724 = vdwg.mxu0
    %7725 = vrot.lane.b32.xlu0 %v4989, 96
    %v7726 = vpop.permute.xlu0 %7725
    %v7729 = vsel %vm733, %v7494, 0
    %7731 = vmatprep.subr.mxu0 0.0
    %7732 = vmatpush1.msra.mxu0 %v7726
    %7733 = vmatprep.subr.mxu0 0.0
    %7734 = vmatpush1.msra.mxu0 0.0
    %7735 = vmatprep.subr.mxu0 0.0
    %7736 = vmatpush1.msra.mxu0 0.0
    %7737 = vmatprep.subr.mxu0 0.0
    %7738 = vmatpush1.msra.mxu0 0.0
    %7739 = vmatprep.subr.mxu0 0.0
    %7740 = vmatpush1.msra.mxu0 0.0
    %7741 = vmatprep.subr.mxu0 0.0
    %7742 = vmatpush1.msra.mxu0 0.0
    %7743 = vmatprep.subr.mxu0 0.0
    %7744 = vmatpush1.msra.mxu0 0.0
    %7745 = vmatprep.subr.mxu0 0.0
    %7746 = vmatpush1.msra.mxu0 0.0
    %7747 = vmatprep.subr.mxu0 0.0
    %7748 = vmatpush1.msra.mxu0 0.0
    %7749 = vmatprep.subr.mxu0 0.0
    %7750 = vmatpush1.msra.mxu0 0.0
    %7751 = vmatprep.subr.mxu0 0.0
    %7752 = vmatpush1.msra.mxu0 0.0
    %7753 = vmatprep.subr.mxu0 0.0
    %7754 = vmatpush1.msra.mxu0 0.0
    %7755 = vmatprep.subr.mxu0 0.0
    %7756 = vmatpush1.msra.mxu0 0.0
    %7757 = vmatprep.subr.mxu0 0.0
    %7758 = vmatpush1.msra.mxu0 0.0
    %7759 = vmatprep.subr.mxu0 0.0
    %7760 = vmatpush1.msra.mxu0 0.0
    %7761 = vmatprep.subr.mxu0 0.0
    %7762 = vmatpush1.msra.mxu0 0.0
    %7763 = vmatprep.subr.mxu0 0.0
    %7764 = vmatpush1.msra.mxu0 0.0
    %7765 = vmatprep.subr.mxu0 0.0
    %7766 = vmatpush1.msra.mxu0 0.0
    %7767 = vmatprep.subr.mxu0 0.0
    %7768 = vmatpush1.msra.mxu0 0.0
    %7769 = vmatprep.subr.mxu0 0.0
    %7770 = vmatpush1.msra.mxu0 0.0
    %7771 = vmatprep.subr.mxu0 0.0
    %7772 = vmatpush1.msra.mxu0 0.0
    %7773 = vmatprep.subr.mxu0 0.0
    %7774 = vmatpush1.msra.mxu0 0.0
    %7775 = vmatprep.subr.mxu0 0.0
    %7776 = vmatpush1.msra.mxu0 0.0
    %7777 = vmatprep.subr.mxu0 0.0
    %7778 = vmatpush1.msra.mxu0 0.0
    %7779 = vmatprep.subr.mxu0 0.0
    %7780 = vmatpush1.msra.mxu0 0.0
    %7781 = vmatprep.subr.mxu0 0.0
    %7782 = vmatpush1.msra.mxu0 0.0
    %7783 = vmatprep.subr.mxu0 0.0
    %7784 = vmatpush1.msra.mxu0 0.0
    %7785 = vmatprep.subr.mxu0 0.0
    %7786 = vmatpush1.msra.mxu0 0.0
    %7787 = vmatprep.subr.mxu0 0.0
    %7788 = vmatpush1.msra.mxu0 0.0
    %7789 = vmatprep.subr.mxu0 0.0
    %7790 = vmatpush1.msra.mxu0 0.0
    %7791 = vmatprep.subr.mxu0 0.0
    %7792 = vmatpush1.msra.mxu0 0.0
    %7793 = vmatprep.subr.mxu0 0.0
    %7794 = vmatpush1.msra.mxu0 0.0
    %7795 = vmatprep.mubr.f32.mxu0 0.0
    %7796 = vmatmul.mubr.f32.gmra.mrb[0].mxu0 %v7729
    %v7797 = vpop.f32.mrb[0].mxu0
    %v7798 = vadd.f32 0.0, %v7797
    %v7799 = vpop.f32.mrb[0].mxu0
    %7800 = vdwg.mxu0
    %7801 = vrot.lane.b32.xlu0 %v4995, 96
    %v7802 = vpop.permute.xlu0 %7801
    %v7805 = vsel %vm733, %v7495, 0
    %7807 = vmatprep.subr.mxu0 0.0
    %7808 = vmatpush1.msra.mxu0 %v7802
    %7809 = vmatprep.subr.mxu0 0.0
    %7810 = vmatpush1.msra.mxu0 0.0
    %7811 = vmatprep.subr.mxu0 0.0
    %7812 = vmatpush1.msra.mxu0 0.0
    %7813 = vmatprep.subr.mxu0 0.0
    %7814 = vmatpush1.msra.mxu0 0.0
    %7815 = vmatprep.subr.mxu0 0.0
    %7816 = vmatpush1.msra.mxu0 0.0
    %7817 = vmatprep.subr.mxu0 0.0
    %7818 = vmatpush1.msra.mxu0 0.0
    %7819 = vmatprep.subr.mxu0 0.0
    %7820 = vmatpush1.msra.mxu0 0.0
    %7821 = vmatprep.subr.mxu0 0.0
    %7822 = vmatpush1.msra.mxu0 0.0
    %7823 = vmatprep.subr.mxu0 0.0
    %7824 = vmatpush1.msra.mxu0 0.0
    %7825 = vmatprep.subr.mxu0 0.0
    %7826 = vmatpush1.msra.mxu0 0.0
    %7827 = vmatprep.subr.mxu0 0.0
    %7828 = vmatpush1.msra.mxu0 0.0
    %7829 = vmatprep.subr.mxu0 0.0
    %7830 = vmatpush1.msra.mxu0 0.0
    %7831 = vmatprep.subr.mxu0 0.0
    %7832 = vmatpush1.msra.mxu0 0.0
    %7833 = vmatprep.subr.mxu0 0.0
    %7834 = vmatpush1.msra.mxu0 0.0
    %7835 = vmatprep.subr.mxu0 0.0
    %7836 = vmatpush1.msra.mxu0 0.0
    %7837 = vmatprep.subr.mxu0 0.0
    %7838 = vmatpush1.msra.mxu0 0.0
    %7839 = vmatprep.subr.mxu0 0.0
    %7840 = vmatpush1.msra.mxu0 0.0
    %7841 = vmatprep.subr.mxu0 0.0
    %7842 = vmatpush1.msra.mxu0 0.0
    %7843 = vmatprep.subr.mxu0 0.0
    %7844 = vmatpush1.msra.mxu0 0.0
    %7845 = vmatprep.subr.mxu0 0.0
    %7846 = vmatpush1.msra.mxu0 0.0
    %7847 = vmatprep.subr.mxu0 0.0
    %7848 = vmatpush1.msra.mxu0 0.0
    %7849 = vmatprep.subr.mxu0 0.0
    %7850 = vmatpush1.msra.mxu0 0.0
    %7851 = vmatprep.subr.mxu0 0.0
    %7852 = vmatpush1.msra.mxu0 0.0
    %7853 = vmatprep.subr.mxu0 0.0
    %7854 = vmatpush1.msra.mxu0 0.0
    %7855 = vmatprep.subr.mxu0 0.0
    %7856 = vmatpush1.msra.mxu0 0.0
    %7857 = vmatprep.subr.mxu0 0.0
    %7858 = vmatpush1.msra.mxu0 0.0
    %7859 = vmatprep.subr.mxu0 0.0
    %7860 = vmatpush1.msra.mxu0 0.0
    %7861 = vmatprep.subr.mxu0 0.0
    %7862 = vmatpush1.msra.mxu0 0.0
    %7863 = vmatprep.subr.mxu0 0.0
    %7864 = vmatpush1.msra.mxu0 0.0
    %7865 = vmatprep.subr.mxu0 0.0
    %7866 = vmatpush1.msra.mxu0 0.0
    %7867 = vmatprep.subr.mxu0 0.0
    %7868 = vmatpush1.msra.mxu0 0.0
    %7869 = vmatprep.subr.mxu0 0.0
    %7870 = vmatpush1.msra.mxu0 0.0
    %7871 = vmatprep.mubr.f32.mxu0 0.0
    %7872 = vmatmul.mubr.f32.gmra.mrb[0].mxu0 %v7805
    %v7873 = vpop.f32.mrb[0].mxu0
    %v7874 = vadd.f32 0.0, %v7873
    %v7875 = vpop.f32.mrb[0].mxu0
    %7876 = vdwg.mxu0
    %7877 = vrot.lane.b32.xlu0 %v4999, 96
    %v7878 = vpop.permute.xlu0 %7877
    %v7881 = vsel %vm733, %v7496, 0
    %7883 = vmatprep.subr.mxu0 0.0
    %7884 = vmatpush1.msra.mxu0 %v7878
    %7885 = vmatprep.subr.mxu0 0.0
    %7886 = vmatpush1.msra.mxu0 0.0
    %7887 = vmatprep.subr.mxu0 0.0
    %7888 = vmatpush1.msra.mxu0 0.0
    %7889 = vmatprep.subr.mxu0 0.0
    %7890 = vmatpush1.msra.mxu0 0.0
    %7891 = vmatprep.subr.mxu0 0.0
    %7892 = vmatpush1.msra.mxu0 0.0
    %7893 = vmatprep.subr.mxu0 0.0
    %7894 = vmatpush1.msra.mxu0 0.0
    %7895 = vmatprep.subr.mxu0 0.0
    %7896 = vmatpush1.msra.mxu0 0.0
    %7897 = vmatprep.subr.mxu0 0.0
    %7898 = vmatpush1.msra.mxu0 0.0
    %7899 = vmatprep.subr.mxu0 0.0
    %7900 = vmatpush1.msra.mxu0 0.0
    %7901 = vmatprep.subr.mxu0 0.0
    %7902 = vmatpush1.msra.mxu0 0.0
    %7903 = vmatprep.subr.mxu0 0.0
    %7904 = vmatpush1.msra.mxu0 0.0
    %7905 = vmatprep.subr.mxu0 0.0
    %7906 = vmatpush1.msra.mxu0 0.0
    %7907 = vmatprep.subr.mxu0 0.0
    %7908 = vmatpush1.msra.mxu0 0.0
    %7909 = vmatprep.subr.mxu0 0.0
    %7910 = vmatpush1.msra.mxu0 0.0
    %7911 = vmatprep.subr.mxu0 0.0
    %7912 = vmatpush1.msra.mxu0 0.0
    %7913 = vmatprep.subr.mxu0 0.0
    %7914 = vmatpush1.msra.mxu0 0.0
    %7915 = vmatprep.subr.mxu0 0.0
    %7916 = vmatpush1.msra.mxu0 0.0
    %7917 = vmatprep.subr.mxu0 0.0
    %7918 = vmatpush1.msra.mxu0 0.0
    %7919 = vmatprep.subr.mxu0 0.0
    %7920 = vmatpush1.msra.mxu0 0.0
    %7921 = vmatprep.subr.mxu0 0.0
    %7922 = vmatpush1.msra.mxu0 0.0
    %7923 = vmatprep.subr.mxu0 0.0
    %7924 = vmatpush1.msra.mxu0 0.0
    %7925 = vmatprep.subr.mxu0 0.0
    %7926 = vmatpush1.msra.mxu0 0.0
    %7927 = vmatprep.subr.mxu0 0.0
    %7928 = vmatpush1.msra.mxu0 0.0
    %7929 = vmatprep.subr.mxu0 0.0
    %7930 = vmatpush1.msra.mxu0 0.0
    %7931 = vmatprep.subr.mxu0 0.0
    %7932 = vmatpush1.msra.mxu0 0.0
    %7933 = vmatprep.subr.mxu0 0.0
    %7934 = vmatpush1.msra.mxu0 0.0
    %7935 = vmatprep.subr.mxu0 0.0
    %7936 = vmatpush1.msra.mxu0 0.0
    %7937 = vmatprep.subr.mxu0 0.0
    %7938 = vmatpush1.msra.mxu0 0.0
    %7939 = vmatprep.subr.mxu0 0.0
    %7940 = vmatpush1.msra.mxu0 0.0
    %7941 = vmatprep.subr.mxu0 0.0
    %7942 = vmatpush1.msra.mxu0 0.0
    %7943 = vmatprep.subr.mxu0 0.0
    %7944 = vmatpush1.msra.mxu0 0.0
    %7945 = vmatprep.subr.mxu0 0.0
    %7946 = vmatpush1.msra.mxu0 0.0
    %7947 = vmatprep.mubr.f32.mxu0 0.0
    %7948 = vmatmul.mubr.f32.gmra.mrb[0].mxu0 %v7881
    %v7949 = vpop.f32.mrb[0].mxu0
    %v7950 = vadd.f32 0.0, %v7949
    %v7951 = vpop.f32.mrb[0].mxu0
    %7952 = vdwg.mxu0
    %7953 = vrot.lane.b32.xlu0 %v4973, 80
    %v7954 = vpop.permute.xlu0 %7953
    %7955 = vrot.lane.b32.xlu0 %v4973, 16
    %v7956 = vpop.permute.xlu0 %7955
    %v7957 = vsel %vm60, %v7954, 0
    %v7959 = vsel %vm60, %v7956, 0
    %7961 = vmatprep.subr.mxu0 0.0
    %7962 = vmatpush1.xpose.msra.mxu0 %v7959
    %7963 = vmatprep.subr.mxu0 0.0
    %7964 = vmatpush1.xpose.msra.mxu0 0.0
    %7965 = vmatprep.subr.mxu0 0.0
    %7966 = vmatpush1.xpose.msra.mxu0 0.0
    %7967 = vmatprep.subr.mxu0 0.0
    %7968 = vmatpush1.xpose.msra.mxu0 0.0
    %7969 = vmatprep.subr.mxu0 0.0
    %7970 = vmatpush1.xpose.msra.mxu0 0.0
    %7971 = vmatprep.subr.mxu0 0.0
    %7972 = vmatpush1.xpose.msra.mxu0 0.0
    %7973 = vmatprep.subr.mxu0 0.0
    %7974 = vmatpush1.xpose.msra.mxu0 0.0
    %7975 = vmatprep.subr.mxu0 0.0
    %7976 = vmatpush1.xpose.msra.mxu0 0.0
    %7977 = vmatprep.subr.mxu0 0.0
    %7978 = vmatpush1.xpose.msra.mxu0 0.0
    %7979 = vmatprep.subr.mxu0 0.0
    %7980 = vmatpush1.xpose.msra.mxu0 0.0
    %7981 = vmatprep.subr.mxu0 0.0
    %7982 = vmatpush1.xpose.msra.mxu0 0.0
    %7983 = vmatprep.subr.mxu0 0.0
    %7984 = vmatpush1.xpose.msra.mxu0 0.0
    %7985 = vmatprep.subr.mxu0 0.0
    %7986 = vmatpush1.xpose.msra.mxu0 0.0
    %7987 = vmatprep.subr.mxu0 0.0
    %7988 = vmatpush1.xpose.msra.mxu0 0.0
    %7989 = vmatprep.subr.mxu0 0.0
    %7990 = vmatpush1.xpose.msra.mxu0 0.0
    %7991 = vmatprep.subr.mxu0 0.0
    %7992 = vmatpush1.xpose.msra.mxu0 0.0
    %7993 = vmatprep.subr.mxu0 0.0
    %7994 = vmatpush1.xpose.msra.mxu0 0.0
    %7995 = vmatprep.subr.mxu0 0.0
    %7996 = vmatpush1.xpose.msra.mxu0 0.0
    %7997 = vmatprep.subr.mxu0 0.0
    %7998 = vmatpush1.xpose.msra.mxu0 0.0
    %7999 = vmatprep.subr.mxu0 0.0
    %8000 = vmatpush1.xpose.msra.mxu0 0.0
    %8001 = vmatprep.subr.mxu0 0.0
    %8002 = vmatpush1.xpose.msra.mxu0 0.0
    %8003 = vmatprep.subr.mxu0 0.0
    %8004 = vmatpush1.xpose.msra.mxu0 0.0
    %8005 = vmatprep.subr.mxu0 0.0
    %8006 = vmatpush1.xpose.msra.mxu0 0.0
    %8007 = vmatprep.subr.mxu0 0.0
    %8008 = vmatpush1.xpose.msra.mxu0 0.0
    %8009 = vmatprep.subr.mxu0 0.0
    %8010 = vmatpush1.xpose.msra.mxu0 0.0
    %8011 = vmatprep.subr.mxu0 0.0
    %8012 = vmatpush1.xpose.msra.mxu0 0.0
    %8013 = vmatprep.subr.mxu0 0.0
    %8014 = vmatpush1.xpose.msra.mxu0 0.0
    %8015 = vmatprep.subr.mxu0 0.0
    %8016 = vmatpush1.xpose.msra.mxu0 0.0
    %8017 = vmatprep.subr.mxu0 0.0
    %8018 = vmatpush1.xpose.msra.mxu0 0.0
    %8019 = vmatprep.subr.mxu0 0.0
    %8020 = vmatpush1.xpose.msra.mxu0 0.0
    %8021 = vmatprep.subr.mxu0 0.0
    %8022 = vmatpush1.xpose.msra.mxu0 0.0
    %8023 = vmatprep.subr.mxu0 0.0
    %8024 = vmatpush1.xpose.msra.mxu0 0.0
    %8025 = vmatprep.mubr.f32.mxu0 0.0
    %8026 = vmatmul.mubr.f32.gmra.mrb[0].mxu0 %v7957
    %v8027 = vpop.f32.mrb[0].mxu0
    %v8028 = vadd.f32 0.0, %v8027
    %v8029 = vpop.f32.mrb[0].mxu0
    %8030 = vdwg.mxu0
    %8031 = vrot.lane.b32.xlu0 %v4977, 80
    %v8032 = vpop.permute.xlu0 %8031
    %8033 = vrot.lane.b32.xlu0 %v4977, 16
    %v8034 = vpop.permute.xlu0 %8033
    %v8035 = vsel %vm60, %v8032, 0
    %v8037 = vsel %vm60, %v8034, 0
    %8039 = vmatprep.subr.mxu0 0.0
    %8040 = vmatpush1.xpose.msra.mxu0 %v8037
    %8041 = vmatprep.subr.mxu0 0.0
    %8042 = vmatpush1.xpose.msra.mxu0 0.0
    %8043 = vmatprep.subr.mxu0 0.0
    %8044 = vmatpush1.xpose.msra.mxu0 0.0
    %8045 = vmatprep.subr.mxu0 0.0
    %8046 = vmatpush1.xpose.msra.mxu0 0.0
    %8047 = vmatprep.subr.mxu0 0.0
    %8048 = vmatpush1.xpose.msra.mxu0 0.0
    %8049 = vmatprep.subr.mxu0 0.0
    %8050 = vmatpush1.xpose.msra.mxu0 0.0
    %8051 = vmatprep.subr.mxu0 0.0
    %8052 = vmatpush1.xpose.msra.mxu0 0.0
    %8053 = vmatprep.subr.mxu0 0.0
    %8054 = vmatpush1.xpose.msra.mxu0 0.0
    %8055 = vmatprep.subr.mxu0 0.0
    %8056 = vmatpush1.xpose.msra.mxu0 0.0
    %8057 = vmatprep.subr.mxu0 0.0
    %8058 = vmatpush1.xpose.msra.mxu0 0.0
    %8059 = vmatprep.subr.mxu0 0.0
    %8060 = vmatpush1.xpose.msra.mxu0 0.0
    %8061 = vmatprep.subr.mxu0 0.0
    %8062 = vmatpush1.xpose.msra.mxu0 0.0
    %8063 = vmatprep.subr.mxu0 0.0
    %8064 = vmatpush1.xpose.msra.mxu0 0.0
    %8065 = vmatprep.subr.mxu0 0.0
    %8066 = vmatpush1.xpose.msra.mxu0 0.0
    %8067 = vmatprep.subr.mxu0 0.0
    %8068 = vmatpush1.xpose.msra.mxu0 0.0
    %8069 = vmatprep.subr.mxu0 0.0
    %8070 = vmatpush1.xpose.msra.mxu0 0.0
    %8071 = vmatprep.subr.mxu0 0.0
    %8072 = vmatpush1.xpose.msra.mxu0 0.0
    %8073 = vmatprep.subr.mxu0 0.0
    %8074 = vmatpush1.xpose.msra.mxu0 0.0
    %8075 = vmatprep.subr.mxu0 0.0
    %8076 = vmatpush1.xpose.msra.mxu0 0.0
    %8077 = vmatprep.subr.mxu0 0.0
    %8078 = vmatpush1.xpose.msra.mxu0 0.0
    %8079 = vmatprep.subr.mxu0 0.0
    %8080 = vmatpush1.xpose.msra.mxu0 0.0
    %8081 = vmatprep.subr.mxu0 0.0
    %8082 = vmatpush1.xpose.msra.mxu0 0.0
    %8083 = vmatprep.subr.mxu0 0.0
    %8084 = vmatpush1.xpose.msra.mxu0 0.0
    %8085 = vmatprep.subr.mxu0 0.0
    %8086 = vmatpush1.xpose.msra.mxu0 0.0
    %8087 = vmatprep.subr.mxu0 0.0
    %8088 = vmatpush1.xpose.msra.mxu0 0.0
    %8089 = vmatprep.subr.mxu0 0.0
    %8090 = vmatpush1.xpose.msra.mxu0 0.0
    %8091 = vmatprep.subr.mxu0 0.0
    %8092 = vmatpush1.xpose.msra.mxu0 0.0
    %8093 = vmatprep.subr.mxu0 0.0
    %8094 = vmatpush1.xpose.msra.mxu0 0.0
    %8095 = vmatprep.subr.mxu0 0.0
    %8096 = vmatpush1.xpose.msra.mxu0 0.0
    %8097 = vmatprep.subr.mxu0 0.0
    %8098 = vmatpush1.xpose.msra.mxu0 0.0
    %8099 = vmatprep.subr.mxu0 0.0
    %8100 = vmatpush1.xpose.msra.mxu0 0.0
    %8101 = vmatprep.subr.mxu0 0.0
    %8102 = vmatpush1.xpose.msra.mxu0 0.0
    %8103 = vmatprep.mubr.f32.mxu0 0.0
    %8104 = vmatmul.mubr.f32.gmra.mrb[0].mxu0 %v8035
    %v8105 = vpop.f32.mrb[0].mxu0
    %v8106 = vadd.f32 0.0, %v8105
    %v8107 = vpop.f32.mrb[0].mxu0
    %8108 = vdwg.mxu0
    %8109 = vrot.lane.b32.xlu0 %v4983, 80
    %v8110 = vpop.permute.xlu0 %8109
    %8111 = vrot.lane.b32.xlu0 %v4983, 16
    %v8112 = vpop.permute.xlu0 %8111
    %v8113 = vsel %vm60, %v8110, 0
    %v8115 = vsel %vm60, %v8112, 0
    %8117 = vmatprep.subr.mxu0 0.0
    %8118 = vmatpush1.xpose.msra.mxu0 %v8115
    %8119 = vmatprep.subr.mxu0 0.0
    %8120 = vmatpush1.xpose.msra.mxu0 0.0
    %8121 = vmatprep.subr.mxu0 0.0
    %8122 = vmatpush1.xpose.msra.mxu0 0.0
    %8123 = vmatprep.subr.mxu0 0.0
    %8124 = vmatpush1.xpose.msra.mxu0 0.0
    %8125 = vmatprep.subr.mxu0 0.0
    %8126 = vmatpush1.xpose.msra.mxu0 0.0
    %8127 = vmatprep.subr.mxu0 0.0
    %8128 = vmatpush1.xpose.msra.mxu0 0.0
    %8129 = vmatprep.subr.mxu0 0.0
    %8130 = vmatpush1.xpose.msra.mxu0 0.0
    %8131 = vmatprep.subr.mxu0 0.0
    %8132 = vmatpush1.xpose.msra.mxu0 0.0
    %8133 = vmatprep.subr.mxu0 0.0
    %8134 = vmatpush1.xpose.msra.mxu0 0.0
    %8135 = vmatprep.subr.mxu0 0.0
    %8136 = vmatpush1.xpose.msra.mxu0 0.0
    %8137 = vmatprep.subr.mxu0 0.0
    %8138 = vmatpush1.xpose.msra.mxu0 0.0
    %8139 = vmatprep.subr.mxu0 0.0
    %8140 = vmatpush1.xpose.msra.mxu0 0.0
    %8141 = vmatprep.subr.mxu0 0.0
    %8142 = vmatpush1.xpose.msra.mxu0 0.0
    %8143 = vmatprep.subr.mxu0 0.0
    %8144 = vmatpush1.xpose.msra.mxu0 0.0
    %8145 = vmatprep.subr.mxu0 0.0
    %8146 = vmatpush1.xpose.msra.mxu0 0.0
    %8147 = vmatprep.subr.mxu0 0.0
    %8148 = vmatpush1.xpose.msra.mxu0 0.0
    %8149 = vmatprep.subr.mxu0 0.0
    %8150 = vmatpush1.xpose.msra.mxu0 0.0
    %8151 = vmatprep.subr.mxu0 0.0
    %8152 = vmatpush1.xpose.msra.mxu0 0.0
    %8153 = vmatprep.subr.mxu0 0.0
    %8154 = vmatpush1.xpose.msra.mxu0 0.0
    %8155 = vmatprep.subr.mxu0 0.0
    %8156 = vmatpush1.xpose.msra.mxu0 0.0
    %8157 = vmatprep.subr.mxu0 0.0
    %8158 = vmatpush1.xpose.msra.mxu0 0.0
    %8159 = vmatprep.subr.mxu0 0.0
    %8160 = vmatpush1.xpose.msra.mxu0 0.0
    %8161 = vmatprep.subr.mxu0 0.0
    %8162 = vmatpush1.xpose.msra.mxu0 0.0
    %8163 = vmatprep.subr.mxu0 0.0
    %8164 = vmatpush1.xpose.msra.mxu0 0.0
    %8165 = vmatprep.subr.mxu0 0.0
    %8166 = vmatpush1.xpose.msra.mxu0 0.0
    %8167 = vmatprep.subr.mxu0 0.0
    %8168 = vmatpush1.xpose.msra.mxu0 0.0
    %8169 = vmatprep.subr.mxu0 0.0
    %8170 = vmatpush1.xpose.msra.mxu0 0.0
    %8171 = vmatprep.subr.mxu0 0.0
    %8172 = vmatpush1.xpose.msra.mxu0 0.0
    %8173 = vmatprep.subr.mxu0 0.0
    %8174 = vmatpush1.xpose.msra.mxu0 0.0
    %8175 = vmatprep.subr.mxu0 0.0
    %8176 = vmatpush1.xpose.msra.mxu0 0.0
    %8177 = vmatprep.subr.mxu0 0.0
    %8178 = vmatpush1.xpose.msra.mxu0 0.0
    %8179 = vmatprep.subr.mxu0 0.0
    %8180 = vmatpush1.xpose.msra.mxu0 0.0
    %8181 = vmatprep.mubr.f32.mxu0 0.0
    %8182 = vmatmul.mubr.f32.gmra.mrb[0].mxu0 %v8113
    %v8183 = vpop.f32.mrb[0].mxu0
    %v8184 = vadd.f32 0.0, %v8183
    %v8185 = vpop.f32.mrb[0].mxu0
    %8186 = vdwg.mxu0
    %8187 = vrot.lane.b32.xlu0 %v4987, 80
    %v8188 = vpop.permute.xlu0 %8187
    %8189 = vrot.lane.b32.xlu0 %v4987, 16
    %v8190 = vpop.permute.xlu0 %8189
    %v8191 = vsel %vm60, %v8188, 0
    %v8193 = vsel %vm60, %v8190, 0
    %8195 = vmatprep.subr.mxu0 0.0
    %8196 = vmatpush1.xpose.msra.mxu0 %v8193
    %8197 = vmatprep.subr.mxu0 0.0
    %8198 = vmatpush1.xpose.msra.mxu0 0.0
    %8199 = vmatprep.subr.mxu0 0.0
    %8200 = vmatpush1.xpose.msra.mxu0 0.0
    %8201 = vmatprep.subr.mxu0 0.0
    %8202 = vmatpush1.xpose.msra.mxu0 0.0
    %8203 = vmatprep.subr.mxu0 0.0
    %8204 = vmatpush1.xpose.msra.mxu0 0.0
    %8205 = vmatprep.subr.mxu0 0.0
    %8206 = vmatpush1.xpose.msra.mxu0 0.0
    %8207 = vmatprep.subr.mxu0 0.0
    %8208 = vmatpush1.xpose.msra.mxu0 0.0
    %8209 = vmatprep.subr.mxu0 0.0
    %8210 = vmatpush1.xpose.msra.mxu0 0.0
    %8211 = vmatprep.subr.mxu0 0.0
    %8212 = vmatpush1.xpose.msra.mxu0 0.0
    %8213 = vmatprep.subr.mxu0 0.0
    %8214 = vmatpush1.xpose.msra.mxu0 0.0
    %8215 = vmatprep.subr.mxu0 0.0
    %8216 = vmatpush1.xpose.msra.mxu0 0.0
    %8217 = vmatprep.subr.mxu0 0.0
    %8218 = vmatpush1.xpose.msra.mxu0 0.0
    %8219 = vmatprep.subr.mxu0 0.0
    %8220 = vmatpush1.xpose.msra.mxu0 0.0
    %8221 = vmatprep.subr.mxu0 0.0
    %8222 = vmatpush1.xpose.msra.mxu0 0.0
    %8223 = vmatprep.subr.mxu0 0.0
    %8224 = vmatpush1.xpose.msra.mxu0 0.0
    %8225 = vmatprep.subr.mxu0 0.0
    %8226 = vmatpush1.xpose.msra.mxu0 0.0
    %8227 = vmatprep.subr.mxu0 0.0
    %8228 = vmatpush1.xpose.msra.mxu0 0.0
    %8229 = vmatprep.subr.mxu0 0.0
    %8230 = vmatpush1.xpose.msra.mxu0 0.0
    %8231 = vmatprep.subr.mxu0 0.0
    %8232 = vmatpush1.xpose.msra.mxu0 0.0
    %8233 = vmatprep.subr.mxu0 0.0
    %8234 = vmatpush1.xpose.msra.mxu0 0.0
    %8235 = vmatprep.subr.mxu0 0.0
    %8236 = vmatpush1.xpose.msra.mxu0 0.0
    %8237 = vmatprep.subr.mxu0 0.0
    %8238 = vmatpush1.xpose.msra.mxu0 0.0
    %8239 = vmatprep.subr.mxu0 0.0
    %8240 = vmatpush1.xpose.msra.mxu0 0.0
    %8241 = vmatprep.subr.mxu0 0.0
    %8242 = vmatpush1.xpose.msra.mxu0 0.0
    %8243 = vmatprep.subr.mxu0 0.0
    %8244 = vmatpush1.xpose.msra.mxu0 0.0
    %8245 = vmatprep.subr.mxu0 0.0
    %8246 = vmatpush1.xpose.msra.mxu0 0.0
    %8247 = vmatprep.subr.mxu0 0.0
    %8248 = vmatpush1.xpose.msra.mxu0 0.0
    %8249 = vmatprep.subr.mxu0 0.0
    %8250 = vmatpush1.xpose.msra.mxu0 0.0
    %8251 = vmatprep.subr.mxu0 0.0
    %8252 = vmatpush1.xpose.msra.mxu0 0.0
    %8253 = vmatprep.subr.mxu0 0.0
    %8254 = vmatpush1.xpose.msra.mxu0 0.0
    %8255 = vmatprep.subr.mxu0 0.0
    %8256 = vmatpush1.xpose.msra.mxu0 0.0
    %8257 = vmatprep.subr.mxu0 0.0
    %8258 = vmatpush1.xpose.msra.mxu0 0.0
    %8259 = vmatprep.mubr.f32.mxu0 0.0
    %8260 = vmatmul.mubr.f32.gmra.mrb[0].mxu0 %v8191
    %v8261 = vpop.f32.mrb[0].mxu0
    %v8262 = vadd.f32 0.0, %v8261
    %v8263 = vpop.f32.mrb[0].mxu0
    %8264 = vdwg.mxu0
    %8265 = vrot.lane.b32.xlu0 %v4993, 80
    %v8266 = vpop.permute.xlu0 %8265
    %8267 = vrot.lane.b32.xlu0 %v4993, 16
    %v8268 = vpop.permute.xlu0 %8267
    %v8269 = vsel %vm60, %v8266, 0
    %v8271 = vsel %vm60, %v8268, 0
    %8273 = vmatprep.subr.mxu0 0.0
    %8274 = vmatpush1.xpose.msra.mxu0 %v8271
    %8275 = vmatprep.subr.mxu0 0.0
    %8276 = vmatpush1.xpose.msra.mxu0 0.0
    %8277 = vmatprep.subr.mxu0 0.0
    %8278 = vmatpush1.xpose.msra.mxu0 0.0
    %8279 = vmatprep.subr.mxu0 0.0
    %8280 = vmatpush1.xpose.msra.mxu0 0.0
    %8281 = vmatprep.subr.mxu0 0.0
    %8282 = vmatpush1.xpose.msra.mxu0 0.0
    %8283 = vmatprep.subr.mxu0 0.0
    %8284 = vmatpush1.xpose.msra.mxu0 0.0
    %8285 = vmatprep.subr.mxu0 0.0
    %8286 = vmatpush1.xpose.msra.mxu0 0.0
    %8287 = vmatprep.subr.mxu0 0.0
    %8288 = vmatpush1.xpose.msra.mxu0 0.0
    %8289 = vmatprep.subr.mxu0 0.0
    %8290 = vmatpush1.xpose.msra.mxu0 0.0
    %8291 = vmatprep.subr.mxu0 0.0
    %8292 = vmatpush1.xpose.msra.mxu0 0.0
    %8293 = vmatprep.subr.mxu0 0.0
    %8294 = vmatpush1.xpose.msra.mxu0 0.0
    %8295 = vmatprep.subr.mxu0 0.0
    %8296 = vmatpush1.xpose.msra.mxu0 0.0
    %8297 = vmatprep.subr.mxu0 0.0
    %8298 = vmatpush1.xpose.msra.mxu0 0.0
    %8299 = vmatprep.subr.mxu0 0.0
    %8300 = vmatpush1.xpose.msra.mxu0 0.0
    %8301 = vmatprep.subr.mxu0 0.0
    %8302 = vmatpush1.xpose.msra.mxu0 0.0
    %8303 = vmatprep.subr.mxu0 0.0
    %8304 = vmatpush1.xpose.msra.mxu0 0.0
    %8305 = vmatprep.subr.mxu0 0.0
    %8306 = vmatpush1.xpose.msra.mxu0 0.0
    %8307 = vmatprep.subr.mxu0 0.0
    %8308 = vmatpush1.xpose.msra.mxu0 0.0
    %8309 = vmatprep.subr.mxu0 0.0
    %8310 = vmatpush1.xpose.msra.mxu0 0.0
    %8311 = vmatprep.subr.mxu0 0.0
    %8312 = vmatpush1.xpose.msra.mxu0 0.0
    %8313 = vmatprep.subr.mxu0 0.0
    %8314 = vmatpush1.xpose.msra.mxu0 0.0
    %8315 = vmatprep.subr.mxu0 0.0
    %8316 = vmatpush1.xpose.msra.mxu0 0.0
    %8317 = vmatprep.subr.mxu0 0.0
    %8318 = vmatpush1.xpose.msra.mxu0 0.0
    %8319 = vmatprep.subr.mxu0 0.0
    %8320 = vmatpush1.xpose.msra.mxu0 0.0
    %8321 = vmatprep.subr.mxu0 0.0
    %8322 = vmatpush1.xpose.msra.mxu0 0.0
    %8323 = vmatprep.subr.mxu0 0.0
    %8324 = vmatpush1.xpose.msra.mxu0 0.0
    %8325 = vmatprep.subr.mxu0 0.0
    %8326 = vmatpush1.xpose.msra.mxu0 0.0
    %8327 = vmatprep.subr.mxu0 0.0
    %8328 = vmatpush1.xpose.msra.mxu0 0.0
    %8329 = vmatprep.subr.mxu0 0.0
    %8330 = vmatpush1.xpose.msra.mxu0 0.0
    %8331 = vmatprep.subr.mxu0 0.0
    %8332 = vmatpush1.xpose.msra.mxu0 0.0
    %8333 = vmatprep.subr.mxu0 0.0
    %8334 = vmatpush1.xpose.msra.mxu0 0.0
    %8335 = vmatprep.subr.mxu0 0.0
    %8336 = vmatpush1.xpose.msra.mxu0 0.0
    %8337 = vmatprep.mubr.f32.mxu0 0.0
    %8338 = vmatmul.mubr.f32.gmra.mrb[0].mxu0 %v8269
    %v8339 = vpop.f32.mrb[0].mxu0
    %v8340 = vadd.f32 0.0, %v8339
    %v8341 = vpop.f32.mrb[0].mxu0
    %8342 = vdwg.mxu0
    %8343 = vrot.lane.b32.xlu0 %v4997, 80
    %v8344 = vpop.permute.xlu0 %8343
    %8345 = vrot.lane.b32.xlu0 %v4997, 16
    %v8346 = vpop.permute.xlu0 %8345
    %v8347 = vsel %vm60, %v8344, 0
    %v8349 = vsel %vm60, %v8346, 0
    %8351 = vmatprep.subr.mxu0 0.0
    %8352 = vmatpush1.xpose.msra.mxu0 %v8349
    %8353 = vmatprep.subr.mxu0 0.0
    %8354 = vmatpush1.xpose.msra.mxu0 0.0
    %8355 = vmatprep.subr.mxu0 0.0
    %8356 = vmatpush1.xpose.msra.mxu0 0.0
    %8357 = vmatprep.subr.mxu0 0.0
    %8358 = vmatpush1.xpose.msra.mxu0 0.0
    %8359 = vmatprep.subr.mxu0 0.0
    %8360 = vmatpush1.xpose.msra.mxu0 0.0
    %8361 = vmatprep.subr.mxu0 0.0
    %8362 = vmatpush1.xpose.msra.mxu0 0.0
    %8363 = vmatprep.subr.mxu0 0.0
    %8364 = vmatpush1.xpose.msra.mxu0 0.0
    %8365 = vmatprep.subr.mxu0 0.0
    %8366 = vmatpush1.xpose.msra.mxu0 0.0
    %8367 = vmatprep.subr.mxu0 0.0
    %8368 = vmatpush1.xpose.msra.mxu0 0.0
    %8369 = vmatprep.subr.mxu0 0.0
    %8370 = vmatpush1.xpose.msra.mxu0 0.0
    %8371 = vmatprep.subr.mxu0 0.0
    %8372 = vmatpush1.xpose.msra.mxu0 0.0
    %8373 = vmatprep.subr.mxu0 0.0
    %8374 = vmatpush1.xpose.msra.mxu0 0.0
    %8375 = vmatprep.subr.mxu0 0.0
    %8376 = vmatpush1.xpose.msra.mxu0 0.0
    %8377 = vmatprep.subr.mxu0 0.0
    %8378 = vmatpush1.xpose.msra.mxu0 0.0
    %8379 = vmatprep.subr.mxu0 0.0
    %8380 = vmatpush1.xpose.msra.mxu0 0.0
    %8381 = vmatprep.subr.mxu0 0.0
    %8382 = vmatpush1.xpose.msra.mxu0 0.0
    %8383 = vmatprep.subr.mxu0 0.0
    %8384 = vmatpush1.xpose.msra.mxu0 0.0
    %8385 = vmatprep.subr.mxu0 0.0
    %8386 = vmatpush1.xpose.msra.mxu0 0.0
    %8387 = vmatprep.subr.mxu0 0.0
    %8388 = vmatpush1.xpose.msra.mxu0 0.0
    %8389 = vmatprep.subr.mxu0 0.0
    %8390 = vmatpush1.xpose.msra.mxu0 0.0
    %8391 = vmatprep.subr.mxu0 0.0
    %8392 = vmatpush1.xpose.msra.mxu0 0.0
    %8393 = vmatprep.subr.mxu0 0.0
    %8394 = vmatpush1.xpose.msra.mxu0 0.0
    %8395 = vmatprep.subr.mxu0 0.0
    %8396 = vmatpush1.xpose.msra.mxu0 0.0
    %8397 = vmatprep.subr.mxu0 0.0
    %8398 = vmatpush1.xpose.msra.mxu0 0.0
    %8399 = vmatprep.subr.mxu0 0.0
    %8400 = vmatpush1.xpose.msra.mxu0 0.0
    %8401 = vmatprep.subr.mxu0 0.0
    %8402 = vmatpush1.xpose.msra.mxu0 0.0
    %8403 = vmatprep.subr.mxu0 0.0
    %8404 = vmatpush1.xpose.msra.mxu0 0.0
    %8405 = vmatprep.subr.mxu0 0.0
    %8406 = vmatpush1.xpose.msra.mxu0 0.0
    %8407 = vmatprep.subr.mxu0 0.0
    %8408 = vmatpush1.xpose.msra.mxu0 0.0
    %8409 = vmatprep.subr.mxu0 0.0
    %8410 = vmatpush1.xpose.msra.mxu0 0.0
    %8411 = vmatprep.subr.mxu0 0.0
    %8412 = vmatpush1.xpose.msra.mxu0 0.0
    %8413 = vmatprep.subr.mxu0 0.0
    %8414 = vmatpush1.xpose.msra.mxu0 0.0
    %8415 = vmatprep.mubr.f32.mxu0 0.0
    %8416 = vmatmul.mubr.f32.gmra.mrb[0].mxu0 %v8347
    %v8417 = vpop.f32.mrb[0].mxu0
    %v8418 = vadd.f32 0.0, %v8417
    %v8419 = vpop.f32.mrb[0].mxu0
    %8420 = vdwg.mxu0
    %v8421 = vsel %vm733, %v8028, -inf
    %8422 = vmax.xlane.f32.xlu0 %v8421
    %v8423 = vpop.xlane.xlu0 %8422
    %v8424 = vsel %vm733, %v8106, -inf
    %8425 = vmax.xlane.f32.xlu0 %v8424
    %v8426 = vpop.xlane.xlu0 %8425
    %v8427 = vsel %vm733, %v8184, -inf
    %8428 = vmax.xlane.f32.xlu0 %v8427
    %v8429 = vpop.xlane.xlu0 %8428
    %v8430 = vsel %vm733, %v8262, -inf
    %8431 = vmax.xlane.f32.xlu0 %v8430
    %v8432 = vpop.xlane.xlu0 %8431
    %v8433 = vsel %vm733, %v8340, -inf
    %8434 = vmax.xlane.f32.xlu0 %v8433
    %v8435 = vpop.xlane.xlu0 %8434
    %v8436 = vsel %vm733, %v8418, -inf
    %8437 = vmax.xlane.f32.xlu0 %v8436
    %v8438 = vpop.xlane.xlu0 %8437
    %v8439 = vsub.f32 %v8028, %v8423
    %v8440 = vsub.f32 %v8106, %v8426
    %v8441 = vsub.f32 %v8184, %v8429
    %v8442 = vsub.f32 %v8262, %v8432
    %v8443 = vsub.f32 %v8340, %v8435
    %v8444 = vsub.f32 %v8418, %v8438
    %v8445 = vmul.f32 %v8439, 1.442695
    %v8446 = vpow.pop %v8445
    %v8447 = vmul.f32 %v8440, 1.442695
    %v8448 = vpow.pop %v8447
    %v8449 = vmul.f32 %v8441, 1.442695
    %v8450 = vpow.pop %v8449
    %v8451 = vmul.f32 %v8442, 1.442695
    %v8452 = vpow.pop %v8451
    %v8453 = vmul.f32 %v8443, 1.442695
    %v8454 = vpow.pop %v8453
    %v8455 = vmul.f32 %v8444, 1.442695
    %v8456 = vpow.pop %v8455
    %v8457 = vsel %vm733, %v8446, 0.0
    %8458 = vadd.xlane.f32.xlu0 %v8457
    %v8459 = vpop.xlane.xlu0 %8458
    %v8460 = vsel %vm733, %v8448, 0.0
    %8461 = vadd.xlane.f32.xlu0 %v8460
    %v8462 = vpop.xlane.xlu0 %8461
    %v8463 = vsel %vm733, %v8450, 0.0
    %8464 = vadd.xlane.f32.xlu0 %v8463
    %v8465 = vpop.xlane.xlu0 %8464
    %v8466 = vsel %vm733, %v8452, 0.0
    %8467 = vadd.xlane.f32.xlu0 %v8466
    %v8468 = vpop.xlane.xlu0 %8467
    %v8469 = vsel %vm733, %v8454, 0.0
    %8470 = vadd.xlane.f32.xlu0 %v8469
    %v8471 = vpop.xlane.xlu0 %8470
    %v8472 = vsel %vm733, %v8456, 0.0
    %8473 = vadd.xlane.f32.xlu0 %v8472
    %v8474 = vpop.xlane.xlu0 %8473
    %v8475 = vrcp.pop %v8459
    %v8476 = vrcp.pop %v8462
    %v8477 = vrcp.pop %v8465
    %v8478 = vrcp.pop %v8468
    %v8479 = vrcp.pop %v8471
    %v8480 = vrcp.pop %v8474
    %v8481 = vmul.f32 %v8446, %v8475
    %v8482 = vmul.f32 %v8448, %v8476
    %v8483 = vmul.f32 %v8450, %v8477
    %v8484 = vmul.f32 %v8452, %v8478
    %v8485 = vmul.f32 %v8454, %v8479
    %v8486 = vmul.f32 %v8456, %v8480
    %8487 = vrot.lane.b32.xlu0 %v4975, 80
    %v8488 = vpop.permute.xlu0 %8487
    %v8491 = vsel %vm733, %v8481, 0
    %8493 = vmatprep.subr.mxu0 0.0
    %8494 = vmatpush1.msra.mxu0 %v8488
    %8495 = vmatprep.subr.mxu0 0.0
    %8496 = vmatpush1.msra.mxu0 0.0
    %8497 = vmatprep.subr.mxu0 0.0
    %8498 = vmatpush1.msra.mxu0 0.0
    %8499 = vmatprep.subr.mxu0 0.0
    %8500 = vmatpush1.msra.mxu0 0.0
    %8501 = vmatprep.subr.mxu0 0.0
    %8502 = vmatpush1.msra.mxu0 0.0
    %8503 = vmatprep.subr.mxu0 0.0
    %8504 = vmatpush1.msra.mxu0 0.0
    %8505 = vmatprep.subr.mxu0 0.0
    %8506 = vmatpush1.msra.mxu0 0.0
    %8507 = vmatprep.subr.mxu0 0.0
    %8508 = vmatpush1.msra.mxu0 0.0
    %8509 = vmatprep.subr.mxu0 0.0
    %8510 = vmatpush1.msra.mxu0 0.0
    %8511 = vmatprep.subr.mxu0 0.0
    %8512 = vmatpush1.msra.mxu0 0.0
    %8513 = vmatprep.subr.mxu0 0.0
    %8514 = vmatpush1.msra.mxu0 0.0
    %8515 = vmatprep.subr.mxu0 0.0
    %8516 = vmatpush1.msra.mxu0 0.0
    %8517 = vmatprep.subr.mxu0 0.0
    %8518 = vmatpush1.msra.mxu0 0.0
    %8519 = vmatprep.subr.mxu0 0.0
    %8520 = vmatpush1.msra.mxu0 0.0
    %8521 = vmatprep.subr.mxu0 0.0
    %8522 = vmatpush1.msra.mxu0 0.0
    %8523 = vmatprep.subr.mxu0 0.0
    %8524 = vmatpush1.msra.mxu0 0.0
    %8525 = vmatprep.subr.mxu0 0.0
    %8526 = vmatpush1.msra.mxu0 0.0
    %8527 = vmatprep.subr.mxu0 0.0
    %8528 = vmatpush1.msra.mxu0 0.0
    %8529 = vmatprep.subr.mxu0 0.0
    %8530 = vmatpush1.msra.mxu0 0.0
    %8531 = vmatprep.subr.mxu0 0.0
    %8532 = vmatpush1.msra.mxu0 0.0
    %8533 = vmatprep.subr.mxu0 0.0
    %8534 = vmatpush1.msra.mxu0 0.0
    %8535 = vmatprep.subr.mxu0 0.0
    %8536 = vmatpush1.msra.mxu0 0.0
    %8537 = vmatprep.subr.mxu0 0.0
    %8538 = vmatpush1.msra.mxu0 0.0
    %8539 = vmatprep.subr.mxu0 0.0
    %8540 = vmatpush1.msra.mxu0 0.0
    %8541 = vmatprep.subr.mxu0 0.0
    %8542 = vmatpush1.msra.mxu0 0.0
    %8543 = vmatprep.subr.mxu0 0.0
    %8544 = vmatpush1.msra.mxu0 0.0
    %8545 = vmatprep.subr.mxu0 0.0
    %8546 = vmatpush1.msra.mxu0 0.0
    %8547 = vmatprep.subr.mxu0 0.0
    %8548 = vmatpush1.msra.mxu0 0.0
    %8549 = vmatprep.subr.mxu0 0.0
    %8550 = vmatpush1.msra.mxu0 0.0
    %8551 = vmatprep.subr.mxu0 0.0
    %8552 = vmatpush1.msra.mxu0 0.0
    %8553 = vmatprep.subr.mxu0 0.0
    %8554 = vmatpush1.msra.mxu0 0.0
    %8555 = vmatprep.subr.mxu0 0.0
    %8556 = vmatpush1.msra.mxu0 0.0
    %8557 = vmatprep.mubr.f32.mxu0 0.0
    %8558 = vmatmul.mubr.f32.gmra.mrb[0].mxu0 %v8491
    %v8559 = vpop.f32.mrb[0].mxu0
    %v8560 = vadd.f32 0.0, %v8559
    %v8561 = vpop.f32.mrb[0].mxu0
    %8562 = vdwg.mxu0
    %8563 = vrot.lane.b32.xlu0 %v4979, 80
    %v8564 = vpop.permute.xlu0 %8563
    %v8567 = vsel %vm733, %v8482, 0
    %8569 = vmatprep.subr.mxu0 0.0
    %8570 = vmatpush1.msra.mxu0 %v8564
    %8571 = vmatprep.subr.mxu0 0.0
    %8572 = vmatpush1.msra.mxu0 0.0
    %8573 = vmatprep.subr.mxu0 0.0
    %8574 = vmatpush1.msra.mxu0 0.0
    %8575 = vmatprep.subr.mxu0 0.0
    %8576 = vmatpush1.msra.mxu0 0.0
    %8577 = vmatprep.subr.mxu0 0.0
    %8578 = vmatpush1.msra.mxu0 0.0
    %8579 = vmatprep.subr.mxu0 0.0
    %8580 = vmatpush1.msra.mxu0 0.0
    %8581 = vmatprep.subr.mxu0 0.0
    %8582 = vmatpush1.msra.mxu0 0.0
    %8583 = vmatprep.subr.mxu0 0.0
    %8584 = vmatpush1.msra.mxu0 0.0
    %8585 = vmatprep.subr.mxu0 0.0
    %8586 = vmatpush1.msra.mxu0 0.0
    %8587 = vmatprep.subr.mxu0 0.0
    %8588 = vmatpush1.msra.mxu0 0.0
    %8589 = vmatprep.subr.mxu0 0.0
    %8590 = vmatpush1.msra.mxu0 0.0
    %8591 = vmatprep.subr.mxu0 0.0
    %8592 = vmatpush1.msra.mxu0 0.0
    %8593 = vmatprep.subr.mxu0 0.0
    %8594 = vmatpush1.msra.mxu0 0.0
    %8595 = vmatprep.subr.mxu0 0.0
    %8596 = vmatpush1.msra.mxu0 0.0
    %8597 = vmatprep.subr.mxu0 0.0
    %8598 = vmatpush1.msra.mxu0 0.0
    %8599 = vmatprep.subr.mxu0 0.0
    %8600 = vmatpush1.msra.mxu0 0.0
    %8601 = vmatprep.subr.mxu0 0.0
    %8602 = vmatpush1.msra.mxu0 0.0
    %8603 = vmatprep.subr.mxu0 0.0
    %8604 = vmatpush1.msra.mxu0 0.0
    %8605 = vmatprep.subr.mxu0 0.0
    %8606 = vmatpush1.msra.mxu0 0.0
    %8607 = vmatprep.subr.mxu0 0.0
    %8608 = vmatpush1.msra.mxu0 0.0
    %8609 = vmatprep.subr.mxu0 0.0
    %8610 = vmatpush1.msra.mxu0 0.0
    %8611 = vmatprep.subr.mxu0 0.0
    %8612 = vmatpush1.msra.mxu0 0.0
    %8613 = vmatprep.subr.mxu0 0.0
    %8614 = vmatpush1.msra.mxu0 0.0
    %8615 = vmatprep.subr.mxu0 0.0
    %8616 = vmatpush1.msra.mxu0 0.0
    %8617 = vmatprep.subr.mxu0 0.0
    %8618 = vmatpush1.msra.mxu0 0.0
    %8619 = vmatprep.subr.mxu0 0.0
    %8620 = vmatpush1.msra.mxu0 0.0
    %8621 = vmatprep.subr.mxu0 0.0
    %8622 = vmatpush1.msra.mxu0 0.0
    %8623 = vmatprep.subr.mxu0 0.0
    %8624 = vmatpush1.msra.mxu0 0.0
    %8625 = vmatprep.subr.mxu0 0.0
    %8626 = vmatpush1.msra.mxu0 0.0
    %8627 = vmatprep.subr.mxu0 0.0
    %8628 = vmatpush1.msra.mxu0 0.0
    %8629 = vmatprep.subr.mxu0 0.0
    %8630 = vmatpush1.msra.mxu0 0.0
    %8631 = vmatprep.subr.mxu0 0.0
    %8632 = vmatpush1.msra.mxu0 0.0
    %8633 = vmatprep.mubr.f32.mxu0 0.0
    %8634 = vmatmul.mubr.f32.gmra.mrb[0].mxu0 %v8567
    %v8635 = vpop.f32.mrb[0].mxu0
    %v8636 = vadd.f32 0.0, %v8635
    %v8637 = vpop.f32.mrb[0].mxu0
    %8638 = vdwg.mxu0
    %8639 = vrot.lane.b32.xlu0 %v4985, 80
    %v8640 = vpop.permute.xlu0 %8639
    %v8643 = vsel %vm733, %v8483, 0
    %8645 = vmatprep.subr.mxu0 0.0
    %8646 = vmatpush1.msra.mxu0 %v8640
    %8647 = vmatprep.subr.mxu0 0.0
    %8648 = vmatpush1.msra.mxu0 0.0
    %8649 = vmatprep.subr.mxu0 0.0
    %8650 = vmatpush1.msra.mxu0 0.0
    %8651 = vmatprep.subr.mxu0 0.0
    %8652 = vmatpush1.msra.mxu0 0.0
    %8653 = vmatprep.subr.mxu0 0.0
    %8654 = vmatpush1.msra.mxu0 0.0
    %8655 = vmatprep.subr.mxu0 0.0
    %8656 = vmatpush1.msra.mxu0 0.0
    %8657 = vmatprep.subr.mxu0 0.0
    %8658 = vmatpush1.msra.mxu0 0.0
    %8659 = vmatprep.subr.mxu0 0.0
    %8660 = vmatpush1.msra.mxu0 0.0
    %8661 = vmatprep.subr.mxu0 0.0
    %8662 = vmatpush1.msra.mxu0 0.0
    %8663 = vmatprep.subr.mxu0 0.0
    %8664 = vmatpush1.msra.mxu0 0.0
    %8665 = vmatprep.subr.mxu0 0.0
    %8666 = vmatpush1.msra.mxu0 0.0
    %8667 = vmatprep.subr.mxu0 0.0
    %8668 = vmatpush1.msra.mxu0 0.0
    %8669 = vmatprep.subr.mxu0 0.0
    %8670 = vmatpush1.msra.mxu0 0.0
    %8671 = vmatprep.subr.mxu0 0.0
    %8672 = vmatpush1.msra.mxu0 0.0
    %8673 = vmatprep.subr.mxu0 0.0
    %8674 = vmatpush1.msra.mxu0 0.0
    %8675 = vmatprep.subr.mxu0 0.0
    %8676 = vmatpush1.msra.mxu0 0.0
    %8677 = vmatprep.subr.mxu0 0.0
    %8678 = vmatpush1.msra.mxu0 0.0
    %8679 = vmatprep.subr.mxu0 0.0
    %8680 = vmatpush1.msra.mxu0 0.0
    %8681 = vmatprep.subr.mxu0 0.0
    %8682 = vmatpush1.msra.mxu0 0.0
    %8683 = vmatprep.subr.mxu0 0.0
    %8684 = vmatpush1.msra.mxu0 0.0
    %8685 = vmatprep.subr.mxu0 0.0
    %8686 = vmatpush1.msra.mxu0 0.0
    %8687 = vmatprep.subr.mxu0 0.0
    %8688 = vmatpush1.msra.mxu0 0.0
    %8689 = vmatprep.subr.mxu0 0.0
    %8690 = vmatpush1.msra.mxu0 0.0
    %8691 = vmatprep.subr.mxu0 0.0
    %8692 = vmatpush1.msra.mxu0 0.0
    %8693 = vmatprep.subr.mxu0 0.0
    %8694 = vmatpush1.msra.mxu0 0.0
    %8695 = vmatprep.subr.mxu0 0.0
    %8696 = vmatpush1.msra.mxu0 0.0
    %8697 = vmatprep.subr.mxu0 0.0
    %8698 = vmatpush1.msra.mxu0 0.0
    %8699 = vmatprep.subr.mxu0 0.0
    %8700 = vmatpush1.msra.mxu0 0.0
    %8701 = vmatprep.subr.mxu0 0.0
    %8702 = vmatpush1.msra.mxu0 0.0
    %8703 = vmatprep.subr.mxu0 0.0
    %8704 = vmatpush1.msra.mxu0 0.0
    %8705 = vmatprep.subr.mxu0 0.0
    %8706 = vmatpush1.msra.mxu0 0.0
    %8707 = vmatprep.subr.mxu0 0.0
    %8708 = vmatpush1.msra.mxu0 0.0
    %8709 = vmatprep.mubr.f32.mxu0 0.0
    %8710 = vmatmul.mubr.f32.gmra.mrb[0].mxu0 %v8643
    %v8711 = vpop.f32.mrb[0].mxu0
    %v8712 = vadd.f32 0.0, %v8711
    %v8713 = vpop.f32.mrb[0].mxu0
    %8714 = vdwg.mxu0
    %8715 = vrot.lane.b32.xlu0 %v4989, 80
    %v8716 = vpop.permute.xlu0 %8715
    %v8719 = vsel %vm733, %v8484, 0
    %8721 = vmatprep.subr.mxu0 0.0
    %8722 = vmatpush1.msra.mxu0 %v8716
    %8723 = vmatprep.subr.mxu0 0.0
    %8724 = vmatpush1.msra.mxu0 0.0
    %8725 = vmatprep.subr.mxu0 0.0
    %8726 = vmatpush1.msra.mxu0 0.0
    %8727 = vmatprep.subr.mxu0 0.0
    %8728 = vmatpush1.msra.mxu0 0.0
    %8729 = vmatprep.subr.mxu0 0.0
    %8730 = vmatpush1.msra.mxu0 0.0
    %8731 = vmatprep.subr.mxu0 0.0
    %8732 = vmatpush1.msra.mxu0 0.0
    %8733 = vmatprep.subr.mxu0 0.0
    %8734 = vmatpush1.msra.mxu0 0.0
    %8735 = vmatprep.subr.mxu0 0.0
    %8736 = vmatpush1.msra.mxu0 0.0
    %8737 = vmatprep.subr.mxu0 0.0
    %8738 = vmatpush1.msra.mxu0 0.0
    %8739 = vmatprep.subr.mxu0 0.0
    %8740 = vmatpush1.msra.mxu0 0.0
    %8741 = vmatprep.subr.mxu0 0.0
    %8742 = vmatpush1.msra.mxu0 0.0
    %8743 = vmatprep.subr.mxu0 0.0
    %8744 = vmatpush1.msra.mxu0 0.0
    %8745 = vmatprep.subr.mxu0 0.0
    %8746 = vmatpush1.msra.mxu0 0.0
    %8747 = vmatprep.subr.mxu0 0.0
    %8748 = vmatpush1.msra.mxu0 0.0
    %8749 = vmatprep.subr.mxu0 0.0
    %8750 = vmatpush1.msra.mxu0 0.0
    %8751 = vmatprep.subr.mxu0 0.0
    %8752 = vmatpush1.msra.mxu0 0.0
    %8753 = vmatprep.subr.mxu0 0.0
    %8754 = vmatpush1.msra.mxu0 0.0
    %8755 = vmatprep.subr.mxu0 0.0
    %8756 = vmatpush1.msra.mxu0 0.0
    %8757 = vmatprep.subr.mxu0 0.0
    %8758 = vmatpush1.msra.mxu0 0.0
    %8759 = vmatprep.subr.mxu0 0.0
    %8760 = vmatpush1.msra.mxu0 0.0
    %8761 = vmatprep.subr.mxu0 0.0
    %8762 = vmatpush1.msra.mxu0 0.0
    %8763 = vmatprep.subr.mxu0 0.0
    %8764 = vmatpush1.msra.mxu0 0.0
    %8765 = vmatprep.subr.mxu0 0.0
    %8766 = vmatpush1.msra.mxu0 0.0
    %8767 = vmatprep.subr.mxu0 0.0
    %8768 = vmatpush1.msra.mxu0 0.0
    %8769 = vmatprep.subr.mxu0 0.0
    %8770 = vmatpush1.msra.mxu0 0.0
    %8771 = vmatprep.subr.mxu0 0.0
    %8772 = vmatpush1.msra.mxu0 0.0
    %8773 = vmatprep.subr.mxu0 0.0
    %8774 = vmatpush1.msra.mxu0 0.0
    %8775 = vmatprep.subr.mxu0 0.0
    %8776 = vmatpush1.msra.mxu0 0.0
    %8777 = vmatprep.subr.mxu0 0.0
    %8778 = vmatpush1.msra.mxu0 0.0
    %8779 = vmatprep.subr.mxu0 0.0
    %8780 = vmatpush1.msra.mxu0 0.0
    %8781 = vmatprep.subr.mxu0 0.0
    %8782 = vmatpush1.msra.mxu0 0.0
    %8783 = vmatprep.subr.mxu0 0.0
    %8784 = vmatpush1.msra.mxu0 0.0
    %8785 = vmatprep.mubr.f32.mxu0 0.0
    %8786 = vmatmul.mubr.f32.gmra.mrb[0].mxu0 %v8719
    %v8787 = vpop.f32.mrb[0].mxu0
    %v8788 = vadd.f32 0.0, %v8787
    %v8789 = vpop.f32.mrb[0].mxu0
    %8790 = vdwg.mxu0
    %8791 = vrot.lane.b32.xlu0 %v4995, 80
    %v8792 = vpop.permute.xlu0 %8791
    %v8795 = vsel %vm733, %v8485, 0
    %8797 = vmatprep.subr.mxu0 0.0
    %8798 = vmatpush1.msra.mxu0 %v8792
    %8799 = vmatprep.subr.mxu0 0.0
    %8800 = vmatpush1.msra.mxu0 0.0
    %8801 = vmatprep.subr.mxu0 0.0
    %8802 = vmatpush1.msra.mxu0 0.0
    %8803 = vmatprep.subr.mxu0 0.0
    %8804 = vmatpush1.msra.mxu0 0.0
    %8805 = vmatprep.subr.mxu0 0.0
    %8806 = vmatpush1.msra.mxu0 0.0
    %8807 = vmatprep.subr.mxu0 0.0
    %8808 = vmatpush1.msra.mxu0 0.0
    %8809 = vmatprep.subr.mxu0 0.0
    %8810 = vmatpush1.msra.mxu0 0.0
    %8811 = vmatprep.subr.mxu0 0.0
    %8812 = vmatpush1.msra.mxu0 0.0
    %8813 = vmatprep.subr.mxu0 0.0
    %8814 = vmatpush1.msra.mxu0 0.0
    %8815 = vmatprep.subr.mxu0 0.0
    %8816 = vmatpush1.msra.mxu0 0.0
    %8817 = vmatprep.subr.mxu0 0.0
    %8818 = vmatpush1.msra.mxu0 0.0
    %8819 = vmatprep.subr.mxu0 0.0
    %8820 = vmatpush1.msra.mxu0 0.0
    %8821 = vmatprep.subr.mxu0 0.0
    %8822 = vmatpush1.msra.mxu0 0.0
    %8823 = vmatprep.subr.mxu0 0.0
    %8824 = vmatpush1.msra.mxu0 0.0
    %8825 = vmatprep.subr.mxu0 0.0
    %8826 = vmatpush1.msra.mxu0 0.0
    %8827 = vmatprep.subr.mxu0 0.0
    %8828 = vmatpush1.msra.mxu0 0.0
    %8829 = vmatprep.subr.mxu0 0.0
    %8830 = vmatpush1.msra.mxu0 0.0
    %8831 = vmatprep.subr.mxu0 0.0
    %8832 = vmatpush1.msra.mxu0 0.0
    %8833 = vmatprep.subr.mxu0 0.0
    %8834 = vmatpush1.msra.mxu0 0.0
    %8835 = vmatprep.subr.mxu0 0.0
    %8836 = vmatpush1.msra.mxu0 0.0
    %8837 = vmatprep.subr.mxu0 0.0
    %8838 = vmatpush1.msra.mxu0 0.0
    %8839 = vmatprep.subr.mxu0 0.0
    %8840 = vmatpush1.msra.mxu0 0.0
    %8841 = vmatprep.subr.mxu0 0.0
    %8842 = vmatpush1.msra.mxu0 0.0
    %8843 = vmatprep.subr.mxu0 0.0
    %8844 = vmatpush1.msra.mxu0 0.0
    %8845 = vmatprep.subr.mxu0 0.0
    %8846 = vmatpush1.msra.mxu0 0.0
    %8847 = vmatprep.subr.mxu0 0.0
    %8848 = vmatpush1.msra.mxu0 0.0
    %8849 = vmatprep.subr.mxu0 0.0
    %8850 = vmatpush1.msra.mxu0 0.0
    %8851 = vmatprep.subr.mxu0 0.0
    %8852 = vmatpush1.msra.mxu0 0.0
    %8853 = vmatprep.subr.mxu0 0.0
    %8854 = vmatpush1.msra.mxu0 0.0
    %8855 = vmatprep.subr.mxu0 0.0
    %8856 = vmatpush1.msra.mxu0 0.0
    %8857 = vmatprep.subr.mxu0 0.0
    %8858 = vmatpush1.msra.mxu0 0.0
    %8859 = vmatprep.subr.mxu0 0.0
    %8860 = vmatpush1.msra.mxu0 0.0
    %8861 = vmatprep.mubr.f32.mxu0 0.0
    %8862 = vmatmul.mubr.f32.gmra.mrb[0].mxu0 %v8795
    %v8863 = vpop.f32.mrb[0].mxu0
    %v8864 = vadd.f32 0.0, %v8863
    %v8865 = vpop.f32.mrb[0].mxu0
    %8866 = vdwg.mxu0
    %8867 = vrot.lane.b32.xlu0 %v4999, 80
    %v8868 = vpop.permute.xlu0 %8867
    %v8871 = vsel %vm733, %v8486, 0
    %8873 = vmatprep.subr.mxu0 0.0
    %8874 = vmatpush1.msra.mxu0 %v8868
    %8875 = vmatprep.subr.mxu0 0.0
    %8876 = vmatpush1.msra.mxu0 0.0
    %8877 = vmatprep.subr.mxu0 0.0
    %8878 = vmatpush1.msra.mxu0 0.0
    %8879 = vmatprep.subr.mxu0 0.0
    %8880 = vmatpush1.msra.mxu0 0.0
    %8881 = vmatprep.subr.mxu0 0.0
    %8882 = vmatpush1.msra.mxu0 0.0
    %8883 = vmatprep.subr.mxu0 0.0
    %8884 = vmatpush1.msra.mxu0 0.0
    %8885 = vmatprep.subr.mxu0 0.0
    %8886 = vmatpush1.msra.mxu0 0.0
    %8887 = vmatprep.subr.mxu0 0.0
    %8888 = vmatpush1.msra.mxu0 0.0
    %8889 = vmatprep.subr.mxu0 0.0
    %8890 = vmatpush1.msra.mxu0 0.0
    %8891 = vmatprep.subr.mxu0 0.0
    %8892 = vmatpush1.msra.mxu0 0.0
    %8893 = vmatprep.subr.mxu0 0.0
    %8894 = vmatpush1.msra.mxu0 0.0
    %8895 = vmatprep.subr.mxu0 0.0
    %8896 = vmatpush1.msra.mxu0 0.0
    %8897 = vmatprep.subr.mxu0 0.0
    %8898 = vmatpush1.msra.mxu0 0.0
    %8899 = vmatprep.subr.mxu0 0.0
    %8900 = vmatpush1.msra.mxu0 0.0
    %8901 = vmatprep.subr.mxu0 0.0
    %8902 = vmatpush1.msra.mxu0 0.0
    %8903 = vmatprep.subr.mxu0 0.0
    %8904 = vmatpush1.msra.mxu0 0.0
    %8905 = vmatprep.subr.mxu0 0.0
    %8906 = vmatpush1.msra.mxu0 0.0
    %8907 = vmatprep.subr.mxu0 0.0
    %8908 = vmatpush1.msra.mxu0 0.0
    %8909 = vmatprep.subr.mxu0 0.0
    %8910 = vmatpush1.msra.mxu0 0.0
    %8911 = vmatprep.subr.mxu0 0.0
    %8912 = vmatpush1.msra.mxu0 0.0
    %8913 = vmatprep.subr.mxu0 0.0
    %8914 = vmatpush1.msra.mxu0 0.0
    %8915 = vmatprep.subr.mxu0 0.0
    %8916 = vmatpush1.msra.mxu0 0.0
    %8917 = vmatprep.subr.mxu0 0.0
    %8918 = vmatpush1.msra.mxu0 0.0
    %8919 = vmatprep.subr.mxu0 0.0
    %8920 = vmatpush1.msra.mxu0 0.0
    %8921 = vmatprep.subr.mxu0 0.0
    %8922 = vmatpush1.msra.mxu0 0.0
    %8923 = vmatprep.subr.mxu0 0.0
    %8924 = vmatpush1.msra.mxu0 0.0
    %8925 = vmatprep.subr.mxu0 0.0
    %8926 = vmatpush1.msra.mxu0 0.0
    %8927 = vmatprep.subr.mxu0 0.0
    %8928 = vmatpush1.msra.mxu0 0.0
    %8929 = vmatprep.subr.mxu0 0.0
    %8930 = vmatpush1.msra.mxu0 0.0
    %8931 = vmatprep.subr.mxu0 0.0
    %8932 = vmatpush1.msra.mxu0 0.0
    %8933 = vmatprep.subr.mxu0 0.0
    %8934 = vmatpush1.msra.mxu0 0.0
    %8935 = vmatprep.subr.mxu0 0.0
    %8936 = vmatpush1.msra.mxu0 0.0
    %8937 = vmatprep.mubr.f32.mxu0 0.0
    %8938 = vmatmul.mubr.f32.gmra.mrb[0].mxu0 %v8871
    %v8939 = vpop.f32.mrb[0].mxu0
    %v8940 = vadd.f32 0.0, %v8939
    %v8941 = vpop.f32.mrb[0].mxu0
    %8942 = vdwg.mxu0
    %8949 = vrot.lane.b32.xlu0 %v6575, 16
    %v8950 = vpop.permute.xlu0 %8949
    %8951 = vrot.lane.b32.xlu0 %v6652, 16
    %v8952 = vpop.permute.xlu0 %8951
    %8953 = vrot.lane.b32.xlu0 %v6729, 16
    %v8954 = vpop.permute.xlu0 %8953
    %8955 = vrot.lane.b32.xlu0 %v6806, 16
    %v8956 = vpop.permute.xlu0 %8955
    %8957 = vrot.lane.b32.xlu0 %v6883, 16
    %v8958 = vpop.permute.xlu0 %8957
    %8959 = vrot.lane.b32.xlu0 %v6960, 16
    %v8960 = vpop.permute.xlu0 %8959
    %8973 = vrot.lane.b32.xlu0 %v7570, 32
    %v8974 = vpop.permute.xlu0 %8973
    %8975 = vrot.lane.b32.xlu0 %v7646, 32
    %v8976 = vpop.permute.xlu0 %8975
    %8977 = vrot.lane.b32.xlu0 %v7722, 32
    %v8978 = vpop.permute.xlu0 %8977
    %8979 = vrot.lane.b32.xlu0 %v7798, 32
    %v8980 = vpop.permute.xlu0 %8979
    %8981 = vrot.lane.b32.xlu0 %v7874, 32
    %v8982 = vpop.permute.xlu0 %8981
    %8983 = vrot.lane.b32.xlu0 %v7950, 32
    %v8984 = vpop.permute.xlu0 %8983
    %8997 = vrot.lane.b32.xlu0 %v8560, 48
    %v8998 = vpop.permute.xlu0 %8997
    %8999 = vrot.lane.b32.xlu0 %v8636, 48
    %v9000 = vpop.permute.xlu0 %8999
    %9001 = vrot.lane.b32.xlu0 %v8712, 48
    %v9002 = vpop.permute.xlu0 %9001
    %9003 = vrot.lane.b32.xlu0 %v8788, 48
    %v9004 = vpop.permute.xlu0 %9003
    %9005 = vrot.lane.b32.xlu0 %v8864, 48
    %v9006 = vpop.permute.xlu0 %9005
    %9007 = vrot.lane.b32.xlu0 %v8940, 48
    %v9008 = vpop.permute.xlu0 %9007
    %v9015 = vsel %vm60, %v5599, %v8950
    %v9016 = vsel %vm60, %v5672, %v8952
    %v9017 = vsel %vm60, %v5745, %v8954
    %v9018 = vsel %vm60, %v5818, %v8956
    %v9019 = vsel %vm60, %v5891, %v8958
    %v9020 = vsel %vm60, %v5964, %v8960
    %v9021 = vsel %vm4292, %v9015, %v8974
    %v9022 = vsel %vm4292, %v9016, %v8976
    %v9023 = vsel %vm4292, %v9017, %v8978
    %v9024 = vsel %vm4292, %v9018, %v8980
    %v9025 = vsel %vm4292, %v9019, %v8982
    %v9026 = vsel %vm4292, %v9020, %v8984
    %v9027 = vsel %vm4299, %v9021, %v8998
    %v9028 = vsel %vm4299, %v9022, %v9000
    %v9029 = vsel %vm4299, %v9023, %v9002
    %v9030 = vsel %vm4299, %v9024, %v9004
    %v9031 = vsel %vm4299, %v9025, %v9006
    %v9032 = vsel %vm4299, %v9026, %v9008
    %v9033 = vpack.c.bf16 %v9028, %v9027
    %v9034 = vpack.c.bf16 %v9030, %v9029
    %v9035 = vpack.c.bf16 %v9032, %v9031
    %s9036 = scalar_lea.vmem %s5, 32
    %v9037 = vld [vmem:[%s9036] sm:$0xf]
    %v9038 = vld [vmem:[%s9036 + $0x4] sm:$0xf]
    %v9039 = vld [vmem:[%s9036 + $0x8] sm:$0xf]
    %v9040 = vld [vmem:[%s9036 + $0xc] sm:$0xf]
    %v9041 = vld [vmem:[%s9036 + $0x10] sm:$0xf]
    %v9042 = vld [vmem:[%s9036 + $0x14] sm:$0xf]
    %v9043 = vld [vmem:[%s9036 + $0x18] sm:$0xf]
    %v9044 = vld [vmem:[%s9036 + $0x1c] sm:$0xf]
    %v9045 = vlaneseq
    %v9046 = vshrl.u32 %v9045, 7
    %v9047 = vsub.s32 0, %v9046
    %v9048 = vrot.slane %v4863, %v9047
    %v9057 = vunpack.c.l.b16 %v9037
    %v9058 = vunpack.c.l.b16 %v9038
    %v9059 = vunpack.c.l.b16 %v9039
    %v9060 = vunpack.c.l.b16 %v9040
    %v9061 = vunpack.c.l.b16 %v9041
    %v9062 = vunpack.c.l.b16 %v9042
    %v9063 = vunpack.c.l.b16 %v9043
    %v9064 = vunpack.c.l.b16 %v9044
    %v9065 = vpack.c.b16 %v9058, %v9057
    %v9066 = vpack.c.b16 %v9060, %v9059
    %v9067 = vpack.c.b16 %v9062, %v9061
    %v9068 = vpack.c.b16 %v9064, %v9063
    %v9074 = vsel %vm198, %v9033, 0
    %v9077 = vsel %vm198, %v9034, 0
    %v9080 = vsel %vm198, %v9035, 0
    %9082 = vmatprep.subr.bf16.mxu0 0
    %9083 = vmatpush1.bf16.msra.mxu0 %v9065
    %9084 = vmatprep.subr.bf16.mxu0 0
    %9085 = vmatpush1.bf16.msra.mxu0 %v9066
    %9086 = vmatprep.subr.bf16.mxu0 0
    %9087 = vmatpush1.bf16.msra.mxu0 %v9067
    %9088 = vmatprep.subr.bf16.mxu0 0
    %9089 = vmatpush1.bf16.msra.mxu0 %v9068
    %9090 = vmatprep.subr.bf16.mxu0 0
    %9091 = vmatpush1.bf16.msra.mxu0 0
    %9092 = vmatprep.subr.bf16.mxu0 0
    %9093 = vmatpush1.bf16.msra.mxu0 0
    %9094 = vmatprep.subr.bf16.mxu0 0
    %9095 = vmatpush1.bf16.msra.mxu0 0
    %9096 = vmatprep.subr.bf16.mxu0 0
    %9097 = vmatpush1.bf16.msra.mxu0 0
    %9098 = vmatprep.subr.bf16.mxu0 0
    %9099 = vmatpush1.bf16.msra.mxu0 0
    %9100 = vmatprep.subr.bf16.mxu0 0
    %9101 = vmatpush1.bf16.msra.mxu0 0
    %9102 = vmatprep.subr.bf16.mxu0 0
    %9103 = vmatpush1.bf16.msra.mxu0 0
    %9104 = vmatprep.subr.bf16.mxu0 0
    %9105 = vmatpush1.bf16.msra.mxu0 0
    %9106 = vmatprep.subr.bf16.mxu0 0
    %9107 = vmatpush1.bf16.msra.mxu0 0
    %9108 = vmatprep.subr.bf16.mxu0 0
    %9109 = vmatpush1.bf16.msra.mxu0 0
    %9110 = vmatprep.subr.bf16.mxu0 0
    %9111 = vmatpush1.bf16.msra.mxu0 0
    %9112 = vmatprep.subr.bf16.mxu0 0
    %9113 = vmatpush1.bf16.msra.mxu0 0
    %9114 = vmatprep.mubr.bf16.mxu0 0
    %9115 = vmatmul.mubr.bf16.gmra.mrb[0].mxu0 %v9074
    %v9116 = vpop.f32.mrb[0].mxu0
    %v9117 = vadd.f32 %v9048, %v9116
    %v9118 = vpop.f32.mrb[0].mxu0
    %v9119 = vpop.f32.mrb[0].mxu0
    %v9120 = vadd.f32 %v9048, %v9119
    %v9121 = vpop.f32.mrb[0].mxu0
    %9122 = vmatprep.mubr.bf16.mxu0 0
    %9123 = vmatmul.mubr.bf16.gmra.mrb[0].mxu0 %v9077
    %v9124 = vpop.f32.mrb[0].mxu0
    %v9125 = vadd.f32 %v9048, %v9124
    %v9126 = vpop.f32.mrb[0].mxu0
    %v9127 = vpop.f32.mrb[0].mxu0
    %v9128 = vadd.f32 %v9048, %v9127
    %v9129 = vpop.f32.mrb[0].mxu0
    %9130 = vmatprep.mubr.bf16.mxu0 0
    %9131 = vmatmul.mubr.bf16.gmra.mrb[0].mxu0 %v9080
    %v9132 = vpop.f32.mrb[0].mxu0
    %v9133 = vadd.f32 %v9048, %v9132
    %v9134 = vpop.f32.mrb[0].mxu0
    %v9135 = vpop.f32.mrb[0].mxu0
    %v9136 = vadd.f32 %v9048, %v9135
    %v9137 = vpop.f32.mrb[0].mxu0
    %9138 = vdwg.mxu0
    %v9139 = vadd.f32 %v4856, %v9117
    %v9140 = vadd.f32 %v4857, %v9120
    %v9141 = vadd.f32 %v4858, %v9125
    %v9142 = vadd.f32 %v4859, %v9128
    %v9143 = vadd.f32 %v4860, %v9133
    %v9144 = vadd.f32 %v4861, %v9136
    %v9145 = vsel %vm198, %v9139, 0.0
    %9146 = vadd.xlane.f32.xlu0 %v9145
    %v9147 = vpop.xlane.xlu0 %9146
    %v9148 = vsel %vm198, %v9140, 0.0
    %9149 = vadd.xlane.f32.xlu0 %v9148
    %v9150 = vpop.xlane.xlu0 %9149
    %v9151 = vsel %vm198, %v9141, 0.0
    %9152 = vadd.xlane.f32.xlu0 %v9151
    %v9153 = vpop.xlane.xlu0 %9152
    %v9154 = vsel %vm198, %v9142, 0.0
    %9155 = vadd.xlane.f32.xlu0 %v9154
    %v9156 = vpop.xlane.xlu0 %9155
    %v9157 = vsel %vm198, %v9143, 0.0
    %9158 = vadd.xlane.f32.xlu0 %v9157
    %v9159 = vpop.xlane.xlu0 %9158
    %v9160 = vsel %vm198, %v9144, 0.0
    %9161 = vadd.xlane.f32.xlu0 %v9160
    %v9162 = vpop.xlane.xlu0 %9161
    %v9163 = vmul.f32 %v9147, %v4435
    %v9164 = vmul.f32 %v9150, %v4435
    %v9165 = vmul.f32 %v9153, %v4435
    %v9166 = vmul.f32 %v9156, %v4435
    %v9167 = vmul.f32 %v9159, %v4435
    %v9168 = vmul.f32 %v9162, %v4435
    %v9169 = vsub.f32 %v9139, %v9163
    %v9170 = vsub.f32 %v9140, %v9164
    %v9171 = vsub.f32 %v9141, %v9165
    %v9172 = vsub.f32 %v9142, %v9166
    %v9173 = vsub.f32 %v9143, %v9167
    %v9174 = vsub.f32 %v9144, %v9168
    %v9175 = vmul.f32 %v9169, %v9169
    %v9176 = vmul.f32 %v9170, %v9170
    %v9177 = vmul.f32 %v9171, %v9171
    %v9178 = vmul.f32 %v9172, %v9172
    %v9179 = vmul.f32 %v9173, %v9173
    %v9180 = vmul.f32 %v9174, %v9174
    %v9181 = vsel %vm198, %v9175, 0.0
    %9182 = vadd.xlane.f32.xlu0 %v9181
    %v9183 = vpop.xlane.xlu0 %9182
    %v9184 = vsel %vm198, %v9176, 0.0
    %9185 = vadd.xlane.f32.xlu0 %v9184
    %v9186 = vpop.xlane.xlu0 %9185
    %v9187 = vsel %vm198, %v9177, 0.0
    %9188 = vadd.xlane.f32.xlu0 %v9187
    %v9189 = vpop.xlane.xlu0 %9188
    %v9190 = vsel %vm198, %v9178, 0.0
    %9191 = vadd.xlane.f32.xlu0 %v9190
    %v9192 = vpop.xlane.xlu0 %9191
    %v9193 = vsel %vm198, %v9179, 0.0
    %9194 = vadd.xlane.f32.xlu0 %v9193
    %v9195 = vpop.xlane.xlu0 %9194
    %v9196 = vsel %vm198, %v9180, 0.0
    %9197 = vadd.xlane.f32.xlu0 %v9196
    %v9198 = vpop.xlane.xlu0 %9197
    %v9199 = vmul.f32 %v9183, %v4435
    %v9200 = vmul.f32 %v9186, %v4435
    %v9201 = vmul.f32 %v9189, %v4435
    %v9202 = vmul.f32 %v9192, %v4435
    %v9203 = vmul.f32 %v9195, %v4435
    %v9204 = vmul.f32 %v9198, %v4435
    %v9205 = vadd.f32 %v9199, 1e-05
    %v9206 = vadd.f32 %v9200, 1e-05
    %v9207 = vadd.f32 %v9201, 1e-05
    %v9208 = vadd.f32 %v9202, 1e-05
    %v9209 = vadd.f32 %v9203, 1e-05
    %v9210 = vadd.f32 %v9204, 1e-05
    %v9211 = vrsqrt.pop %v9205
    %v9212 = vrsqrt.pop %v9206
    %v9213 = vrsqrt.pop %v9207
    %v9214 = vrsqrt.pop %v9208
    %v9215 = vrsqrt.pop %v9209
    %v9216 = vrsqrt.pop %v9210
    %v9217 = vmul.f32 %v9169, %v9211
    %v9218 = vmul.f32 %v9170, %v9212
    %v9219 = vmul.f32 %v9171, %v9213
    %v9220 = vmul.f32 %v9172, %v9214
    %v9221 = vmul.f32 %v9173, %v9215
    %v9222 = vmul.f32 %v9174, %v9216
    %v9223 = vlaneseq
    %v9224 = vshrl.u32 %v9223, 7
    %v9225 = vsub.s32 1, %v9224
    %v9226 = vrot.slane %v4863, %v9225
    %v9227 = vmul.f32 %v9217, %v9226
    %v9228 = vmul.f32 %v9218, %v9226
    %v9229 = vmul.f32 %v9219, %v9226
    %v9230 = vmul.f32 %v9220, %v9226
    %v9231 = vmul.f32 %v9221, %v9226
    %v9232 = vmul.f32 %v9222, %v9226
    %v9233 = vlaneseq
    %v9234 = vshrl.u32 %v9233, 7
    %v9235 = vsub.s32 2, %v9234
    %v9236 = vrot.slane %v4863, %v9235
    %v9237 = vadd.f32 %v9227, %v9236
    %v9238 = vadd.f32 %v9228, %v9236
    %v9239 = vadd.f32 %v9229, %v9236
    %v9240 = vadd.f32 %v9230, %v9236
    %v9241 = vadd.f32 %v9231, %v9236
    %v9242 = vadd.f32 %v9232, %v9236
    %v9243 = vpack.c.bf16 %v9238, %v9237
    %v9244 = vpack.c.bf16 %v9240, %v9239
    %v9245 = vpack.c.bf16 %v9242, %v9241
    %s9246 = scalar_lea.vmem %s6, 32
    %v9247 = vld [vmem:[%s9246] sm:$0xf]
    %v9248 = vld [vmem:[%s9246 + $0x4] sm:$0xf]
    %v9249 = vld [vmem:[%s9246 + $0x8] sm:$0xf]
    %v9250 = vld [vmem:[%s9246 + $0xc] sm:$0xf]
    %v9251 = vld [vmem:[%s9246 + $0x10] sm:$0xf]
    %v9252 = vld [vmem:[%s9246 + $0x14] sm:$0xf]
    %v9253 = vld [vmem:[%s9246 + $0x18] sm:$0xf]
    %v9254 = vld [vmem:[%s9246 + $0x1c] sm:$0xf]
    %s9255 = scalar_lea.vmem %s7, 1
    %v9256 = vld [vmem:[%s9255] sm:$0x1]
    %v9258 = vlaneseq
    %v9259 = vshrl.u32 %v9258, 7
    %v9260 = vsub.s32 0, %v9259
    %v9261 = vrot.slane %v9256, %v9260
    %v9271 = vunpack.c.l.b16 %v9247
    %v9272 = vunpack.c.l.b16 %v9248
    %v9273 = vunpack.c.l.b16 %v9249
    %v9274 = vunpack.c.l.b16 %v9250
    %v9275 = vunpack.c.l.b16 %v9251
    %v9276 = vunpack.c.l.b16 %v9252
    %v9277 = vunpack.c.l.b16 %v9253
    %v9278 = vunpack.c.l.b16 %v9254
    %v9279 = vpack.c.b16 %v9272, %v9271
    %v9280 = vpack.c.b16 %v9274, %v9273
    %v9281 = vpack.c.b16 %v9276, %v9275
    %v9282 = vpack.c.b16 %v9278, %v9277
    %v9288 = vsel %vm198, %v9243, 0
    %v9291 = vsel %vm198, %v9244, 0
    %v9294 = vsel %vm198, %v9245, 0
    %9296 = vmatprep.subr.bf16.mxu0 0
    %9297 = vmatpush1.bf16.msra.mxu0 %v9279
    %9298 = vmatprep.subr.bf16.mxu0 0
    %9299 = vmatpush1.bf16.msra.mxu0 %v9280
    %9300 = vmatprep.subr.bf16.mxu0 0
    %9301 = vmatpush1.bf16.msra.mxu0 %v9281
    %9302 = vmatprep.subr.bf16.mxu0 0
    %9303 = vmatpush1.bf16.msra.mxu0 %v9282
    %9304 = vmatprep.subr.bf16.mxu0 0
    %9305 = vmatpush1.bf16.msra.mxu0 0
    %9306 = vmatprep.subr.bf16.mxu0 0
    %9307 = vmatpush1.bf16.msra.mxu0 0
    %9308 = vmatprep.subr.bf16.mxu0 0
    %9309 = vmatpush1.bf16.msra.mxu0 0
    %9310 = vmatprep.subr.bf16.mxu0 0
    %9311 = vmatpush1.bf16.msra.mxu0 0
    %9312 = vmatprep.subr.bf16.mxu0 0
    %9313 = vmatpush1.bf16.msra.mxu0 0
    %9314 = vmatprep.subr.bf16.mxu0 0
    %9315 = vmatpush1.bf16.msra.mxu0 0
    %9316 = vmatprep.subr.bf16.mxu0 0
    %9317 = vmatpush1.bf16.msra.mxu0 0
    %9318 = vmatprep.subr.bf16.mxu0 0
    %9319 = vmatpush1.bf16.msra.mxu0 0
    %9320 = vmatprep.subr.bf16.mxu0 0
    %9321 = vmatpush1.bf16.msra.mxu0 0
    %9322 = vmatprep.subr.bf16.mxu0 0
    %9323 = vmatpush1.bf16.msra.mxu0 0
    %9324 = vmatprep.subr.bf16.mxu0 0
    %9325 = vmatpush1.bf16.msra.mxu0 0
    %9326 = vmatprep.subr.bf16.mxu0 0
    %9327 = vmatpush1.bf16.msra.mxu0 0
    %9328 = vmatprep.mubr.bf16.mxu0 0
    %9329 = vmatmul.mubr.bf16.gmra.mrb[0].mxu0 %v9288
    %v9330 = vpop.f32.mrb[0].mxu0
    %v9331 = vadd.f32 %v9261, %v9330
    %v9332 = vpop.f32.mrb[0].mxu0
    %v9333 = vpop.f32.mrb[0].mxu0
    %v9334 = vadd.f32 %v9261, %v9333
    %v9335 = vpop.f32.mrb[0].mxu0
    %9336 = vmatprep.mubr.bf16.mxu0 0
    %9337 = vmatmul.mubr.bf16.gmra.mrb[0].mxu0 %v9291
    %v9338 = vpop.f32.mrb[0].mxu0
    %v9339 = vadd.f32 %v9261, %v9338
    %v9340 = vpop.f32.mrb[0].mxu0
    %v9341 = vpop.f32.mrb[0].mxu0
    %v9342 = vadd.f32 %v9261, %v9341
    %v9343 = vpop.f32.mrb[0].mxu0
    %9344 = vmatprep.mubr.bf16.mxu0 0
    %9345 = vmatmul.mubr.bf16.gmra.mrb[0].mxu0 %v9294
    %v9346 = vpop.f32.mrb[0].mxu0
    %v9347 = vadd.f32 %v9261, %v9346
    %v9348 = vpop.f32.mrb[0].mxu0
    %v9349 = vpop.f32.mrb[0].mxu0
    %v9350 = vadd.f32 %v9261, %v9349
    %v9351 = vpop.f32.mrb[0].mxu0
    %9352 = vdwg.mxu0
    %v9353 = vmax.f32 %v9331, 0.0
    %v9354 = vmax.f32 %v9334, 0.0
    %v9355 = vmax.f32 %v9339, 0.0
    %v9356 = vmax.f32 %v9342, 0.0
    %v9357 = vmax.f32 %v9347, 0.0
    %v9358 = vmax.f32 %v9350, 0.0
    %v9359 = vpack.c.bf16 %v9354, %v9353
    %v9360 = vpack.c.bf16 %v9356, %v9355
    %v9361 = vpack.c.bf16 %v9358, %v9357
    %s9362 = scalar_lea.vmem %s8, 64
    %v9363 = vld [vmem:[%s9362] sm:$0xf]
    %v9364 = vld [vmem:[%s9362 + $0x4] sm:$0xf]
    %v9365 = vld [vmem:[%s9362 + $0x8] sm:$0xf]
    %v9366 = vld [vmem:[%s9362 + $0xc] sm:$0xf]
    %v9367 = vld [vmem:[%s9362 + $0x10] sm:$0xf]
    %v9368 = vld [vmem:[%s9362 + $0x14] sm:$0xf]
    %v9369 = vld [vmem:[%s9362 + $0x18] sm:$0xf]
    %v9370 = vld [vmem:[%s9362 + $0x1c] sm:$0xf]
    %v9371 = vld [vmem:[%s9362 + $0x20] sm:$0xf]
    %v9372 = vld [vmem:[%s9362 + $0x24] sm:$0xf]
    %v9373 = vld [vmem:[%s9362 + $0x28] sm:$0xf]
    %v9374 = vld [vmem:[%s9362 + $0x2c] sm:$0xf]
    %v9375 = vld [vmem:[%s9362 + $0x30] sm:$0xf]
    %v9376 = vld [vmem:[%s9362 + $0x34] sm:$0xf]
    %v9377 = vld [vmem:[%s9362 + $0x38] sm:$0xf]
    %v9378 = vld [vmem:[%s9362 + $0x3c] sm:$0xf]
    %v9379 = vlaneseq
    %v9380 = vshrl.u32 %v9379, 7
    %v9381 = vsub.s32 3, %v9380
    %v9382 = vrot.slane %v4863, %v9381
    %v9399 = vunpack.c.l.b16 %v9363
    %v9400 = vunpack.c.l.b16 %v9364
    %v9401 = vunpack.c.l.b16 %v9365
    %v9402 = vunpack.c.l.b16 %v9366
    %v9403 = vunpack.c.l.b16 %v9367
    %v9404 = vunpack.c.l.b16 %v9368
    %v9405 = vunpack.c.l.b16 %v9369
    %v9406 = vunpack.c.l.b16 %v9370
    %v9407 = vunpack.c.l.b16 %v9371
    %v9408 = vunpack.c.l.b16 %v9372
    %v9409 = vunpack.c.l.b16 %v9373
    %v9410 = vunpack.c.l.b16 %v9374
    %v9411 = vunpack.c.l.b16 %v9375
    %v9412 = vunpack.c.l.b16 %v9376
    %v9413 = vunpack.c.l.b16 %v9377
    %v9414 = vunpack.c.l.b16 %v9378
    %v9415 = vpack.c.b16 %v9400, %v9399
    %v9416 = vpack.c.b16 %v9402, %v9401
    %v9417 = vpack.c.b16 %v9404, %v9403
    %v9418 = vpack.c.b16 %v9406, %v9405
    %v9419 = vpack.c.b16 %v9408, %v9407
    %v9420 = vpack.c.b16 %v9410, %v9409
    %v9421 = vpack.c.b16 %v9412, %v9411
    %v9422 = vpack.c.b16 %v9414, %v9413
    %9431 = vmatprep.subr.bf16.mxu0 0
    %9432 = vmatpush1.bf16.msra.mxu0 %v9415
    %9433 = vmatprep.subr.bf16.mxu0 0
    %9434 = vmatpush1.bf16.msra.mxu0 %v9416
    %9435 = vmatprep.subr.bf16.mxu0 0
    %9436 = vmatpush1.bf16.msra.mxu0 %v9417
    %9437 = vmatprep.subr.bf16.mxu0 0
    %9438 = vmatpush1.bf16.msra.mxu0 %v9418
    %9439 = vmatprep.subr.bf16.mxu0 0
    %9440 = vmatpush1.bf16.msra.mxu0 %v9419
    %9441 = vmatprep.subr.bf16.mxu0 0
    %9442 = vmatpush1.bf16.msra.mxu0 %v9420
    %9443 = vmatprep.subr.bf16.mxu0 0
    %9444 = vmatpush1.bf16.msra.mxu0 %v9421
    %9445 = vmatprep.subr.bf16.mxu0 0
    %9446 = vmatpush1.bf16.msra.mxu0 %v9422
    %9447 = vmatprep.subr.bf16.mxu0 0
    %9448 = vmatpush1.bf16.msra.mxu0 0
    %9449 = vmatprep.subr.bf16.mxu0 0
    %9450 = vmatpush1.bf16.msra.mxu0 0
    %9451 = vmatprep.subr.bf16.mxu0 0
    %9452 = vmatpush1.bf16.msra.mxu0 0
    %9453 = vmatprep.subr.bf16.mxu0 0
    %9454 = vmatpush1.bf16.msra.mxu0 0
    %9455 = vmatprep.subr.bf16.mxu0 0
    %9456 = vmatpush1.bf16.msra.mxu0 0
    %9457 = vmatprep.subr.bf16.mxu0 0
    %9458 = vmatpush1.bf16.msra.mxu0 0
    %9459 = vmatprep.subr.bf16.mxu0 0
    %9460 = vmatpush1.bf16.msra.mxu0 0
    %9461 = vmatprep.subr.bf16.mxu0 0
    %9462 = vmatpush1.bf16.msra.mxu0 0
    %9463 = vmatprep.mubr.bf16.mxu0 0
    %9464 = vmatmul.mubr.bf16.gmra.mrb[0].mxu0 %v9359
    %v9465 = vpop.f32.mrb[0].mxu0
    %v9466 = vadd.f32 %v9382, %v9465
    %v9467 = vpop.f32.mrb[0].mxu0
    %v9468 = vpop.f32.mrb[0].mxu0
    %v9469 = vadd.f32 %v9382, %v9468
    %v9470 = vpop.f32.mrb[0].mxu0
    %9471 = vmatprep.mubr.bf16.mxu0 0
    %9472 = vmatmul.mubr.bf16.gmra.mrb[0].mxu0 %v9360
    %v9473 = vpop.f32.mrb[0].mxu0
    %v9474 = vadd.f32 %v9382, %v9473
    %v9475 = vpop.f32.mrb[0].mxu0
    %v9476 = vpop.f32.mrb[0].mxu0
    %v9477 = vadd.f32 %v9382, %v9476
    %v9478 = vpop.f32.mrb[0].mxu0
    %9479 = vmatprep.mubr.bf16.mxu0 0
    %9480 = vmatmul.mubr.bf16.gmra.mrb[0].mxu0 %v9361
    %v9481 = vpop.f32.mrb[0].mxu0
    %v9482 = vadd.f32 %v9382, %v9481
    %v9483 = vpop.f32.mrb[0].mxu0
    %v9484 = vpop.f32.mrb[0].mxu0
    %v9485 = vadd.f32 %v9382, %v9484
    %v9486 = vpop.f32.mrb[0].mxu0
    %9487 = vdwg.mxu0
    %v9488 = vadd.f32 %v9237, %v9466
    %v9489 = vadd.f32 %v9238, %v9469
    %v9490 = vadd.f32 %v9239, %v9474
    %v9491 = vadd.f32 %v9240, %v9477
    %v9492 = vadd.f32 %v9241, %v9482
    %v9493 = vadd.f32 %v9242, %v9485
    %v9494 = vsel %vm198, %v9488, 0.0
    %9495 = vadd.xlane.f32.xlu0 %v9494
    %v9496 = vpop.xlane.xlu0 %9495
    %v9497 = vsel %vm198, %v9489, 0.0
    %9498 = vadd.xlane.f32.xlu0 %v9497
    %v9499 = vpop.xlane.xlu0 %9498
    %v9500 = vsel %vm198, %v9490, 0.0
    %9501 = vadd.xlane.f32.xlu0 %v9500
    %v9502 = vpop.xlane.xlu0 %9501
    %v9503 = vsel %vm198, %v9491, 0.0
    %9504 = vadd.xlane.f32.xlu0 %v9503
    %v9505 = vpop.xlane.xlu0 %9504
    %v9506 = vsel %vm198, %v9492, 0.0
    %9507 = vadd.xlane.f32.xlu0 %v9506
    %v9508 = vpop.xlane.xlu0 %9507
    %v9509 = vsel %vm198, %v9493, 0.0
    %9510 = vadd.xlane.f32.xlu0 %v9509
    %v9511 = vpop.xlane.xlu0 %9510
    %v9512 = vmul.f32 %v9496, %v4435
    %v9513 = vmul.f32 %v9499, %v4435
    %v9514 = vmul.f32 %v9502, %v4435
    %v9515 = vmul.f32 %v9505, %v4435
    %v9516 = vmul.f32 %v9508, %v4435
    %v9517 = vmul.f32 %v9511, %v4435
    %v9518 = vsub.f32 %v9488, %v9512
    %v9519 = vsub.f32 %v9489, %v9513
    %v9520 = vsub.f32 %v9490, %v9514
    %v9521 = vsub.f32 %v9491, %v9515
    %v9522 = vsub.f32 %v9492, %v9516
    %v9523 = vsub.f32 %v9493, %v9517
    %v9524 = vmul.f32 %v9518, %v9518
    %v9525 = vmul.f32 %v9519, %v9519
    %v9526 = vmul.f32 %v9520, %v9520
    %v9527 = vmul.f32 %v9521, %v9521
    %v9528 = vmul.f32 %v9522, %v9522
    %v9529 = vmul.f32 %v9523, %v9523
    %v9530 = vsel %vm198, %v9524, 0.0
    %9531 = vadd.xlane.f32.xlu0 %v9530
    %v9532 = vpop.xlane.xlu0 %9531
    %v9533 = vsel %vm198, %v9525, 0.0
    %9534 = vadd.xlane.f32.xlu0 %v9533
    %v9535 = vpop.xlane.xlu0 %9534
    %v9536 = vsel %vm198, %v9526, 0.0
    %9537 = vadd.xlane.f32.xlu0 %v9536
    %v9538 = vpop.xlane.xlu0 %9537
    %v9539 = vsel %vm198, %v9527, 0.0
    %9540 = vadd.xlane.f32.xlu0 %v9539
    %v9541 = vpop.xlane.xlu0 %9540
    %v9542 = vsel %vm198, %v9528, 0.0
    %9543 = vadd.xlane.f32.xlu0 %v9542
    %v9544 = vpop.xlane.xlu0 %9543
    %v9545 = vsel %vm198, %v9529, 0.0
    %9546 = vadd.xlane.f32.xlu0 %v9545
    %v9547 = vpop.xlane.xlu0 %9546
    %v9548 = vmul.f32 %v9532, %v4435
    %v9549 = vmul.f32 %v9535, %v4435
    %v9550 = vmul.f32 %v9538, %v4435
    %v9551 = vmul.f32 %v9541, %v4435
    %v9552 = vmul.f32 %v9544, %v4435
    %v9553 = vmul.f32 %v9547, %v4435
    %v9554 = vadd.f32 %v9548, 1e-05
    %v9555 = vadd.f32 %v9549, 1e-05
    %v9556 = vadd.f32 %v9550, 1e-05
    %v9557 = vadd.f32 %v9551, 1e-05
    %v9558 = vadd.f32 %v9552, 1e-05
    %v9559 = vadd.f32 %v9553, 1e-05
    %v9560 = vrsqrt.pop %v9554
    %v9561 = vrsqrt.pop %v9555
    %v9562 = vrsqrt.pop %v9556
    %v9563 = vrsqrt.pop %v9557
    %v9564 = vrsqrt.pop %v9558
    %v9565 = vrsqrt.pop %v9559
    %v9566 = vmul.f32 %v9518, %v9560
    %v9567 = vmul.f32 %v9519, %v9561
    %v9568 = vmul.f32 %v9520, %v9562
    %v9569 = vmul.f32 %v9521, %v9563
    %v9570 = vmul.f32 %v9522, %v9564
    %v9571 = vmul.f32 %v9523, %v9565
    %v9572 = vlaneseq
    %v9573 = vshrl.u32 %v9572, 7
    %v9574 = vsub.s32 4, %v9573
    %v9575 = vrot.slane %v4863, %v9574
    %v9576 = vmul.f32 %v9566, %v9575
    %v9577 = vmul.f32 %v9567, %v9575
    %v9578 = vmul.f32 %v9568, %v9575
    %v9579 = vmul.f32 %v9569, %v9575
    %v9580 = vmul.f32 %v9570, %v9575
    %v9581 = vmul.f32 %v9571, %v9575
    %v9582 = vlaneseq
    %v9583 = vshrl.u32 %v9582, 7
    %v9584 = vsub.s32 5, %v9583
    %v9585 = vrot.slane %v4863, %v9584
    %v9586 = vadd.f32 %v9576, %v9585
    %v9587 = vadd.f32 %v9577, %v9585
    %v9588 = vadd.f32 %v9578, %v9585
    %v9589 = vadd.f32 %v9579, %v9585
    %v9590 = vadd.f32 %v9580, %v9585
    %v9591 = vadd.f32 %v9581, %v9585
    %v9592 = vpack.c.bf16 %v9586, %v9586
    %v9593 = vpack.c.bf16 %v9587, %v9587
    %v9594 = vpack.c.bf16 %v9588, %v9588
    %v9595 = vpack.c.bf16 %v9589, %v9589
    %v9596 = vpack.c.bf16 %v9590, %v9590
    %v9597 = vpack.c.bf16 %v9591, %v9591
    %v9598 = vld [vmem:[%s10] sm:$0xf]
    %v9599 = vld [vmem:[%s10 + $0x4] sm:$0xf]
    %v9600 = vld [vmem:[%s10 + $0x8] sm:$0xf]
    %v9601 = vld [vmem:[%s10 + $0xc] sm:$0xf]
    %v9602 = vld [vmem:[%s10 + $0x10] sm:$0xf]
    %v9603 = vld [vmem:[%s10 + $0x14] sm:$0xf]
    %v9604 = vld [vmem:[%s10 + $0x18] sm:$0xf]
    %v9605 = vld [vmem:[%s10 + $0x1c] sm:$0xf]
    %s9606 = scalar_lea.vmem %s10, 32
    %v9607 = vld [vmem:[%s9606] sm:$0xf]
    %v9608 = vld [vmem:[%s9606 + $0x4] sm:$0xf]
    %v9609 = vld [vmem:[%s9606 + $0x8] sm:$0xf]
    %v9610 = vld [vmem:[%s9606 + $0xc] sm:$0xf]
    %v9611 = vld [vmem:[%s9606 + $0x10] sm:$0xf]
    %v9612 = vld [vmem:[%s9606 + $0x14] sm:$0xf]
    %v9613 = vld [vmem:[%s9606 + $0x18] sm:$0xf]
    %v9614 = vld [vmem:[%s9606 + $0x1c] sm:$0xf]
    %v9621 = vunpack.c.l.b16 %v9592
    %v9622 = vunpack.c.l.b16 %v9593
    %v9623 = vunpack.c.l.b16 %v9594
    %v9624 = vunpack.c.l.b16 %v9595
    %v9625 = vunpack.c.l.b16 %v9596
    %v9626 = vunpack.c.l.b16 %v9597
    %v9627 = vrot.slane %v9621, 1
    %vm9628 = vcmask 1041409
    %v9629 = vsel %vm9628, %v9622, %v9627
    %v9630 = vrot.slane %v9623, 7
    %vm9631 = vcmask 1042434
    %v9632 = vsel %vm9631, %v9630, %v9629
    %v9633 = vrot.slane %v9624, 6
    %vm9634 = vcmask 1043459
    %v9635 = vsel %vm9634, %v9633, %v9632
    %v9636 = vrot.slane %v9625, 5
    %vm9637 = vcmask 1044484
    %v9638 = vsel %vm9637, %v9636, %v9635
    %v9639 = vrot.slane %v9626, 4
    %vm9640 = vcmask 1045509
    %v9641 = vsel %vm9640, %v9639, %v9638
    %v9642 = vpack.c.b16 %v9641, %v9641
    %v9651 = vunpack.c.l.b16 %v9607
    %v9652 = vunpack.c.l.b16 %v9608
    %v9653 = vunpack.c.l.b16 %v9609
    %v9654 = vunpack.c.l.b16 %v9610
    %v9655 = vunpack.c.l.b16 %v9611
    %v9656 = vunpack.c.l.b16 %v9612
    %v9657 = vunpack.c.l.b16 %v9613
    %v9658 = vunpack.c.l.b16 %v9614
    %v9659 = vpack.c.b16 %v9652, %v9651
    %v9660 = vpack.c.b16 %v9654, %v9653
    %v9661 = vpack.c.b16 %v9656, %v9655
    %v9662 = vpack.c.b16 %v9658, %v9657
    %v9668 = vsel %vm198, %v9642, 0
    %9670 = vmatprep.subr.bf16.mxu0 0
    %9671 = vmatpush1.bf16.msra.mxu0 %v9659
    %9672 = vmatprep.subr.bf16.mxu0 0
    %9673 = vmatpush1.bf16.msra.mxu0 %v9660
    %9674 = vmatprep.subr.bf16.mxu0 0
    %9675 = vmatpush1.bf16.msra.mxu0 %v9661
    %9676 = vmatprep.subr.bf16.mxu0 0
    %9677 = vmatpush1.bf16.msra.mxu0 %v9662
    %9678 = vmatprep.subr.bf16.mxu0 0
    %9679 = vmatpush1.bf16.msra.mxu0 0
    %9680 = vmatprep.subr.bf16.mxu0 0
    %9681 = vmatpush1.bf16.msra.mxu0 0
    %9682 = vmatprep.subr.bf16.mxu0 0
    %9683 = vmatpush1.bf16.msra.mxu0 0
    %9684 = vmatprep.subr.bf16.mxu0 0
    %9685 = vmatpush1.bf16.msra.mxu0 0
    %9686 = vmatprep.subr.bf16.mxu0 0
    %9687 = vmatpush1.bf16.msra.mxu0 0
    %9688 = vmatprep.subr.bf16.mxu0 0
    %9689 = vmatpush1.bf16.msra.mxu0 0
    %9690 = vmatprep.subr.bf16.mxu0 0
    %9691 = vmatpush1.bf16.msra.mxu0 0
    %9692 = vmatprep.subr.bf16.mxu0 0
    %9693 = vmatpush1.bf16.msra.mxu0 0
    %9694 = vmatprep.subr.bf16.mxu0 0
    %9695 = vmatpush1.bf16.msra.mxu0 0
    %9696 = vmatprep.subr.bf16.mxu0 0
    %9697 = vmatpush1.bf16.msra.mxu0 0
    %9698 = vmatprep.subr.bf16.mxu0 0
    %9699 = vmatpush1.bf16.msra.mxu0 0
    %9700 = vmatprep.subr.bf16.mxu0 0
    %9701 = vmatpush1.bf16.msra.mxu0 0
    %9702 = vmatprep.mubr.bf16.mxu0 0
    %9703 = vmatmul.mubr.bf16.gmra.mrb[0].mxu0 %v9668
    %v9704 = vpop.f32.mrb[0].mxu0
    %v9705 = vadd.f32 0.0, %v9704
    %v9706 = vpop.f32.mrb[0].mxu0
    %v9707 = vpop.f32.mrb[0].mxu0
    %v9708 = vpop.f32.mrb[0].mxu0
    %9709 = vdwg.mxu0
    %v9710 = vrot.slane %v9622, 7
    %v9711 = vsel %vm9628, %v9710, %v9621
    %v9712 = vrot.slane %v9623, 6
    %v9713 = vsel %vm9631, %v9712, %v9711
    %v9714 = vrot.slane %v9624, 5
    %v9715 = vsel %vm9634, %v9714, %v9713
    %v9716 = vrot.slane %v9625, 4
    %v9717 = vsel %vm9637, %v9716, %v9715
    %v9718 = vrot.slane %v9626, 3
    %v9719 = vsel %vm9640, %v9718, %v9717
    %v9720 = vpack.c.b16 %v9719, %v9719
    %v9729 = vunpack.c.l.b16 %v9598
    %v9730 = vunpack.c.l.b16 %v9599
    %v9731 = vunpack.c.l.b16 %v9600
    %v9732 = vunpack.c.l.b16 %v9601
    %v9733 = vunpack.c.l.b16 %v9602
    %v9734 = vunpack.c.l.b16 %v9603
    %v9735 = vunpack.c.l.b16 %v9604
    %v9736 = vunpack.c.l.b16 %v9605
    %v9737 = vpack.c.b16 %v9730, %v9729
    %v9738 = vpack.c.b16 %v9732, %v9731
    %v9739 = vpack.c.b16 %v9734, %v9733
    %v9740 = vpack.c.b16 %v9736, %v9735
    %v9746 = vsel %vm198, %v9720, 0
    %9748 = vmatprep.subr.bf16.mxu0 0
    %9749 = vmatpush1.bf16.msra.mxu0 %v9737
    %9750 = vmatprep.subr.bf16.mxu0 0
    %9751 = vmatpush1.bf16.msra.mxu0 %v9738
    %9752 = vmatprep.subr.bf16.mxu0 0
    %9753 = vmatpush1.bf16.msra.mxu0 %v9739
    %9754 = vmatprep.subr.bf16.mxu0 0
    %9755 = vmatpush1.bf16.msra.mxu0 %v9740
    %9756 = vmatprep.subr.bf16.mxu0 0
    %9757 = vmatpush1.bf16.msra.mxu0 0
    %9758 = vmatprep.subr.bf16.mxu0 0
    %9759 = vmatpush1.bf16.msra.mxu0 0
    %9760 = vmatprep.subr.bf16.mxu0 0
    %9761 = vmatpush1.bf16.msra.mxu0 0
    %9762 = vmatprep.subr.bf16.mxu0 0
    %9763 = vmatpush1.bf16.msra.mxu0 0
    %9764 = vmatprep.subr.bf16.mxu0 0
    %9765 = vmatpush1.bf16.msra.mxu0 0
    %9766 = vmatprep.subr.bf16.mxu0 0
    %9767 = vmatpush1.bf16.msra.mxu0 0
    %9768 = vmatprep.subr.bf16.mxu0 0
    %9769 = vmatpush1.bf16.msra.mxu0 0
    %9770 = vmatprep.subr.bf16.mxu0 0
    %9771 = vmatpush1.bf16.msra.mxu0 0
    %9772 = vmatprep.subr.bf16.mxu0 0
    %9773 = vmatpush1.bf16.msra.mxu0 0
    %9774 = vmatprep.subr.bf16.mxu0 0
    %9775 = vmatpush1.bf16.msra.mxu0 0
    %9776 = vmatprep.subr.bf16.mxu0 0
    %9777 = vmatpush1.bf16.msra.mxu0 0
    %9778 = vmatprep.subr.bf16.mxu0 0
    %9779 = vmatpush1.bf16.msra.mxu0 0
    %9780 = vmatprep.mubr.bf16.mxu0 0
    %9781 = vmatmul.mubr.bf16.gmra.mrb[0].mxu0 %v9746
    %v9782 = vpop.f32.mrb[0].mxu0
    %v9783 = vadd.f32 %v9705, %v9782
    %v9784 = vpop.f32.mrb[0].mxu0
    %v9785 = vpop.f32.mrb[0].mxu0
    %v9786 = vpop.f32.mrb[0].mxu0
    %9787 = vdwg.mxu0
    %s9788 = scalar_lea.vmem %s10, 64
    %v9789 = vld [vmem:[%s9788] sm:$0xf]
    %v9790 = vld [vmem:[%s9788 + $0x4] sm:$0xf]
    %v9791 = vld [vmem:[%s9788 + $0x8] sm:$0xf]
    %v9792 = vld [vmem:[%s9788 + $0xc] sm:$0xf]
    %v9793 = vld [vmem:[%s9788 + $0x10] sm:$0xf]
    %v9794 = vld [vmem:[%s9788 + $0x14] sm:$0xf]
    %v9795 = vld [vmem:[%s9788 + $0x18] sm:$0xf]
    %v9796 = vld [vmem:[%s9788 + $0x1c] sm:$0xf]
    %v9797 = vrot.slane %v9621, 2
    %v9798 = vrot.slane %v9622, 1
    %v9799 = vsel %vm9628, %v9798, %v9797
    %v9800 = vsel %vm9631, %v9623, %v9799
    %v9801 = vrot.slane %v9624, 7
    %v9802 = vsel %vm9634, %v9801, %v9800
    %v9803 = vrot.slane %v9625, 6
    %v9804 = vsel %vm9637, %v9803, %v9802
    %v9805 = vrot.slane %v9626, 5
    %v9806 = vsel %vm9640, %v9805, %v9804
    %v9807 = vpack.c.b16 %v9806, %v9806
    %v9816 = vunpack.c.l.b16 %v9789
    %v9817 = vunpack.c.l.b16 %v9790
    %v9818 = vunpack.c.l.b16 %v9791
    %v9819 = vunpack.c.l.b16 %v9792
    %v9820 = vunpack.c.l.b16 %v9793
    %v9821 = vunpack.c.l.b16 %v9794
    %v9822 = vunpack.c.l.b16 %v9795
    %v9823 = vunpack.c.l.b16 %v9796
    %v9824 = vpack.c.b16 %v9817, %v9816
    %v9825 = vpack.c.b16 %v9819, %v9818
    %v9826 = vpack.c.b16 %v9821, %v9820
    %v9827 = vpack.c.b16 %v9823, %v9822
    %v9833 = vsel %vm198, %v9807, 0
    %9835 = vmatprep.subr.bf16.mxu0 0
    %9836 = vmatpush1.bf16.msra.mxu0 %v9824
    %9837 = vmatprep.subr.bf16.mxu0 0
    %9838 = vmatpush1.bf16.msra.mxu0 %v9825
    %9839 = vmatprep.subr.bf16.mxu0 0
    %9840 = vmatpush1.bf16.msra.mxu0 %v9826
    %9841 = vmatprep.subr.bf16.mxu0 0
    %9842 = vmatpush1.bf16.msra.mxu0 %v9827
    %9843 = vmatprep.subr.bf16.mxu0 0
    %9844 = vmatpush1.bf16.msra.mxu0 0
    %9845 = vmatprep.subr.bf16.mxu0 0
    %9846 = vmatpush1.bf16.msra.mxu0 0
    %9847 = vmatprep.subr.bf16.mxu0 0
    %9848 = vmatpush1.bf16.msra.mxu0 0
    %9849 = vmatprep.subr.bf16.mxu0 0
    %9850 = vmatpush1.bf16.msra.mxu0 0
    %9851 = vmatprep.subr.bf16.mxu0 0
    %9852 = vmatpush1.bf16.msra.mxu0 0
    %9853 = vmatprep.subr.bf16.mxu0 0
    %9854 = vmatpush1.bf16.msra.mxu0 0
    %9855 = vmatprep.subr.bf16.mxu0 0
    %9856 = vmatpush1.bf16.msra.mxu0 0
    %9857 = vmatprep.subr.bf16.mxu0 0
    %9858 = vmatpush1.bf16.msra.mxu0 0
    %9859 = vmatprep.subr.bf16.mxu0 0
    %9860 = vmatpush1.bf16.msra.mxu0 0
    %9861 = vmatprep.subr.bf16.mxu0 0
    %9862 = vmatpush1.bf16.msra.mxu0 0
    %9863 = vmatprep.subr.bf16.mxu0 0
    %9864 = vmatpush1.bf16.msra.mxu0 0
    %9865 = vmatprep.subr.bf16.mxu0 0
    %9866 = vmatpush1.bf16.msra.mxu0 0
    %9867 = vmatprep.mubr.bf16.mxu0 0
    %9868 = vmatmul.mubr.bf16.gmra.mrb[0].mxu0 %v9833
    %v9869 = vpop.f32.mrb[0].mxu0
    %v9870 = vadd.f32 0.0, %v9869
    %v9871 = vpop.f32.mrb[0].mxu0
    %v9872 = vpop.f32.mrb[0].mxu0
    %v9873 = vpop.f32.mrb[0].mxu0
    %9874 = vdwg.mxu0
    %v9875 = vadd.f32 %v9783, %v9870
    %s9876 = scalar_lea.vmem %s10, 96
    %v9877 = vld [vmem:[%s9876] sm:$0xf]
    %v9878 = vld [vmem:[%s9876 + $0x4] sm:$0xf]
    %v9879 = vld [vmem:[%s9876 + $0x8] sm:$0xf]
    %v9880 = vld [vmem:[%s9876 + $0xc] sm:$0xf]
    %v9881 = vld [vmem:[%s9876 + $0x10] sm:$0xf]
    %v9882 = vld [vmem:[%s9876 + $0x14] sm:$0xf]
    %v9883 = vld [vmem:[%s9876 + $0x18] sm:$0xf]
    %v9884 = vld [vmem:[%s9876 + $0x1c] sm:$0xf]
    %v9885 = vrot.slane %v9621, 3
    %v9886 = vrot.slane %v9622, 2
    %v9887 = vsel %vm9628, %v9886, %v9885
    %v9888 = vrot.slane %v9623, 1
    %v9889 = vsel %vm9631, %v9888, %v9887
    %v9890 = vsel %vm9634, %v9624, %v9889
    %v9891 = vrot.slane %v9625, 7
    %v9892 = vsel %vm9637, %v9891, %v9890
    %v9893 = vrot.slane %v9626, 6
    %v9894 = vsel %vm9640, %v9893, %v9892
    %v9895 = vpack.c.b16 %v9894, %v9894
    %v9904 = vunpack.c.l.b16 %v9877
    %v9905 = vunpack.c.l.b16 %v9878
    %v9906 = vunpack.c.l.b16 %v9879
    %v9907 = vunpack.c.l.b16 %v9880
    %v9908 = vunpack.c.l.b16 %v9881
    %v9909 = vunpack.c.l.b16 %v9882
    %v9910 = vunpack.c.l.b16 %v9883
    %v9911 = vunpack.c.l.b16 %v9884
    %v9912 = vpack.c.b16 %v9905, %v9904
    %v9913 = vpack.c.b16 %v9907, %v9906
    %v9914 = vpack.c.b16 %v9909, %v9908
    %v9915 = vpack.c.b16 %v9911, %v9910
    %v9921 = vsel %vm198, %v9895, 0
    %9923 = vmatprep.subr.bf16.mxu0 0
    %9924 = vmatpush1.bf16.msra.mxu0 %v9912
    %9925 = vmatprep.subr.bf16.mxu0 0
    %9926 = vmatpush1.bf16.msra.mxu0 %v9913
    %9927 = vmatprep.subr.bf16.mxu0 0
    %9928 = vmatpush1.bf16.msra.mxu0 %v9914
    %9929 = vmatprep.subr.bf16.mxu0 0
    %9930 = vmatpush1.bf16.msra.mxu0 %v9915
    %9931 = vmatprep.subr.bf16.mxu0 0
    %9932 = vmatpush1.bf16.msra.mxu0 0
    %9933 = vmatprep.subr.bf16.mxu0 0
    %9934 = vmatpush1.bf16.msra.mxu0 0
    %9935 = vmatprep.subr.bf16.mxu0 0
    %9936 = vmatpush1.bf16.msra.mxu0 0
    %9937 = vmatprep.subr.bf16.mxu0 0
    %9938 = vmatpush1.bf16.msra.mxu0 0
    %9939 = vmatprep.subr.bf16.mxu0 0
    %9940 = vmatpush1.bf16.msra.mxu0 0
    %9941 = vmatprep.subr.bf16.mxu0 0
    %9942 = vmatpush1.bf16.msra.mxu0 0
    %9943 = vmatprep.subr.bf16.mxu0 0
    %9944 = vmatpush1.bf16.msra.mxu0 0
    %9945 = vmatprep.subr.bf16.mxu0 0
    %9946 = vmatpush1.bf16.msra.mxu0 0
    %9947 = vmatprep.subr.bf16.mxu0 0
    %9948 = vmatpush1.bf16.msra.mxu0 0
    %9949 = vmatprep.subr.bf16.mxu0 0
    %9950 = vmatpush1.bf16.msra.mxu0 0
    %9951 = vmatprep.subr.bf16.mxu0 0
    %9952 = vmatpush1.bf16.msra.mxu0 0
    %9953 = vmatprep.subr.bf16.mxu0 0
    %9954 = vmatpush1.bf16.msra.mxu0 0
    %9955 = vmatprep.mubr.bf16.mxu0 0
    %9956 = vmatmul.mubr.bf16.gmra.mrb[0].mxu0 %v9921
    %v9957 = vpop.f32.mrb[0].mxu0
    %v9958 = vadd.f32 0.0, %v9957
    %v9959 = vpop.f32.mrb[0].mxu0
    %v9960 = vpop.f32.mrb[0].mxu0
    %v9961 = vpop.f32.mrb[0].mxu0
    %9962 = vdwg.mxu0
    %v9963 = vadd.f32 %v9875, %v9958
    %s9964 = scalar_lea.vmem %s10, 128
    %v9965 = vld [vmem:[%s9964] sm:$0xf]
    %v9966 = vld [vmem:[%s9964 + $0x4] sm:$0xf]
    %v9967 = vld [vmem:[%s9964 + $0x8] sm:$0xf]
    %v9968 = vld [vmem:[%s9964 + $0xc] sm:$0xf]
    %v9969 = vld [vmem:[%s9964 + $0x10] sm:$0xf]
    %v9970 = vld [vmem:[%s9964 + $0x14] sm:$0xf]
    %v9971 = vld [vmem:[%s9964 + $0x18] sm:$0xf]
    %v9972 = vld [vmem:[%s9964 + $0x1c] sm:$0xf]
    %v9973 = vrot.slane %v9621, 4
    %v9974 = vrot.slane %v9622, 3
    %v9975 = vsel %vm9628, %v9974, %v9973
    %v9976 = vrot.slane %v9623, 2
    %v9977 = vsel %vm9631, %v9976, %v9975
    %v9978 = vrot.slane %v9624, 1
    %v9979 = vsel %vm9634, %v9978, %v9977
    %v9980 = vsel %vm9637, %v9625, %v9979
    %v9981 = vrot.slane %v9626, 7
    %v9982 = vsel %vm9640, %v9981, %v9980
    %v9983 = vpack.c.b16 %v9982, %v9982
    %v9992 = vunpack.c.l.b16 %v9965
    %v9993 = vunpack.c.l.b16 %v9966
    %v9994 = vunpack.c.l.b16 %v9967
    %v9995 = vunpack.c.l.b16 %v9968
    %v9996 = vunpack.c.l.b16 %v9969
    %v9997 = vunpack.c.l.b16 %v9970
    %v9998 = vunpack.c.l.b16 %v9971
    %v9999 = vunpack.c.l.b16 %v9972
    %v10000 = vpack.c.b16 %v9993, %v9992
    %v10001 = vpack.c.b16 %v9995, %v9994
    %v10002 = vpack.c.b16 %v9997, %v9996
    %v10003 = vpack.c.b16 %v9999, %v9998
    %v10009 = vsel %vm198, %v9983, 0
    %10011 = vmatprep.subr.bf16.mxu0 0
    %10012 = vmatpush1.bf16.msra.mxu0 %v10000
    %10013 = vmatprep.subr.bf16.mxu0 0
    %10014 = vmatpush1.bf16.msra.mxu0 %v10001
    %10015 = vmatprep.subr.bf16.mxu0 0
    %10016 = vmatpush1.bf16.msra.mxu0 %v10002
    %10017 = vmatprep.subr.bf16.mxu0 0
    %10018 = vmatpush1.bf16.msra.mxu0 %v10003
    %10019 = vmatprep.subr.bf16.mxu0 0
    %10020 = vmatpush1.bf16.msra.mxu0 0
    %10021 = vmatprep.subr.bf16.mxu0 0
    %10022 = vmatpush1.bf16.msra.mxu0 0
    %10023 = vmatprep.subr.bf16.mxu0 0
    %10024 = vmatpush1.bf16.msra.mxu0 0
    %10025 = vmatprep.subr.bf16.mxu0 0
    %10026 = vmatpush1.bf16.msra.mxu0 0
    %10027 = vmatprep.subr.bf16.mxu0 0
    %10028 = vmatpush1.bf16.msra.mxu0 0
    %10029 = vmatprep.subr.bf16.mxu0 0
    %10030 = vmatpush1.bf16.msra.mxu0 0
    %10031 = vmatprep.subr.bf16.mxu0 0
    %10032 = vmatpush1.bf16.msra.mxu0 0
    %10033 = vmatprep.subr.bf16.mxu0 0
    %10034 = vmatpush1.bf16.msra.mxu0 0
    %10035 = vmatprep.subr.bf16.mxu0 0
    %10036 = vmatpush1.bf16.msra.mxu0 0
    %10037 = vmatprep.subr.bf16.mxu0 0
    %10038 = vmatpush1.bf16.msra.mxu0 0
    %10039 = vmatprep.subr.bf16.mxu0 0
    %10040 = vmatpush1.bf16.msra.mxu0 0
    %10041 = vmatprep.subr.bf16.mxu0 0
    %10042 = vmatpush1.bf16.msra.mxu0 0
    %10043 = vmatprep.mubr.bf16.mxu0 0
    %10044 = vmatmul.mubr.bf16.gmra.mrb[0].mxu0 %v10009
    %v10045 = vpop.f32.mrb[0].mxu0
    %v10046 = vadd.f32 0.0, %v10045
    %v10047 = vpop.f32.mrb[0].mxu0
    %v10048 = vpop.f32.mrb[0].mxu0
    %v10049 = vpop.f32.mrb[0].mxu0
    %10050 = vdwg.mxu0
    %v10051 = vadd.f32 %v9963, %v10046
    %s10052 = scalar_lea.vmem %s10, 160
    %v10053 = vld [vmem:[%s10052] sm:$0xf]
    %v10054 = vld [vmem:[%s10052 + $0x4] sm:$0xf]
    %v10055 = vld [vmem:[%s10052 + $0x8] sm:$0xf]
    %v10056 = vld [vmem:[%s10052 + $0xc] sm:$0xf]
    %v10057 = vld [vmem:[%s10052 + $0x10] sm:$0xf]
    %v10058 = vld [vmem:[%s10052 + $0x14] sm:$0xf]
    %v10059 = vld [vmem:[%s10052 + $0x18] sm:$0xf]
    %v10060 = vld [vmem:[%s10052 + $0x1c] sm:$0xf]
    %v10061 = vrot.slane %v9621, 5
    %v10062 = vrot.slane %v9622, 4
    %v10063 = vsel %vm9628, %v10062, %v10061
    %v10064 = vrot.slane %v9623, 3
    %v10065 = vsel %vm9631, %v10064, %v10063
    %v10066 = vrot.slane %v9624, 2
    %v10067 = vsel %vm9634, %v10066, %v10065
    %v10068 = vrot.slane %v9625, 1
    %v10069 = vsel %vm9637, %v10068, %v10067
    %v10070 = vsel %vm9640, %v9626, %v10069
    %v10071 = vpack.c.b16 %v10070, %v10070
    %v10080 = vunpack.c.l.b16 %v10053
    %v10081 = vunpack.c.l.b16 %v10054
    %v10082 = vunpack.c.l.b16 %v10055
    %v10083 = vunpack.c.l.b16 %v10056
    %v10084 = vunpack.c.l.b16 %v10057
    %v10085 = vunpack.c.l.b16 %v10058
    %v10086 = vunpack.c.l.b16 %v10059
    %v10087 = vunpack.c.l.b16 %v10060
    %v10088 = vpack.c.b16 %v10081, %v10080
    %v10089 = vpack.c.b16 %v10083, %v10082
    %v10090 = vpack.c.b16 %v10085, %v10084
    %v10091 = vpack.c.b16 %v10087, %v10086
    %v10097 = vsel %vm198, %v10071, 0
    %10099 = vmatprep.subr.bf16.mxu0 0
    %10100 = vmatpush1.bf16.msra.mxu0 %v10088
    %10101 = vmatprep.subr.bf16.mxu0 0
    %10102 = vmatpush1.bf16.msra.mxu0 %v10089
    %10103 = vmatprep.subr.bf16.mxu0 0
    %10104 = vmatpush1.bf16.msra.mxu0 %v10090
    %10105 = vmatprep.subr.bf16.mxu0 0
    %10106 = vmatpush1.bf16.msra.mxu0 %v10091
    %10107 = vmatprep.subr.bf16.mxu0 0
    %10108 = vmatpush1.bf16.msra.mxu0 0
    %10109 = vmatprep.subr.bf16.mxu0 0
    %10110 = vmatpush1.bf16.msra.mxu0 0
    %10111 = vmatprep.subr.bf16.mxu0 0
    %10112 = vmatpush1.bf16.msra.mxu0 0
    %10113 = vmatprep.subr.bf16.mxu0 0
    %10114 = vmatpush1.bf16.msra.mxu0 0
    %10115 = vmatprep.subr.bf16.mxu0 0
    %10116 = vmatpush1.bf16.msra.mxu0 0
    %10117 = vmatprep.subr.bf16.mxu0 0
    %10118 = vmatpush1.bf16.msra.mxu0 0
    %10119 = vmatprep.subr.bf16.mxu0 0
    %10120 = vmatpush1.bf16.msra.mxu0 0
    %10121 = vmatprep.subr.bf16.mxu0 0
    %10122 = vmatpush1.bf16.msra.mxu0 0
    %10123 = vmatprep.subr.bf16.mxu0 0
    %10124 = vmatpush1.bf16.msra.mxu0 0
    %10125 = vmatprep.subr.bf16.mxu0 0
    %10126 = vmatpush1.bf16.msra.mxu0 0
    %10127 = vmatprep.subr.bf16.mxu0 0
    %10128 = vmatpush1.bf16.msra.mxu0 0
    %10129 = vmatprep.subr.bf16.mxu0 0
    %10130 = vmatpush1.bf16.msra.mxu0 0
    %10131 = vmatprep.mubr.bf16.mxu0 0
    %10132 = vmatmul.mubr.bf16.gmra.mrb[0].mxu0 %v10097
    %v10133 = vpop.f32.mrb[0].mxu0
    %v10134 = vadd.f32 0.0, %v10133
    %v10135 = vpop.f32.mrb[0].mxu0
    %v10136 = vpop.f32.mrb[0].mxu0
    %v10137 = vpop.f32.mrb[0].mxu0
    %10138 = vdwg.mxu0
    %v10139 = vadd.f32 %v10051, %v10134
    %s10140 = scalar_lea.vmem %s10, 192
    %v10141 = vld [vmem:[%s10140] sm:$0xf]
    %v10142 = vld [vmem:[%s10140 + $0x4] sm:$0xf]
    %v10143 = vld [vmem:[%s10140 + $0x8] sm:$0xf]
    %v10144 = vld [vmem:[%s10140 + $0xc] sm:$0xf]
    %v10145 = vld [vmem:[%s10140 + $0x10] sm:$0xf]
    %v10146 = vld [vmem:[%s10140 + $0x14] sm:$0xf]
    %v10147 = vld [vmem:[%s10140 + $0x18] sm:$0xf]
    %v10148 = vld [vmem:[%s10140 + $0x1c] sm:$0xf]
    %v10149 = vrot.slane %v9621, 6
    %v10150 = vrot.slane %v9622, 5
    %v10151 = vsel %vm9628, %v10150, %v10149
    %v10152 = vrot.slane %v9623, 4
    %v10153 = vsel %vm9631, %v10152, %v10151
    %v10154 = vrot.slane %v9624, 3
    %v10155 = vsel %vm9634, %v10154, %v10153
    %v10156 = vrot.slane %v9625, 2
    %v10157 = vsel %vm9637, %v10156, %v10155
    %v10158 = vrot.slane %v9626, 1
    %v10159 = vsel %vm9640, %v10158, %v10157
    %v10160 = vpack.c.b16 %v10159, %v10159
    %v10169 = vunpack.c.l.b16 %v10141
    %v10170 = vunpack.c.l.b16 %v10142
    %v10171 = vunpack.c.l.b16 %v10143
    %v10172 = vunpack.c.l.b16 %v10144
    %v10173 = vunpack.c.l.b16 %v10145
    %v10174 = vunpack.c.l.b16 %v10146
    %v10175 = vunpack.c.l.b16 %v10147
    %v10176 = vunpack.c.l.b16 %v10148
    %v10177 = vpack.c.b16 %v10170, %v10169
    %v10178 = vpack.c.b16 %v10172, %v10171
    %v10179 = vpack.c.b16 %v10174, %v10173
    %v10180 = vpack.c.b16 %v10176, %v10175
    %v10186 = vsel %vm198, %v10160, 0
    %10188 = vmatprep.subr.bf16.mxu0 0
    %10189 = vmatpush1.bf16.msra.mxu0 %v10177
    %10190 = vmatprep.subr.bf16.mxu0 0
    %10191 = vmatpush1.bf16.msra.mxu0 %v10178
    %10192 = vmatprep.subr.bf16.mxu0 0
    %10193 = vmatpush1.bf16.msra.mxu0 %v10179
    %10194 = vmatprep.subr.bf16.mxu0 0
    %10195 = vmatpush1.bf16.msra.mxu0 %v10180
    %10196 = vmatprep.subr.bf16.mxu0 0
    %10197 = vmatpush1.bf16.msra.mxu0 0
    %10198 = vmatprep.subr.bf16.mxu0 0
    %10199 = vmatpush1.bf16.msra.mxu0 0
    %10200 = vmatprep.subr.bf16.mxu0 0
    %10201 = vmatpush1.bf16.msra.mxu0 0
    %10202 = vmatprep.subr.bf16.mxu0 0
    %10203 = vmatpush1.bf16.msra.mxu0 0
    %10204 = vmatprep.subr.bf16.mxu0 0
    %10205 = vmatpush1.bf16.msra.mxu0 0
    %10206 = vmatprep.subr.bf16.mxu0 0
    %10207 = vmatpush1.bf16.msra.mxu0 0
    %10208 = vmatprep.subr.bf16.mxu0 0
    %10209 = vmatpush1.bf16.msra.mxu0 0
    %10210 = vmatprep.subr.bf16.mxu0 0
    %10211 = vmatpush1.bf16.msra.mxu0 0
    %10212 = vmatprep.subr.bf16.mxu0 0
    %10213 = vmatpush1.bf16.msra.mxu0 0
    %10214 = vmatprep.subr.bf16.mxu0 0
    %10215 = vmatpush1.bf16.msra.mxu0 0
    %10216 = vmatprep.subr.bf16.mxu0 0
    %10217 = vmatpush1.bf16.msra.mxu0 0
    %10218 = vmatprep.subr.bf16.mxu0 0
    %10219 = vmatpush1.bf16.msra.mxu0 0
    %10220 = vmatprep.mubr.bf16.mxu0 0
    %10221 = vmatmul.mubr.bf16.gmra.mrb[0].mxu0 %v10186
    %v10222 = vpop.f32.mrb[0].mxu0
    %v10223 = vadd.f32 0.0, %v10222
    %v10224 = vpop.f32.mrb[0].mxu0
    %v10225 = vpop.f32.mrb[0].mxu0
    %v10226 = vpop.f32.mrb[0].mxu0
    %10227 = vdwg.mxu0
    %v10228 = vadd.f32 %v10139, %v10223
    %s10229 = scalar_lea.vmem %s10, 224
    %v10230 = vld [vmem:[%s10229] sm:$0xf]
    %v10231 = vld [vmem:[%s10229 + $0x4] sm:$0xf]
    %v10232 = vld [vmem:[%s10229 + $0x8] sm:$0xf]
    %v10233 = vld [vmem:[%s10229 + $0xc] sm:$0xf]
    %v10234 = vld [vmem:[%s10229 + $0x10] sm:$0xf]
    %v10235 = vld [vmem:[%s10229 + $0x14] sm:$0xf]
    %v10236 = vld [vmem:[%s10229 + $0x18] sm:$0xf]
    %v10237 = vld [vmem:[%s10229 + $0x1c] sm:$0xf]
    %v10238 = vrot.slane %v9621, 7
    %v10239 = vrot.slane %v9622, 6
    %v10240 = vsel %vm9628, %v10239, %v10238
    %v10241 = vrot.slane %v9623, 5
    %v10242 = vsel %vm9631, %v10241, %v10240
    %v10243 = vrot.slane %v9624, 4
    %v10244 = vsel %vm9634, %v10243, %v10242
    %v10245 = vrot.slane %v9625, 3
    %v10246 = vsel %vm9637, %v10245, %v10244
    %v10247 = vrot.slane %v9626, 2
    %v10248 = vsel %vm9640, %v10247, %v10246
    %v10249 = vpack.c.b16 %v10248, %v10248
    %v10258 = vunpack.c.l.b16 %v10230
    %v10259 = vunpack.c.l.b16 %v10231
    %v10260 = vunpack.c.l.b16 %v10232
    %v10261 = vunpack.c.l.b16 %v10233
    %v10262 = vunpack.c.l.b16 %v10234
    %v10263 = vunpack.c.l.b16 %v10235
    %v10264 = vunpack.c.l.b16 %v10236
    %v10265 = vunpack.c.l.b16 %v10237
    %v10266 = vpack.c.b16 %v10259, %v10258
    %v10267 = vpack.c.b16 %v10261, %v10260
    %v10268 = vpack.c.b16 %v10263, %v10262
    %v10269 = vpack.c.b16 %v10265, %v10264
    %v10275 = vsel %vm198, %v10249, 0
    %10277 = vmatprep.subr.bf16.mxu0 0
    %10278 = vmatpush1.bf16.msra.mxu0 %v10266
    %10279 = vmatprep.subr.bf16.mxu0 0
    %10280 = vmatpush1.bf16.msra.mxu0 %v10267
    %10281 = vmatprep.subr.bf16.mxu0 0
    %10282 = vmatpush1.bf16.msra.mxu0 %v10268
    %10283 = vmatprep.subr.bf16.mxu0 0
    %10284 = vmatpush1.bf16.msra.mxu0 %v10269
    %10285 = vmatprep.subr.bf16.mxu0 0
    %10286 = vmatpush1.bf16.msra.mxu0 0
    %10287 = vmatprep.subr.bf16.mxu0 0
    %10288 = vmatpush1.bf16.msra.mxu0 0
    %10289 = vmatprep.subr.bf16.mxu0 0
    %10290 = vmatpush1.bf16.msra.mxu0 0
    %10291 = vmatprep.subr.bf16.mxu0 0
    %10292 = vmatpush1.bf16.msra.mxu0 0
    %10293 = vmatprep.subr.bf16.mxu0 0
    %10294 = vmatpush1.bf16.msra.mxu0 0
    %10295 = vmatprep.subr.bf16.mxu0 0
    %10296 = vmatpush1.bf16.msra.mxu0 0
    %10297 = vmatprep.subr.bf16.mxu0 0
    %10298 = vmatpush1.bf16.msra.mxu0 0
    %10299 = vmatprep.subr.bf16.mxu0 0
    %10300 = vmatpush1.bf16.msra.mxu0 0
    %10301 = vmatprep.subr.bf16.mxu0 0
    %10302 = vmatpush1.bf16.msra.mxu0 0
    %10303 = vmatprep.subr.bf16.mxu0 0
    %10304 = vmatpush1.bf16.msra.mxu0 0
    %10305 = vmatprep.subr.bf16.mxu0 0
    %10306 = vmatpush1.bf16.msra.mxu0 0
    %10307 = vmatprep.subr.bf16.mxu0 0
    %10308 = vmatpush1.bf16.msra.mxu0 0
    %10309 = vmatprep.mubr.bf16.mxu0 0
    %10310 = vmatmul.mubr.bf16.gmra.mrb[0].mxu0 %v10275
    %v10311 = vpop.f32.mrb[0].mxu0
    %v10312 = vadd.f32 0.0, %v10311
    %v10313 = vpop.f32.mrb[0].mxu0
    %v10314 = vpop.f32.mrb[0].mxu0
    %v10315 = vpop.f32.mrb[0].mxu0
    %10316 = vdwg.mxu0
    %v10317 = vadd.f32 %v10228, %v10312
    %v10318 = vld [vmem:[%s11] sm:$0x1]
    %v10320 = vlaneseq
    %v10321 = vshrl.u32 %v10320, 7
    %v10322 = vsub.s32 0, %v10321
    %v10323 = vrot.slane %v10318, %v10322
    %v10325 = vadd.f32 %v10317, %v10323
    %vm10326 = vcmask 95232
    %10327 = vst.msk [vmem:[#allocation2] sm:$0x3f] %vm10326, %v10325
    // Predicated region
    $region50: #{tpu_custom_call.1} parent=1 // pred_check
      _
    $region51: #{tpu_custom_call.1} parent=1 // pred_check_branch
      %10329 = sbr.rel (0) target = $region53
    $region52: #{tpu_custom_call.1} parent=1 // pred_region
      %s10331 = ssub.s32 128, 128
      %10332 = vsyncadd [#allocation3], %s10331
      %s10334 = sshll.u32 [#allocation2], 4
      %s10335 = int_to_ptr.vmem [resolvable:$true] %s10334
      %10337 = dma.vmem_to_hbm [thread:$0]  %s10335, 128, %s12, [#allocation3]
    $region53: #{tpu_custom_call.1} parent=1 // pred_fallthru
      _
    // Predicated region
    $region54: #{tpu_custom_call.1} parent=1 // pred_check
      _
    $region55: #{tpu_custom_call.1} parent=1 // pred_check_branch
      %10339 = sbr.rel (0) target = $region57
    $region56: #{tpu_custom_call.1} parent=1 // pred_region
      %10340 = dma.done [#allocation3], 128
    $region57: #{tpu_custom_call.1} parent=1 // pred_fallthru
      _
    %10341 = vsyncpa [#allocation3], 1

</llo_original>
